<compile_context>
chip_gen: v7x
topology: tpu7x:2x2x1
jax: 0.10.0
libtpu: 0.0.40
codegen_flags: <defaults>
</compile_context>

<pallas_src>
from functools import partial

import jax
import jax.numpy as jnp
from jax.experimental import pallas as pl
from jax.experimental.pallas import tpu as pltpu


# ----------------------------------------------------------------------------
# Pallas kernel: fused QKV projection + per-head window attention (+rel-pos
# bias, +mask) + softmax + weighted sum + output projection, WB windows per
# grid step.
# ----------------------------------------------------------------------------
def _window_attn_kernel(x_ref, wqkv_ref, bqkv_ref, bias_ref, mask_ref,
                        wproj_ref, bproj_ref, o_ref, qkv_ref, acc_ref,
                        *, num_heads, seq_len, windows_per_block,
                        num_mask_windows, apply_mask, head_group):
    H, N, WB, nW = num_heads, seq_len, windows_per_block, num_mask_windows
    rows, C = x_ref.shape                      # rows = WB * N
    hd = C // H

    # Fused QKV projection on the MXU: (WB*N, C) @ (C, 3C), bf16 in / f32 acc.
    # Written once to VMEM scratch so the big (rows, 3C) value is not kept
    # live across the unrolled head loop (per-head slices are VMEM loads).
    qkv = jnp.dot(x_ref[...], wqkv_ref[...],
                  preferred_element_type=jnp.float32) + bqkv_ref[...]
    qkv_ref[...] = qkv.astype(qkv_ref.dtype)

    if apply_mask:
        mask = mask_ref[...]                   # (nW, N, N) f32, never tiled

    # Heads are grouped so each store into the concat scratch is a wide
    # (rows, head_group*hd) slab (lane-dense when head_group*hd hits 128/C).
    for g0 in range(0, H, head_group):
        slabs = []
        for h in range(g0, g0 + head_group):
            # Q scale was folded into wqkv/bqkv offline -> no per-head multiply.
            qh = qkv_ref[:, h * hd:(h + 1) * hd].reshape(WB, N, hd)
            kh = qkv_ref[:, C + h * hd:C + (h + 1) * hd].reshape(WB, N, hd)
            vh = qkv_ref[:, 2 * C + h * hd:2 * C + (h + 1) * hd].reshape(WB, N, hd)

            # Batched over the WB windows; contraction over hd (no explicit k.T).
            s = jnp.einsum('wnd,wmd->wnm', qh, kh,
                           preferred_element_type=jnp.float32)     # (WB, N, N)
            s = s + bias_ref[h][None]          # rel-pos bias, broadcast over WB
            if apply_mask:
                # window w inside the block uses mask (w % nW); broadcast-add,
                # no (WB, N, N) mask temporary is materialized.
                s = (s.reshape(WB // nW, nW, N, N) + mask[None]).reshape(WB, N, N)

            # Numerically-stable softmax over the last axis, all in f32.
            s = s - jnp.max(s, axis=-1, keepdims=True)
            p = jnp.exp(s)
            p = p * pl.reciprocal(jnp.sum(p, axis=-1, keepdims=True), approx=True)

            oh = jnp.einsum('wnm,wmd->wnd', p.astype(vh.dtype), vh,
                            preferred_element_type=jnp.float32)    # (WB, N, hd)
            slabs.append(oh.reshape(rows, hd))

        slab = slabs[0] if head_group == 1 else jnp.concatenate(slabs, axis=-1)
        acc_ref[:, g0 * hd:(g0 + head_group) * hd] = slab.astype(acc_ref.dtype)

    # Output projection on the MXU: (WB*N, C) @ (C, C_out), bf16 in / f32 acc.
    y = jnp.dot(acc_ref[...], wproj_ref[...],
                preferred_element_type=jnp.float32) + bproj_ref[...]
    o_ref[...] = y.astype(o_ref.dtype)


# ----------------------------------------------------------------------------
# Generation-aware sizing helpers.
# ----------------------------------------------------------------------------
def _round_up(x, m):
    return (x + m - 1) // m * m


def _tpu_hw_info():
    """(physical VMEM bytes, # TensorCores sharing the grid) -- best effort."""
    vmem = 128 * 1024 * 1024                     # v5e/v6e default
    try:
        vmem = int(pltpu.get_tpu_info().vmem_capacity_bytes)
    except Exception:
        pass
    kind = ""
    try:
        kind = jax.devices()[0].device_kind.lower()
    except Exception:
        pass
    num_tc = 2 if "v7" in kind else 1            # v7x: 2 TensorCores per chip
    return vmem, num_tc


def _vmem_estimate(WB, N, C, C_out, H, nW, out_bytes):
    """Conservative per-grid-step VMEM footprint in bytes (weights counted
    double-buffered even though Buffered(1) is requested, for the fallback)."""
    rows = WB * N
    est = 2 * rows * C * 2                       # x block, bf16, double-buffered
    est += 2 * rows * C_out * out_bytes          # out block, double-buffered
    est += 2 * (C * 3 * C + C * C_out) * 2       # wqkv + wproj, bf16
    est += 2 * (3 * C + C_out) * 4               # biases, f32
    est += 2 * (H + nW) * N * N * 4              # rel-pos bias + mask, f32
    est += rows * 3 * C * 2                      # qkv scratch, bf16
    est += rows * C * 2                          # head-concat scratch, bf16
    est += 4 * WB * N * N * 4                    # live f32 score/prob temporaries
    est += rows * 256 * 4                        # head-group slab + slack
    return est


def _choose_windows_per_block(B_, N, nW, C, C_out, H, out_bytes,
                              vmem_budget, num_tc):
    """Pick WB = windows per grid step.

    WB must be a multiple of nW (so the (nW, N, N) mask lines up inside a
    block) and divide B_.  Keep the block's sublane dim (WB*N) 8-aligned
    unless the block covers the whole array.  Size against the per-chip VMEM
    budget; on 2-TC chips (v7x) prefer an even number of grid steps >= 2 so
    both TensorCores get balanced work, on single-TC chips (v5e/v6e) take the
    largest block that fits (possibly one grid step)."""
    assert B_ % nW == 0
    B = B_ // nW
    cands = [nW * k for k in range(1, B + 1) if B % k == 0]
    cands = [wb for wb in cands if (wb * N) % 8 == 0 or wb == B_] or [B_]
    fits = [wb for wb in cands
            if _vmem_estimate(wb, N, C, C_out, H, nW, out_bytes) <= vmem_budget]
    if not fits:
        fits = cands[:1]
    if num_tc >= 2:
        even = [wb for wb in fits if (B_ // wb) >= 2 and (B_ // wb) % 2 == 0]
        pool = even or [wb for wb in fits if (B_ // wb) >= 2] or fits
        return max(pool)
    return max(fits)


def fold_qk_scale(wqkv, bqkv, num_heads):
    """One-time offline param transform: fold 1/sqrt(head_dim) into the Q slice
    of the QKV projection so the kernel needs no per-head scale multiply."""
    C = wqkv.shape[0]
    scale = float(C // num_heads) ** (-0.5)
    wqkv = wqkv.at[:, :C].multiply(scale)
    bqkv = bqkv.at[:C].multiply(scale)
    return wqkv, bqkv


# ----------------------------------------------------------------------------
# Wrapper.
# ----------------------------------------------------------------------------
def window_attention(x, wqkv, bqkv, wproj, bproj, rel_bias, mask=None,
                     mxu_dtype=jnp.bfloat16):
    """x: (B_, N, C); rel_bias: (H, N, N); mask: (nW, N, N) or None.

    NOTE: wqkv/bqkv must already have the query scale folded in
    (see fold_qk_scale)."""
    B_, N, C = x.shape
    H = rel_bias.shape[0]
    assert C % H == 0
    hd = C // H
    nW = 1 if mask is None else mask.shape[0]
    assert B_ % nW == 0

    # Lane-dense output: pad the projection output dim to the next multiple of
    # 128 when the padding overhead is modest (Swin 96/192 -> 128/256); slice
    # the pad off outside the kernel.
    C_out = C
    if C % 128 != 0 and _round_up(C, 128) * 3 <= 4 * C:
        C_out = _round_up(C, 128)

    out_dtype = x.dtype
    out_bytes = jnp.dtype(out_dtype).itemsize
    phys_vmem, num_tc = _tpu_hw_info()
    vmem_budget = max(16 * 1024 * 1024, int(phys_vmem * 0.55))
    WB = _choose_windows_per_block(B_, N, nW, C, C_out, H, out_bytes,
                                   vmem_budget, num_tc)
    grid = (B_ // WB,)
    est = _vmem_estimate(WB, N, C, C_out, H, nW, out_bytes)
    vmem_limit = int(min(phys_vmem - (2 << 20),
                         max(32 << 20, int(est * 1.5) + (4 << 20))))

    # bf16 MXU operands (cast once at the boundary -> half the x/weight DMA
    # bytes); biases / rel-pos bias / mask stay f32 so softmax math is f32.
    x2 = x.reshape(B_ * N, C).astype(mxu_dtype)
    wqkv2 = wqkv.astype(mxu_dtype)
    bqkv2 = bqkv.reshape(1, 3 * C).astype(jnp.float32)
    wproj2 = wproj.astype(mxu_dtype)
    bproj2 = bproj.reshape(1, C).astype(jnp.float32)
    if C_out != C:
        wproj2 = jnp.pad(wproj2, ((0, 0), (0, C_out - C)))
        bproj2 = jnp.pad(bproj2, ((0, 0), (0, C_out - C)))
    rel_bias2 = rel_bias.astype(jnp.float32)
    if mask is None:
        mask_in = jnp.zeros((1, N, N), jnp.float32)   # tiny; statically ignored
    else:
        mask_in = mask.astype(jnp.float32)

    # Head-group width for lane-dense stores into the concat scratch.
    gmax = max(1, 128 // hd)
    head_group = max(g for g in range(1, H + 1) if H % g == 0 and g <= gmax)

    kernel = partial(_window_attn_kernel, num_heads=H, seq_len=N,
                     windows_per_block=WB, num_mask_windows=nW,
                     apply_mask=mask is not None, head_group=head_group)

    def build(single_buffer_consts):
        def const_spec(shape):
            idx = (lambda b: (0, 0, 0)) if len(shape) == 3 else (lambda b: (0, 0))
            if single_buffer_consts:
                # Constant index_map -> never re-DMA'd; single-buffer to save VMEM.
                return pl.BlockSpec(shape, idx, pipeline_mode=pl.Buffered(1))
            return pl.BlockSpec(shape, idx)

        return pl.pallas_call(
            kernel,
            out_shape=jax.ShapeDtypeStruct((B_ * N, C_out), out_dtype),
            grid=grid,
            in_specs=[
                pl.BlockSpec((WB * N, C), lambda b: (b, 0)),       # x rows
                const_spec((C, 3 * C)),                            # qkv weight
                const_spec((1, 3 * C)),                            # qkv bias
                const_spec((H, N, N)),                             # rel-pos bias
                const_spec(mask_in.shape),                         # (nW, N, N) mask
                const_spec((C, C_out)),                            # proj weight
                const_spec((1, C_out)),                            # proj bias
            ],
            out_specs=pl.BlockSpec((WB * N, C_out), lambda b: (b, 0)),
            scratch_shapes=[pltpu.VMEM((WB * N, 3 * C), mxu_dtype),   # qkv buf
                            pltpu.VMEM((WB * N, C), mxu_dtype)],      # head concat
            compiler_params=pltpu.CompilerParams(
                dimension_semantics=("parallel",),
                vmem_limit_bytes=vmem_limit),
        )

    try:
        out = build(True)(x2, wqkv2, bqkv2, rel_bias2, mask_in, wproj2, bproj2)
    except Exception:
        # Fallback if this JAX/Mosaic version rejects Buffered(1) single-buffering.
        out = build(False)(x2, wqkv2, bqkv2, rel_bias2, mask_in, wproj2, bproj2)

    if C_out != C:
        out = out[:, :C]
    return out.reshape(B_, N, C)


# ----------------------------------------------------------------------------
# Glue: parameter construction + relative-position-bias gather (plain JAX).
# ----------------------------------------------------------------------------
def make_relative_position_index(window_size):
    Wh, Ww = window_size
    coords = jnp.stack(jnp.meshgrid(jnp.arange(Wh), jnp.arange(Ww), indexing="ij"))
    coords_flatten = coords.reshape(2, -1)
    rel = coords_flatten[:, :, None] - coords_flatten[:, None, :]
    rel = rel.transpose(1, 2, 0)
    rel = rel.at[:, :, 0].add(Wh - 1)
    rel = rel.at[:, :, 1].add(Ww - 1)
    rel = rel.at[:, :, 0].multiply(2 * Ww - 1)
    return rel.sum(-1)                                            # (N, N)


def gather_relative_position_bias(table, rpi, window_size, num_heads):
    Wh, Ww = window_size
    N = Wh * Ww
    bias = table[rpi.reshape(-1)].reshape(N, N, num_heads)
    return jnp.transpose(bias, (2, 0, 1)).astype(jnp.float32)     # (H, N, N)


def init_params(key, dim, window_size, num_heads):
    Wh, Ww = window_size
    k1, k2, k3 = jax.random.split(key, 3)
    table = 0.02 * jax.random.truncated_normal(
        k1, -2.0, 2.0, ((2 * Wh - 1) * (2 * Ww - 1), num_heads), jnp.float32)
    wqkv = 0.02 * jax.random.normal(k2, (dim, 3 * dim), jnp.float32)
    bqkv = jnp.zeros((3 * dim,), jnp.float32)
    wproj = 0.02 * jax.random.normal(k3, (dim, dim), jnp.float32)
    bproj = jnp.zeros((dim,), jnp.float32)
    return table, wqkv, bqkv, wproj, bproj


# ----------------------------------------------------------------------------
# Pure-JAX reference (mirrors the PyTorch forward) for a correctness check.
# Uses the ORIGINAL (unscaled) qkv params + explicit q*scale, all in f32.
# ----------------------------------------------------------------------------
def reference_forward(x, wqkv, bqkv, wproj, bproj, rel_bias, num_heads, mask=None):
    B_, N, C = x.shape
    hd = C // num_heads
    scale = hd ** (-0.5)
    qkv = (x @ wqkv + bqkv).reshape(B_, N, 3, num_heads, hd).transpose(2, 0, 3, 1, 4)
    q, k, v = qkv[0], qkv[1], qkv[2]
    attn = (q * scale) @ jnp.swapaxes(k, -2, -1)
    attn = attn + rel_bias[None]
    if mask is not None:
        nW = mask.shape[0]
        attn = attn.reshape(B_ // nW, nW, num_heads, N, N) + mask[None, :, None]
        attn = attn.reshape(B_, num_heads, N, N)
    attn = jax.nn.softmax(attn, axis=-1)
    out = (attn @ v).transpose(0, 2, 1, 3).reshape(B_, N, C)
    return out @ wproj + bproj


if __name__ == "__main__":
    dim = 32
    num_heads = 4
    window_size = (4, 4)
    N = window_size[0] * window_size[1]       # 16
    nW = 4
    B = 2
    B_ = B * nW                               # 8 window-batches

    key = jax.random.PRNGKey(0)
    kx, kp, km = jax.random.split(key, 3)

    x = jax.random.normal(kx, (B_, N, dim), jnp.float32)
    table, wqkv, bqkv, wproj, bproj = init_params(kp, dim, window_size, num_heads)

    rpi = make_relative_position_index(window_size)
    rel_bias = gather_relative_position_bias(table, rpi, window_size, num_heads)

    # Shift-window style 0/-100 mask, shape (nW, N, N).
    mask = jnp.where(jax.random.uniform(km, (nW, N, N)) < 0.2, -100.0, 0.0).astype(jnp.float32)

    # Offline param transform: fold 1/sqrt(head_dim) into the Q projection.
    wqkv_f, bqkv_f = fold_qk_scale(wqkv, bqkv, num_heads)

    out = window_attention(x, wqkv_f, bqkv_f, wproj, bproj, rel_bias, mask=mask)
    out = jax.block_until_ready(out)

    ref = reference_forward(x, wqkv, bqkv, wproj, bproj, rel_bias, num_heads, mask=mask)
    assert out.shape == (B_, N, dim)
    # Tolerance accounts for bf16 MXU operands + approximate reciprocal in the
    # softmax denominator; real bugs would be O(1) (many x the signal) off.
    assert jnp.allclose(out, ref, atol=5e-3, rtol=5e-2), "mismatch vs JAX reference"

    # Also exercise the mask=None path.
    out2 = jax.block_until_ready(
        window_attention(x, wqkv_f, bqkv_f, wproj, bproj, rel_bias, mask=None))
    ref2 = reference_forward(x, wqkv, bqkv, wproj, bproj, rel_bias, num_heads, mask=None)
    assert jnp.allclose(out2, ref2, atol=5e-3, rtol=5e-2), "mismatch vs JAX reference (no mask)"

    print("KERNEL_OK")
</pallas_src>

<mosaic_0001>
module attributes {stable_mosaic.version = 11 : i64} {
  func.func @_window_attn_kernel(%arg0: i32, %arg1: memref<128x32xbf16, #tpu.memory_space<vmem>>, %arg2: memref<32x96xbf16, #tpu.memory_space<vmem>>, %arg3: memref<1x96xf32, #tpu.memory_space<vmem>>, %arg4: memref<4x16x16xf32, #tpu.memory_space<vmem>>, %arg5: memref<4x16x16xf32, #tpu.memory_space<vmem>>, %arg6: memref<32x32xbf16, #tpu.memory_space<vmem>>, %arg7: memref<1x32xf32, #tpu.memory_space<vmem>>, %arg8: memref<128x32xf32, #tpu.memory_space<vmem>>, %arg9: memref<128x96xbf16, #tpu.memory_space<vmem>>, %arg10: memref<128x32xbf16, #tpu.memory_space<vmem>>) attributes {dimension_semantics = [#tpu.dimension_semantics<parallel>], iteration_bounds = array<i64: 1>, scalar_prefetch = 0 : i64, scratch_operands = 2 : i64, tpu.core_type = #tpu.core_type<tc>, window_params = [{transform_indices = @transform_0, window_bounds = array<i64: 128, 32>}, {pipeline_mode = #tpu.pipeline_mode<synchronous>, transform_indices = @transform_1, window_bounds = array<i64: 32, 96>}, {pipeline_mode = #tpu.pipeline_mode<synchronous>, transform_indices = @transform_2, window_bounds = array<i64: 1, 96>}, {pipeline_mode = #tpu.pipeline_mode<synchronous>, transform_indices = @transform_3, window_bounds = array<i64: 4, 16, 16>}, {pipeline_mode = #tpu.pipeline_mode<synchronous>, transform_indices = @transform_4, window_bounds = array<i64: 4, 16, 16>}, {pipeline_mode = #tpu.pipeline_mode<synchronous>, transform_indices = @transform_5, window_bounds = array<i64: 32, 32>}, {pipeline_mode = #tpu.pipeline_mode<synchronous>, transform_indices = @transform_6, window_bounds = array<i64: 1, 32>}, {transform_indices = @transform_7, window_bounds = array<i64: 128, 32>}]} {
    %c0 = arith.constant 0 : index
    %c0_0 = arith.constant 0 : index
    %0 = vector.load %arg1[%c0, %c0_0] : memref<128x32xbf16, #tpu.memory_space<vmem>>, vector<128x32xbf16>
    %c0_1 = arith.constant 0 : index
    %c0_2 = arith.constant 0 : index
    %1 = vector.load %arg2[%c0_1, %c0_2] : memref<32x96xbf16, #tpu.memory_space<vmem>>, vector<32x96xbf16>
    %cst = arith.constant dense<0.000000e+00> : vector<128x96xf32>
    %2 = tpu.matmul %0, %1, %cst {dimension_numbers = #tpu.dot_dimension_numbers<[1], [0], [0], [1], [0, 0, 1, 1], [], []>} : vector<128x32xbf16>, vector<32x96xbf16>, vector<128x96xf32> -> vector<128x96xf32>
    %c0_3 = arith.constant 0 : index
    %c0_4 = arith.constant 0 : index
    %3 = vector.load %arg3[%c0_3, %c0_4] : memref<1x96xf32, #tpu.memory_space<vmem>>, vector<1x96xf32>
    %4 = vector.broadcast %3 : vector<1x96xf32> to vector<128x96xf32>
    %5 = arith.addf %2, %4 : vector<128x96xf32>
    %6 = arith.truncf %5 : vector<128x96xf32> to vector<128x96xbf16>
    %c0_5 = arith.constant 0 : index
    %c0_6 = arith.constant 0 : index
    %7 = vector.load %arg9[%c0_5, %c0_6] : memref<128x96xbf16, #tpu.memory_space<vmem>>, vector<128x96xbf16>
    tpu.vector_store %arg9[%c0_5, %c0_6], %6 {strides = array<i32>} : memref<128x96xbf16, #tpu.memory_space<vmem>>, vector<128x96xbf16>,
    %c0_7 = arith.constant 0 : index
    %c0_8 = arith.constant 0 : index
    %c0_9 = arith.constant 0 : index
    %8 = vector.load %arg5[%c0_7, %c0_8, %c0_9] : memref<4x16x16xf32, #tpu.memory_space<vmem>>, vector<4x16x16xf32>
    %c0_10 = arith.constant 0 : index
    %c0_11 = arith.constant 0 : index
    %9 = vector.load %arg9[%c0_10, %c0_11] : memref<128x96xbf16, #tpu.memory_space<vmem>>, vector<128x8xbf16>
    %10 = vector.shape_cast %9 : vector<128x8xbf16> to vector<8x16x8xbf16>
    %c0_12 = arith.constant 0 : index
    %c32 = arith.constant 32 : index
    %11 = vector.load %arg9[%c0_12, %c32] : memref<128x96xbf16, #tpu.memory_space<vmem>>, vector<128x8xbf16>
    %12 = vector.shape_cast %11 : vector<128x8xbf16> to vector<8x16x8xbf16>
    %c0_13 = arith.constant 0 : index
    %c64 = arith.constant 64 : index
    %13 = vector.load %arg9[%c0_13, %c64] : memref<128x96xbf16, #tpu.memory_space<vmem>>, vector<128x8xbf16>
    %14 = vector.shape_cast %13 : vector<128x8xbf16> to vector<8x16x8xbf16>
    "tpu.trace_start"() <{level = 10 : i32, message = "wnd,wmd->wnm"}> : () -> ()
    %cst_14 = arith.constant dense<0.000000e+00> : vector<8x16x16xf32>
    %15 = tpu.matmul %10, %12, %cst_14 {dimension_numbers = #tpu.dot_dimension_numbers<[2], [2], [1], [1], [0, 0, 0, 1, 1, 1], [0], [0]>} : vector<8x16x8xbf16>, vector<8x16x8xbf16>, vector<8x16x16xf32> -> vector<8x16x16xf32>
    "tpu.trace_stop"() : () -> ()
    %c0_15 = arith.constant 0 : index
    %c0_16 = arith.constant 0 : index
    %c0_17 = arith.constant 0 : index
    %16 = vector.load %arg4[%c0_15, %c0_16, %c0_17] : memref<4x16x16xf32, #tpu.memory_space<vmem>>, vector<1x16x16xf32>
    %17 = vector.shape_cast %16 : vector<1x16x16xf32> to vector<16x16xf32>
    %18 = vector.shape_cast %17 : vector<16x16xf32> to vector<1x16x16xf32>
    %19 = vector.broadcast %18 : vector<1x16x16xf32> to vector<8x16x16xf32>
    %20 = arith.addf %15, %19 : vector<8x16x16xf32>
    %21 = vector.shape_cast %20 : vector<8x16x16xf32> to vector<2x4x16x16xf32>
    %22 = vector.shape_cast %8 : vector<4x16x16xf32> to vector<1x4x16x16xf32>
    %23 = vector.broadcast %22 : vector<1x4x16x16xf32> to vector<2x4x16x16xf32>
    %24 = arith.addf %21, %23 : vector<2x4x16x16xf32>
    %25 = vector.shape_cast %24 : vector<2x4x16x16xf32> to vector<8x16x16xf32>
    %cst_18 = arith.constant dense<0xFF800000> : vector<8x16xf32>
    %26 = vector.multi_reduction <maximumf>, %25, %cst_18 [2] : vector<8x16x16xf32> to vector<8x16xf32>
    %27 = vector.shape_cast %26 : vector<8x16xf32> to vector<8x16x1xf32>
    %28 = vector.broadcast %27 : vector<8x16x1xf32> to vector<8x16x16xf32>
    %29 = arith.subf %25, %28 : vector<8x16x16xf32>
    %30 = math.exp %29 : vector<8x16x16xf32>
    %cst_19 = arith.constant dense<0.000000e+00> : vector<8x16xf32>
    %31 = vector.multi_reduction <add>, %30, %cst_19 [2] : vector<8x16x16xf32> to vector<8x16xf32>
    %32 = vector.shape_cast %31 : vector<8x16xf32> to vector<8x16x1xf32>
    %33 = tpu.reciprocal %32 {approx = true} : vector<8x16x1xf32> -> vector<8x16x1xf32>
    %34 = vector.broadcast %33 : vector<8x16x1xf32> to vector<8x16x16xf32>
    %35 = arith.mulf %30, %34 : vector<8x16x16xf32>
    %36 = arith.truncf %35 : vector<8x16x16xf32> to vector<8x16x16xbf16>
    "tpu.trace_start"() <{level = 10 : i32, message = "wnm,wmd->wnd"}> : () -> ()
    %cst_20 = arith.constant dense<0.000000e+00> : vector<8x16x8xf32>
    %37 = tpu.matmul %36, %14, %cst_20 {dimension_numbers = #tpu.dot_dimension_numbers<[2], [1], [1], [2], [0, 0, 0, 1, 1, 2], [0], [0]>} : vector<8x16x16xbf16>, vector<8x16x8xbf16>, vector<8x16x8xf32> -> vector<8x16x8xf32>
    "tpu.trace_stop"() : () -> ()
    %38 = vector.shape_cast %37 : vector<8x16x8xf32> to vector<128x8xf32>
    %c0_21 = arith.constant 0 : index
    %c8 = arith.constant 8 : index
    %39 = vector.load %arg9[%c0_21, %c8] : memref<128x96xbf16, #tpu.memory_space<vmem>>, vector<128x8xbf16>
    %40 = vector.shape_cast %39 : vector<128x8xbf16> to vector<8x16x8xbf16>
    %c0_22 = arith.constant 0 : index
    %c40 = arith.constant 40 : index
    %41 = vector.load %arg9[%c0_22, %c40] : memref<128x96xbf16, #tpu.memory_space<vmem>>, vector<128x8xbf16>
    %42 = vector.shape_cast %41 : vector<128x8xbf16> to vector<8x16x8xbf16>
    %c0_23 = arith.constant 0 : index
    %c72 = arith.constant 72 : index
    %43 = vector.load %arg9[%c0_23, %c72] : memref<128x96xbf16, #tpu.memory_space<vmem>>, vector<128x8xbf16>
    %44 = vector.shape_cast %43 : vector<128x8xbf16> to vector<8x16x8xbf16>
    "tpu.trace_start"() <{level = 10 : i32, message = "wnd,wmd->wnm"}> : () -> ()
    %cst_24 = arith.constant dense<0.000000e+00> : vector<8x16x16xf32>
    %45 = tpu.matmul %40, %42, %cst_24 {dimension_numbers = #tpu.dot_dimension_numbers<[2], [2], [1], [1], [0, 0, 0, 1, 1, 1], [0], [0]>} : vector<8x16x8xbf16>, vector<8x16x8xbf16>, vector<8x16x16xf32> -> vector<8x16x16xf32>
    "tpu.trace_stop"() : () -> ()
    %c1 = arith.constant 1 : index
    %c0_25 = arith.constant 0 : index
    %c0_26 = arith.constant 0 : index
    %46 = vector.load %arg4[%c1, %c0_25, %c0_26] : memref<4x16x16xf32, #tpu.memory_space<vmem>>, vector<1x16x16xf32>
    %47 = vector.shape_cast %46 : vector<1x16x16xf32> to vector<16x16xf32>
    %48 = vector.shape_cast %47 : vector<16x16xf32> to vector<1x16x16xf32>
    %49 = vector.broadcast %48 : vector<1x16x16xf32> to vector<8x16x16xf32>
    %50 = arith.addf %45, %49 : vector<8x16x16xf32>
    %51 = vector.shape_cast %50 : vector<8x16x16xf32> to vector<2x4x16x16xf32>
    %52 = vector.shape_cast %8 : vector<4x16x16xf32> to vector<1x4x16x16xf32>
    %53 = vector.broadcast %52 : vector<1x4x16x16xf32> to vector<2x4x16x16xf32>
    %54 = arith.addf %51, %53 : vector<2x4x16x16xf32>
    %55 = vector.shape_cast %54 : vector<2x4x16x16xf32> to vector<8x16x16xf32>
    %cst_27 = arith.constant dense<0xFF800000> : vector<8x16xf32>
    %56 = vector.multi_reduction <maximumf>, %55, %cst_27 [2] : vector<8x16x16xf32> to vector<8x16xf32>
    %57 = vector.shape_cast %56 : vector<8x16xf32> to vector<8x16x1xf32>
    %58 = vector.broadcast %57 : vector<8x16x1xf32> to vector<8x16x16xf32>
    %59 = arith.subf %55, %58 : vector<8x16x16xf32>
    %60 = math.exp %59 : vector<8x16x16xf32>
    %cst_28 = arith.constant dense<0.000000e+00> : vector<8x16xf32>
    %61 = vector.multi_reduction <add>, %60, %cst_28 [2] : vector<8x16x16xf32> to vector<8x16xf32>
    %62 = vector.shape_cast %61 : vector<8x16xf32> to vector<8x16x1xf32>
    %63 = tpu.reciprocal %62 {approx = true} : vector<8x16x1xf32> -> vector<8x16x1xf32>
    %64 = vector.broadcast %63 : vector<8x16x1xf32> to vector<8x16x16xf32>
    %65 = arith.mulf %60, %64 : vector<8x16x16xf32>
    %66 = arith.truncf %65 : vector<8x16x16xf32> to vector<8x16x16xbf16>
    "tpu.trace_start"() <{level = 10 : i32, message = "wnm,wmd->wnd"}> : () -> ()
    %cst_29 = arith.constant dense<0.000000e+00> : vector<8x16x8xf32>
    %67 = tpu.matmul %66, %44, %cst_29 {dimension_numbers = #tpu.dot_dimension_numbers<[2], [1], [1], [2], [0, 0, 0, 1, 1, 2], [0], [0]>} : vector<8x16x16xbf16>, vector<8x16x8xbf16>, vector<8x16x8xf32> -> vector<8x16x8xf32>
    "tpu.trace_stop"() : () -> ()
    %68 = vector.shape_cast %67 : vector<8x16x8xf32> to vector<128x8xf32>
    %c0_30 = arith.constant 0 : index
    %c16 = arith.constant 16 : index
    %69 = vector.load %arg9[%c0_30, %c16] : memref<128x96xbf16, #tpu.memory_space<vmem>>, vector<128x8xbf16>
    %70 = vector.shape_cast %69 : vector<128x8xbf16> to vector<8x16x8xbf16>
    %c0_31 = arith.constant 0 : index
    %c48 = arith.constant 48 : index
    %71 = vector.load %arg9[%c0_31, %c48] : memref<128x96xbf16, #tpu.memory_space<vmem>>, vector<128x8xbf16>
    %72 = vector.shape_cast %71 : vector<128x8xbf16> to vector<8x16x8xbf16>
    %c0_32 = arith.constant 0 : index
    %c80 = arith.constant 80 : index
    %73 = vector.load %arg9[%c0_32, %c80] : memref<128x96xbf16, #tpu.memory_space<vmem>>, vector<128x8xbf16>
    %74 = vector.shape_cast %73 : vector<128x8xbf16> to vector<8x16x8xbf16>
    "tpu.trace_start"() <{level = 10 : i32, message = "wnd,wmd->wnm"}> : () -> ()
    %cst_33 = arith.constant dense<0.000000e+00> : vector<8x16x16xf32>
    %75 = tpu.matmul %70, %72, %cst_33 {dimension_numbers = #tpu.dot_dimension_numbers<[2], [2], [1], [1], [0, 0, 0, 1, 1, 1], [0], [0]>} : vector<8x16x8xbf16>, vector<8x16x8xbf16>, vector<8x16x16xf32> -> vector<8x16x16xf32>
    "tpu.trace_stop"() : () -> ()
    %c2 = arith.constant 2 : index
    %c0_34 = arith.constant 0 : index
    %c0_35 = arith.constant 0 : index
    %76 = vector.load %arg4[%c2, %c0_34, %c0_35] : memref<4x16x16xf32, #tpu.memory_space<vmem>>, vector<1x16x16xf32>
    %77 = vector.shape_cast %76 : vector<1x16x16xf32> to vector<16x16xf32>
    %78 = vector.shape_cast %77 : vector<16x16xf32> to vector<1x16x16xf32>
    %79 = vector.broadcast %78 : vector<1x16x16xf32> to vector<8x16x16xf32>
    %80 = arith.addf %75, %79 : vector<8x16x16xf32>
    %81 = vector.shape_cast %80 : vector<8x16x16xf32> to vector<2x4x16x16xf32>
    %82 = vector.shape_cast %8 : vector<4x16x16xf32> to vector<1x4x16x16xf32>
    %83 = vector.broadcast %82 : vector<1x4x16x16xf32> to vector<2x4x16x16xf32>
    %84 = arith.addf %81, %83 : vector<2x4x16x16xf32>
    %85 = vector.shape_cast %84 : vector<2x4x16x16xf32> to vector<8x16x16xf32>
    %cst_36 = arith.constant dense<0xFF800000> : vector<8x16xf32>
    %86 = vector.multi_reduction <maximumf>, %85, %cst_36 [2] : vector<8x16x16xf32> to vector<8x16xf32>
    %87 = vector.shape_cast %86 : vector<8x16xf32> to vector<8x16x1xf32>
    %88 = vector.broadcast %87 : vector<8x16x1xf32> to vector<8x16x16xf32>
    %89 = arith.subf %85, %88 : vector<8x16x16xf32>
    %90 = math.exp %89 : vector<8x16x16xf32>
    %cst_37 = arith.constant dense<0.000000e+00> : vector<8x16xf32>
    %91 = vector.multi_reduction <add>, %90, %cst_37 [2] : vector<8x16x16xf32> to vector<8x16xf32>
    %92 = vector.shape_cast %91 : vector<8x16xf32> to vector<8x16x1xf32>
    %93 = tpu.reciprocal %92 {approx = true} : vector<8x16x1xf32> -> vector<8x16x1xf32>
    %94 = vector.broadcast %93 : vector<8x16x1xf32> to vector<8x16x16xf32>
    %95 = arith.mulf %90, %94 : vector<8x16x16xf32>
    %96 = arith.truncf %95 : vector<8x16x16xf32> to vector<8x16x16xbf16>
    "tpu.trace_start"() <{level = 10 : i32, message = "wnm,wmd->wnd"}> : () -> ()
    %cst_38 = arith.constant dense<0.000000e+00> : vector<8x16x8xf32>
    %97 = tpu.matmul %96, %74, %cst_38 {dimension_numbers = #tpu.dot_dimension_numbers<[2], [1], [1], [2], [0, 0, 0, 1, 1, 2], [0], [0]>} : vector<8x16x16xbf16>, vector<8x16x8xbf16>, vector<8x16x8xf32> -> vector<8x16x8xf32>
    "tpu.trace_stop"() : () -> ()
    %98 = vector.shape_cast %97 : vector<8x16x8xf32> to vector<128x8xf32>
    %c0_39 = arith.constant 0 : index
    %c24 = arith.constant 24 : index
    %99 = vector.load %arg9[%c0_39, %c24] : memref<128x96xbf16, #tpu.memory_space<vmem>>, vector<128x8xbf16>
    %100 = vector.shape_cast %99 : vector<128x8xbf16> to vector<8x16x8xbf16>
    %c0_40 = arith.constant 0 : index
    %c56 = arith.constant 56 : index
    %101 = vector.load %arg9[%c0_40, %c56] : memref<128x96xbf16, #tpu.memory_space<vmem>>, vector<128x8xbf16>
    %102 = vector.shape_cast %101 : vector<128x8xbf16> to vector<8x16x8xbf16>
    %c0_41 = arith.constant 0 : index
    %c88 = arith.constant 88 : index
    %103 = vector.load %arg9[%c0_41, %c88] : memref<128x96xbf16, #tpu.memory_space<vmem>>, vector<128x8xbf16>
    %104 = vector.shape_cast %103 : vector<128x8xbf16> to vector<8x16x8xbf16>
    "tpu.trace_start"() <{level = 10 : i32, message = "wnd,wmd->wnm"}> : () -> ()
    %cst_42 = arith.constant dense<0.000000e+00> : vector<8x16x16xf32>
    %105 = tpu.matmul %100, %102, %cst_42 {dimension_numbers = #tpu.dot_dimension_numbers<[2], [2], [1], [1], [0, 0, 0, 1, 1, 1], [0], [0]>} : vector<8x16x8xbf16>, vector<8x16x8xbf16>, vector<8x16x16xf32> -> vector<8x16x16xf32>
    "tpu.trace_stop"() : () -> ()
    %c3 = arith.constant 3 : index
    %c0_43 = arith.constant 0 : index
    %c0_44 = arith.constant 0 : index
    %106 = vector.load %arg4[%c3, %c0_43, %c0_44] : memref<4x16x16xf32, #tpu.memory_space<vmem>>, vector<1x16x16xf32>
    %107 = vector.shape_cast %106 : vector<1x16x16xf32> to vector<16x16xf32>
    %108 = vector.shape_cast %107 : vector<16x16xf32> to vector<1x16x16xf32>
    %109 = vector.broadcast %108 : vector<1x16x16xf32> to vector<8x16x16xf32>
    %110 = arith.addf %105, %109 : vector<8x16x16xf32>
    %111 = vector.shape_cast %110 : vector<8x16x16xf32> to vector<2x4x16x16xf32>
    %112 = vector.shape_cast %8 : vector<4x16x16xf32> to vector<1x4x16x16xf32>
    %113 = vector.broadcast %112 : vector<1x4x16x16xf32> to vector<2x4x16x16xf32>
    %114 = arith.addf %111, %113 : vector<2x4x16x16xf32>
    %115 = vector.shape_cast %114 : vector<2x4x16x16xf32> to vector<8x16x16xf32>
    %cst_45 = arith.constant dense<0xFF800000> : vector<8x16xf32>
    %116 = vector.multi_reduction <maximumf>, %115, %cst_45 [2] : vector<8x16x16xf32> to vector<8x16xf32>
    %117 = vector.shape_cast %116 : vector<8x16xf32> to vector<8x16x1xf32>
    %118 = vector.broadcast %117 : vector<8x16x1xf32> to vector<8x16x16xf32>
    %119 = arith.subf %115, %118 : vector<8x16x16xf32>
    %120 = math.exp %119 : vector<8x16x16xf32>
    %cst_46 = arith.constant dense<0.000000e+00> : vector<8x16xf32>
    %121 = vector.multi_reduction <add>, %120, %cst_46 [2] : vector<8x16x16xf32> to vector<8x16xf32>
    %122 = vector.shape_cast %121 : vector<8x16xf32> to vector<8x16x1xf32>
    %123 = tpu.reciprocal %122 {approx = true} : vector<8x16x1xf32> -> vector<8x16x1xf32>
    %124 = vector.broadcast %123 : vector<8x16x1xf32> to vector<8x16x16xf32>
    %125 = arith.mulf %120, %124 : vector<8x16x16xf32>
    %126 = arith.truncf %125 : vector<8x16x16xf32> to vector<8x16x16xbf16>
    "tpu.trace_start"() <{level = 10 : i32, message = "wnm,wmd->wnd"}> : () -> ()
    %cst_47 = arith.constant dense<0.000000e+00> : vector<8x16x8xf32>
    %127 = tpu.matmul %126, %104, %cst_47 {dimension_numbers = #tpu.dot_dimension_numbers<[2], [1], [1], [2], [0, 0, 0, 1, 1, 2], [0], [0]>} : vector<8x16x16xbf16>, vector<8x16x8xbf16>, vector<8x16x8xf32> -> vector<8x16x8xf32>
    "tpu.trace_stop"() : () -> ()
    %128 = vector.shape_cast %127 : vector<8x16x8xf32> to vector<128x8xf32>
    %129 = tpu.concatenate %38, %68, %98, %128 in 1 : vector<128x8xf32>, vector<128x8xf32>, vector<128x8xf32>, vector<128x8xf32> -> vector<128x32xf32>
    %130 = arith.truncf %129 : vector<128x32xf32> to vector<128x32xbf16>
    %c0_48 = arith.constant 0 : index
    %c0_49 = arith.constant 0 : index
    %131 = vector.load %arg10[%c0_48, %c0_49] : memref<128x32xbf16, #tpu.memory_space<vmem>>, vector<128x32xbf16>
    tpu.vector_store %arg10[%c0_48, %c0_49], %130 {strides = array<i32>} : memref<128x32xbf16, #tpu.memory_space<vmem>>, vector<128x32xbf16>,
    %c0_50 = arith.constant 0 : index
    %c0_51 = arith.constant 0 : index
    %132 = vector.load %arg10[%c0_50, %c0_51] : memref<128x32xbf16, #tpu.memory_space<vmem>>, vector<128x32xbf16>
    %c0_52 = arith.constant 0 : index
    %c0_53 = arith.constant 0 : index
    %133 = vector.load %arg6[%c0_52, %c0_53] : memref<32x32xbf16, #tpu.memory_space<vmem>>, vector<32x32xbf16>
    %cst_54 = arith.constant dense<0.000000e+00> : vector<128x32xf32>
    %134 = tpu.matmul %132, %133, %cst_54 {dimension_numbers = #tpu.dot_dimension_numbers<[1], [0], [0], [1], [0, 0, 1, 1], [], []>} : vector<128x32xbf16>, vector<32x32xbf16>, vector<128x32xf32> -> vector<128x32xf32>
    %c0_55 = arith.constant 0 : index
    %c0_56 = arith.constant 0 : index
    %135 = vector.load %arg7[%c0_55, %c0_56] : memref<1x32xf32, #tpu.memory_space<vmem>>, vector<1x32xf32>
    %136 = vector.broadcast %135 : vector<1x32xf32> to vector<128x32xf32>
    %137 = arith.addf %134, %136 : vector<128x32xf32>
    %c0_57 = arith.constant 0 : index
    %c0_58 = arith.constant 0 : index
    %138 = vector.load %arg8[%c0_57, %c0_58] : memref<128x32xf32, #tpu.memory_space<vmem>>, vector<128x32xf32>
    tpu.vector_store %arg8[%c0_57, %c0_58], %137 {strides = array<i32>} : memref<128x32xf32, #tpu.memory_space<vmem>>, vector<128x32xf32>,
    return
  }
  func.func @transform_0(%arg0: i32) -> (i32, i32) {
    %c0_i32 = arith.constant 0 : i32
    %c0_i32_0 = arith.constant 0 : i32
    return %arg0, %c0_i32 : i32, i32
  }
  func.func @transform_1(%arg0: i32) -> (i32, i32) {
    %c0_i32 = arith.constant 0 : i32
    %c0_i32_0 = arith.constant 0 : i32
    %c0_i32_1 = arith.constant 0 : i32
    return %c0_i32, %c0_i32_0 : i32, i32
  }
  func.func @transform_2(%arg0: i32) -> (i32, i32) {
    %c0_i32 = arith.constant 0 : i32
    %c0_i32_0 = arith.constant 0 : i32
    %c0_i32_1 = arith.constant 0 : i32
    return %c0_i32, %c0_i32_0 : i32, i32
  }
  func.func @transform_3(%arg0: i32) -> (i32, i32, i32) {
    %c0_i32 = arith.constant 0 : i32
    %c0_i32_0 = arith.constant 0 : i32
    %c0_i32_1 = arith.constant 0 : i32
    %c0_i32_2 = arith.constant 0 : i32
    return %c0_i32, %c0_i32_0, %c0_i32_1 : i32, i32, i32
  }
  func.func @transform_4(%arg0: i32) -> (i32, i32, i32) {
    %c0_i32 = arith.constant 0 : i32
    %c0_i32_0 = arith.constant 0 : i32
    %c0_i32_1 = arith.constant 0 : i32
    %c0_i32_2 = arith.constant 0 : i32
    return %c0_i32, %c0_i32_0, %c0_i32_1 : i32, i32, i32
  }
  func.func @transform_5(%arg0: i32) -> (i32, i32) {
    %c0_i32 = arith.constant 0 : i32
    %c0_i32_0 = arith.constant 0 : i32
    %c0_i32_1 = arith.constant 0 : i32
    return %c0_i32, %c0_i32_0 : i32, i32
  }
  func.func @transform_6(%arg0: i32) -> (i32, i32) {
    %c0_i32 = arith.constant 0 : i32
    %c0_i32_0 = arith.constant 0 : i32
    %c0_i32_1 = arith.constant 0 : i32
    return %c0_i32, %c0_i32_0 : i32, i32
  }
  func.func @transform_7(%arg0: i32) -> (i32, i32) {
    %c0_i32 = arith.constant 0 : i32
    %c0_i32_0 = arith.constant 0 : i32
    return %arg0, %c0_i32 : i32, i32
  }
}

module attributes {stable_mosaic.version = 11 : i64} {
  func.func @_window_attn_kernel(%arg0: i32, %arg1: memref<128x32xbf16, #tpu.memory_space<vmem>>, %arg2: memref<32x96xbf16, #tpu.memory_space<vmem>>, %arg3: memref<1x96xf32, #tpu.memory_space<vmem>>, %arg4: memref<4x16x16xf32, #tpu.memory_space<vmem>>, %arg5: memref<4x16x16xf32, #tpu.memory_space<vmem>>, %arg6: memref<32x32xbf16, #tpu.memory_space<vmem>>, %arg7: memref<1x32xf32, #tpu.memory_space<vmem>>, %arg8: memref<128x32xf32, #tpu.memory_space<vmem>>, %arg9: memref<128x96xbf16, #tpu.memory_space<vmem>>, %arg10: memref<128x32xbf16, #tpu.memory_space<vmem>>) attributes {dimension_semantics = [#tpu.dimension_semantics<parallel>], iteration_bounds = array<i64: 1>, scalar_prefetch = 0 : i64, scratch_operands = 2 : i64, tpu.core_type = #tpu.core_type<tc>, window_params = [{transform_indices = @transform_0, window_bounds = array<i64: 128, 32>}, {pipeline_mode = #tpu.pipeline_mode<synchronous>, transform_indices = @transform_1, window_bounds = array<i64: 32, 96>}, {pipeline_mode = #tpu.pipeline_mode<synchronous>, transform_indices = @transform_2, window_bounds = array<i64: 1, 96>}, {pipeline_mode = #tpu.pipeline_mode<synchronous>, transform_indices = @transform_3, window_bounds = array<i64: 4, 16, 16>}, {pipeline_mode = #tpu.pipeline_mode<synchronous>, transform_indices = @transform_4, window_bounds = array<i64: 4, 16, 16>}, {pipeline_mode = #tpu.pipeline_mode<synchronous>, transform_indices = @transform_5, window_bounds = array<i64: 32, 32>}, {pipeline_mode = #tpu.pipeline_mode<synchronous>, transform_indices = @transform_6, window_bounds = array<i64: 1, 32>}, {transform_indices = @transform_7, window_bounds = array<i64: 128, 32>}]} {
    %c0 = arith.constant 0 : index
    %c0_0 = arith.constant 0 : index
    %0 = vector.load %arg1[%c0, %c0_0] : memref<128x32xbf16, #tpu.memory_space<vmem>>, vector<128x32xbf16>
    %c0_1 = arith.constant 0 : index
    %c0_2 = arith.constant 0 : index
    %1 = vector.load %arg2[%c0_1, %c0_2] : memref<32x96xbf16, #tpu.memory_space<vmem>>, vector<32x96xbf16>
    %cst = arith.constant dense<0.000000e+00> : vector<128x96xf32>
    %2 = tpu.matmul %0, %1, %cst {dimension_numbers = #tpu.dot_dimension_numbers<[1], [0], [0], [1], [0, 0, 1, 1], [], []>} : vector<128x32xbf16>, vector<32x96xbf16>, vector<128x96xf32> -> vector<128x96xf32>
    %c0_3 = arith.constant 0 : index
    %c0_4 = arith.constant 0 : index
    %3 = vector.load %arg3[%c0_3, %c0_4] : memref<1x96xf32, #tpu.memory_space<vmem>>, vector<1x96xf32>
    %4 = vector.broadcast %3 : vector<1x96xf32> to vector<128x96xf32>
    %5 = arith.addf %2, %4 : vector<128x96xf32>
    %6 = arith.truncf %5 : vector<128x96xf32> to vector<128x96xbf16>
    %c0_5 = arith.constant 0 : index
    %c0_6 = arith.constant 0 : index
    %7 = vector.load %arg9[%c0_5, %c0_6] : memref<128x96xbf16, #tpu.memory_space<vmem>>, vector<128x96xbf16>
    tpu.vector_store %arg9[%c0_5, %c0_6], %6 {strides = array<i32>} : memref<128x96xbf16, #tpu.memory_space<vmem>>, vector<128x96xbf16>,
    %c0_7 = arith.constant 0 : index
    %c0_8 = arith.constant 0 : index
    %c0_9 = arith.constant 0 : index
    %8 = vector.load %arg5[%c0_7, %c0_8, %c0_9] : memref<4x16x16xf32, #tpu.memory_space<vmem>>, vector<4x16x16xf32>
    %c0_10 = arith.constant 0 : index
    %c0_11 = arith.constant 0 : index
    %9 = vector.load %arg9[%c0_10, %c0_11] : memref<128x96xbf16, #tpu.memory_space<vmem>>, vector<128x8xbf16>
    %10 = vector.shape_cast %9 : vector<128x8xbf16> to vector<8x16x8xbf16>
    %c0_12 = arith.constant 0 : index
    %c32 = arith.constant 32 : index
    %11 = vector.load %arg9[%c0_12, %c32] : memref<128x96xbf16, #tpu.memory_space<vmem>>, vector<128x8xbf16>
    %12 = vector.shape_cast %11 : vector<128x8xbf16> to vector<8x16x8xbf16>
    %c0_13 = arith.constant 0 : index
    %c64 = arith.constant 64 : index
    %13 = vector.load %arg9[%c0_13, %c64] : memref<128x96xbf16, #tpu.memory_space<vmem>>, vector<128x8xbf16>
    %14 = vector.shape_cast %13 : vector<128x8xbf16> to vector<8x16x8xbf16>
    "tpu.trace_start"() <{level = 10 : i32, message = "wnd,wmd->wnm"}> : () -> ()
    %cst_14 = arith.constant dense<0.000000e+00> : vector<8x16x16xf32>
    %15 = tpu.matmul %10, %12, %cst_14 {dimension_numbers = #tpu.dot_dimension_numbers<[2], [2], [1], [1], [0, 0, 0, 1, 1, 1], [0], [0]>} : vector<8x16x8xbf16>, vector<8x16x8xbf16>, vector<8x16x16xf32> -> vector<8x16x16xf32>
    "tpu.trace_stop"() : () -> ()
    %c0_15 = arith.constant 0 : index
    %c0_16 = arith.constant 0 : index
    %c0_17 = arith.constant 0 : index
    %16 = vector.load %arg4[%c0_15, %c0_16, %c0_17] : memref<4x16x16xf32, #tpu.memory_space<vmem>>, vector<1x16x16xf32>
    %17 = vector.shape_cast %16 : vector<1x16x16xf32> to vector<16x16xf32>
    %18 = vector.shape_cast %17 : vector<16x16xf32> to vector<1x16x16xf32>
    %19 = vector.broadcast %18 : vector<1x16x16xf32> to vector<8x16x16xf32>
    %20 = arith.addf %15, %19 : vector<8x16x16xf32>
    %21 = vector.shape_cast %20 : vector<8x16x16xf32> to vector<2x4x16x16xf32>
    %22 = vector.shape_cast %8 : vector<4x16x16xf32> to vector<1x4x16x16xf32>
    %23 = vector.broadcast %22 : vector<1x4x16x16xf32> to vector<2x4x16x16xf32>
    %24 = arith.addf %21, %23 : vector<2x4x16x16xf32>
    %25 = vector.shape_cast %24 : vector<2x4x16x16xf32> to vector<8x16x16xf32>
    %cst_18 = arith.constant dense<0xFF800000> : vector<8x16xf32>
    %26 = vector.multi_reduction <maximumf>, %25, %cst_18 [2] : vector<8x16x16xf32> to vector<8x16xf32>
    %27 = vector.shape_cast %26 : vector<8x16xf32> to vector<8x16x1xf32>
    %28 = vector.broadcast %27 : vector<8x16x1xf32> to vector<8x16x16xf32>
    %29 = arith.subf %25, %28 : vector<8x16x16xf32>
    %30 = math.exp %29 : vector<8x16x16xf32>
    %cst_19 = arith.constant dense<0.000000e+00> : vector<8x16xf32>
    %31 = vector.multi_reduction <add>, %30, %cst_19 [2] : vector<8x16x16xf32> to vector<8x16xf32>
    %32 = vector.shape_cast %31 : vector<8x16xf32> to vector<8x16x1xf32>
    %33 = tpu.reciprocal %32 {approx = true} : vector<8x16x1xf32> -> vector<8x16x1xf32>
    %34 = vector.broadcast %33 : vector<8x16x1xf32> to vector<8x16x16xf32>
    %35 = arith.mulf %30, %34 : vector<8x16x16xf32>
    %36 = arith.truncf %35 : vector<8x16x16xf32> to vector<8x16x16xbf16>
    "tpu.trace_start"() <{level = 10 : i32, message = "wnm,wmd->wnd"}> : () -> ()
    %cst_20 = arith.constant dense<0.000000e+00> : vector<8x16x8xf32>
    %37 = tpu.matmul %36, %14, %cst_20 {dimension_numbers = #tpu.dot_dimension_numbers<[2], [1], [1], [2], [0, 0, 0, 1, 1, 2], [0], [0]>} : vector<8x16x16xbf16>, vector<8x16x8xbf16>, vector<8x16x8xf32> -> vector<8x16x8xf32>
    "tpu.trace_stop"() : () -> ()
    %38 = vector.shape_cast %37 : vector<8x16x8xf32> to vector<128x8xf32>
    %c0_21 = arith.constant 0 : index
    %c8 = arith.constant 8 : index
    %39 = vector.load %arg9[%c0_21, %c8] : memref<128x96xbf16, #tpu.memory_space<vmem>>, vector<128x8xbf16>
    %40 = vector.shape_cast %39 : vector<128x8xbf16> to vector<8x16x8xbf16>
    %c0_22 = arith.constant 0 : index
    %c40 = arith.constant 40 : index
    %41 = vector.load %arg9[%c0_22, %c40] : memref<128x96xbf16, #tpu.memory_space<vmem>>, vector<128x8xbf16>
    %42 = vector.shape_cast %41 : vector<128x8xbf16> to vector<8x16x8xbf16>
    %c0_23 = arith.constant 0 : index
    %c72 = arith.constant 72 : index
    %43 = vector.load %arg9[%c0_23, %c72] : memref<128x96xbf16, #tpu.memory_space<vmem>>, vector<128x8xbf16>
    %44 = vector.shape_cast %43 : vector<128x8xbf16> to vector<8x16x8xbf16>
    "tpu.trace_start"() <{level = 10 : i32, message = "wnd,wmd->wnm"}> : () -> ()
    %cst_24 = arith.constant dense<0.000000e+00> : vector<8x16x16xf32>
    %45 = tpu.matmul %40, %42, %cst_24 {dimension_numbers = #tpu.dot_dimension_numbers<[2], [2], [1], [1], [0, 0, 0, 1, 1, 1], [0], [0]>} : vector<8x16x8xbf16>, vector<8x16x8xbf16>, vector<8x16x16xf32> -> vector<8x16x16xf32>
    "tpu.trace_stop"() : () -> ()
    %c1 = arith.constant 1 : index
    %c0_25 = arith.constant 0 : index
    %c0_26 = arith.constant 0 : index
    %46 = vector.load %arg4[%c1, %c0_25, %c0_26] : memref<4x16x16xf32, #tpu.memory_space<vmem>>, vector<1x16x16xf32>
    %47 = vector.shape_cast %46 : vector<1x16x16xf32> to vector<16x16xf32>
    %48 = vector.shape_cast %47 : vector<16x16xf32> to vector<1x16x16xf32>
    %49 = vector.broadcast %48 : vector<1x16x16xf32> to vector<8x16x16xf32>
    %50 = arith.addf %45, %49 : vector<8x16x16xf32>
    %51 = vector.shape_cast %50 : vector<8x16x16xf32> to vector<2x4x16x16xf32>
    %52 = vector.shape_cast %8 : vector<4x16x16xf32> to vector<1x4x16x16xf32>
    %53 = vector.broadcast %52 : vector<1x4x16x16xf32> to vector<2x4x16x16xf32>
    %54 = arith.addf %51, %53 : vector<2x4x16x16xf32>
    %55 = vector.shape_cast %54 : vector<2x4x16x16xf32> to vector<8x16x16xf32>
    %cst_27 = arith.constant dense<0xFF800000> : vector<8x16xf32>
    %56 = vector.multi_reduction <maximumf>, %55, %cst_27 [2] : vector<8x16x16xf32> to vector<8x16xf32>
    %57 = vector.shape_cast %56 : vector<8x16xf32> to vector<8x16x1xf32>
    %58 = vector.broadcast %57 : vector<8x16x1xf32> to vector<8x16x16xf32>
    %59 = arith.subf %55, %58 : vector<8x16x16xf32>
    %60 = math.exp %59 : vector<8x16x16xf32>
    %cst_28 = arith.constant dense<0.000000e+00> : vector<8x16xf32>
    %61 = vector.multi_reduction <add>, %60, %cst_28 [2] : vector<8x16x16xf32> to vector<8x16xf32>
    %62 = vector.shape_cast %61 : vector<8x16xf32> to vector<8x16x1xf32>
    %63 = tpu.reciprocal %62 {approx = true} : vector<8x16x1xf32> -> vector<8x16x1xf32>
    %64 = vector.broadcast %63 : vector<8x16x1xf32> to vector<8x16x16xf32>
    %65 = arith.mulf %60, %64 : vector<8x16x16xf32>
    %66 = arith.truncf %65 : vector<8x16x16xf32> to vector<8x16x16xbf16>
    "tpu.trace_start"() <{level = 10 : i32, message = "wnm,wmd->wnd"}> : () -> ()
    %cst_29 = arith.constant dense<0.000000e+00> : vector<8x16x8xf32>
    %67 = tpu.matmul %66, %44, %cst_29 {dimension_numbers = #tpu.dot_dimension_numbers<[2], [1], [1], [2], [0, 0, 0, 1, 1, 2], [0], [0]>} : vector<8x16x16xbf16>, vector<8x16x8xbf16>, vector<8x16x8xf32> -> vector<8x16x8xf32>
    "tpu.trace_stop"() : () -> ()
    %68 = vector.shape_cast %67 : vector<8x16x8xf32> to vector<128x8xf32>
    %c0_30 = arith.constant 0 : index
    %c16 = arith.constant 16 : index
    %69 = vector.load %arg9[%c0_30, %c16] : memref<128x96xbf16, #tpu.memory_space<vmem>>, vector<128x8xbf16>
    %70 = vector.shape_cast %69 : vector<128x8xbf16> to vector<8x16x8xbf16>
    %c0_31 = arith.constant 0 : index
    %c48 = arith.constant 48 : index
    %71 = vector.load %arg9[%c0_31, %c48] : memref<128x96xbf16, #tpu.memory_space<vmem>>, vector<128x8xbf16>
    %72 = vector.shape_cast %71 : vector<128x8xbf16> to vector<8x16x8xbf16>
    %c0_32 = arith.constant 0 : index
    %c80 = arith.constant 80 : index
    %73 = vector.load %arg9[%c0_32, %c80] : memref<128x96xbf16, #tpu.memory_space<vmem>>, vector<128x8xbf16>
    %74 = vector.shape_cast %73 : vector<128x8xbf16> to vector<8x16x8xbf16>
    "tpu.trace_start"() <{level = 10 : i32, message = "wnd,wmd->wnm"}> : () -> ()
    %cst_33 = arith.constant dense<0.000000e+00> : vector<8x16x16xf32>
    %75 = tpu.matmul %70, %72, %cst_33 {dimension_numbers = #tpu.dot_dimension_numbers<[2], [2], [1], [1], [0, 0, 0, 1, 1, 1], [0], [0]>} : vector<8x16x8xbf16>, vector<8x16x8xbf16>, vector<8x16x16xf32> -> vector<8x16x16xf32>
    "tpu.trace_stop"() : () -> ()
    %c2 = arith.constant 2 : index
    %c0_34 = arith.constant 0 : index
    %c0_35 = arith.constant 0 : index
    %76 = vector.load %arg4[%c2, %c0_34, %c0_35] : memref<4x16x16xf32, #tpu.memory_space<vmem>>, vector<1x16x16xf32>
    %77 = vector.shape_cast %76 : vector<1x16x16xf32> to vector<16x16xf32>
    %78 = vector.shape_cast %77 : vector<16x16xf32> to vector<1x16x16xf32>
    %79 = vector.broadcast %78 : vector<1x16x16xf32> to vector<8x16x16xf32>
    %80 = arith.addf %75, %79 : vector<8x16x16xf32>
    %81 = vector.shape_cast %80 : vector<8x16x16xf32> to vector<2x4x16x16xf32>
    %82 = vector.shape_cast %8 : vector<4x16x16xf32> to vector<1x4x16x16xf32>
    %83 = vector.broadcast %82 : vector<1x4x16x16xf32> to vector<2x4x16x16xf32>
    %84 = arith.addf %81, %83 : vector<2x4x16x16xf32>
    %85 = vector.shape_cast %84 : vector<2x4x16x16xf32> to vector<8x16x16xf32>
    %cst_36 = arith.constant dense<0xFF800000> : vector<8x16xf32>
    %86 = vector.multi_reduction <maximumf>, %85, %cst_36 [2] : vector<8x16x16xf32> to vector<8x16xf32>
    %87 = vector.shape_cast %86 : vector<8x16xf32> to vector<8x16x1xf32>
    %88 = vector.broadcast %87 : vector<8x16x1xf32> to vector<8x16x16xf32>
    %89 = arith.subf %85, %88 : vector<8x16x16xf32>
    %90 = math.exp %89 : vector<8x16x16xf32>
    %cst_37 = arith.constant dense<0.000000e+00> : vector<8x16xf32>
    %91 = vector.multi_reduction <add>, %90, %cst_37 [2] : vector<8x16x16xf32> to vector<8x16xf32>
    %92 = vector.shape_cast %91 : vector<8x16xf32> to vector<8x16x1xf32>
    %93 = tpu.reciprocal %92 {approx = true} : vector<8x16x1xf32> -> vector<8x16x1xf32>
    %94 = vector.broadcast %93 : vector<8x16x1xf32> to vector<8x16x16xf32>
    %95 = arith.mulf %90, %94 : vector<8x16x16xf32>
    %96 = arith.truncf %95 : vector<8x16x16xf32> to vector<8x16x16xbf16>
    "tpu.trace_start"() <{level = 10 : i32, message = "wnm,wmd->wnd"}> : () -> ()
    %cst_38 = arith.constant dense<0.000000e+00> : vector<8x16x8xf32>
    %97 = tpu.matmul %96, %74, %cst_38 {dimension_numbers = #tpu.dot_dimension_numbers<[2], [1], [1], [2], [0, 0, 0, 1, 1, 2], [0], [0]>} : vector<8x16x16xbf16>, vector<8x16x8xbf16>, vector<8x16x8xf32> -> vector<8x16x8xf32>
    "tpu.trace_stop"() : () -> ()
    %98 = vector.shape_cast %97 : vector<8x16x8xf32> to vector<128x8xf32>
    %c0_39 = arith.constant 0 : index
    %c24 = arith.constant 24 : index
    %99 = vector.load %arg9[%c0_39, %c24] : memref<128x96xbf16, #tpu.memory_space<vmem>>, vector<128x8xbf16>
    %100 = vector.shape_cast %99 : vector<128x8xbf16> to vector<8x16x8xbf16>
    %c0_40 = arith.constant 0 : index
    %c56 = arith.constant 56 : index
    %101 = vector.load %arg9[%c0_40, %c56] : memref<128x96xbf16, #tpu.memory_space<vmem>>, vector<128x8xbf16>
    %102 = vector.shape_cast %101 : vector<128x8xbf16> to vector<8x16x8xbf16>
    %c0_41 = arith.constant 0 : index
    %c88 = arith.constant 88 : index
    %103 = vector.load %arg9[%c0_41, %c88] : memref<128x96xbf16, #tpu.memory_space<vmem>>, vector<128x8xbf16>
    %104 = vector.shape_cast %103 : vector<128x8xbf16> to vector<8x16x8xbf16>
    "tpu.trace_start"() <{level = 10 : i32, message = "wnd,wmd->wnm"}> : () -> ()
    %cst_42 = arith.constant dense<0.000000e+00> : vector<8x16x16xf32>
    %105 = tpu.matmul %100, %102, %cst_42 {dimension_numbers = #tpu.dot_dimension_numbers<[2], [2], [1], [1], [0, 0, 0, 1, 1, 1], [0], [0]>} : vector<8x16x8xbf16>, vector<8x16x8xbf16>, vector<8x16x16xf32> -> vector<8x16x16xf32>
    "tpu.trace_stop"() : () -> ()
    %c3 = arith.constant 3 : index
    %c0_43 = arith.constant 0 : index
    %c0_44 = arith.constant 0 : index
    %106 = vector.load %arg4[%c3, %c0_43, %c0_44] : memref<4x16x16xf32, #tpu.memory_space<vmem>>, vector<1x16x16xf32>
    %107 = vector.shape_cast %106 : vector<1x16x16xf32> to vector<16x16xf32>
    %108 = vector.shape_cast %107 : vector<16x16xf32> to vector<1x16x16xf32>
    %109 = vector.broadcast %108 : vector<1x16x16xf32> to vector<8x16x16xf32>
    %110 = arith.addf %105, %109 : vector<8x16x16xf32>
    %111 = vector.shape_cast %110 : vector<8x16x16xf32> to vector<2x4x16x16xf32>
    %112 = vector.shape_cast %8 : vector<4x16x16xf32> to vector<1x4x16x16xf32>
    %113 = vector.broadcast %112 : vector<1x4x16x16xf32> to vector<2x4x16x16xf32>
    %114 = arith.addf %111, %113 : vector<2x4x16x16xf32>
    %115 = vector.shape_cast %114 : vector<2x4x16x16xf32> to vector<8x16x16xf32>
    %cst_45 = arith.constant dense<0xFF800000> : vector<8x16xf32>
    %116 = vector.multi_reduction <maximumf>, %115, %cst_45 [2] : vector<8x16x16xf32> to vector<8x16xf32>
    %117 = vector.shape_cast %116 : vector<8x16xf32> to vector<8x16x1xf32>
    %118 = vector.broadcast %117 : vector<8x16x1xf32> to vector<8x16x16xf32>
    %119 = arith.subf %115, %118 : vector<8x16x16xf32>
    %120 = math.exp %119 : vector<8x16x16xf32>
    %cst_46 = arith.constant dense<0.000000e+00> : vector<8x16xf32>
    %121 = vector.multi_reduction <add>, %120, %cst_46 [2] : vector<8x16x16xf32> to vector<8x16xf32>
    %122 = vector.shape_cast %121 : vector<8x16xf32> to vector<8x16x1xf32>
    %123 = tpu.reciprocal %122 {approx = true} : vector<8x16x1xf32> -> vector<8x16x1xf32>
    %124 = vector.broadcast %123 : vector<8x16x1xf32> to vector<8x16x16xf32>
    %125 = arith.mulf %120, %124 : vector<8x16x16xf32>
    %126 = arith.truncf %125 : vector<8x16x16xf32> to vector<8x16x16xbf16>
    "tpu.trace_start"() <{level = 10 : i32, message = "wnm,wmd->wnd"}> : () -> ()
    %cst_47 = arith.constant dense<0.000000e+00> : vector<8x16x8xf32>
    %127 = tpu.matmul %126, %104, %cst_47 {dimension_numbers = #tpu.dot_dimension_numbers<[2], [1], [1], [2], [0, 0, 0, 1, 1, 2], [0], [0]>} : vector<8x16x16xbf16>, vector<8x16x8xbf16>, vector<8x16x8xf32> -> vector<8x16x8xf32>
    "tpu.trace_stop"() : () -> ()
    %128 = vector.shape_cast %127 : vector<8x16x8xf32> to vector<128x8xf32>
    %129 = tpu.concatenate %38, %68, %98, %128 in 1 : vector<128x8xf32>, vector<128x8xf32>, vector<128x8xf32>, vector<128x8xf32> -> vector<128x32xf32>
    %130 = arith.truncf %129 : vector<128x32xf32> to vector<128x32xbf16>
    %c0_48 = arith.constant 0 : index
    %c0_49 = arith.constant 0 : index
    %131 = vector.load %arg10[%c0_48, %c0_49] : memref<128x32xbf16, #tpu.memory_space<vmem>>, vector<128x32xbf16>
    tpu.vector_store %arg10[%c0_48, %c0_49], %130 {strides = array<i32>} : memref<128x32xbf16, #tpu.memory_space<vmem>>, vector<128x32xbf16>,
    %c0_50 = arith.constant 0 : index
    %c0_51 = arith.constant 0 : index
    %132 = vector.load %arg10[%c0_50, %c0_51] : memref<128x32xbf16, #tpu.memory_space<vmem>>, vector<128x32xbf16>
    %c0_52 = arith.constant 0 : index
    %c0_53 = arith.constant 0 : index
    %133 = vector.load %arg6[%c0_52, %c0_53] : memref<32x32xbf16, #tpu.memory_space<vmem>>, vector<32x32xbf16>
    %cst_54 = arith.constant dense<0.000000e+00> : vector<128x32xf32>
    %134 = tpu.matmul %132, %133, %cst_54 {dimension_numbers = #tpu.dot_dimension_numbers<[1], [0], [0], [1], [0, 0, 1, 1], [], []>} : vector<128x32xbf16>, vector<32x32xbf16>, vector<128x32xf32> -> vector<128x32xf32>
    %c0_55 = arith.constant 0 : index
    %c0_56 = arith.constant 0 : index
    %135 = vector.load %arg7[%c0_55, %c0_56] : memref<1x32xf32, #tpu.memory_space<vmem>>, vector<1x32xf32>
    %136 = vector.broadcast %135 : vector<1x32xf32> to vector<128x32xf32>
    %137 = arith.addf %134, %136 : vector<128x32xf32>
    %c0_57 = arith.constant 0 : index
    %c0_58 = arith.constant 0 : index
    %138 = vector.load %arg8[%c0_57, %c0_58] : memref<128x32xf32, #tpu.memory_space<vmem>>, vector<128x32xf32>
    tpu.vector_store %arg8[%c0_57, %c0_58], %137 {strides = array<i32>} : memref<128x32xf32, #tpu.memory_space<vmem>>, vector<128x32xf32>,
    return
  }
  func.func @transform_0(%arg0: i32) -> (i32, i32) {
    %c0_i32 = arith.constant 0 : i32
    %c0_i32_0 = arith.constant 0 : i32
    return %arg0, %c0_i32 : i32, i32
  }
  func.func @transform_1(%arg0: i32) -> (i32, i32) {
    %c0_i32 = arith.constant 0 : i32
    %c0_i32_0 = arith.constant 0 : i32
    %c0_i32_1 = arith.constant 0 : i32
    return %c0_i32, %c0_i32_0 : i32, i32
  }
  func.func @transform_2(%arg0: i32) -> (i32, i32) {
    %c0_i32 = arith.constant 0 : i32
    %c0_i32_0 = arith.constant 0 : i32
    %c0_i32_1 = arith.constant 0 : i32
    return %c0_i32, %c0_i32_0 : i32, i32
  }
  func.func @transform_3(%arg0: i32) -> (i32, i32, i32) {
    %c0_i32 = arith.constant 0 : i32
    %c0_i32_0 = arith.constant 0 : i32
    %c0_i32_1 = arith.constant 0 : i32
    %c0_i32_2 = arith.constant 0 : i32
    return %c0_i32, %c0_i32_0, %c0_i32_1 : i32, i32, i32
  }
  func.func @transform_4(%arg0: i32) -> (i32, i32, i32) {
    %c0_i32 = arith.constant 0 : i32
    %c0_i32_0 = arith.constant 0 : i32
    %c0_i32_1 = arith.constant 0 : i32
    %c0_i32_2 = arith.constant 0 : i32
    return %c0_i32, %c0_i32_0, %c0_i32_1 : i32, i32, i32
  }
  func.func @transform_5(%arg0: i32) -> (i32, i32) {
    %c0_i32 = arith.constant 0 : i32
    %c0_i32_0 = arith.constant 0 : i32
    %c0_i32_1 = arith.constant 0 : i32
    return %c0_i32, %c0_i32_0 : i32, i32
  }
  func.func @transform_6(%arg0: i32) -> (i32, i32) {
    %c0_i32 = arith.constant 0 : i32
    %c0_i32_0 = arith.constant 0 : i32
    %c0_i32_1 = arith.constant 0 : i32
    return %c0_i32, %c0_i32_0 : i32, i32
  }
  func.func @transform_7(%arg0: i32) -> (i32, i32) {
    %c0_i32 = arith.constant 0 : i32
    %c0_i32_0 = arith.constant 0 : i32
    return %arg0, %c0_i32 : i32, i32
  }
}

</mosaic_0001>

<llo_original>
// kernel: tpu_custom_call.1
$region0: #{tpu_custom_call.1}
  #allocation0 [shape = 'u32[]', space=smem, size = 0x4, offset = 0x4, fixed_abs, tag = 'smem constant byte address 0x4 - core index']
  #allocation1 [shape = 'u32[144,128]{1,0:T(1,128)}', space=vmem, size = 0x12000, scoped, tag = 'internal scratch']
  #allocation2 [shape = 'bf16[128,96]{1,0:T(16,128)(2,1)}', space=vmem, size = 0x8000, scoped, tag = 'scratch operand']
  #allocation3 [shape = 'bf16[128,32]{1,0:T(16,128)(2,1)}', space=vmem, size = 0x8000, scoped, tag = 'scratch operand']
  %s0 = inlined_call_operand.vmem [shape: bf16[128,32], index: 0, kind: input, shape index: {}]
  %s1 = inlined_call_operand.vmem [shape: bf16[32,96], index: 1, kind: input, shape index: {}]
  %s2 = inlined_call_operand.vmem [shape: f32[1,96], index: 2, kind: input, shape index: {}]
  %s3 = inlined_call_operand.vmem [shape: f32[4,16,16], index: 3, kind: input, shape index: {}]
  %s4 = inlined_call_operand.hbm [shape: f32[4,16,16], index: 4, kind: input, shape index: {}]
  %s5 = inlined_call_operand.vmem [shape: bf16[32,32], index: 5, kind: input, shape index: {}]
  %s6 = inlined_call_operand.vmem [shape: f32[1,32], index: 6, kind: input, shape index: {}]
  %s7 = inlined_call_operand.vmem [shape: f32[128,32], index: 7, kind: output, shape index: {}]
  %s8 = sld [smem:[#allocation0]]
  $region42: #{tpu_custom_call.1} parent=0
    _
  %s10 = ssub.s32 1, %s8
  %s11 = scalar_select 0, %s10, %s8
  $region1: #{tpu_custom_call.1} parent=0
    #allocation4 [shape = 'u8[32768]{0}', space=vmem, size = 0x8000, scoped, tag = 'input window, operand 4, single buffered']
    #allocation5 [shape = 's32[1]{0}', space=sflag, size = 0x4, scoped, tag = 'scoped memory for tpu_custom_call.1']
    %12 = vsyncpa [#allocation5], 0
    // Predicated region
    $region2: #{tpu_custom_call.1} parent=1 // pred_check
      _
    $region3: #{tpu_custom_call.1} parent=1 // pred_check_branch
      %14 = sbr.rel (0) target = $region5
    $region4: #{tpu_custom_call.1} parent=1 // pred_region
      _
    $region5: #{tpu_custom_call.1} parent=1 // pred_fallthru
      _
    // Predicated region
    $region6: #{tpu_custom_call.1} parent=1 // pred_check
      _
    $region7: #{tpu_custom_call.1} parent=1 // pred_check_branch
      %16 = sbr.rel (0) target = $region9
    $region8: #{tpu_custom_call.1} parent=1 // pred_region
      _
    $region9: #{tpu_custom_call.1} parent=1 // pred_fallthru
      _
    // Predicated region
    $region10: #{tpu_custom_call.1} parent=1 // pred_check
      _
    $region11: #{tpu_custom_call.1} parent=1 // pred_check_branch
      %18 = sbr.rel (0) target = $region13
    $region12: #{tpu_custom_call.1} parent=1 // pred_region
      _
    $region13: #{tpu_custom_call.1} parent=1 // pred_fallthru
      _
    // Predicated region
    $region14: #{tpu_custom_call.1} parent=1 // pred_check
      _
    $region15: #{tpu_custom_call.1} parent=1 // pred_check_branch
      %20 = sbr.rel (0) target = $region17
    $region16: #{tpu_custom_call.1} parent=1 // pred_region
      _
    $region17: #{tpu_custom_call.1} parent=1 // pred_fallthru
      _
    // Predicated region
    $region18: #{tpu_custom_call.1} parent=1 // pred_check
      _
    $region19: #{tpu_custom_call.1} parent=1 // pred_check_branch
      %22 = sbr.rel (0) target = $region21
    $region20: #{tpu_custom_call.1} parent=1 // pred_region
      %s24 = ssub.s32 1024, 1024
      %25 = vsyncadd [#allocation5], %s24
      %s26 = sshll.u32 [#allocation4], 4
      %s27 = int_to_ptr.vmem [resolvable:$true] %s26
      %32 = dma.hbm_to_vmem [thread:$0]  %s4, 1024, %s27, [#allocation5], 128, 128, 8
    $region21: #{tpu_custom_call.1} parent=1 // pred_fallthru
      _
    // Predicated region
    $region22: #{tpu_custom_call.1} parent=1 // pred_check
      _
    $region23: #{tpu_custom_call.1} parent=1 // pred_check_branch
      %34 = sbr.rel (0) target = $region25
    $region24: #{tpu_custom_call.1} parent=1 // pred_region
      _
    $region25: #{tpu_custom_call.1} parent=1 // pred_fallthru
      _
    // Predicated region
    $region26: #{tpu_custom_call.1} parent=1 // pred_check
      _
    $region27: #{tpu_custom_call.1} parent=1 // pred_check_branch
      %36 = sbr.rel (0) target = $region29
    $region28: #{tpu_custom_call.1} parent=1 // pred_region
      _
    $region29: #{tpu_custom_call.1} parent=1 // pred_fallthru
      _
    // Predicated region
    $region30: #{tpu_custom_call.1} parent=1 // pred_check
      _
    $region31: #{tpu_custom_call.1} parent=1 // pred_check_branch
      %38 = sbr.rel (0) target = $region33
    $region32: #{tpu_custom_call.1} parent=1 // pred_region
      %39 = dma.done [#allocation5], 1024
    $region33: #{tpu_custom_call.1} parent=1 // pred_fallthru
      _
    %v41 = vld [vmem:[%s0] sm:$0xf]
    %v42 = vld [vmem:[%s0 + $0x4] sm:$0xf]
    %v43 = vld [vmem:[%s0 + $0x8] sm:$0xf]
    %v44 = vld [vmem:[%s0 + $0xc] sm:$0xf]
    %v45 = vld [vmem:[%s0 + $0x10] sm:$0xf]
    %v46 = vld [vmem:[%s0 + $0x14] sm:$0xf]
    %v47 = vld [vmem:[%s0 + $0x18] sm:$0xf]
    %v48 = vld [vmem:[%s0 + $0x1c] sm:$0xf]
    %v49 = vld [vmem:[%s0 + $0x20] sm:$0xf]
    %v50 = vld [vmem:[%s0 + $0x24] sm:$0xf]
    %v51 = vld [vmem:[%s0 + $0x28] sm:$0xf]
    %v52 = vld [vmem:[%s0 + $0x2c] sm:$0xf]
    %v53 = vld [vmem:[%s0 + $0x30] sm:$0xf]
    %v54 = vld [vmem:[%s0 + $0x34] sm:$0xf]
    %v55 = vld [vmem:[%s0 + $0x38] sm:$0xf]
    %v56 = vld [vmem:[%s0 + $0x3c] sm:$0xf]
    %v57 = vld [vmem:[%s1] sm:$0xf]
    %v58 = vld [vmem:[%s1 + $0x4] sm:$0xf]
    %v59 = vld [vmem:[%s1 + $0x8] sm:$0xf]
    %v60 = vld [vmem:[%s1 + $0xc] sm:$0xf]
    %v61 = vld [vmem:[%s2] sm:$0x1]
    %v63 = vlaneseq
    %v64 = vshrl.u32 %v63, 7
    %v65 = vsub.s32 0, %v64
    %v66 = vrot.slane %v61, %v65
    %v84 = vunpack.c.l.b16 %v41
    %v85 = vunpack.c.l.b16 %v42
    %v86 = vunpack.c.l.b16 %v43
    %v87 = vunpack.c.l.b16 %v44
    %v88 = vunpack.c.l.b16 %v45
    %v89 = vunpack.c.l.b16 %v46
    %v90 = vunpack.c.l.b16 %v47
    %v91 = vunpack.c.l.b16 %v48
    %v92 = vunpack.c.l.b16 %v49
    %v93 = vunpack.c.l.b16 %v50
    %v94 = vunpack.c.l.b16 %v51
    %v95 = vunpack.c.l.b16 %v52
    %v96 = vunpack.c.l.b16 %v53
    %v97 = vunpack.c.l.b16 %v54
    %v98 = vunpack.c.l.b16 %v55
    %v99 = vunpack.c.l.b16 %v56
    %v100 = vpack.c.b16 %v85, %v84
    %v101 = vpack.c.b16 %v87, %v86
    %v102 = vpack.c.b16 %v89, %v88
    %v103 = vpack.c.b16 %v91, %v90
    %v104 = vpack.c.b16 %v93, %v92
    %v105 = vpack.c.b16 %v95, %v94
    %v106 = vpack.c.b16 %v97, %v96
    %v107 = vpack.c.b16 %v99, %v98
    %v112 = vunpack.c.l.b16 %v57
    %v113 = vunpack.c.l.b16 %v58
    %v114 = vunpack.c.l.b16 %v59
    %v115 = vunpack.c.l.b16 %v60
    %v116 = vpack.c.b16 %v113, %v112
    %v117 = vpack.c.b16 %v115, %v114
    %vm120 = vcmask 261120
    %v122 = vsel %vm120, %v100, 0
    %v125 = vsel %vm120, %v101, 0
    %v128 = vsel %vm120, %v102, 0
    %v131 = vsel %vm120, %v103, 0
    %v134 = vsel %vm120, %v104, 0
    %v137 = vsel %vm120, %v105, 0
    %v140 = vsel %vm120, %v106, 0
    %v143 = vsel %vm120, %v107, 0
    %145 = vmatprep.subr.bf16.mxu0 0
    %146 = vmatpush1.bf16.msra.mxu0 %v116
    %147 = vmatprep.subr.bf16.mxu0 0
    %148 = vmatpush1.bf16.msra.mxu0 %v117
    %149 = vmatprep.subr.bf16.mxu0 0
    %150 = vmatpush1.bf16.msra.mxu0 0
    %151 = vmatprep.subr.bf16.mxu0 0
    %152 = vmatpush1.bf16.msra.mxu0 0
    %153 = vmatprep.subr.bf16.mxu0 0
    %154 = vmatpush1.bf16.msra.mxu0 0
    %155 = vmatprep.subr.bf16.mxu0 0
    %156 = vmatpush1.bf16.msra.mxu0 0
    %157 = vmatprep.subr.bf16.mxu0 0
    %158 = vmatpush1.bf16.msra.mxu0 0
    %159 = vmatprep.subr.bf16.mxu0 0
    %160 = vmatpush1.bf16.msra.mxu0 0
    %161 = vmatprep.subr.bf16.mxu0 0
    %162 = vmatpush1.bf16.msra.mxu0 0
    %163 = vmatprep.subr.bf16.mxu0 0
    %164 = vmatpush1.bf16.msra.mxu0 0
    %165 = vmatprep.subr.bf16.mxu0 0
    %166 = vmatpush1.bf16.msra.mxu0 0
    %167 = vmatprep.subr.bf16.mxu0 0
    %168 = vmatpush1.bf16.msra.mxu0 0
    %169 = vmatprep.subr.bf16.mxu0 0
    %170 = vmatpush1.bf16.msra.mxu0 0
    %171 = vmatprep.subr.bf16.mxu0 0
    %172 = vmatpush1.bf16.msra.mxu0 0
    %173 = vmatprep.subr.bf16.mxu0 0
    %174 = vmatpush1.bf16.msra.mxu0 0
    %175 = vmatprep.subr.bf16.mxu0 0
    %176 = vmatpush1.bf16.msra.mxu0 0
    %177 = vmatprep.mubr.bf16.mxu0 0
    %178 = vmatmul.mubr.bf16.gmra.mrb[0].mxu0 %v122
    %v179 = vpop.f32.mrb[0].mxu0
    %v180 = vadd.f32 %v66, %v179
    %v181 = vpop.f32.mrb[0].mxu0
    %v182 = vpop.f32.mrb[0].mxu0
    %v183 = vadd.f32 %v66, %v182
    %v184 = vpop.f32.mrb[0].mxu0
    %185 = vmatprep.mubr.bf16.mxu0 0
    %186 = vmatmul.mubr.bf16.gmra.mrb[0].mxu0 %v125
    %v187 = vpop.f32.mrb[0].mxu0
    %v188 = vadd.f32 %v66, %v187
    %v189 = vpop.f32.mrb[0].mxu0
    %v190 = vpop.f32.mrb[0].mxu0
    %v191 = vadd.f32 %v66, %v190
    %v192 = vpop.f32.mrb[0].mxu0
    %193 = vmatprep.mubr.bf16.mxu0 0
    %194 = vmatmul.mubr.bf16.gmra.mrb[0].mxu0 %v128
    %v195 = vpop.f32.mrb[0].mxu0
    %v196 = vadd.f32 %v66, %v195
    %v197 = vpop.f32.mrb[0].mxu0
    %v198 = vpop.f32.mrb[0].mxu0
    %v199 = vadd.f32 %v66, %v198
    %v200 = vpop.f32.mrb[0].mxu0
    %201 = vmatprep.mubr.bf16.mxu0 0
    %202 = vmatmul.mubr.bf16.gmra.mrb[0].mxu0 %v131
    %v203 = vpop.f32.mrb[0].mxu0
    %v204 = vadd.f32 %v66, %v203
    %v205 = vpop.f32.mrb[0].mxu0
    %v206 = vpop.f32.mrb[0].mxu0
    %v207 = vadd.f32 %v66, %v206
    %v208 = vpop.f32.mrb[0].mxu0
    %209 = vmatprep.mubr.bf16.mxu0 0
    %210 = vmatmul.mubr.bf16.gmra.mrb[0].mxu0 %v134
    %v211 = vpop.f32.mrb[0].mxu0
    %v212 = vadd.f32 %v66, %v211
    %v213 = vpop.f32.mrb[0].mxu0
    %v214 = vpop.f32.mrb[0].mxu0
    %v215 = vadd.f32 %v66, %v214
    %v216 = vpop.f32.mrb[0].mxu0
    %217 = vmatprep.mubr.bf16.mxu0 0
    %218 = vmatmul.mubr.bf16.gmra.mrb[0].mxu0 %v137
    %v219 = vpop.f32.mrb[0].mxu0
    %v220 = vadd.f32 %v66, %v219
    %v221 = vpop.f32.mrb[0].mxu0
    %v222 = vpop.f32.mrb[0].mxu0
    %v223 = vadd.f32 %v66, %v222
    %v224 = vpop.f32.mrb[0].mxu0
    %225 = vmatprep.mubr.bf16.mxu0 0
    %226 = vmatmul.mubr.bf16.gmra.mrb[0].mxu0 %v140
    %v227 = vpop.f32.mrb[0].mxu0
    %v228 = vadd.f32 %v66, %v227
    %v229 = vpop.f32.mrb[0].mxu0
    %v230 = vpop.f32.mrb[0].mxu0
    %v231 = vadd.f32 %v66, %v230
    %v232 = vpop.f32.mrb[0].mxu0
    %233 = vmatprep.mubr.bf16.mxu0 0
    %234 = vmatmul.mubr.bf16.gmra.mrb[0].mxu0 %v143
    %v235 = vpop.f32.mrb[0].mxu0
    %v236 = vadd.f32 %v66, %v235
    %v237 = vpop.f32.mrb[0].mxu0
    %v238 = vpop.f32.mrb[0].mxu0
    %v239 = vadd.f32 %v66, %v238
    %v240 = vpop.f32.mrb[0].mxu0
    %241 = vdwg.mxu0
    %v242 = vpack.c.bf16 %v183, %v180
    %v243 = vpack.c.bf16 %v191, %v188
    %v244 = vpack.c.bf16 %v199, %v196
    %v245 = vpack.c.bf16 %v207, %v204
    %v246 = vpack.c.bf16 %v215, %v212
    %v247 = vpack.c.bf16 %v223, %v220
    %v248 = vpack.c.bf16 %v231, %v228
    %v249 = vpack.c.bf16 %v239, %v236
    %vm250 = vcmask 785408
    %251 = vst.msk [vmem:[#allocation2] sm:$0xff] %vm250, %v242
    %252 = vst.msk [vmem:[#allocation2 + $0x8] sm:$0xff] %vm250, %v243
    %253 = vst.msk [vmem:[#allocation2 + $0x10] sm:$0xff] %vm250, %v244
    %254 = vst.msk [vmem:[#allocation2 + $0x18] sm:$0xff] %vm250, %v245
    %255 = vst.msk [vmem:[#allocation2 + $0x20] sm:$0xff] %vm250, %v246
    %256 = vst.msk [vmem:[#allocation2 + $0x28] sm:$0xff] %vm250, %v247
    %257 = vst.msk [vmem:[#allocation2 + $0x30] sm:$0xff] %vm250, %v248
    %258 = vst.msk [vmem:[#allocation2 + $0x38] sm:$0xff] %vm250, %v249
    %v259 = vld [vmem:[#allocation4] sm:$0xff]
    %v260 = vld [vmem:[#allocation4 + $0x8] sm:$0xff]
    %v261 = vld [vmem:[#allocation4 + $0x10] sm:$0xff]
    %v262 = vld [vmem:[#allocation4 + $0x18] sm:$0xff]
    %v263 = vld [vmem:[#allocation4 + $0x20] sm:$0xff]
    %v264 = vld [vmem:[#allocation4 + $0x28] sm:$0xff]
    %v265 = vld [vmem:[#allocation4 + $0x30] sm:$0xff]
    %v266 = vld [vmem:[#allocation4 + $0x38] sm:$0xff]
    %v267 = vld [vmem:[#allocation2] sm:$0xff]
    %v268 = vld [vmem:[#allocation2 + $0x8] sm:$0xff]
    %v269 = vld [vmem:[#allocation2 + $0x10] sm:$0xff]
    %v270 = vld [vmem:[#allocation2 + $0x18] sm:$0xff]
    %v271 = vld [vmem:[#allocation2 + $0x20] sm:$0xff]
    %v272 = vld [vmem:[#allocation2 + $0x28] sm:$0xff]
    %v273 = vld [vmem:[#allocation2 + $0x30] sm:$0xff]
    %v274 = vld [vmem:[#allocation2 + $0x38] sm:$0xff]
    %v275 = vld [vmem:[%s3] sm:$0xff]
    %v276 = vld [vmem:[%s3 + $0x8] sm:$0xff]
    %278 = vrot.lane.b32.xlu0 %v267, 96
    %v279 = vpop.permute.xlu0 %278
    %vm280 = vcmask 64512
    %v282 = vsel %vm280, %v267, 0
    %v285 = vsel %vm280, %v279, 0
    %287 = vmatprep.subr.bf16.mxu0 0
    %288 = vmatpush1.bf16.xpose.msra.mxu0 %v285
    %289 = vmatprep.subr.bf16.mxu0 0
    %290 = vmatpush1.bf16.xpose.msra.mxu0 0
    %291 = vmatprep.subr.bf16.mxu0 0
    %292 = vmatpush1.bf16.xpose.msra.mxu0 0
    %293 = vmatprep.subr.bf16.mxu0 0
    %294 = vmatpush1.bf16.xpose.msra.mxu0 0
    %295 = vmatprep.subr.bf16.mxu0 0
    %296 = vmatpush1.bf16.xpose.msra.mxu0 0
    %297 = vmatprep.subr.bf16.mxu0 0
    %298 = vmatpush1.bf16.xpose.msra.mxu0 0
    %299 = vmatprep.subr.bf16.mxu0 0
    %300 = vmatpush1.bf16.xpose.msra.mxu0 0
    %301 = vmatprep.subr.bf16.mxu0 0
    %302 = vmatpush1.bf16.xpose.msra.mxu0 0
    %303 = vmatprep.subr.bf16.mxu0 0
    %304 = vmatpush1.bf16.xpose.msra.mxu0 0
    %305 = vmatprep.subr.bf16.mxu0 0
    %306 = vmatpush1.bf16.xpose.msra.mxu0 0
    %307 = vmatprep.subr.bf16.mxu0 0
    %308 = vmatpush1.bf16.xpose.msra.mxu0 0
    %309 = vmatprep.subr.bf16.mxu0 0
    %310 = vmatpush1.bf16.xpose.msra.mxu0 0
    %311 = vmatprep.subr.bf16.mxu0 0
    %312 = vmatpush1.bf16.xpose.msra.mxu0 0
    %313 = vmatprep.subr.bf16.mxu0 0
    %314 = vmatpush1.bf16.xpose.msra.mxu0 0
    %315 = vmatprep.subr.bf16.mxu0 0
    %316 = vmatpush1.bf16.xpose.msra.mxu0 0
    %317 = vmatprep.subr.bf16.mxu0 0
    %318 = vmatpush1.bf16.xpose.msra.mxu0 0
    %319 = vmatprep.mubr.bf16.mxu0 0
    %320 = vmatmul.mubr.bf16.gmra.mrb[0].mxu0 %v282
    %v321 = vpop.f32.mrb[0].mxu0
    %v322 = vadd.f32 %v275, %v321
    %v323 = vpop.f32.mrb[0].mxu0
    %v324 = vpop.f32.mrb[0].mxu0
    %v325 = vadd.f32 %v276, %v324
    %v326 = vpop.f32.mrb[0].mxu0
    %327 = vdwg.mxu0
    %329 = vrot.lane.b32.xlu0 %v268, 96
    %v330 = vpop.permute.xlu0 %329
    %v332 = vsel %vm280, %v268, 0
    %v335 = vsel %vm280, %v330, 0
    %337 = vmatprep.subr.bf16.mxu0 0
    %338 = vmatpush1.bf16.xpose.msra.mxu0 %v335
    %339 = vmatprep.subr.bf16.mxu0 0
    %340 = vmatpush1.bf16.xpose.msra.mxu0 0
    %341 = vmatprep.subr.bf16.mxu0 0
    %342 = vmatpush1.bf16.xpose.msra.mxu0 0
    %343 = vmatprep.subr.bf16.mxu0 0
    %344 = vmatpush1.bf16.xpose.msra.mxu0 0
    %345 = vmatprep.subr.bf16.mxu0 0
    %346 = vmatpush1.bf16.xpose.msra.mxu0 0
    %347 = vmatprep.subr.bf16.mxu0 0
    %348 = vmatpush1.bf16.xpose.msra.mxu0 0
    %349 = vmatprep.subr.bf16.mxu0 0
    %350 = vmatpush1.bf16.xpose.msra.mxu0 0
    %351 = vmatprep.subr.bf16.mxu0 0
    %352 = vmatpush1.bf16.xpose.msra.mxu0 0
    %353 = vmatprep.subr.bf16.mxu0 0
    %354 = vmatpush1.bf16.xpose.msra.mxu0 0
    %355 = vmatprep.subr.bf16.mxu0 0
    %356 = vmatpush1.bf16.xpose.msra.mxu0 0
    %357 = vmatprep.subr.bf16.mxu0 0
    %358 = vmatpush1.bf16.xpose.msra.mxu0 0
    %359 = vmatprep.subr.bf16.mxu0 0
    %360 = vmatpush1.bf16.xpose.msra.mxu0 0
    %361 = vmatprep.subr.bf16.mxu0 0
    %362 = vmatpush1.bf16.xpose.msra.mxu0 0
    %363 = vmatprep.subr.bf16.mxu0 0
    %364 = vmatpush1.bf16.xpose.msra.mxu0 0
    %365 = vmatprep.subr.bf16.mxu0 0
    %366 = vmatpush1.bf16.xpose.msra.mxu0 0
    %367 = vmatprep.subr.bf16.mxu0 0
    %368 = vmatpush1.bf16.xpose.msra.mxu0 0
    %369 = vmatprep.mubr.bf16.mxu0 0
    %370 = vmatmul.mubr.bf16.gmra.mrb[0].mxu0 %v332
    %v371 = vpop.f32.mrb[0].mxu0
    %v372 = vadd.f32 %v275, %v371
    %v373 = vpop.f32.mrb[0].mxu0
    %v374 = vpop.f32.mrb[0].mxu0
    %v375 = vadd.f32 %v276, %v374
    %v376 = vpop.f32.mrb[0].mxu0
    %377 = vdwg.mxu0
    %379 = vrot.lane.b32.xlu0 %v269, 96
    %v380 = vpop.permute.xlu0 %379
    %v382 = vsel %vm280, %v269, 0
    %v385 = vsel %vm280, %v380, 0
    %387 = vmatprep.subr.bf16.mxu0 0
    %388 = vmatpush1.bf16.xpose.msra.mxu0 %v385
    %389 = vmatprep.subr.bf16.mxu0 0
    %390 = vmatpush1.bf16.xpose.msra.mxu0 0
    %391 = vmatprep.subr.bf16.mxu0 0
    %392 = vmatpush1.bf16.xpose.msra.mxu0 0
    %393 = vmatprep.subr.bf16.mxu0 0
    %394 = vmatpush1.bf16.xpose.msra.mxu0 0
    %395 = vmatprep.subr.bf16.mxu0 0
    %396 = vmatpush1.bf16.xpose.msra.mxu0 0
    %397 = vmatprep.subr.bf16.mxu0 0
    %398 = vmatpush1.bf16.xpose.msra.mxu0 0
    %399 = vmatprep.subr.bf16.mxu0 0
    %400 = vmatpush1.bf16.xpose.msra.mxu0 0
    %401 = vmatprep.subr.bf16.mxu0 0
    %402 = vmatpush1.bf16.xpose.msra.mxu0 0
    %403 = vmatprep.subr.bf16.mxu0 0
    %404 = vmatpush1.bf16.xpose.msra.mxu0 0
    %405 = vmatprep.subr.bf16.mxu0 0
    %406 = vmatpush1.bf16.xpose.msra.mxu0 0
    %407 = vmatprep.subr.bf16.mxu0 0
    %408 = vmatpush1.bf16.xpose.msra.mxu0 0
    %409 = vmatprep.subr.bf16.mxu0 0
    %410 = vmatpush1.bf16.xpose.msra.mxu0 0
    %411 = vmatprep.subr.bf16.mxu0 0
    %412 = vmatpush1.bf16.xpose.msra.mxu0 0
    %413 = vmatprep.subr.bf16.mxu0 0
    %414 = vmatpush1.bf16.xpose.msra.mxu0 0
    %415 = vmatprep.subr.bf16.mxu0 0
    %416 = vmatpush1.bf16.xpose.msra.mxu0 0
    %417 = vmatprep.subr.bf16.mxu0 0
    %418 = vmatpush1.bf16.xpose.msra.mxu0 0
    %419 = vmatprep.mubr.bf16.mxu0 0
    %420 = vmatmul.mubr.bf16.gmra.mrb[0].mxu0 %v382
    %v421 = vpop.f32.mrb[0].mxu0
    %v422 = vadd.f32 %v275, %v421
    %v423 = vpop.f32.mrb[0].mxu0
    %v424 = vpop.f32.mrb[0].mxu0
    %v425 = vadd.f32 %v276, %v424
    %v426 = vpop.f32.mrb[0].mxu0
    %427 = vdwg.mxu0
    %429 = vrot.lane.b32.xlu0 %v270, 96
    %v430 = vpop.permute.xlu0 %429
    %v432 = vsel %vm280, %v270, 0
    %v435 = vsel %vm280, %v430, 0
    %437 = vmatprep.subr.bf16.mxu0 0
    %438 = vmatpush1.bf16.xpose.msra.mxu0 %v435
    %439 = vmatprep.subr.bf16.mxu0 0
    %440 = vmatpush1.bf16.xpose.msra.mxu0 0
    %441 = vmatprep.subr.bf16.mxu0 0
    %442 = vmatpush1.bf16.xpose.msra.mxu0 0
    %443 = vmatprep.subr.bf16.mxu0 0
    %444 = vmatpush1.bf16.xpose.msra.mxu0 0
    %445 = vmatprep.subr.bf16.mxu0 0
    %446 = vmatpush1.bf16.xpose.msra.mxu0 0
    %447 = vmatprep.subr.bf16.mxu0 0
    %448 = vmatpush1.bf16.xpose.msra.mxu0 0
    %449 = vmatprep.subr.bf16.mxu0 0
    %450 = vmatpush1.bf16.xpose.msra.mxu0 0
    %451 = vmatprep.subr.bf16.mxu0 0
    %452 = vmatpush1.bf16.xpose.msra.mxu0 0
    %453 = vmatprep.subr.bf16.mxu0 0
    %454 = vmatpush1.bf16.xpose.msra.mxu0 0
    %455 = vmatprep.subr.bf16.mxu0 0
    %456 = vmatpush1.bf16.xpose.msra.mxu0 0
    %457 = vmatprep.subr.bf16.mxu0 0
    %458 = vmatpush1.bf16.xpose.msra.mxu0 0
    %459 = vmatprep.subr.bf16.mxu0 0
    %460 = vmatpush1.bf16.xpose.msra.mxu0 0
    %461 = vmatprep.subr.bf16.mxu0 0
    %462 = vmatpush1.bf16.xpose.msra.mxu0 0
    %463 = vmatprep.subr.bf16.mxu0 0
    %464 = vmatpush1.bf16.xpose.msra.mxu0 0
    %465 = vmatprep.subr.bf16.mxu0 0
    %466 = vmatpush1.bf16.xpose.msra.mxu0 0
    %467 = vmatprep.subr.bf16.mxu0 0
    %468 = vmatpush1.bf16.xpose.msra.mxu0 0
    %469 = vmatprep.mubr.bf16.mxu0 0
    %470 = vmatmul.mubr.bf16.gmra.mrb[0].mxu0 %v432
    %v471 = vpop.f32.mrb[0].mxu0
    %v472 = vadd.f32 %v275, %v471
    %v473 = vpop.f32.mrb[0].mxu0
    %v474 = vpop.f32.mrb[0].mxu0
    %v475 = vadd.f32 %v276, %v474
    %v476 = vpop.f32.mrb[0].mxu0
    %477 = vdwg.mxu0
    %479 = vrot.lane.b32.xlu0 %v271, 96
    %v480 = vpop.permute.xlu0 %479
    %v482 = vsel %vm280, %v271, 0
    %v485 = vsel %vm280, %v480, 0
    %487 = vmatprep.subr.bf16.mxu0 0
    %488 = vmatpush1.bf16.xpose.msra.mxu0 %v485
    %489 = vmatprep.subr.bf16.mxu0 0
    %490 = vmatpush1.bf16.xpose.msra.mxu0 0
    %491 = vmatprep.subr.bf16.mxu0 0
    %492 = vmatpush1.bf16.xpose.msra.mxu0 0
    %493 = vmatprep.subr.bf16.mxu0 0
    %494 = vmatpush1.bf16.xpose.msra.mxu0 0
    %495 = vmatprep.subr.bf16.mxu0 0
    %496 = vmatpush1.bf16.xpose.msra.mxu0 0
    %497 = vmatprep.subr.bf16.mxu0 0
    %498 = vmatpush1.bf16.xpose.msra.mxu0 0
    %499 = vmatprep.subr.bf16.mxu0 0
    %500 = vmatpush1.bf16.xpose.msra.mxu0 0
    %501 = vmatprep.subr.bf16.mxu0 0
    %502 = vmatpush1.bf16.xpose.msra.mxu0 0
    %503 = vmatprep.subr.bf16.mxu0 0
    %504 = vmatpush1.bf16.xpose.msra.mxu0 0
    %505 = vmatprep.subr.bf16.mxu0 0
    %506 = vmatpush1.bf16.xpose.msra.mxu0 0
    %507 = vmatprep.subr.bf16.mxu0 0
    %508 = vmatpush1.bf16.xpose.msra.mxu0 0
    %509 = vmatprep.subr.bf16.mxu0 0
    %510 = vmatpush1.bf16.xpose.msra.mxu0 0
    %511 = vmatprep.subr.bf16.mxu0 0
    %512 = vmatpush1.bf16.xpose.msra.mxu0 0
    %513 = vmatprep.subr.bf16.mxu0 0
    %514 = vmatpush1.bf16.xpose.msra.mxu0 0
    %515 = vmatprep.subr.bf16.mxu0 0
    %516 = vmatpush1.bf16.xpose.msra.mxu0 0
    %517 = vmatprep.subr.bf16.mxu0 0
    %518 = vmatpush1.bf16.xpose.msra.mxu0 0
    %519 = vmatprep.mubr.bf16.mxu0 0
    %520 = vmatmul.mubr.bf16.gmra.mrb[0].mxu0 %v482
    %v521 = vpop.f32.mrb[0].mxu0
    %v522 = vadd.f32 %v275, %v521
    %v523 = vpop.f32.mrb[0].mxu0
    %v524 = vpop.f32.mrb[0].mxu0
    %v525 = vadd.f32 %v276, %v524
    %v526 = vpop.f32.mrb[0].mxu0
    %527 = vdwg.mxu0
    %529 = vrot.lane.b32.xlu0 %v272, 96
    %v530 = vpop.permute.xlu0 %529
    %v532 = vsel %vm280, %v272, 0
    %v535 = vsel %vm280, %v530, 0
    %537 = vmatprep.subr.bf16.mxu0 0
    %538 = vmatpush1.bf16.xpose.msra.mxu0 %v535
    %539 = vmatprep.subr.bf16.mxu0 0
    %540 = vmatpush1.bf16.xpose.msra.mxu0 0
    %541 = vmatprep.subr.bf16.mxu0 0
    %542 = vmatpush1.bf16.xpose.msra.mxu0 0
    %543 = vmatprep.subr.bf16.mxu0 0
    %544 = vmatpush1.bf16.xpose.msra.mxu0 0
    %545 = vmatprep.subr.bf16.mxu0 0
    %546 = vmatpush1.bf16.xpose.msra.mxu0 0
    %547 = vmatprep.subr.bf16.mxu0 0
    %548 = vmatpush1.bf16.xpose.msra.mxu0 0
    %549 = vmatprep.subr.bf16.mxu0 0
    %550 = vmatpush1.bf16.xpose.msra.mxu0 0
    %551 = vmatprep.subr.bf16.mxu0 0
    %552 = vmatpush1.bf16.xpose.msra.mxu0 0
    %553 = vmatprep.subr.bf16.mxu0 0
    %554 = vmatpush1.bf16.xpose.msra.mxu0 0
    %555 = vmatprep.subr.bf16.mxu0 0
    %556 = vmatpush1.bf16.xpose.msra.mxu0 0
    %557 = vmatprep.subr.bf16.mxu0 0
    %558 = vmatpush1.bf16.xpose.msra.mxu0 0
    %559 = vmatprep.subr.bf16.mxu0 0
    %560 = vmatpush1.bf16.xpose.msra.mxu0 0
    %561 = vmatprep.subr.bf16.mxu0 0
    %562 = vmatpush1.bf16.xpose.msra.mxu0 0
    %563 = vmatprep.subr.bf16.mxu0 0
    %564 = vmatpush1.bf16.xpose.msra.mxu0 0
    %565 = vmatprep.subr.bf16.mxu0 0
    %566 = vmatpush1.bf16.xpose.msra.mxu0 0
    %567 = vmatprep.subr.bf16.mxu0 0
    %568 = vmatpush1.bf16.xpose.msra.mxu0 0
    %569 = vmatprep.mubr.bf16.mxu0 0
    %570 = vmatmul.mubr.bf16.gmra.mrb[0].mxu0 %v532
    %v571 = vpop.f32.mrb[0].mxu0
    %v572 = vadd.f32 %v275, %v571
    %v573 = vpop.f32.mrb[0].mxu0
    %v574 = vpop.f32.mrb[0].mxu0
    %v575 = vadd.f32 %v276, %v574
    %v576 = vpop.f32.mrb[0].mxu0
    %577 = vdwg.mxu0
    %579 = vrot.lane.b32.xlu0 %v273, 96
    %v580 = vpop.permute.xlu0 %579
    %v582 = vsel %vm280, %v273, 0
    %v585 = vsel %vm280, %v580, 0
    %587 = vmatprep.subr.bf16.mxu0 0
    %588 = vmatpush1.bf16.xpose.msra.mxu0 %v585
    %589 = vmatprep.subr.bf16.mxu0 0
    %590 = vmatpush1.bf16.xpose.msra.mxu0 0
    %591 = vmatprep.subr.bf16.mxu0 0
    %592 = vmatpush1.bf16.xpose.msra.mxu0 0
    %593 = vmatprep.subr.bf16.mxu0 0
    %594 = vmatpush1.bf16.xpose.msra.mxu0 0
    %595 = vmatprep.subr.bf16.mxu0 0
    %596 = vmatpush1.bf16.xpose.msra.mxu0 0
    %597 = vmatprep.subr.bf16.mxu0 0
    %598 = vmatpush1.bf16.xpose.msra.mxu0 0
    %599 = vmatprep.subr.bf16.mxu0 0
    %600 = vmatpush1.bf16.xpose.msra.mxu0 0
    %601 = vmatprep.subr.bf16.mxu0 0
    %602 = vmatpush1.bf16.xpose.msra.mxu0 0
    %603 = vmatprep.subr.bf16.mxu0 0
    %604 = vmatpush1.bf16.xpose.msra.mxu0 0
    %605 = vmatprep.subr.bf16.mxu0 0
    %606 = vmatpush1.bf16.xpose.msra.mxu0 0
    %607 = vmatprep.subr.bf16.mxu0 0
    %608 = vmatpush1.bf16.xpose.msra.mxu0 0
    %609 = vmatprep.subr.bf16.mxu0 0
    %610 = vmatpush1.bf16.xpose.msra.mxu0 0
    %611 = vmatprep.subr.bf16.mxu0 0
    %612 = vmatpush1.bf16.xpose.msra.mxu0 0
    %613 = vmatprep.subr.bf16.mxu0 0
    %614 = vmatpush1.bf16.xpose.msra.mxu0 0
    %615 = vmatprep.subr.bf16.mxu0 0
    %616 = vmatpush1.bf16.xpose.msra.mxu0 0
    %617 = vmatprep.subr.bf16.mxu0 0
    %618 = vmatpush1.bf16.xpose.msra.mxu0 0
    %619 = vmatprep.mubr.bf16.mxu0 0
    %620 = vmatmul.mubr.bf16.gmra.mrb[0].mxu0 %v582
    %v621 = vpop.f32.mrb[0].mxu0
    %v622 = vadd.f32 %v275, %v621
    %v623 = vpop.f32.mrb[0].mxu0
    %v624 = vpop.f32.mrb[0].mxu0
    %v625 = vadd.f32 %v276, %v624
    %v626 = vpop.f32.mrb[0].mxu0
    %627 = vdwg.mxu0
    %629 = vrot.lane.b32.xlu0 %v274, 96
    %v630 = vpop.permute.xlu0 %629
    %v632 = vsel %vm280, %v274, 0
    %v635 = vsel %vm280, %v630, 0
    %637 = vmatprep.subr.bf16.mxu0 0
    %638 = vmatpush1.bf16.xpose.msra.mxu0 %v635
    %639 = vmatprep.subr.bf16.mxu0 0
    %640 = vmatpush1.bf16.xpose.msra.mxu0 0
    %641 = vmatprep.subr.bf16.mxu0 0
    %642 = vmatpush1.bf16.xpose.msra.mxu0 0
    %643 = vmatprep.subr.bf16.mxu0 0
    %644 = vmatpush1.bf16.xpose.msra.mxu0 0
    %645 = vmatprep.subr.bf16.mxu0 0
    %646 = vmatpush1.bf16.xpose.msra.mxu0 0
    %647 = vmatprep.subr.bf16.mxu0 0
    %648 = vmatpush1.bf16.xpose.msra.mxu0 0
    %649 = vmatprep.subr.bf16.mxu0 0
    %650 = vmatpush1.bf16.xpose.msra.mxu0 0
    %651 = vmatprep.subr.bf16.mxu0 0
    %652 = vmatpush1.bf16.xpose.msra.mxu0 0
    %653 = vmatprep.subr.bf16.mxu0 0
    %654 = vmatpush1.bf16.xpose.msra.mxu0 0
    %655 = vmatprep.subr.bf16.mxu0 0
    %656 = vmatpush1.bf16.xpose.msra.mxu0 0
    %657 = vmatprep.subr.bf16.mxu0 0
    %658 = vmatpush1.bf16.xpose.msra.mxu0 0
    %659 = vmatprep.subr.bf16.mxu0 0
    %660 = vmatpush1.bf16.xpose.msra.mxu0 0
    %661 = vmatprep.subr.bf16.mxu0 0
    %662 = vmatpush1.bf16.xpose.msra.mxu0 0
    %663 = vmatprep.subr.bf16.mxu0 0
    %664 = vmatpush1.bf16.xpose.msra.mxu0 0
    %665 = vmatprep.subr.bf16.mxu0 0
    %666 = vmatpush1.bf16.xpose.msra.mxu0 0
    %667 = vmatprep.subr.bf16.mxu0 0
    %668 = vmatpush1.bf16.xpose.msra.mxu0 0
    %669 = vmatprep.mubr.bf16.mxu0 0
    %670 = vmatmul.mubr.bf16.gmra.mrb[0].mxu0 %v632
    %v671 = vpop.f32.mrb[0].mxu0
    %v672 = vadd.f32 %v275, %v671
    %v673 = vpop.f32.mrb[0].mxu0
    %v674 = vpop.f32.mrb[0].mxu0
    %v675 = vadd.f32 %v276, %v674
    %v676 = vpop.f32.mrb[0].mxu0
    %677 = vdwg.mxu0
    %v678 = vadd.f32 %v322, %v259
    %v679 = vadd.f32 %v325, %v260
    %v680 = vadd.f32 %v372, %v261
    %v681 = vadd.f32 %v375, %v262
    %v682 = vadd.f32 %v422, %v263
    %v683 = vadd.f32 %v425, %v264
    %v684 = vadd.f32 %v472, %v265
    %v685 = vadd.f32 %v475, %v266
    %v686 = vadd.f32 %v522, %v259
    %v687 = vadd.f32 %v525, %v260
    %v688 = vadd.f32 %v572, %v261
    %v689 = vadd.f32 %v575, %v262
    %v690 = vadd.f32 %v622, %v263
    %v691 = vadd.f32 %v625, %v264
    %v692 = vadd.f32 %v672, %v265
    %v693 = vadd.f32 %v675, %v266
    %vm694 = vcmask 130048
    %v695 = vsel %vm694, %v678, -inf
    %696 = vmax.xlane.f32.xlu0 %v695
    %v697 = vpop.xlane.xlu0 %696
    %v698 = vsel %vm694, %v679, -inf
    %699 = vmax.xlane.f32.xlu0 %v698
    %v700 = vpop.xlane.xlu0 %699
    %v701 = vsel %vm694, %v680, -inf
    %702 = vmax.xlane.f32.xlu0 %v701
    %v703 = vpop.xlane.xlu0 %702
    %v704 = vsel %vm694, %v681, -inf
    %705 = vmax.xlane.f32.xlu0 %v704
    %v706 = vpop.xlane.xlu0 %705
    %v707 = vsel %vm694, %v682, -inf
    %708 = vmax.xlane.f32.xlu0 %v707
    %v709 = vpop.xlane.xlu0 %708
    %v710 = vsel %vm694, %v683, -inf
    %711 = vmax.xlane.f32.xlu0 %v710
    %v712 = vpop.xlane.xlu0 %711
    %v713 = vsel %vm694, %v684, -inf
    %714 = vmax.xlane.f32.xlu0 %v713
    %v715 = vpop.xlane.xlu0 %714
    %v716 = vsel %vm694, %v685, -inf
    %717 = vmax.xlane.f32.xlu0 %v716
    %v718 = vpop.xlane.xlu0 %717
    %v719 = vsel %vm694, %v686, -inf
    %720 = vmax.xlane.f32.xlu0 %v719
    %v721 = vpop.xlane.xlu0 %720
    %v722 = vsel %vm694, %v687, -inf
    %723 = vmax.xlane.f32.xlu0 %v722
    %v724 = vpop.xlane.xlu0 %723
    %v725 = vsel %vm694, %v688, -inf
    %726 = vmax.xlane.f32.xlu0 %v725
    %v727 = vpop.xlane.xlu0 %726
    %v728 = vsel %vm694, %v689, -inf
    %729 = vmax.xlane.f32.xlu0 %v728
    %v730 = vpop.xlane.xlu0 %729
    %v731 = vsel %vm694, %v690, -inf
    %732 = vmax.xlane.f32.xlu0 %v731
    %v733 = vpop.xlane.xlu0 %732
    %v734 = vsel %vm694, %v691, -inf
    %735 = vmax.xlane.f32.xlu0 %v734
    %v736 = vpop.xlane.xlu0 %735
    %v737 = vsel %vm694, %v692, -inf
    %738 = vmax.xlane.f32.xlu0 %v737
    %v739 = vpop.xlane.xlu0 %738
    %v740 = vsel %vm694, %v693, -inf
    %741 = vmax.xlane.f32.xlu0 %v740
    %v742 = vpop.xlane.xlu0 %741
    %v743 = vsub.f32 %v678, %v697
    %v744 = vsub.f32 %v679, %v700
    %v745 = vsub.f32 %v680, %v703
    %v746 = vsub.f32 %v681, %v706
    %v747 = vsub.f32 %v682, %v709
    %v748 = vsub.f32 %v683, %v712
    %v749 = vsub.f32 %v684, %v715
    %v750 = vsub.f32 %v685, %v718
    %v751 = vsub.f32 %v686, %v721
    %v752 = vsub.f32 %v687, %v724
    %v753 = vsub.f32 %v688, %v727
    %v754 = vsub.f32 %v689, %v730
    %v755 = vsub.f32 %v690, %v733
    %v756 = vsub.f32 %v691, %v736
    %v757 = vsub.f32 %v692, %v739
    %v758 = vsub.f32 %v693, %v742
    %v759 = vmul.f32 %v743, 1.442695
    %v760 = vpow.pop %v759
    %v761 = vmul.f32 %v744, 1.442695
    %v762 = vpow.pop %v761
    %v763 = vmul.f32 %v745, 1.442695
    %v764 = vpow.pop %v763
    %v765 = vmul.f32 %v746, 1.442695
    %v766 = vpow.pop %v765
    %v767 = vmul.f32 %v747, 1.442695
    %v768 = vpow.pop %v767
    %v769 = vmul.f32 %v748, 1.442695
    %v770 = vpow.pop %v769
    %v771 = vmul.f32 %v749, 1.442695
    %v772 = vpow.pop %v771
    %v773 = vmul.f32 %v750, 1.442695
    %v774 = vpow.pop %v773
    %v775 = vmul.f32 %v751, 1.442695
    %v776 = vpow.pop %v775
    %v777 = vmul.f32 %v752, 1.442695
    %v778 = vpow.pop %v777
    %v779 = vmul.f32 %v753, 1.442695
    %v780 = vpow.pop %v779
    %v781 = vmul.f32 %v754, 1.442695
    %v782 = vpow.pop %v781
    %v783 = vmul.f32 %v755, 1.442695
    %v784 = vpow.pop %v783
    %v785 = vmul.f32 %v756, 1.442695
    %v786 = vpow.pop %v785
    %v787 = vmul.f32 %v757, 1.442695
    %v788 = vpow.pop %v787
    %v789 = vmul.f32 %v758, 1.442695
    %v790 = vpow.pop %v789
    %v791 = vsel %vm694, %v760, 0.0
    %792 = vadd.xlane.f32.xlu0 %v791
    %v793 = vpop.xlane.xlu0 %792
    %v794 = vsel %vm694, %v762, 0.0
    %795 = vadd.xlane.f32.xlu0 %v794
    %v796 = vpop.xlane.xlu0 %795
    %v797 = vsel %vm694, %v764, 0.0
    %798 = vadd.xlane.f32.xlu0 %v797
    %v799 = vpop.xlane.xlu0 %798
    %v800 = vsel %vm694, %v766, 0.0
    %801 = vadd.xlane.f32.xlu0 %v800
    %v802 = vpop.xlane.xlu0 %801
    %v803 = vsel %vm694, %v768, 0.0
    %804 = vadd.xlane.f32.xlu0 %v803
    %v805 = vpop.xlane.xlu0 %804
    %v806 = vsel %vm694, %v770, 0.0
    %807 = vadd.xlane.f32.xlu0 %v806
    %v808 = vpop.xlane.xlu0 %807
    %v809 = vsel %vm694, %v772, 0.0
    %810 = vadd.xlane.f32.xlu0 %v809
    %v811 = vpop.xlane.xlu0 %810
    %v812 = vsel %vm694, %v774, 0.0
    %813 = vadd.xlane.f32.xlu0 %v812
    %v814 = vpop.xlane.xlu0 %813
    %v815 = vsel %vm694, %v776, 0.0
    %816 = vadd.xlane.f32.xlu0 %v815
    %v817 = vpop.xlane.xlu0 %816
    %v818 = vsel %vm694, %v778, 0.0
    %819 = vadd.xlane.f32.xlu0 %v818
    %v820 = vpop.xlane.xlu0 %819
    %v821 = vsel %vm694, %v780, 0.0
    %822 = vadd.xlane.f32.xlu0 %v821
    %v823 = vpop.xlane.xlu0 %822
    %v824 = vsel %vm694, %v782, 0.0
    %825 = vadd.xlane.f32.xlu0 %v824
    %v826 = vpop.xlane.xlu0 %825
    %v827 = vsel %vm694, %v784, 0.0
    %828 = vadd.xlane.f32.xlu0 %v827
    %v829 = vpop.xlane.xlu0 %828
    %v830 = vsel %vm694, %v786, 0.0
    %831 = vadd.xlane.f32.xlu0 %v830
    %v832 = vpop.xlane.xlu0 %831
    %v833 = vsel %vm694, %v788, 0.0
    %834 = vadd.xlane.f32.xlu0 %v833
    %v835 = vpop.xlane.xlu0 %834
    %v836 = vsel %vm694, %v790, 0.0
    %837 = vadd.xlane.f32.xlu0 %v836
    %v838 = vpop.xlane.xlu0 %837
    %v839 = vrcp.pop %v793
    %v840 = vrcp.pop %v796
    %v841 = vrcp.pop %v799
    %v842 = vrcp.pop %v802
    %v843 = vrcp.pop %v805
    %v844 = vrcp.pop %v808
    %v845 = vrcp.pop %v811
    %v846 = vrcp.pop %v814
    %v847 = vrcp.pop %v817
    %v848 = vrcp.pop %v820
    %v849 = vrcp.pop %v823
    %v850 = vrcp.pop %v826
    %v851 = vrcp.pop %v829
    %v852 = vrcp.pop %v832
    %v853 = vrcp.pop %v835
    %v854 = vrcp.pop %v838
    %v855 = vmul.f32 %v760, %v839
    %v856 = vmul.f32 %v762, %v840
    %v857 = vmul.f32 %v764, %v841
    %v858 = vmul.f32 %v766, %v842
    %v859 = vmul.f32 %v768, %v843
    %v860 = vmul.f32 %v770, %v844
    %v861 = vmul.f32 %v772, %v845
    %v862 = vmul.f32 %v774, %v846
    %v863 = vmul.f32 %v776, %v847
    %v864 = vmul.f32 %v778, %v848
    %v865 = vmul.f32 %v780, %v849
    %v866 = vmul.f32 %v782, %v850
    %v867 = vmul.f32 %v784, %v851
    %v868 = vmul.f32 %v786, %v852
    %v869 = vmul.f32 %v788, %v853
    %v870 = vmul.f32 %v790, %v854
    %v871 = vpack.c.bf16 %v856, %v855
    %v872 = vpack.c.bf16 %v858, %v857
    %v873 = vpack.c.bf16 %v860, %v859
    %v874 = vpack.c.bf16 %v862, %v861
    %v875 = vpack.c.bf16 %v864, %v863
    %v876 = vpack.c.bf16 %v866, %v865
    %v877 = vpack.c.bf16 %v868, %v867
    %v878 = vpack.c.bf16 %v870, %v869
    %879 = vrot.lane.b32.xlu0 %v267, 64
    %v880 = vpop.permute.xlu0 %879
    %v883 = vsel %vm694, %v871, 0
    %885 = vmatprep.subr.bf16.mxu0 0
    %886 = vmatpush1.bf16.msra.mxu0 %v880
    %887 = vmatprep.subr.bf16.mxu0 0
    %888 = vmatpush1.bf16.msra.mxu0 0
    %889 = vmatprep.subr.bf16.mxu0 0
    %890 = vmatpush1.bf16.msra.mxu0 0
    %891 = vmatprep.subr.bf16.mxu0 0
    %892 = vmatpush1.bf16.msra.mxu0 0
    %893 = vmatprep.subr.bf16.mxu0 0
    %894 = vmatpush1.bf16.msra.mxu0 0
    %895 = vmatprep.subr.bf16.mxu0 0
    %896 = vmatpush1.bf16.msra.mxu0 0
    %897 = vmatprep.subr.bf16.mxu0 0
    %898 = vmatpush1.bf16.msra.mxu0 0
    %899 = vmatprep.subr.bf16.mxu0 0
    %900 = vmatpush1.bf16.msra.mxu0 0
    %901 = vmatprep.subr.bf16.mxu0 0
    %902 = vmatpush1.bf16.msra.mxu0 0
    %903 = vmatprep.subr.bf16.mxu0 0
    %904 = vmatpush1.bf16.msra.mxu0 0
    %905 = vmatprep.subr.bf16.mxu0 0
    %906 = vmatpush1.bf16.msra.mxu0 0
    %907 = vmatprep.subr.bf16.mxu0 0
    %908 = vmatpush1.bf16.msra.mxu0 0
    %909 = vmatprep.subr.bf16.mxu0 0
    %910 = vmatpush1.bf16.msra.mxu0 0
    %911 = vmatprep.subr.bf16.mxu0 0
    %912 = vmatpush1.bf16.msra.mxu0 0
    %913 = vmatprep.subr.bf16.mxu0 0
    %914 = vmatpush1.bf16.msra.mxu0 0
    %915 = vmatprep.subr.bf16.mxu0 0
    %916 = vmatpush1.bf16.msra.mxu0 0
    %917 = vmatprep.mubr.bf16.mxu0 0
    %918 = vmatmul.mubr.bf16.gmra.mrb[0].mxu0 %v883
    %v919 = vpop.f32.mrb[0].mxu0
    %v920 = vadd.f32 0.0, %v919
    %v921 = vpop.f32.mrb[0].mxu0
    %v922 = vpop.f32.mrb[0].mxu0
    %v923 = vadd.f32 0.0, %v922
    %v924 = vpop.f32.mrb[0].mxu0
    %925 = vdwg.mxu0
    %926 = vrot.lane.b32.xlu0 %v268, 64
    %v927 = vpop.permute.xlu0 %926
    %v930 = vsel %vm694, %v872, 0
    %932 = vmatprep.subr.bf16.mxu0 0
    %933 = vmatpush1.bf16.msra.mxu0 %v927
    %934 = vmatprep.subr.bf16.mxu0 0
    %935 = vmatpush1.bf16.msra.mxu0 0
    %936 = vmatprep.subr.bf16.mxu0 0
    %937 = vmatpush1.bf16.msra.mxu0 0
    %938 = vmatprep.subr.bf16.mxu0 0
    %939 = vmatpush1.bf16.msra.mxu0 0
    %940 = vmatprep.subr.bf16.mxu0 0
    %941 = vmatpush1.bf16.msra.mxu0 0
    %942 = vmatprep.subr.bf16.mxu0 0
    %943 = vmatpush1.bf16.msra.mxu0 0
    %944 = vmatprep.subr.bf16.mxu0 0
    %945 = vmatpush1.bf16.msra.mxu0 0
    %946 = vmatprep.subr.bf16.mxu0 0
    %947 = vmatpush1.bf16.msra.mxu0 0
    %948 = vmatprep.subr.bf16.mxu0 0
    %949 = vmatpush1.bf16.msra.mxu0 0
    %950 = vmatprep.subr.bf16.mxu0 0
    %951 = vmatpush1.bf16.msra.mxu0 0
    %952 = vmatprep.subr.bf16.mxu0 0
    %953 = vmatpush1.bf16.msra.mxu0 0
    %954 = vmatprep.subr.bf16.mxu0 0
    %955 = vmatpush1.bf16.msra.mxu0 0
    %956 = vmatprep.subr.bf16.mxu0 0
    %957 = vmatpush1.bf16.msra.mxu0 0
    %958 = vmatprep.subr.bf16.mxu0 0
    %959 = vmatpush1.bf16.msra.mxu0 0
    %960 = vmatprep.subr.bf16.mxu0 0
    %961 = vmatpush1.bf16.msra.mxu0 0
    %962 = vmatprep.subr.bf16.mxu0 0
    %963 = vmatpush1.bf16.msra.mxu0 0
    %964 = vmatprep.mubr.bf16.mxu0 0
    %965 = vmatmul.mubr.bf16.gmra.mrb[0].mxu0 %v930
    %v966 = vpop.f32.mrb[0].mxu0
    %v967 = vadd.f32 0.0, %v966
    %v968 = vpop.f32.mrb[0].mxu0
    %v969 = vpop.f32.mrb[0].mxu0
    %v970 = vadd.f32 0.0, %v969
    %v971 = vpop.f32.mrb[0].mxu0
    %972 = vdwg.mxu0
    %973 = vrot.lane.b32.xlu0 %v269, 64
    %v974 = vpop.permute.xlu0 %973
    %v977 = vsel %vm694, %v873, 0
    %979 = vmatprep.subr.bf16.mxu0 0
    %980 = vmatpush1.bf16.msra.mxu0 %v974
    %981 = vmatprep.subr.bf16.mxu0 0
    %982 = vmatpush1.bf16.msra.mxu0 0
    %983 = vmatprep.subr.bf16.mxu0 0
    %984 = vmatpush1.bf16.msra.mxu0 0
    %985 = vmatprep.subr.bf16.mxu0 0
    %986 = vmatpush1.bf16.msra.mxu0 0
    %987 = vmatprep.subr.bf16.mxu0 0
    %988 = vmatpush1.bf16.msra.mxu0 0
    %989 = vmatprep.subr.bf16.mxu0 0
    %990 = vmatpush1.bf16.msra.mxu0 0
    %991 = vmatprep.subr.bf16.mxu0 0
    %992 = vmatpush1.bf16.msra.mxu0 0
    %993 = vmatprep.subr.bf16.mxu0 0
    %994 = vmatpush1.bf16.msra.mxu0 0
    %995 = vmatprep.subr.bf16.mxu0 0
    %996 = vmatpush1.bf16.msra.mxu0 0
    %997 = vmatprep.subr.bf16.mxu0 0
    %998 = vmatpush1.bf16.msra.mxu0 0
    %999 = vmatprep.subr.bf16.mxu0 0
    %1000 = vmatpush1.bf16.msra.mxu0 0
    %1001 = vmatprep.subr.bf16.mxu0 0
    %1002 = vmatpush1.bf16.msra.mxu0 0
    %1003 = vmatprep.subr.bf16.mxu0 0
    %1004 = vmatpush1.bf16.msra.mxu0 0
    %1005 = vmatprep.subr.bf16.mxu0 0
    %1006 = vmatpush1.bf16.msra.mxu0 0
    %1007 = vmatprep.subr.bf16.mxu0 0
    %1008 = vmatpush1.bf16.msra.mxu0 0
    %1009 = vmatprep.subr.bf16.mxu0 0
    %1010 = vmatpush1.bf16.msra.mxu0 0
    %1011 = vmatprep.mubr.bf16.mxu0 0
    %1012 = vmatmul.mubr.bf16.gmra.mrb[0].mxu0 %v977
    %v1013 = vpop.f32.mrb[0].mxu0
    %v1014 = vadd.f32 0.0, %v1013
    %v1015 = vpop.f32.mrb[0].mxu0
    %v1016 = vpop.f32.mrb[0].mxu0
    %v1017 = vadd.f32 0.0, %v1016
    %v1018 = vpop.f32.mrb[0].mxu0
    %1019 = vdwg.mxu0
    %1020 = vrot.lane.b32.xlu0 %v270, 64
    %v1021 = vpop.permute.xlu0 %1020
    %v1024 = vsel %vm694, %v874, 0
    %1026 = vmatprep.subr.bf16.mxu0 0
    %1027 = vmatpush1.bf16.msra.mxu0 %v1021
    %1028 = vmatprep.subr.bf16.mxu0 0
    %1029 = vmatpush1.bf16.msra.mxu0 0
    %1030 = vmatprep.subr.bf16.mxu0 0
    %1031 = vmatpush1.bf16.msra.mxu0 0
    %1032 = vmatprep.subr.bf16.mxu0 0
    %1033 = vmatpush1.bf16.msra.mxu0 0
    %1034 = vmatprep.subr.bf16.mxu0 0
    %1035 = vmatpush1.bf16.msra.mxu0 0
    %1036 = vmatprep.subr.bf16.mxu0 0
    %1037 = vmatpush1.bf16.msra.mxu0 0
    %1038 = vmatprep.subr.bf16.mxu0 0
    %1039 = vmatpush1.bf16.msra.mxu0 0
    %1040 = vmatprep.subr.bf16.mxu0 0
    %1041 = vmatpush1.bf16.msra.mxu0 0
    %1042 = vmatprep.subr.bf16.mxu0 0
    %1043 = vmatpush1.bf16.msra.mxu0 0
    %1044 = vmatprep.subr.bf16.mxu0 0
    %1045 = vmatpush1.bf16.msra.mxu0 0
    %1046 = vmatprep.subr.bf16.mxu0 0
    %1047 = vmatpush1.bf16.msra.mxu0 0
    %1048 = vmatprep.subr.bf16.mxu0 0
    %1049 = vmatpush1.bf16.msra.mxu0 0
    %1050 = vmatprep.subr.bf16.mxu0 0
    %1051 = vmatpush1.bf16.msra.mxu0 0
    %1052 = vmatprep.subr.bf16.mxu0 0
    %1053 = vmatpush1.bf16.msra.mxu0 0
    %1054 = vmatprep.subr.bf16.mxu0 0
    %1055 = vmatpush1.bf16.msra.mxu0 0
    %1056 = vmatprep.subr.bf16.mxu0 0
    %1057 = vmatpush1.bf16.msra.mxu0 0
    %1058 = vmatprep.mubr.bf16.mxu0 0
    %1059 = vmatmul.mubr.bf16.gmra.mrb[0].mxu0 %v1024
    %v1060 = vpop.f32.mrb[0].mxu0
    %v1061 = vadd.f32 0.0, %v1060
    %v1062 = vpop.f32.mrb[0].mxu0
    %v1063 = vpop.f32.mrb[0].mxu0
    %v1064 = vadd.f32 0.0, %v1063
    %v1065 = vpop.f32.mrb[0].mxu0
    %1066 = vdwg.mxu0
    %1067 = vrot.lane.b32.xlu0 %v271, 64
    %v1068 = vpop.permute.xlu0 %1067
    %v1071 = vsel %vm694, %v875, 0
    %1073 = vmatprep.subr.bf16.mxu0 0
    %1074 = vmatpush1.bf16.msra.mxu0 %v1068
    %1075 = vmatprep.subr.bf16.mxu0 0
    %1076 = vmatpush1.bf16.msra.mxu0 0
    %1077 = vmatprep.subr.bf16.mxu0 0
    %1078 = vmatpush1.bf16.msra.mxu0 0
    %1079 = vmatprep.subr.bf16.mxu0 0
    %1080 = vmatpush1.bf16.msra.mxu0 0
    %1081 = vmatprep.subr.bf16.mxu0 0
    %1082 = vmatpush1.bf16.msra.mxu0 0
    %1083 = vmatprep.subr.bf16.mxu0 0
    %1084 = vmatpush1.bf16.msra.mxu0 0
    %1085 = vmatprep.subr.bf16.mxu0 0
    %1086 = vmatpush1.bf16.msra.mxu0 0
    %1087 = vmatprep.subr.bf16.mxu0 0
    %1088 = vmatpush1.bf16.msra.mxu0 0
    %1089 = vmatprep.subr.bf16.mxu0 0
    %1090 = vmatpush1.bf16.msra.mxu0 0
    %1091 = vmatprep.subr.bf16.mxu0 0
    %1092 = vmatpush1.bf16.msra.mxu0 0
    %1093 = vmatprep.subr.bf16.mxu0 0
    %1094 = vmatpush1.bf16.msra.mxu0 0
    %1095 = vmatprep.subr.bf16.mxu0 0
    %1096 = vmatpush1.bf16.msra.mxu0 0
    %1097 = vmatprep.subr.bf16.mxu0 0
    %1098 = vmatpush1.bf16.msra.mxu0 0
    %1099 = vmatprep.subr.bf16.mxu0 0
    %1100 = vmatpush1.bf16.msra.mxu0 0
    %1101 = vmatprep.subr.bf16.mxu0 0
    %1102 = vmatpush1.bf16.msra.mxu0 0
    %1103 = vmatprep.subr.bf16.mxu0 0
    %1104 = vmatpush1.bf16.msra.mxu0 0
    %1105 = vmatprep.mubr.bf16.mxu0 0
    %1106 = vmatmul.mubr.bf16.gmra.mrb[0].mxu0 %v1071
    %v1107 = vpop.f32.mrb[0].mxu0
    %v1108 = vadd.f32 0.0, %v1107
    %v1109 = vpop.f32.mrb[0].mxu0
    %v1110 = vpop.f32.mrb[0].mxu0
    %v1111 = vadd.f32 0.0, %v1110
    %v1112 = vpop.f32.mrb[0].mxu0
    %1113 = vdwg.mxu0
    %1114 = vrot.lane.b32.xlu0 %v272, 64
    %v1115 = vpop.permute.xlu0 %1114
    %v1118 = vsel %vm694, %v876, 0
    %1120 = vmatprep.subr.bf16.mxu0 0
    %1121 = vmatpush1.bf16.msra.mxu0 %v1115
    %1122 = vmatprep.subr.bf16.mxu0 0
    %1123 = vmatpush1.bf16.msra.mxu0 0
    %1124 = vmatprep.subr.bf16.mxu0 0
    %1125 = vmatpush1.bf16.msra.mxu0 0
    %1126 = vmatprep.subr.bf16.mxu0 0
    %1127 = vmatpush1.bf16.msra.mxu0 0
    %1128 = vmatprep.subr.bf16.mxu0 0
    %1129 = vmatpush1.bf16.msra.mxu0 0
    %1130 = vmatprep.subr.bf16.mxu0 0
    %1131 = vmatpush1.bf16.msra.mxu0 0
    %1132 = vmatprep.subr.bf16.mxu0 0
    %1133 = vmatpush1.bf16.msra.mxu0 0
    %1134 = vmatprep.subr.bf16.mxu0 0
    %1135 = vmatpush1.bf16.msra.mxu0 0
    %1136 = vmatprep.subr.bf16.mxu0 0
    %1137 = vmatpush1.bf16.msra.mxu0 0
    %1138 = vmatprep.subr.bf16.mxu0 0
    %1139 = vmatpush1.bf16.msra.mxu0 0
    %1140 = vmatprep.subr.bf16.mxu0 0
    %1141 = vmatpush1.bf16.msra.mxu0 0
    %1142 = vmatprep.subr.bf16.mxu0 0
    %1143 = vmatpush1.bf16.msra.mxu0 0
    %1144 = vmatprep.subr.bf16.mxu0 0
    %1145 = vmatpush1.bf16.msra.mxu0 0
    %1146 = vmatprep.subr.bf16.mxu0 0
    %1147 = vmatpush1.bf16.msra.mxu0 0
    %1148 = vmatprep.subr.bf16.mxu0 0
    %1149 = vmatpush1.bf16.msra.mxu0 0
    %1150 = vmatprep.subr.bf16.mxu0 0
    %1151 = vmatpush1.bf16.msra.mxu0 0
    %1152 = vmatprep.mubr.bf16.mxu0 0
    %1153 = vmatmul.mubr.bf16.gmra.mrb[0].mxu0 %v1118
    %v1154 = vpop.f32.mrb[0].mxu0
    %v1155 = vadd.f32 0.0, %v1154
    %v1156 = vpop.f32.mrb[0].mxu0
    %v1157 = vpop.f32.mrb[0].mxu0
    %v1158 = vadd.f32 0.0, %v1157
    %v1159 = vpop.f32.mrb[0].mxu0
    %1160 = vdwg.mxu0
    %1161 = vrot.lane.b32.xlu0 %v273, 64
    %v1162 = vpop.permute.xlu0 %1161
    %v1165 = vsel %vm694, %v877, 0
    %1167 = vmatprep.subr.bf16.mxu0 0
    %1168 = vmatpush1.bf16.msra.mxu0 %v1162
    %1169 = vmatprep.subr.bf16.mxu0 0
    %1170 = vmatpush1.bf16.msra.mxu0 0
    %1171 = vmatprep.subr.bf16.mxu0 0
    %1172 = vmatpush1.bf16.msra.mxu0 0
    %1173 = vmatprep.subr.bf16.mxu0 0
    %1174 = vmatpush1.bf16.msra.mxu0 0
    %1175 = vmatprep.subr.bf16.mxu0 0
    %1176 = vmatpush1.bf16.msra.mxu0 0
    %1177 = vmatprep.subr.bf16.mxu0 0
    %1178 = vmatpush1.bf16.msra.mxu0 0
    %1179 = vmatprep.subr.bf16.mxu0 0
    %1180 = vmatpush1.bf16.msra.mxu0 0
    %1181 = vmatprep.subr.bf16.mxu0 0
    %1182 = vmatpush1.bf16.msra.mxu0 0
    %1183 = vmatprep.subr.bf16.mxu0 0
    %1184 = vmatpush1.bf16.msra.mxu0 0
    %1185 = vmatprep.subr.bf16.mxu0 0
    %1186 = vmatpush1.bf16.msra.mxu0 0
    %1187 = vmatprep.subr.bf16.mxu0 0
    %1188 = vmatpush1.bf16.msra.mxu0 0
    %1189 = vmatprep.subr.bf16.mxu0 0
    %1190 = vmatpush1.bf16.msra.mxu0 0
    %1191 = vmatprep.subr.bf16.mxu0 0
    %1192 = vmatpush1.bf16.msra.mxu0 0
    %1193 = vmatprep.subr.bf16.mxu0 0
    %1194 = vmatpush1.bf16.msra.mxu0 0
    %1195 = vmatprep.subr.bf16.mxu0 0
    %1196 = vmatpush1.bf16.msra.mxu0 0
    %1197 = vmatprep.subr.bf16.mxu0 0
    %1198 = vmatpush1.bf16.msra.mxu0 0
    %1199 = vmatprep.mubr.bf16.mxu0 0
    %1200 = vmatmul.mubr.bf16.gmra.mrb[0].mxu0 %v1165
    %v1201 = vpop.f32.mrb[0].mxu0
    %v1202 = vadd.f32 0.0, %v1201
    %v1203 = vpop.f32.mrb[0].mxu0
    %v1204 = vpop.f32.mrb[0].mxu0
    %v1205 = vadd.f32 0.0, %v1204
    %v1206 = vpop.f32.mrb[0].mxu0
    %1207 = vdwg.mxu0
    %1208 = vrot.lane.b32.xlu0 %v274, 64
    %v1209 = vpop.permute.xlu0 %1208
    %v1212 = vsel %vm694, %v878, 0
    %1214 = vmatprep.subr.bf16.mxu0 0
    %1215 = vmatpush1.bf16.msra.mxu0 %v1209
    %1216 = vmatprep.subr.bf16.mxu0 0
    %1217 = vmatpush1.bf16.msra.mxu0 0
    %1218 = vmatprep.subr.bf16.mxu0 0
    %1219 = vmatpush1.bf16.msra.mxu0 0
    %1220 = vmatprep.subr.bf16.mxu0 0
    %1221 = vmatpush1.bf16.msra.mxu0 0
    %1222 = vmatprep.subr.bf16.mxu0 0
    %1223 = vmatpush1.bf16.msra.mxu0 0
    %1224 = vmatprep.subr.bf16.mxu0 0
    %1225 = vmatpush1.bf16.msra.mxu0 0
    %1226 = vmatprep.subr.bf16.mxu0 0
    %1227 = vmatpush1.bf16.msra.mxu0 0
    %1228 = vmatprep.subr.bf16.mxu0 0
    %1229 = vmatpush1.bf16.msra.mxu0 0
    %1230 = vmatprep.subr.bf16.mxu0 0
    %1231 = vmatpush1.bf16.msra.mxu0 0
    %1232 = vmatprep.subr.bf16.mxu0 0
    %1233 = vmatpush1.bf16.msra.mxu0 0
    %1234 = vmatprep.subr.bf16.mxu0 0
    %1235 = vmatpush1.bf16.msra.mxu0 0
    %1236 = vmatprep.subr.bf16.mxu0 0
    %1237 = vmatpush1.bf16.msra.mxu0 0
    %1238 = vmatprep.subr.bf16.mxu0 0
    %1239 = vmatpush1.bf16.msra.mxu0 0
    %1240 = vmatprep.subr.bf16.mxu0 0
    %1241 = vmatpush1.bf16.msra.mxu0 0
    %1242 = vmatprep.subr.bf16.mxu0 0
    %1243 = vmatpush1.bf16.msra.mxu0 0
    %1244 = vmatprep.subr.bf16.mxu0 0
    %1245 = vmatpush1.bf16.msra.mxu0 0
    %1246 = vmatprep.mubr.bf16.mxu0 0
    %1247 = vmatmul.mubr.bf16.gmra.mrb[0].mxu0 %v1212
    %v1248 = vpop.f32.mrb[0].mxu0
    %v1249 = vadd.f32 0.0, %v1248
    %v1250 = vpop.f32.mrb[0].mxu0
    %v1251 = vpop.f32.mrb[0].mxu0
    %v1252 = vadd.f32 0.0, %v1251
    %v1253 = vpop.f32.mrb[0].mxu0
    %1254 = vdwg.mxu0
    %v1255 = vld [vmem:[#allocation2] sm:$0xff]
    %v1256 = vld [vmem:[#allocation2 + $0x8] sm:$0xff]
    %v1257 = vld [vmem:[#allocation2 + $0x10] sm:$0xff]
    %v1258 = vld [vmem:[#allocation2 + $0x18] sm:$0xff]
    %v1259 = vld [vmem:[#allocation2 + $0x20] sm:$0xff]
    %v1260 = vld [vmem:[#allocation2 + $0x28] sm:$0xff]
    %v1261 = vld [vmem:[#allocation2 + $0x30] sm:$0xff]
    %v1262 = vld [vmem:[#allocation2 + $0x38] sm:$0xff]
    %s1263 = scalar_lea.vmem %s3, 16
    %v1264 = vld [vmem:[%s1263] sm:$0xff]
    %v1265 = vld [vmem:[%s1263 + $0x8] sm:$0xff]
    %1267 = vrot.lane.b32.xlu0 %v1255, 120
    %v1268 = vpop.permute.xlu0 %1267
    %1269 = vrot.lane.b32.xlu0 %v1255, 88
    %v1270 = vpop.permute.xlu0 %1269
    %v1272 = vsel %vm280, %v1268, 0
    %v1275 = vsel %vm280, %v1270, 0
    %1277 = vmatprep.subr.bf16.mxu0 0
    %1278 = vmatpush1.bf16.xpose.msra.mxu0 %v1275
    %1279 = vmatprep.subr.bf16.mxu0 0
    %1280 = vmatpush1.bf16.xpose.msra.mxu0 0
    %1281 = vmatprep.subr.bf16.mxu0 0
    %1282 = vmatpush1.bf16.xpose.msra.mxu0 0
    %1283 = vmatprep.subr.bf16.mxu0 0
    %1284 = vmatpush1.bf16.xpose.msra.mxu0 0
    %1285 = vmatprep.subr.bf16.mxu0 0
    %1286 = vmatpush1.bf16.xpose.msra.mxu0 0
    %1287 = vmatprep.subr.bf16.mxu0 0
    %1288 = vmatpush1.bf16.xpose.msra.mxu0 0
    %1289 = vmatprep.subr.bf16.mxu0 0
    %1290 = vmatpush1.bf16.xpose.msra.mxu0 0
    %1291 = vmatprep.subr.bf16.mxu0 0
    %1292 = vmatpush1.bf16.xpose.msra.mxu0 0
    %1293 = vmatprep.subr.bf16.mxu0 0
    %1294 = vmatpush1.bf16.xpose.msra.mxu0 0
    %1295 = vmatprep.subr.bf16.mxu0 0
    %1296 = vmatpush1.bf16.xpose.msra.mxu0 0
    %1297 = vmatprep.subr.bf16.mxu0 0
    %1298 = vmatpush1.bf16.xpose.msra.mxu0 0
    %1299 = vmatprep.subr.bf16.mxu0 0
    %1300 = vmatpush1.bf16.xpose.msra.mxu0 0
    %1301 = vmatprep.subr.bf16.mxu0 0
    %1302 = vmatpush1.bf16.xpose.msra.mxu0 0
    %1303 = vmatprep.subr.bf16.mxu0 0
    %1304 = vmatpush1.bf16.xpose.msra.mxu0 0
    %1305 = vmatprep.subr.bf16.mxu0 0
    %1306 = vmatpush1.bf16.xpose.msra.mxu0 0
    %1307 = vmatprep.subr.bf16.mxu0 0
    %1308 = vmatpush1.bf16.xpose.msra.mxu0 0
    %1309 = vmatprep.mubr.bf16.mxu0 0
    %1310 = vmatmul.mubr.bf16.gmra.mrb[0].mxu0 %v1272
    %v1311 = vpop.f32.mrb[0].mxu0
    %v1312 = vadd.f32 %v1264, %v1311
    %v1313 = vpop.f32.mrb[0].mxu0
    %v1314 = vpop.f32.mrb[0].mxu0
    %v1315 = vadd.f32 %v1265, %v1314
    %v1316 = vpop.f32.mrb[0].mxu0
    %1317 = vdwg.mxu0
    %1319 = vrot.lane.b32.xlu0 %v1256, 120
    %v1320 = vpop.permute.xlu0 %1319
    %1321 = vrot.lane.b32.xlu0 %v1256, 88
    %v1322 = vpop.permute.xlu0 %1321
    %v1324 = vsel %vm280, %v1320, 0
    %v1327 = vsel %vm280, %v1322, 0
    %1329 = vmatprep.subr.bf16.mxu0 0
    %1330 = vmatpush1.bf16.xpose.msra.mxu0 %v1327
    %1331 = vmatprep.subr.bf16.mxu0 0
    %1332 = vmatpush1.bf16.xpose.msra.mxu0 0
    %1333 = vmatprep.subr.bf16.mxu0 0
    %1334 = vmatpush1.bf16.xpose.msra.mxu0 0
    %1335 = vmatprep.subr.bf16.mxu0 0
    %1336 = vmatpush1.bf16.xpose.msra.mxu0 0
    %1337 = vmatprep.subr.bf16.mxu0 0
    %1338 = vmatpush1.bf16.xpose.msra.mxu0 0
    %1339 = vmatprep.subr.bf16.mxu0 0
    %1340 = vmatpush1.bf16.xpose.msra.mxu0 0
    %1341 = vmatprep.subr.bf16.mxu0 0
    %1342 = vmatpush1.bf16.xpose.msra.mxu0 0
    %1343 = vmatprep.subr.bf16.mxu0 0
    %1344 = vmatpush1.bf16.xpose.msra.mxu0 0
    %1345 = vmatprep.subr.bf16.mxu0 0
    %1346 = vmatpush1.bf16.xpose.msra.mxu0 0
    %1347 = vmatprep.subr.bf16.mxu0 0
    %1348 = vmatpush1.bf16.xpose.msra.mxu0 0
    %1349 = vmatprep.subr.bf16.mxu0 0
    %1350 = vmatpush1.bf16.xpose.msra.mxu0 0
    %1351 = vmatprep.subr.bf16.mxu0 0
    %1352 = vmatpush1.bf16.xpose.msra.mxu0 0
    %1353 = vmatprep.subr.bf16.mxu0 0
    %1354 = vmatpush1.bf16.xpose.msra.mxu0 0
    %1355 = vmatprep.subr.bf16.mxu0 0
    %1356 = vmatpush1.bf16.xpose.msra.mxu0 0
    %1357 = vmatprep.subr.bf16.mxu0 0
    %1358 = vmatpush1.bf16.xpose.msra.mxu0 0
    %1359 = vmatprep.subr.bf16.mxu0 0
    %1360 = vmatpush1.bf16.xpose.msra.mxu0 0
    %1361 = vmatprep.mubr.bf16.mxu0 0
    %1362 = vmatmul.mubr.bf16.gmra.mrb[0].mxu0 %v1324
    %v1363 = vpop.f32.mrb[0].mxu0
    %v1364 = vadd.f32 %v1264, %v1363
    %v1365 = vpop.f32.mrb[0].mxu0
    %v1366 = vpop.f32.mrb[0].mxu0
    %v1367 = vadd.f32 %v1265, %v1366
    %v1368 = vpop.f32.mrb[0].mxu0
    %1369 = vdwg.mxu0
    %1371 = vrot.lane.b32.xlu0 %v1257, 120
    %v1372 = vpop.permute.xlu0 %1371
    %1373 = vrot.lane.b32.xlu0 %v1257, 88
    %v1374 = vpop.permute.xlu0 %1373
    %v1376 = vsel %vm280, %v1372, 0
    %v1379 = vsel %vm280, %v1374, 0
    %1381 = vmatprep.subr.bf16.mxu0 0
    %1382 = vmatpush1.bf16.xpose.msra.mxu0 %v1379
    %1383 = vmatprep.subr.bf16.mxu0 0
    %1384 = vmatpush1.bf16.xpose.msra.mxu0 0
    %1385 = vmatprep.subr.bf16.mxu0 0
    %1386 = vmatpush1.bf16.xpose.msra.mxu0 0
    %1387 = vmatprep.subr.bf16.mxu0 0
    %1388 = vmatpush1.bf16.xpose.msra.mxu0 0
    %1389 = vmatprep.subr.bf16.mxu0 0
    %1390 = vmatpush1.bf16.xpose.msra.mxu0 0
    %1391 = vmatprep.subr.bf16.mxu0 0
    %1392 = vmatpush1.bf16.xpose.msra.mxu0 0
    %1393 = vmatprep.subr.bf16.mxu0 0
    %1394 = vmatpush1.bf16.xpose.msra.mxu0 0
    %1395 = vmatprep.subr.bf16.mxu0 0
    %1396 = vmatpush1.bf16.xpose.msra.mxu0 0
    %1397 = vmatprep.subr.bf16.mxu0 0
    %1398 = vmatpush1.bf16.xpose.msra.mxu0 0
    %1399 = vmatprep.subr.bf16.mxu0 0
    %1400 = vmatpush1.bf16.xpose.msra.mxu0 0
    %1401 = vmatprep.subr.bf16.mxu0 0
    %1402 = vmatpush1.bf16.xpose.msra.mxu0 0
    %1403 = vmatprep.subr.bf16.mxu0 0
    %1404 = vmatpush1.bf16.xpose.msra.mxu0 0
    %1405 = vmatprep.subr.bf16.mxu0 0
    %1406 = vmatpush1.bf16.xpose.msra.mxu0 0
    %1407 = vmatprep.subr.bf16.mxu0 0
    %1408 = vmatpush1.bf16.xpose.msra.mxu0 0
    %1409 = vmatprep.subr.bf16.mxu0 0
    %1410 = vmatpush1.bf16.xpose.msra.mxu0 0
    %1411 = vmatprep.subr.bf16.mxu0 0
    %1412 = vmatpush1.bf16.xpose.msra.mxu0 0
    %1413 = vmatprep.mubr.bf16.mxu0 0
    %1414 = vmatmul.mubr.bf16.gmra.mrb[0].mxu0 %v1376
    %v1415 = vpop.f32.mrb[0].mxu0
    %v1416 = vadd.f32 %v1264, %v1415
    %v1417 = vpop.f32.mrb[0].mxu0
    %v1418 = vpop.f32.mrb[0].mxu0
    %v1419 = vadd.f32 %v1265, %v1418
    %v1420 = vpop.f32.mrb[0].mxu0
    %1421 = vdwg.mxu0
    %1423 = vrot.lane.b32.xlu0 %v1258, 120
    %v1424 = vpop.permute.xlu0 %1423
    %1425 = vrot.lane.b32.xlu0 %v1258, 88
    %v1426 = vpop.permute.xlu0 %1425
    %v1428 = vsel %vm280, %v1424, 0
    %v1431 = vsel %vm280, %v1426, 0
    %1433 = vmatprep.subr.bf16.mxu0 0
    %1434 = vmatpush1.bf16.xpose.msra.mxu0 %v1431
    %1435 = vmatprep.subr.bf16.mxu0 0
    %1436 = vmatpush1.bf16.xpose.msra.mxu0 0
    %1437 = vmatprep.subr.bf16.mxu0 0
    %1438 = vmatpush1.bf16.xpose.msra.mxu0 0
    %1439 = vmatprep.subr.bf16.mxu0 0
    %1440 = vmatpush1.bf16.xpose.msra.mxu0 0
    %1441 = vmatprep.subr.bf16.mxu0 0
    %1442 = vmatpush1.bf16.xpose.msra.mxu0 0
    %1443 = vmatprep.subr.bf16.mxu0 0
    %1444 = vmatpush1.bf16.xpose.msra.mxu0 0
    %1445 = vmatprep.subr.bf16.mxu0 0
    %1446 = vmatpush1.bf16.xpose.msra.mxu0 0
    %1447 = vmatprep.subr.bf16.mxu0 0
    %1448 = vmatpush1.bf16.xpose.msra.mxu0 0
    %1449 = vmatprep.subr.bf16.mxu0 0
    %1450 = vmatpush1.bf16.xpose.msra.mxu0 0
    %1451 = vmatprep.subr.bf16.mxu0 0
    %1452 = vmatpush1.bf16.xpose.msra.mxu0 0
    %1453 = vmatprep.subr.bf16.mxu0 0
    %1454 = vmatpush1.bf16.xpose.msra.mxu0 0
    %1455 = vmatprep.subr.bf16.mxu0 0
    %1456 = vmatpush1.bf16.xpose.msra.mxu0 0
    %1457 = vmatprep.subr.bf16.mxu0 0
    %1458 = vmatpush1.bf16.xpose.msra.mxu0 0
    %1459 = vmatprep.subr.bf16.mxu0 0
    %1460 = vmatpush1.bf16.xpose.msra.mxu0 0
    %1461 = vmatprep.subr.bf16.mxu0 0
    %1462 = vmatpush1.bf16.xpose.msra.mxu0 0
    %1463 = vmatprep.subr.bf16.mxu0 0
    %1464 = vmatpush1.bf16.xpose.msra.mxu0 0
    %1465 = vmatprep.mubr.bf16.mxu0 0
    %1466 = vmatmul.mubr.bf16.gmra.mrb[0].mxu0 %v1428
    %v1467 = vpop.f32.mrb[0].mxu0
    %v1468 = vadd.f32 %v1264, %v1467
    %v1469 = vpop.f32.mrb[0].mxu0
    %v1470 = vpop.f32.mrb[0].mxu0
    %v1471 = vadd.f32 %v1265, %v1470
    %v1472 = vpop.f32.mrb[0].mxu0
    %1473 = vdwg.mxu0
    %1475 = vrot.lane.b32.xlu0 %v1259, 120
    %v1476 = vpop.permute.xlu0 %1475
    %1477 = vrot.lane.b32.xlu0 %v1259, 88
    %v1478 = vpop.permute.xlu0 %1477
    %v1480 = vsel %vm280, %v1476, 0
    %v1483 = vsel %vm280, %v1478, 0
    %1485 = vmatprep.subr.bf16.mxu0 0
    %1486 = vmatpush1.bf16.xpose.msra.mxu0 %v1483
    %1487 = vmatprep.subr.bf16.mxu0 0
    %1488 = vmatpush1.bf16.xpose.msra.mxu0 0
    %1489 = vmatprep.subr.bf16.mxu0 0
    %1490 = vmatpush1.bf16.xpose.msra.mxu0 0
    %1491 = vmatprep.subr.bf16.mxu0 0
    %1492 = vmatpush1.bf16.xpose.msra.mxu0 0
    %1493 = vmatprep.subr.bf16.mxu0 0
    %1494 = vmatpush1.bf16.xpose.msra.mxu0 0
    %1495 = vmatprep.subr.bf16.mxu0 0
    %1496 = vmatpush1.bf16.xpose.msra.mxu0 0
    %1497 = vmatprep.subr.bf16.mxu0 0
    %1498 = vmatpush1.bf16.xpose.msra.mxu0 0
    %1499 = vmatprep.subr.bf16.mxu0 0
    %1500 = vmatpush1.bf16.xpose.msra.mxu0 0
    %1501 = vmatprep.subr.bf16.mxu0 0
    %1502 = vmatpush1.bf16.xpose.msra.mxu0 0
    %1503 = vmatprep.subr.bf16.mxu0 0
    %1504 = vmatpush1.bf16.xpose.msra.mxu0 0
    %1505 = vmatprep.subr.bf16.mxu0 0
    %1506 = vmatpush1.bf16.xpose.msra.mxu0 0
    %1507 = vmatprep.subr.bf16.mxu0 0
    %1508 = vmatpush1.bf16.xpose.msra.mxu0 0
    %1509 = vmatprep.subr.bf16.mxu0 0
    %1510 = vmatpush1.bf16.xpose.msra.mxu0 0
    %1511 = vmatprep.subr.bf16.mxu0 0
    %1512 = vmatpush1.bf16.xpose.msra.mxu0 0
    %1513 = vmatprep.subr.bf16.mxu0 0
    %1514 = vmatpush1.bf16.xpose.msra.mxu0 0
    %1515 = vmatprep.subr.bf16.mxu0 0
    %1516 = vmatpush1.bf16.xpose.msra.mxu0 0
    %1517 = vmatprep.mubr.bf16.mxu0 0
    %1518 = vmatmul.mubr.bf16.gmra.mrb[0].mxu0 %v1480
    %v1519 = vpop.f32.mrb[0].mxu0
    %v1520 = vadd.f32 %v1264, %v1519
    %v1521 = vpop.f32.mrb[0].mxu0
    %v1522 = vpop.f32.mrb[0].mxu0
    %v1523 = vadd.f32 %v1265, %v1522
    %v1524 = vpop.f32.mrb[0].mxu0
    %1525 = vdwg.mxu0
    %1527 = vrot.lane.b32.xlu0 %v1260, 120
    %v1528 = vpop.permute.xlu0 %1527
    %1529 = vrot.lane.b32.xlu0 %v1260, 88
    %v1530 = vpop.permute.xlu0 %1529
    %v1532 = vsel %vm280, %v1528, 0
    %v1535 = vsel %vm280, %v1530, 0
    %1537 = vmatprep.subr.bf16.mxu0 0
    %1538 = vmatpush1.bf16.xpose.msra.mxu0 %v1535
    %1539 = vmatprep.subr.bf16.mxu0 0
    %1540 = vmatpush1.bf16.xpose.msra.mxu0 0
    %1541 = vmatprep.subr.bf16.mxu0 0
    %1542 = vmatpush1.bf16.xpose.msra.mxu0 0
    %1543 = vmatprep.subr.bf16.mxu0 0
    %1544 = vmatpush1.bf16.xpose.msra.mxu0 0
    %1545 = vmatprep.subr.bf16.mxu0 0
    %1546 = vmatpush1.bf16.xpose.msra.mxu0 0
    %1547 = vmatprep.subr.bf16.mxu0 0
    %1548 = vmatpush1.bf16.xpose.msra.mxu0 0
    %1549 = vmatprep.subr.bf16.mxu0 0
    %1550 = vmatpush1.bf16.xpose.msra.mxu0 0
    %1551 = vmatprep.subr.bf16.mxu0 0
    %1552 = vmatpush1.bf16.xpose.msra.mxu0 0
    %1553 = vmatprep.subr.bf16.mxu0 0
    %1554 = vmatpush1.bf16.xpose.msra.mxu0 0
    %1555 = vmatprep.subr.bf16.mxu0 0
    %1556 = vmatpush1.bf16.xpose.msra.mxu0 0
    %1557 = vmatprep.subr.bf16.mxu0 0
    %1558 = vmatpush1.bf16.xpose.msra.mxu0 0
    %1559 = vmatprep.subr.bf16.mxu0 0
    %1560 = vmatpush1.bf16.xpose.msra.mxu0 0
    %1561 = vmatprep.subr.bf16.mxu0 0
    %1562 = vmatpush1.bf16.xpose.msra.mxu0 0
    %1563 = vmatprep.subr.bf16.mxu0 0
    %1564 = vmatpush1.bf16.xpose.msra.mxu0 0
    %1565 = vmatprep.subr.bf16.mxu0 0
    %1566 = vmatpush1.bf16.xpose.msra.mxu0 0
    %1567 = vmatprep.subr.bf16.mxu0 0
    %1568 = vmatpush1.bf16.xpose.msra.mxu0 0
    %1569 = vmatprep.mubr.bf16.mxu0 0
    %1570 = vmatmul.mubr.bf16.gmra.mrb[0].mxu0 %v1532
    %v1571 = vpop.f32.mrb[0].mxu0
    %v1572 = vadd.f32 %v1264, %v1571
    %v1573 = vpop.f32.mrb[0].mxu0
    %v1574 = vpop.f32.mrb[0].mxu0
    %v1575 = vadd.f32 %v1265, %v1574
    %v1576 = vpop.f32.mrb[0].mxu0
    %1577 = vdwg.mxu0
    %1579 = vrot.lane.b32.xlu0 %v1261, 120
    %v1580 = vpop.permute.xlu0 %1579
    %1581 = vrot.lane.b32.xlu0 %v1261, 88
    %v1582 = vpop.permute.xlu0 %1581
    %v1584 = vsel %vm280, %v1580, 0
    %v1587 = vsel %vm280, %v1582, 0
    %1589 = vmatprep.subr.bf16.mxu0 0
    %1590 = vmatpush1.bf16.xpose.msra.mxu0 %v1587
    %1591 = vmatprep.subr.bf16.mxu0 0
    %1592 = vmatpush1.bf16.xpose.msra.mxu0 0
    %1593 = vmatprep.subr.bf16.mxu0 0
    %1594 = vmatpush1.bf16.xpose.msra.mxu0 0
    %1595 = vmatprep.subr.bf16.mxu0 0
    %1596 = vmatpush1.bf16.xpose.msra.mxu0 0
    %1597 = vmatprep.subr.bf16.mxu0 0
    %1598 = vmatpush1.bf16.xpose.msra.mxu0 0
    %1599 = vmatprep.subr.bf16.mxu0 0
    %1600 = vmatpush1.bf16.xpose.msra.mxu0 0
    %1601 = vmatprep.subr.bf16.mxu0 0
    %1602 = vmatpush1.bf16.xpose.msra.mxu0 0
    %1603 = vmatprep.subr.bf16.mxu0 0
    %1604 = vmatpush1.bf16.xpose.msra.mxu0 0
    %1605 = vmatprep.subr.bf16.mxu0 0
    %1606 = vmatpush1.bf16.xpose.msra.mxu0 0
    %1607 = vmatprep.subr.bf16.mxu0 0
    %1608 = vmatpush1.bf16.xpose.msra.mxu0 0
    %1609 = vmatprep.subr.bf16.mxu0 0
    %1610 = vmatpush1.bf16.xpose.msra.mxu0 0
    %1611 = vmatprep.subr.bf16.mxu0 0
    %1612 = vmatpush1.bf16.xpose.msra.mxu0 0
    %1613 = vmatprep.subr.bf16.mxu0 0
    %1614 = vmatpush1.bf16.xpose.msra.mxu0 0
    %1615 = vmatprep.subr.bf16.mxu0 0
    %1616 = vmatpush1.bf16.xpose.msra.mxu0 0
    %1617 = vmatprep.subr.bf16.mxu0 0
    %1618 = vmatpush1.bf16.xpose.msra.mxu0 0
    %1619 = vmatprep.subr.bf16.mxu0 0
    %1620 = vmatpush1.bf16.xpose.msra.mxu0 0
    %1621 = vmatprep.mubr.bf16.mxu0 0
    %1622 = vmatmul.mubr.bf16.gmra.mrb[0].mxu0 %v1584
    %v1623 = vpop.f32.mrb[0].mxu0
    %v1624 = vadd.f32 %v1264, %v1623
    %v1625 = vpop.f32.mrb[0].mxu0
    %v1626 = vpop.f32.mrb[0].mxu0
    %v1627 = vadd.f32 %v1265, %v1626
    %v1628 = vpop.f32.mrb[0].mxu0
    %1629 = vdwg.mxu0
    %1631 = vrot.lane.b32.xlu0 %v1262, 120
    %v1632 = vpop.permute.xlu0 %1631
    %1633 = vrot.lane.b32.xlu0 %v1262, 88
    %v1634 = vpop.permute.xlu0 %1633
    %v1636 = vsel %vm280, %v1632, 0
    %v1639 = vsel %vm280, %v1634, 0
    %1641 = vmatprep.subr.bf16.mxu0 0
    %1642 = vmatpush1.bf16.xpose.msra.mxu0 %v1639
    %1643 = vmatprep.subr.bf16.mxu0 0
    %1644 = vmatpush1.bf16.xpose.msra.mxu0 0
    %1645 = vmatprep.subr.bf16.mxu0 0
    %1646 = vmatpush1.bf16.xpose.msra.mxu0 0
    %1647 = vmatprep.subr.bf16.mxu0 0
    %1648 = vmatpush1.bf16.xpose.msra.mxu0 0
    %1649 = vmatprep.subr.bf16.mxu0 0
    %1650 = vmatpush1.bf16.xpose.msra.mxu0 0
    %1651 = vmatprep.subr.bf16.mxu0 0
    %1652 = vmatpush1.bf16.xpose.msra.mxu0 0
    %1653 = vmatprep.subr.bf16.mxu0 0
    %1654 = vmatpush1.bf16.xpose.msra.mxu0 0
    %1655 = vmatprep.subr.bf16.mxu0 0
    %1656 = vmatpush1.bf16.xpose.msra.mxu0 0
    %1657 = vmatprep.subr.bf16.mxu0 0
    %1658 = vmatpush1.bf16.xpose.msra.mxu0 0
    %1659 = vmatprep.subr.bf16.mxu0 0
    %1660 = vmatpush1.bf16.xpose.msra.mxu0 0
    %1661 = vmatprep.subr.bf16.mxu0 0
    %1662 = vmatpush1.bf16.xpose.msra.mxu0 0
    %1663 = vmatprep.subr.bf16.mxu0 0
    %1664 = vmatpush1.bf16.xpose.msra.mxu0 0
    %1665 = vmatprep.subr.bf16.mxu0 0
    %1666 = vmatpush1.bf16.xpose.msra.mxu0 0
    %1667 = vmatprep.subr.bf16.mxu0 0
    %1668 = vmatpush1.bf16.xpose.msra.mxu0 0
    %1669 = vmatprep.subr.bf16.mxu0 0
    %1670 = vmatpush1.bf16.xpose.msra.mxu0 0
    %1671 = vmatprep.subr.bf16.mxu0 0
    %1672 = vmatpush1.bf16.xpose.msra.mxu0 0
    %1673 = vmatprep.mubr.bf16.mxu0 0
    %1674 = vmatmul.mubr.bf16.gmra.mrb[0].mxu0 %v1636
    %v1675 = vpop.f32.mrb[0].mxu0
    %v1676 = vadd.f32 %v1264, %v1675
    %v1677 = vpop.f32.mrb[0].mxu0
    %v1678 = vpop.f32.mrb[0].mxu0
    %v1679 = vadd.f32 %v1265, %v1678
    %v1680 = vpop.f32.mrb[0].mxu0
    %1681 = vdwg.mxu0
    %v1682 = vadd.f32 %v1312, %v259
    %v1683 = vadd.f32 %v1315, %v260
    %v1684 = vadd.f32 %v1364, %v261
    %v1685 = vadd.f32 %v1367, %v262
    %v1686 = vadd.f32 %v1416, %v263
    %v1687 = vadd.f32 %v1419, %v264
    %v1688 = vadd.f32 %v1468, %v265
    %v1689 = vadd.f32 %v1471, %v266
    %v1690 = vadd.f32 %v1520, %v259
    %v1691 = vadd.f32 %v1523, %v260
    %v1692 = vadd.f32 %v1572, %v261
    %v1693 = vadd.f32 %v1575, %v262
    %v1694 = vadd.f32 %v1624, %v263
    %v1695 = vadd.f32 %v1627, %v264
    %v1696 = vadd.f32 %v1676, %v265
    %v1697 = vadd.f32 %v1679, %v266
    %v1698 = vsel %vm694, %v1682, -inf
    %1699 = vmax.xlane.f32.xlu0 %v1698
    %v1700 = vpop.xlane.xlu0 %1699
    %v1701 = vsel %vm694, %v1683, -inf
    %1702 = vmax.xlane.f32.xlu0 %v1701
    %v1703 = vpop.xlane.xlu0 %1702
    %v1704 = vsel %vm694, %v1684, -inf
    %1705 = vmax.xlane.f32.xlu0 %v1704
    %v1706 = vpop.xlane.xlu0 %1705
    %v1707 = vsel %vm694, %v1685, -inf
    %1708 = vmax.xlane.f32.xlu0 %v1707
    %v1709 = vpop.xlane.xlu0 %1708
    %v1710 = vsel %vm694, %v1686, -inf
    %1711 = vmax.xlane.f32.xlu0 %v1710
    %v1712 = vpop.xlane.xlu0 %1711
    %v1713 = vsel %vm694, %v1687, -inf
    %1714 = vmax.xlane.f32.xlu0 %v1713
    %v1715 = vpop.xlane.xlu0 %1714
    %v1716 = vsel %vm694, %v1688, -inf
    %1717 = vmax.xlane.f32.xlu0 %v1716
    %v1718 = vpop.xlane.xlu0 %1717
    %v1719 = vsel %vm694, %v1689, -inf
    %1720 = vmax.xlane.f32.xlu0 %v1719
    %v1721 = vpop.xlane.xlu0 %1720
    %v1722 = vsel %vm694, %v1690, -inf
    %1723 = vmax.xlane.f32.xlu0 %v1722
    %v1724 = vpop.xlane.xlu0 %1723
    %v1725 = vsel %vm694, %v1691, -inf
    %1726 = vmax.xlane.f32.xlu0 %v1725
    %v1727 = vpop.xlane.xlu0 %1726
    %v1728 = vsel %vm694, %v1692, -inf
    %1729 = vmax.xlane.f32.xlu0 %v1728
    %v1730 = vpop.xlane.xlu0 %1729
    %v1731 = vsel %vm694, %v1693, -inf
    %1732 = vmax.xlane.f32.xlu0 %v1731
    %v1733 = vpop.xlane.xlu0 %1732
    %v1734 = vsel %vm694, %v1694, -inf
    %1735 = vmax.xlane.f32.xlu0 %v1734
    %v1736 = vpop.xlane.xlu0 %1735
    %v1737 = vsel %vm694, %v1695, -inf
    %1738 = vmax.xlane.f32.xlu0 %v1737
    %v1739 = vpop.xlane.xlu0 %1738
    %v1740 = vsel %vm694, %v1696, -inf
    %1741 = vmax.xlane.f32.xlu0 %v1740
    %v1742 = vpop.xlane.xlu0 %1741
    %v1743 = vsel %vm694, %v1697, -inf
    %1744 = vmax.xlane.f32.xlu0 %v1743
    %v1745 = vpop.xlane.xlu0 %1744
    %v1746 = vsub.f32 %v1682, %v1700
    %v1747 = vsub.f32 %v1683, %v1703
    %v1748 = vsub.f32 %v1684, %v1706
    %v1749 = vsub.f32 %v1685, %v1709
    %v1750 = vsub.f32 %v1686, %v1712
    %v1751 = vsub.f32 %v1687, %v1715
    %v1752 = vsub.f32 %v1688, %v1718
    %v1753 = vsub.f32 %v1689, %v1721
    %v1754 = vsub.f32 %v1690, %v1724
    %v1755 = vsub.f32 %v1691, %v1727
    %v1756 = vsub.f32 %v1692, %v1730
    %v1757 = vsub.f32 %v1693, %v1733
    %v1758 = vsub.f32 %v1694, %v1736
    %v1759 = vsub.f32 %v1695, %v1739
    %v1760 = vsub.f32 %v1696, %v1742
    %v1761 = vsub.f32 %v1697, %v1745
    %v1762 = vmul.f32 %v1746, 1.442695
    %v1763 = vpow.pop %v1762
    %v1764 = vmul.f32 %v1747, 1.442695
    %v1765 = vpow.pop %v1764
    %v1766 = vmul.f32 %v1748, 1.442695
    %v1767 = vpow.pop %v1766
    %v1768 = vmul.f32 %v1749, 1.442695
    %v1769 = vpow.pop %v1768
    %v1770 = vmul.f32 %v1750, 1.442695
    %v1771 = vpow.pop %v1770
    %v1772 = vmul.f32 %v1751, 1.442695
    %v1773 = vpow.pop %v1772
    %v1774 = vmul.f32 %v1752, 1.442695
    %v1775 = vpow.pop %v1774
    %v1776 = vmul.f32 %v1753, 1.442695
    %v1777 = vpow.pop %v1776
    %v1778 = vmul.f32 %v1754, 1.442695
    %v1779 = vpow.pop %v1778
    %v1780 = vmul.f32 %v1755, 1.442695
    %v1781 = vpow.pop %v1780
    %v1782 = vmul.f32 %v1756, 1.442695
    %v1783 = vpow.pop %v1782
    %v1784 = vmul.f32 %v1757, 1.442695
    %v1785 = vpow.pop %v1784
    %v1786 = vmul.f32 %v1758, 1.442695
    %v1787 = vpow.pop %v1786
    %v1788 = vmul.f32 %v1759, 1.442695
    %v1789 = vpow.pop %v1788
    %v1790 = vmul.f32 %v1760, 1.442695
    %v1791 = vpow.pop %v1790
    %v1792 = vmul.f32 %v1761, 1.442695
    %v1793 = vpow.pop %v1792
    %v1794 = vsel %vm694, %v1763, 0.0
    %1795 = vadd.xlane.f32.xlu0 %v1794
    %v1796 = vpop.xlane.xlu0 %1795
    %v1797 = vsel %vm694, %v1765, 0.0
    %1798 = vadd.xlane.f32.xlu0 %v1797
    %v1799 = vpop.xlane.xlu0 %1798
    %v1800 = vsel %vm694, %v1767, 0.0
    %1801 = vadd.xlane.f32.xlu0 %v1800
    %v1802 = vpop.xlane.xlu0 %1801
    %v1803 = vsel %vm694, %v1769, 0.0
    %1804 = vadd.xlane.f32.xlu0 %v1803
    %v1805 = vpop.xlane.xlu0 %1804
    %v1806 = vsel %vm694, %v1771, 0.0
    %1807 = vadd.xlane.f32.xlu0 %v1806
    %v1808 = vpop.xlane.xlu0 %1807
    %v1809 = vsel %vm694, %v1773, 0.0
    %1810 = vadd.xlane.f32.xlu0 %v1809
    %v1811 = vpop.xlane.xlu0 %1810
    %v1812 = vsel %vm694, %v1775, 0.0
    %1813 = vadd.xlane.f32.xlu0 %v1812
    %v1814 = vpop.xlane.xlu0 %1813
    %v1815 = vsel %vm694, %v1777, 0.0
    %1816 = vadd.xlane.f32.xlu0 %v1815
    %v1817 = vpop.xlane.xlu0 %1816
    %v1818 = vsel %vm694, %v1779, 0.0
    %1819 = vadd.xlane.f32.xlu0 %v1818
    %v1820 = vpop.xlane.xlu0 %1819
    %v1821 = vsel %vm694, %v1781, 0.0
    %1822 = vadd.xlane.f32.xlu0 %v1821
    %v1823 = vpop.xlane.xlu0 %1822
    %v1824 = vsel %vm694, %v1783, 0.0
    %1825 = vadd.xlane.f32.xlu0 %v1824
    %v1826 = vpop.xlane.xlu0 %1825
    %v1827 = vsel %vm694, %v1785, 0.0
    %1828 = vadd.xlane.f32.xlu0 %v1827
    %v1829 = vpop.xlane.xlu0 %1828
    %v1830 = vsel %vm694, %v1787, 0.0
    %1831 = vadd.xlane.f32.xlu0 %v1830
    %v1832 = vpop.xlane.xlu0 %1831
    %v1833 = vsel %vm694, %v1789, 0.0
    %1834 = vadd.xlane.f32.xlu0 %v1833
    %v1835 = vpop.xlane.xlu0 %1834
    %v1836 = vsel %vm694, %v1791, 0.0
    %1837 = vadd.xlane.f32.xlu0 %v1836
    %v1838 = vpop.xlane.xlu0 %1837
    %v1839 = vsel %vm694, %v1793, 0.0
    %1840 = vadd.xlane.f32.xlu0 %v1839
    %v1841 = vpop.xlane.xlu0 %1840
    %v1842 = vrcp.pop %v1796
    %v1843 = vrcp.pop %v1799
    %v1844 = vrcp.pop %v1802
    %v1845 = vrcp.pop %v1805
    %v1846 = vrcp.pop %v1808
    %v1847 = vrcp.pop %v1811
    %v1848 = vrcp.pop %v1814
    %v1849 = vrcp.pop %v1817
    %v1850 = vrcp.pop %v1820
    %v1851 = vrcp.pop %v1823
    %v1852 = vrcp.pop %v1826
    %v1853 = vrcp.pop %v1829
    %v1854 = vrcp.pop %v1832
    %v1855 = vrcp.pop %v1835
    %v1856 = vrcp.pop %v1838
    %v1857 = vrcp.pop %v1841
    %v1858 = vmul.f32 %v1763, %v1842
    %v1859 = vmul.f32 %v1765, %v1843
    %v1860 = vmul.f32 %v1767, %v1844
    %v1861 = vmul.f32 %v1769, %v1845
    %v1862 = vmul.f32 %v1771, %v1846
    %v1863 = vmul.f32 %v1773, %v1847
    %v1864 = vmul.f32 %v1775, %v1848
    %v1865 = vmul.f32 %v1777, %v1849
    %v1866 = vmul.f32 %v1779, %v1850
    %v1867 = vmul.f32 %v1781, %v1851
    %v1868 = vmul.f32 %v1783, %v1852
    %v1869 = vmul.f32 %v1785, %v1853
    %v1870 = vmul.f32 %v1787, %v1854
    %v1871 = vmul.f32 %v1789, %v1855
    %v1872 = vmul.f32 %v1791, %v1856
    %v1873 = vmul.f32 %v1793, %v1857
    %v1874 = vpack.c.bf16 %v1859, %v1858
    %v1875 = vpack.c.bf16 %v1861, %v1860
    %v1876 = vpack.c.bf16 %v1863, %v1862
    %v1877 = vpack.c.bf16 %v1865, %v1864
    %v1878 = vpack.c.bf16 %v1867, %v1866
    %v1879 = vpack.c.bf16 %v1869, %v1868
    %v1880 = vpack.c.bf16 %v1871, %v1870
    %v1881 = vpack.c.bf16 %v1873, %v1872
    %1882 = vrot.lane.b32.xlu0 %v1255, 56
    %v1883 = vpop.permute.xlu0 %1882
    %v1886 = vsel %vm694, %v1874, 0
    %1888 = vmatprep.subr.bf16.mxu0 0
    %1889 = vmatpush1.bf16.msra.mxu0 %v1883
    %1890 = vmatprep.subr.bf16.mxu0 0
    %1891 = vmatpush1.bf16.msra.mxu0 0
    %1892 = vmatprep.subr.bf16.mxu0 0
    %1893 = vmatpush1.bf16.msra.mxu0 0
    %1894 = vmatprep.subr.bf16.mxu0 0
    %1895 = vmatpush1.bf16.msra.mxu0 0
    %1896 = vmatprep.subr.bf16.mxu0 0
    %1897 = vmatpush1.bf16.msra.mxu0 0
    %1898 = vmatprep.subr.bf16.mxu0 0
    %1899 = vmatpush1.bf16.msra.mxu0 0
    %1900 = vmatprep.subr.bf16.mxu0 0
    %1901 = vmatpush1.bf16.msra.mxu0 0
    %1902 = vmatprep.subr.bf16.mxu0 0
    %1903 = vmatpush1.bf16.msra.mxu0 0
    %1904 = vmatprep.subr.bf16.mxu0 0
    %1905 = vmatpush1.bf16.msra.mxu0 0
    %1906 = vmatprep.subr.bf16.mxu0 0
    %1907 = vmatpush1.bf16.msra.mxu0 0
    %1908 = vmatprep.subr.bf16.mxu0 0
    %1909 = vmatpush1.bf16.msra.mxu0 0
    %1910 = vmatprep.subr.bf16.mxu0 0
    %1911 = vmatpush1.bf16.msra.mxu0 0
    %1912 = vmatprep.subr.bf16.mxu0 0
    %1913 = vmatpush1.bf16.msra.mxu0 0
    %1914 = vmatprep.subr.bf16.mxu0 0
    %1915 = vmatpush1.bf16.msra.mxu0 0
    %1916 = vmatprep.subr.bf16.mxu0 0
    %1917 = vmatpush1.bf16.msra.mxu0 0
    %1918 = vmatprep.subr.bf16.mxu0 0
    %1919 = vmatpush1.bf16.msra.mxu0 0
    %1920 = vmatprep.mubr.bf16.mxu0 0
    %1921 = vmatmul.mubr.bf16.gmra.mrb[0].mxu0 %v1886
    %v1922 = vpop.f32.mrb[0].mxu0
    %v1923 = vadd.f32 0.0, %v1922
    %v1924 = vpop.f32.mrb[0].mxu0
    %v1925 = vpop.f32.mrb[0].mxu0
    %v1926 = vadd.f32 0.0, %v1925
    %v1927 = vpop.f32.mrb[0].mxu0
    %1928 = vdwg.mxu0
    %1929 = vrot.lane.b32.xlu0 %v1256, 56
    %v1930 = vpop.permute.xlu0 %1929
    %v1933 = vsel %vm694, %v1875, 0
    %1935 = vmatprep.subr.bf16.mxu0 0
    %1936 = vmatpush1.bf16.msra.mxu0 %v1930
    %1937 = vmatprep.subr.bf16.mxu0 0
    %1938 = vmatpush1.bf16.msra.mxu0 0
    %1939 = vmatprep.subr.bf16.mxu0 0
    %1940 = vmatpush1.bf16.msra.mxu0 0
    %1941 = vmatprep.subr.bf16.mxu0 0
    %1942 = vmatpush1.bf16.msra.mxu0 0
    %1943 = vmatprep.subr.bf16.mxu0 0
    %1944 = vmatpush1.bf16.msra.mxu0 0
    %1945 = vmatprep.subr.bf16.mxu0 0
    %1946 = vmatpush1.bf16.msra.mxu0 0
    %1947 = vmatprep.subr.bf16.mxu0 0
    %1948 = vmatpush1.bf16.msra.mxu0 0
    %1949 = vmatprep.subr.bf16.mxu0 0
    %1950 = vmatpush1.bf16.msra.mxu0 0
    %1951 = vmatprep.subr.bf16.mxu0 0
    %1952 = vmatpush1.bf16.msra.mxu0 0
    %1953 = vmatprep.subr.bf16.mxu0 0
    %1954 = vmatpush1.bf16.msra.mxu0 0
    %1955 = vmatprep.subr.bf16.mxu0 0
    %1956 = vmatpush1.bf16.msra.mxu0 0
    %1957 = vmatprep.subr.bf16.mxu0 0
    %1958 = vmatpush1.bf16.msra.mxu0 0
    %1959 = vmatprep.subr.bf16.mxu0 0
    %1960 = vmatpush1.bf16.msra.mxu0 0
    %1961 = vmatprep.subr.bf16.mxu0 0
    %1962 = vmatpush1.bf16.msra.mxu0 0
    %1963 = vmatprep.subr.bf16.mxu0 0
    %1964 = vmatpush1.bf16.msra.mxu0 0
    %1965 = vmatprep.subr.bf16.mxu0 0
    %1966 = vmatpush1.bf16.msra.mxu0 0
    %1967 = vmatprep.mubr.bf16.mxu0 0
    %1968 = vmatmul.mubr.bf16.gmra.mrb[0].mxu0 %v1933
    %v1969 = vpop.f32.mrb[0].mxu0
    %v1970 = vadd.f32 0.0, %v1969
    %v1971 = vpop.f32.mrb[0].mxu0
    %v1972 = vpop.f32.mrb[0].mxu0
    %v1973 = vadd.f32 0.0, %v1972
    %v1974 = vpop.f32.mrb[0].mxu0
    %1975 = vdwg.mxu0
    %1976 = vrot.lane.b32.xlu0 %v1257, 56
    %v1977 = vpop.permute.xlu0 %1976
    %v1980 = vsel %vm694, %v1876, 0
    %1982 = vmatprep.subr.bf16.mxu0 0
    %1983 = vmatpush1.bf16.msra.mxu0 %v1977
    %1984 = vmatprep.subr.bf16.mxu0 0
    %1985 = vmatpush1.bf16.msra.mxu0 0
    %1986 = vmatprep.subr.bf16.mxu0 0
    %1987 = vmatpush1.bf16.msra.mxu0 0
    %1988 = vmatprep.subr.bf16.mxu0 0
    %1989 = vmatpush1.bf16.msra.mxu0 0
    %1990 = vmatprep.subr.bf16.mxu0 0
    %1991 = vmatpush1.bf16.msra.mxu0 0
    %1992 = vmatprep.subr.bf16.mxu0 0
    %1993 = vmatpush1.bf16.msra.mxu0 0
    %1994 = vmatprep.subr.bf16.mxu0 0
    %1995 = vmatpush1.bf16.msra.mxu0 0
    %1996 = vmatprep.subr.bf16.mxu0 0
    %1997 = vmatpush1.bf16.msra.mxu0 0
    %1998 = vmatprep.subr.bf16.mxu0 0
    %1999 = vmatpush1.bf16.msra.mxu0 0
    %2000 = vmatprep.subr.bf16.mxu0 0
    %2001 = vmatpush1.bf16.msra.mxu0 0
    %2002 = vmatprep.subr.bf16.mxu0 0
    %2003 = vmatpush1.bf16.msra.mxu0 0
    %2004 = vmatprep.subr.bf16.mxu0 0
    %2005 = vmatpush1.bf16.msra.mxu0 0
    %2006 = vmatprep.subr.bf16.mxu0 0
    %2007 = vmatpush1.bf16.msra.mxu0 0
    %2008 = vmatprep.subr.bf16.mxu0 0
    %2009 = vmatpush1.bf16.msra.mxu0 0
    %2010 = vmatprep.subr.bf16.mxu0 0
    %2011 = vmatpush1.bf16.msra.mxu0 0
    %2012 = vmatprep.subr.bf16.mxu0 0
    %2013 = vmatpush1.bf16.msra.mxu0 0
    %2014 = vmatprep.mubr.bf16.mxu0 0
    %2015 = vmatmul.mubr.bf16.gmra.mrb[0].mxu0 %v1980
    %v2016 = vpop.f32.mrb[0].mxu0
    %v2017 = vadd.f32 0.0, %v2016
    %v2018 = vpop.f32.mrb[0].mxu0
    %v2019 = vpop.f32.mrb[0].mxu0
    %v2020 = vadd.f32 0.0, %v2019
    %v2021 = vpop.f32.mrb[0].mxu0
    %2022 = vdwg.mxu0
    %2023 = vrot.lane.b32.xlu0 %v1258, 56
    %v2024 = vpop.permute.xlu0 %2023
    %v2027 = vsel %vm694, %v1877, 0
    %2029 = vmatprep.subr.bf16.mxu0 0
    %2030 = vmatpush1.bf16.msra.mxu0 %v2024
    %2031 = vmatprep.subr.bf16.mxu0 0
    %2032 = vmatpush1.bf16.msra.mxu0 0
    %2033 = vmatprep.subr.bf16.mxu0 0
    %2034 = vmatpush1.bf16.msra.mxu0 0
    %2035 = vmatprep.subr.bf16.mxu0 0
    %2036 = vmatpush1.bf16.msra.mxu0 0
    %2037 = vmatprep.subr.bf16.mxu0 0
    %2038 = vmatpush1.bf16.msra.mxu0 0
    %2039 = vmatprep.subr.bf16.mxu0 0
    %2040 = vmatpush1.bf16.msra.mxu0 0
    %2041 = vmatprep.subr.bf16.mxu0 0
    %2042 = vmatpush1.bf16.msra.mxu0 0
    %2043 = vmatprep.subr.bf16.mxu0 0
    %2044 = vmatpush1.bf16.msra.mxu0 0
    %2045 = vmatprep.subr.bf16.mxu0 0
    %2046 = vmatpush1.bf16.msra.mxu0 0
    %2047 = vmatprep.subr.bf16.mxu0 0
    %2048 = vmatpush1.bf16.msra.mxu0 0
    %2049 = vmatprep.subr.bf16.mxu0 0
    %2050 = vmatpush1.bf16.msra.mxu0 0
    %2051 = vmatprep.subr.bf16.mxu0 0
    %2052 = vmatpush1.bf16.msra.mxu0 0
    %2053 = vmatprep.subr.bf16.mxu0 0
    %2054 = vmatpush1.bf16.msra.mxu0 0
    %2055 = vmatprep.subr.bf16.mxu0 0
    %2056 = vmatpush1.bf16.msra.mxu0 0
    %2057 = vmatprep.subr.bf16.mxu0 0
    %2058 = vmatpush1.bf16.msra.mxu0 0
    %2059 = vmatprep.subr.bf16.mxu0 0
    %2060 = vmatpush1.bf16.msra.mxu0 0
    %2061 = vmatprep.mubr.bf16.mxu0 0
    %2062 = vmatmul.mubr.bf16.gmra.mrb[0].mxu0 %v2027
    %v2063 = vpop.f32.mrb[0].mxu0
    %v2064 = vadd.f32 0.0, %v2063
    %v2065 = vpop.f32.mrb[0].mxu0
    %v2066 = vpop.f32.mrb[0].mxu0
    %v2067 = vadd.f32 0.0, %v2066
    %v2068 = vpop.f32.mrb[0].mxu0
    %2069 = vdwg.mxu0
    %2070 = vrot.lane.b32.xlu0 %v1259, 56
    %v2071 = vpop.permute.xlu0 %2070
    %v2074 = vsel %vm694, %v1878, 0
    %2076 = vmatprep.subr.bf16.mxu0 0
    %2077 = vmatpush1.bf16.msra.mxu0 %v2071
    %2078 = vmatprep.subr.bf16.mxu0 0
    %2079 = vmatpush1.bf16.msra.mxu0 0
    %2080 = vmatprep.subr.bf16.mxu0 0
    %2081 = vmatpush1.bf16.msra.mxu0 0
    %2082 = vmatprep.subr.bf16.mxu0 0
    %2083 = vmatpush1.bf16.msra.mxu0 0
    %2084 = vmatprep.subr.bf16.mxu0 0
    %2085 = vmatpush1.bf16.msra.mxu0 0
    %2086 = vmatprep.subr.bf16.mxu0 0
    %2087 = vmatpush1.bf16.msra.mxu0 0
    %2088 = vmatprep.subr.bf16.mxu0 0
    %2089 = vmatpush1.bf16.msra.mxu0 0
    %2090 = vmatprep.subr.bf16.mxu0 0
    %2091 = vmatpush1.bf16.msra.mxu0 0
    %2092 = vmatprep.subr.bf16.mxu0 0
    %2093 = vmatpush1.bf16.msra.mxu0 0
    %2094 = vmatprep.subr.bf16.mxu0 0
    %2095 = vmatpush1.bf16.msra.mxu0 0
    %2096 = vmatprep.subr.bf16.mxu0 0
    %2097 = vmatpush1.bf16.msra.mxu0 0
    %2098 = vmatprep.subr.bf16.mxu0 0
    %2099 = vmatpush1.bf16.msra.mxu0 0
    %2100 = vmatprep.subr.bf16.mxu0 0
    %2101 = vmatpush1.bf16.msra.mxu0 0
    %2102 = vmatprep.subr.bf16.mxu0 0
    %2103 = vmatpush1.bf16.msra.mxu0 0
    %2104 = vmatprep.subr.bf16.mxu0 0
    %2105 = vmatpush1.bf16.msra.mxu0 0
    %2106 = vmatprep.subr.bf16.mxu0 0
    %2107 = vmatpush1.bf16.msra.mxu0 0
    %2108 = vmatprep.mubr.bf16.mxu0 0
    %2109 = vmatmul.mubr.bf16.gmra.mrb[0].mxu0 %v2074
    %v2110 = vpop.f32.mrb[0].mxu0
    %v2111 = vadd.f32 0.0, %v2110
    %v2112 = vpop.f32.mrb[0].mxu0
    %v2113 = vpop.f32.mrb[0].mxu0
    %v2114 = vadd.f32 0.0, %v2113
    %v2115 = vpop.f32.mrb[0].mxu0
    %2116 = vdwg.mxu0
    %2117 = vrot.lane.b32.xlu0 %v1260, 56
    %v2118 = vpop.permute.xlu0 %2117
    %v2121 = vsel %vm694, %v1879, 0
    %2123 = vmatprep.subr.bf16.mxu0 0
    %2124 = vmatpush1.bf16.msra.mxu0 %v2118
    %2125 = vmatprep.subr.bf16.mxu0 0
    %2126 = vmatpush1.bf16.msra.mxu0 0
    %2127 = vmatprep.subr.bf16.mxu0 0
    %2128 = vmatpush1.bf16.msra.mxu0 0
    %2129 = vmatprep.subr.bf16.mxu0 0
    %2130 = vmatpush1.bf16.msra.mxu0 0
    %2131 = vmatprep.subr.bf16.mxu0 0
    %2132 = vmatpush1.bf16.msra.mxu0 0
    %2133 = vmatprep.subr.bf16.mxu0 0
    %2134 = vmatpush1.bf16.msra.mxu0 0
    %2135 = vmatprep.subr.bf16.mxu0 0
    %2136 = vmatpush1.bf16.msra.mxu0 0
    %2137 = vmatprep.subr.bf16.mxu0 0
    %2138 = vmatpush1.bf16.msra.mxu0 0
    %2139 = vmatprep.subr.bf16.mxu0 0
    %2140 = vmatpush1.bf16.msra.mxu0 0
    %2141 = vmatprep.subr.bf16.mxu0 0
    %2142 = vmatpush1.bf16.msra.mxu0 0
    %2143 = vmatprep.subr.bf16.mxu0 0
    %2144 = vmatpush1.bf16.msra.mxu0 0
    %2145 = vmatprep.subr.bf16.mxu0 0
    %2146 = vmatpush1.bf16.msra.mxu0 0
    %2147 = vmatprep.subr.bf16.mxu0 0
    %2148 = vmatpush1.bf16.msra.mxu0 0
    %2149 = vmatprep.subr.bf16.mxu0 0
    %2150 = vmatpush1.bf16.msra.mxu0 0
    %2151 = vmatprep.subr.bf16.mxu0 0
    %2152 = vmatpush1.bf16.msra.mxu0 0
    %2153 = vmatprep.subr.bf16.mxu0 0
    %2154 = vmatpush1.bf16.msra.mxu0 0
    %2155 = vmatprep.mubr.bf16.mxu0 0
    %2156 = vmatmul.mubr.bf16.gmra.mrb[0].mxu0 %v2121
    %v2157 = vpop.f32.mrb[0].mxu0
    %v2158 = vadd.f32 0.0, %v2157
    %v2159 = vpop.f32.mrb[0].mxu0
    %v2160 = vpop.f32.mrb[0].mxu0
    %v2161 = vadd.f32 0.0, %v2160
    %v2162 = vpop.f32.mrb[0].mxu0
    %2163 = vdwg.mxu0
    %2164 = vrot.lane.b32.xlu0 %v1261, 56
    %v2165 = vpop.permute.xlu0 %2164
    %v2168 = vsel %vm694, %v1880, 0
    %2170 = vmatprep.subr.bf16.mxu0 0
    %2171 = vmatpush1.bf16.msra.mxu0 %v2165
    %2172 = vmatprep.subr.bf16.mxu0 0
    %2173 = vmatpush1.bf16.msra.mxu0 0
    %2174 = vmatprep.subr.bf16.mxu0 0
    %2175 = vmatpush1.bf16.msra.mxu0 0
    %2176 = vmatprep.subr.bf16.mxu0 0
    %2177 = vmatpush1.bf16.msra.mxu0 0
    %2178 = vmatprep.subr.bf16.mxu0 0
    %2179 = vmatpush1.bf16.msra.mxu0 0
    %2180 = vmatprep.subr.bf16.mxu0 0
    %2181 = vmatpush1.bf16.msra.mxu0 0
    %2182 = vmatprep.subr.bf16.mxu0 0
    %2183 = vmatpush1.bf16.msra.mxu0 0
    %2184 = vmatprep.subr.bf16.mxu0 0
    %2185 = vmatpush1.bf16.msra.mxu0 0
    %2186 = vmatprep.subr.bf16.mxu0 0
    %2187 = vmatpush1.bf16.msra.mxu0 0
    %2188 = vmatprep.subr.bf16.mxu0 0
    %2189 = vmatpush1.bf16.msra.mxu0 0
    %2190 = vmatprep.subr.bf16.mxu0 0
    %2191 = vmatpush1.bf16.msra.mxu0 0
    %2192 = vmatprep.subr.bf16.mxu0 0
    %2193 = vmatpush1.bf16.msra.mxu0 0
    %2194 = vmatprep.subr.bf16.mxu0 0
    %2195 = vmatpush1.bf16.msra.mxu0 0
    %2196 = vmatprep.subr.bf16.mxu0 0
    %2197 = vmatpush1.bf16.msra.mxu0 0
    %2198 = vmatprep.subr.bf16.mxu0 0
    %2199 = vmatpush1.bf16.msra.mxu0 0
    %2200 = vmatprep.subr.bf16.mxu0 0
    %2201 = vmatpush1.bf16.msra.mxu0 0
    %2202 = vmatprep.mubr.bf16.mxu0 0
    %2203 = vmatmul.mubr.bf16.gmra.mrb[0].mxu0 %v2168
    %v2204 = vpop.f32.mrb[0].mxu0
    %v2205 = vadd.f32 0.0, %v2204
    %v2206 = vpop.f32.mrb[0].mxu0
    %v2207 = vpop.f32.mrb[0].mxu0
    %v2208 = vadd.f32 0.0, %v2207
    %v2209 = vpop.f32.mrb[0].mxu0
    %2210 = vdwg.mxu0
    %2211 = vrot.lane.b32.xlu0 %v1262, 56
    %v2212 = vpop.permute.xlu0 %2211
    %v2215 = vsel %vm694, %v1881, 0
    %2217 = vmatprep.subr.bf16.mxu0 0
    %2218 = vmatpush1.bf16.msra.mxu0 %v2212
    %2219 = vmatprep.subr.bf16.mxu0 0
    %2220 = vmatpush1.bf16.msra.mxu0 0
    %2221 = vmatprep.subr.bf16.mxu0 0
    %2222 = vmatpush1.bf16.msra.mxu0 0
    %2223 = vmatprep.subr.bf16.mxu0 0
    %2224 = vmatpush1.bf16.msra.mxu0 0
    %2225 = vmatprep.subr.bf16.mxu0 0
    %2226 = vmatpush1.bf16.msra.mxu0 0
    %2227 = vmatprep.subr.bf16.mxu0 0
    %2228 = vmatpush1.bf16.msra.mxu0 0
    %2229 = vmatprep.subr.bf16.mxu0 0
    %2230 = vmatpush1.bf16.msra.mxu0 0
    %2231 = vmatprep.subr.bf16.mxu0 0
    %2232 = vmatpush1.bf16.msra.mxu0 0
    %2233 = vmatprep.subr.bf16.mxu0 0
    %2234 = vmatpush1.bf16.msra.mxu0 0
    %2235 = vmatprep.subr.bf16.mxu0 0
    %2236 = vmatpush1.bf16.msra.mxu0 0
    %2237 = vmatprep.subr.bf16.mxu0 0
    %2238 = vmatpush1.bf16.msra.mxu0 0
    %2239 = vmatprep.subr.bf16.mxu0 0
    %2240 = vmatpush1.bf16.msra.mxu0 0
    %2241 = vmatprep.subr.bf16.mxu0 0
    %2242 = vmatpush1.bf16.msra.mxu0 0
    %2243 = vmatprep.subr.bf16.mxu0 0
    %2244 = vmatpush1.bf16.msra.mxu0 0
    %2245 = vmatprep.subr.bf16.mxu0 0
    %2246 = vmatpush1.bf16.msra.mxu0 0
    %2247 = vmatprep.subr.bf16.mxu0 0
    %2248 = vmatpush1.bf16.msra.mxu0 0
    %2249 = vmatprep.mubr.bf16.mxu0 0
    %2250 = vmatmul.mubr.bf16.gmra.mrb[0].mxu0 %v2215
    %v2251 = vpop.f32.mrb[0].mxu0
    %v2252 = vadd.f32 0.0, %v2251
    %v2253 = vpop.f32.mrb[0].mxu0
    %v2254 = vpop.f32.mrb[0].mxu0
    %v2255 = vadd.f32 0.0, %v2254
    %v2256 = vpop.f32.mrb[0].mxu0
    %2257 = vdwg.mxu0
    %v2258 = vld [vmem:[#allocation2] sm:$0xff]
    %v2259 = vld [vmem:[#allocation2 + $0x8] sm:$0xff]
    %v2260 = vld [vmem:[#allocation2 + $0x10] sm:$0xff]
    %v2261 = vld [vmem:[#allocation2 + $0x18] sm:$0xff]
    %v2262 = vld [vmem:[#allocation2 + $0x20] sm:$0xff]
    %v2263 = vld [vmem:[#allocation2 + $0x28] sm:$0xff]
    %v2264 = vld [vmem:[#allocation2 + $0x30] sm:$0xff]
    %v2265 = vld [vmem:[#allocation2 + $0x38] sm:$0xff]
    %s2266 = scalar_lea.vmem %s3, 32
    %v2267 = vld [vmem:[%s2266] sm:$0xff]
    %v2268 = vld [vmem:[%s2266 + $0x8] sm:$0xff]
    %2270 = vrot.lane.b32.xlu0 %v2258, 112
    %v2271 = vpop.permute.xlu0 %2270
    %2272 = vrot.lane.b32.xlu0 %v2258, 80
    %v2273 = vpop.permute.xlu0 %2272
    %v2275 = vsel %vm280, %v2271, 0
    %v2278 = vsel %vm280, %v2273, 0
    %2280 = vmatprep.subr.bf16.mxu0 0
    %2281 = vmatpush1.bf16.xpose.msra.mxu0 %v2278
    %2282 = vmatprep.subr.bf16.mxu0 0
    %2283 = vmatpush1.bf16.xpose.msra.mxu0 0
    %2284 = vmatprep.subr.bf16.mxu0 0
    %2285 = vmatpush1.bf16.xpose.msra.mxu0 0
    %2286 = vmatprep.subr.bf16.mxu0 0
    %2287 = vmatpush1.bf16.xpose.msra.mxu0 0
    %2288 = vmatprep.subr.bf16.mxu0 0
    %2289 = vmatpush1.bf16.xpose.msra.mxu0 0
    %2290 = vmatprep.subr.bf16.mxu0 0
    %2291 = vmatpush1.bf16.xpose.msra.mxu0 0
    %2292 = vmatprep.subr.bf16.mxu0 0
    %2293 = vmatpush1.bf16.xpose.msra.mxu0 0
    %2294 = vmatprep.subr.bf16.mxu0 0
    %2295 = vmatpush1.bf16.xpose.msra.mxu0 0
    %2296 = vmatprep.subr.bf16.mxu0 0
    %2297 = vmatpush1.bf16.xpose.msra.mxu0 0
    %2298 = vmatprep.subr.bf16.mxu0 0
    %2299 = vmatpush1.bf16.xpose.msra.mxu0 0
    %2300 = vmatprep.subr.bf16.mxu0 0
    %2301 = vmatpush1.bf16.xpose.msra.mxu0 0
    %2302 = vmatprep.subr.bf16.mxu0 0
    %2303 = vmatpush1.bf16.xpose.msra.mxu0 0
    %2304 = vmatprep.subr.bf16.mxu0 0
    %2305 = vmatpush1.bf16.xpose.msra.mxu0 0
    %2306 = vmatprep.subr.bf16.mxu0 0
    %2307 = vmatpush1.bf16.xpose.msra.mxu0 0
    %2308 = vmatprep.subr.bf16.mxu0 0
    %2309 = vmatpush1.bf16.xpose.msra.mxu0 0
    %2310 = vmatprep.subr.bf16.mxu0 0
    %2311 = vmatpush1.bf16.xpose.msra.mxu0 0
    %2312 = vmatprep.mubr.bf16.mxu0 0
    %2313 = vmatmul.mubr.bf16.gmra.mrb[0].mxu0 %v2275
    %v2314 = vpop.f32.mrb[0].mxu0
    %v2315 = vadd.f32 %v2267, %v2314
    %v2316 = vpop.f32.mrb[0].mxu0
    %v2317 = vpop.f32.mrb[0].mxu0
    %v2318 = vadd.f32 %v2268, %v2317
    %v2319 = vpop.f32.mrb[0].mxu0
    %2320 = vdwg.mxu0
    %2322 = vrot.lane.b32.xlu0 %v2259, 112
    %v2323 = vpop.permute.xlu0 %2322
    %2324 = vrot.lane.b32.xlu0 %v2259, 80
    %v2325 = vpop.permute.xlu0 %2324
    %v2327 = vsel %vm280, %v2323, 0
    %v2330 = vsel %vm280, %v2325, 0
    %2332 = vmatprep.subr.bf16.mxu0 0
    %2333 = vmatpush1.bf16.xpose.msra.mxu0 %v2330
    %2334 = vmatprep.subr.bf16.mxu0 0
    %2335 = vmatpush1.bf16.xpose.msra.mxu0 0
    %2336 = vmatprep.subr.bf16.mxu0 0
    %2337 = vmatpush1.bf16.xpose.msra.mxu0 0
    %2338 = vmatprep.subr.bf16.mxu0 0
    %2339 = vmatpush1.bf16.xpose.msra.mxu0 0
    %2340 = vmatprep.subr.bf16.mxu0 0
    %2341 = vmatpush1.bf16.xpose.msra.mxu0 0
    %2342 = vmatprep.subr.bf16.mxu0 0
    %2343 = vmatpush1.bf16.xpose.msra.mxu0 0
    %2344 = vmatprep.subr.bf16.mxu0 0
    %2345 = vmatpush1.bf16.xpose.msra.mxu0 0
    %2346 = vmatprep.subr.bf16.mxu0 0
    %2347 = vmatpush1.bf16.xpose.msra.mxu0 0
    %2348 = vmatprep.subr.bf16.mxu0 0
    %2349 = vmatpush1.bf16.xpose.msra.mxu0 0
    %2350 = vmatprep.subr.bf16.mxu0 0
    %2351 = vmatpush1.bf16.xpose.msra.mxu0 0
    %2352 = vmatprep.subr.bf16.mxu0 0
    %2353 = vmatpush1.bf16.xpose.msra.mxu0 0
    %2354 = vmatprep.subr.bf16.mxu0 0
    %2355 = vmatpush1.bf16.xpose.msra.mxu0 0
    %2356 = vmatprep.subr.bf16.mxu0 0
    %2357 = vmatpush1.bf16.xpose.msra.mxu0 0
    %2358 = vmatprep.subr.bf16.mxu0 0
    %2359 = vmatpush1.bf16.xpose.msra.mxu0 0
    %2360 = vmatprep.subr.bf16.mxu0 0
    %2361 = vmatpush1.bf16.xpose.msra.mxu0 0
    %2362 = vmatprep.subr.bf16.mxu0 0
    %2363 = vmatpush1.bf16.xpose.msra.mxu0 0
    %2364 = vmatprep.mubr.bf16.mxu0 0
    %2365 = vmatmul.mubr.bf16.gmra.mrb[0].mxu0 %v2327
    %v2366 = vpop.f32.mrb[0].mxu0
    %v2367 = vadd.f32 %v2267, %v2366
    %v2368 = vpop.f32.mrb[0].mxu0
    %v2369 = vpop.f32.mrb[0].mxu0
    %v2370 = vadd.f32 %v2268, %v2369
    %v2371 = vpop.f32.mrb[0].mxu0
    %2372 = vdwg.mxu0
    %2374 = vrot.lane.b32.xlu0 %v2260, 112
    %v2375 = vpop.permute.xlu0 %2374
    %2376 = vrot.lane.b32.xlu0 %v2260, 80
    %v2377 = vpop.permute.xlu0 %2376
    %v2379 = vsel %vm280, %v2375, 0
    %v2382 = vsel %vm280, %v2377, 0
    %2384 = vmatprep.subr.bf16.mxu0 0
    %2385 = vmatpush1.bf16.xpose.msra.mxu0 %v2382
    %2386 = vmatprep.subr.bf16.mxu0 0
    %2387 = vmatpush1.bf16.xpose.msra.mxu0 0
    %2388 = vmatprep.subr.bf16.mxu0 0
    %2389 = vmatpush1.bf16.xpose.msra.mxu0 0
    %2390 = vmatprep.subr.bf16.mxu0 0
    %2391 = vmatpush1.bf16.xpose.msra.mxu0 0
    %2392 = vmatprep.subr.bf16.mxu0 0
    %2393 = vmatpush1.bf16.xpose.msra.mxu0 0
    %2394 = vmatprep.subr.bf16.mxu0 0
    %2395 = vmatpush1.bf16.xpose.msra.mxu0 0
    %2396 = vmatprep.subr.bf16.mxu0 0
    %2397 = vmatpush1.bf16.xpose.msra.mxu0 0
    %2398 = vmatprep.subr.bf16.mxu0 0
    %2399 = vmatpush1.bf16.xpose.msra.mxu0 0
    %2400 = vmatprep.subr.bf16.mxu0 0
    %2401 = vmatpush1.bf16.xpose.msra.mxu0 0
    %2402 = vmatprep.subr.bf16.mxu0 0
    %2403 = vmatpush1.bf16.xpose.msra.mxu0 0
    %2404 = vmatprep.subr.bf16.mxu0 0
    %2405 = vmatpush1.bf16.xpose.msra.mxu0 0
    %2406 = vmatprep.subr.bf16.mxu0 0
    %2407 = vmatpush1.bf16.xpose.msra.mxu0 0
    %2408 = vmatprep.subr.bf16.mxu0 0
    %2409 = vmatpush1.bf16.xpose.msra.mxu0 0
    %2410 = vmatprep.subr.bf16.mxu0 0
    %2411 = vmatpush1.bf16.xpose.msra.mxu0 0
    %2412 = vmatprep.subr.bf16.mxu0 0
    %2413 = vmatpush1.bf16.xpose.msra.mxu0 0
    %2414 = vmatprep.subr.bf16.mxu0 0
    %2415 = vmatpush1.bf16.xpose.msra.mxu0 0
    %2416 = vmatprep.mubr.bf16.mxu0 0
    %2417 = vmatmul.mubr.bf16.gmra.mrb[0].mxu0 %v2379
    %v2418 = vpop.f32.mrb[0].mxu0
    %v2419 = vadd.f32 %v2267, %v2418
    %v2420 = vpop.f32.mrb[0].mxu0
    %v2421 = vpop.f32.mrb[0].mxu0
    %v2422 = vadd.f32 %v2268, %v2421
    %v2423 = vpop.f32.mrb[0].mxu0
    %2424 = vdwg.mxu0
    %2426 = vrot.lane.b32.xlu0 %v2261, 112
    %v2427 = vpop.permute.xlu0 %2426
    %2428 = vrot.lane.b32.xlu0 %v2261, 80
    %v2429 = vpop.permute.xlu0 %2428
    %v2431 = vsel %vm280, %v2427, 0
    %v2434 = vsel %vm280, %v2429, 0
    %2436 = vmatprep.subr.bf16.mxu0 0
    %2437 = vmatpush1.bf16.xpose.msra.mxu0 %v2434
    %2438 = vmatprep.subr.bf16.mxu0 0
    %2439 = vmatpush1.bf16.xpose.msra.mxu0 0
    %2440 = vmatprep.subr.bf16.mxu0 0
    %2441 = vmatpush1.bf16.xpose.msra.mxu0 0
    %2442 = vmatprep.subr.bf16.mxu0 0
    %2443 = vmatpush1.bf16.xpose.msra.mxu0 0
    %2444 = vmatprep.subr.bf16.mxu0 0
    %2445 = vmatpush1.bf16.xpose.msra.mxu0 0
    %2446 = vmatprep.subr.bf16.mxu0 0
    %2447 = vmatpush1.bf16.xpose.msra.mxu0 0
    %2448 = vmatprep.subr.bf16.mxu0 0
    %2449 = vmatpush1.bf16.xpose.msra.mxu0 0
    %2450 = vmatprep.subr.bf16.mxu0 0
    %2451 = vmatpush1.bf16.xpose.msra.mxu0 0
    %2452 = vmatprep.subr.bf16.mxu0 0
    %2453 = vmatpush1.bf16.xpose.msra.mxu0 0
    %2454 = vmatprep.subr.bf16.mxu0 0
    %2455 = vmatpush1.bf16.xpose.msra.mxu0 0
    %2456 = vmatprep.subr.bf16.mxu0 0
    %2457 = vmatpush1.bf16.xpose.msra.mxu0 0
    %2458 = vmatprep.subr.bf16.mxu0 0
    %2459 = vmatpush1.bf16.xpose.msra.mxu0 0
    %2460 = vmatprep.subr.bf16.mxu0 0
    %2461 = vmatpush1.bf16.xpose.msra.mxu0 0
    %2462 = vmatprep.subr.bf16.mxu0 0
    %2463 = vmatpush1.bf16.xpose.msra.mxu0 0
    %2464 = vmatprep.subr.bf16.mxu0 0
    %2465 = vmatpush1.bf16.xpose.msra.mxu0 0
    %2466 = vmatprep.subr.bf16.mxu0 0
    %2467 = vmatpush1.bf16.xpose.msra.mxu0 0
    %2468 = vmatprep.mubr.bf16.mxu0 0
    %2469 = vmatmul.mubr.bf16.gmra.mrb[0].mxu0 %v2431
    %v2470 = vpop.f32.mrb[0].mxu0
    %v2471 = vadd.f32 %v2267, %v2470
    %v2472 = vpop.f32.mrb[0].mxu0
    %v2473 = vpop.f32.mrb[0].mxu0
    %v2474 = vadd.f32 %v2268, %v2473
    %v2475 = vpop.f32.mrb[0].mxu0
    %2476 = vdwg.mxu0
    %2478 = vrot.lane.b32.xlu0 %v2262, 112
    %v2479 = vpop.permute.xlu0 %2478
    %2480 = vrot.lane.b32.xlu0 %v2262, 80
    %v2481 = vpop.permute.xlu0 %2480
    %v2483 = vsel %vm280, %v2479, 0
    %v2486 = vsel %vm280, %v2481, 0
    %2488 = vmatprep.subr.bf16.mxu0 0
    %2489 = vmatpush1.bf16.xpose.msra.mxu0 %v2486
    %2490 = vmatprep.subr.bf16.mxu0 0
    %2491 = vmatpush1.bf16.xpose.msra.mxu0 0
    %2492 = vmatprep.subr.bf16.mxu0 0
    %2493 = vmatpush1.bf16.xpose.msra.mxu0 0
    %2494 = vmatprep.subr.bf16.mxu0 0
    %2495 = vmatpush1.bf16.xpose.msra.mxu0 0
    %2496 = vmatprep.subr.bf16.mxu0 0
    %2497 = vmatpush1.bf16.xpose.msra.mxu0 0
    %2498 = vmatprep.subr.bf16.mxu0 0
    %2499 = vmatpush1.bf16.xpose.msra.mxu0 0
    %2500 = vmatprep.subr.bf16.mxu0 0
    %2501 = vmatpush1.bf16.xpose.msra.mxu0 0
    %2502 = vmatprep.subr.bf16.mxu0 0
    %2503 = vmatpush1.bf16.xpose.msra.mxu0 0
    %2504 = vmatprep.subr.bf16.mxu0 0
    %2505 = vmatpush1.bf16.xpose.msra.mxu0 0
    %2506 = vmatprep.subr.bf16.mxu0 0
    %2507 = vmatpush1.bf16.xpose.msra.mxu0 0
    %2508 = vmatprep.subr.bf16.mxu0 0
    %2509 = vmatpush1.bf16.xpose.msra.mxu0 0
    %2510 = vmatprep.subr.bf16.mxu0 0
    %2511 = vmatpush1.bf16.xpose.msra.mxu0 0
    %2512 = vmatprep.subr.bf16.mxu0 0
    %2513 = vmatpush1.bf16.xpose.msra.mxu0 0
    %2514 = vmatprep.subr.bf16.mxu0 0
    %2515 = vmatpush1.bf16.xpose.msra.mxu0 0
    %2516 = vmatprep.subr.bf16.mxu0 0
    %2517 = vmatpush1.bf16.xpose.msra.mxu0 0
    %2518 = vmatprep.subr.bf16.mxu0 0
    %2519 = vmatpush1.bf16.xpose.msra.mxu0 0
    %2520 = vmatprep.mubr.bf16.mxu0 0
    %2521 = vmatmul.mubr.bf16.gmra.mrb[0].mxu0 %v2483
    %v2522 = vpop.f32.mrb[0].mxu0
    %v2523 = vadd.f32 %v2267, %v2522
    %v2524 = vpop.f32.mrb[0].mxu0
    %v2525 = vpop.f32.mrb[0].mxu0
    %v2526 = vadd.f32 %v2268, %v2525
    %v2527 = vpop.f32.mrb[0].mxu0
    %2528 = vdwg.mxu0
    %2530 = vrot.lane.b32.xlu0 %v2263, 112
    %v2531 = vpop.permute.xlu0 %2530
    %2532 = vrot.lane.b32.xlu0 %v2263, 80
    %v2533 = vpop.permute.xlu0 %2532
    %v2535 = vsel %vm280, %v2531, 0
    %v2538 = vsel %vm280, %v2533, 0
    %2540 = vmatprep.subr.bf16.mxu0 0
    %2541 = vmatpush1.bf16.xpose.msra.mxu0 %v2538
    %2542 = vmatprep.subr.bf16.mxu0 0
    %2543 = vmatpush1.bf16.xpose.msra.mxu0 0
    %2544 = vmatprep.subr.bf16.mxu0 0
    %2545 = vmatpush1.bf16.xpose.msra.mxu0 0
    %2546 = vmatprep.subr.bf16.mxu0 0
    %2547 = vmatpush1.bf16.xpose.msra.mxu0 0
    %2548 = vmatprep.subr.bf16.mxu0 0
    %2549 = vmatpush1.bf16.xpose.msra.mxu0 0
    %2550 = vmatprep.subr.bf16.mxu0 0
    %2551 = vmatpush1.bf16.xpose.msra.mxu0 0
    %2552 = vmatprep.subr.bf16.mxu0 0
    %2553 = vmatpush1.bf16.xpose.msra.mxu0 0
    %2554 = vmatprep.subr.bf16.mxu0 0
    %2555 = vmatpush1.bf16.xpose.msra.mxu0 0
    %2556 = vmatprep.subr.bf16.mxu0 0
    %2557 = vmatpush1.bf16.xpose.msra.mxu0 0
    %2558 = vmatprep.subr.bf16.mxu0 0
    %2559 = vmatpush1.bf16.xpose.msra.mxu0 0
    %2560 = vmatprep.subr.bf16.mxu0 0
    %2561 = vmatpush1.bf16.xpose.msra.mxu0 0
    %2562 = vmatprep.subr.bf16.mxu0 0
    %2563 = vmatpush1.bf16.xpose.msra.mxu0 0
    %2564 = vmatprep.subr.bf16.mxu0 0
    %2565 = vmatpush1.bf16.xpose.msra.mxu0 0
    %2566 = vmatprep.subr.bf16.mxu0 0
    %2567 = vmatpush1.bf16.xpose.msra.mxu0 0
    %2568 = vmatprep.subr.bf16.mxu0 0
    %2569 = vmatpush1.bf16.xpose.msra.mxu0 0
    %2570 = vmatprep.subr.bf16.mxu0 0
    %2571 = vmatpush1.bf16.xpose.msra.mxu0 0
    %2572 = vmatprep.mubr.bf16.mxu0 0
    %2573 = vmatmul.mubr.bf16.gmra.mrb[0].mxu0 %v2535
    %v2574 = vpop.f32.mrb[0].mxu0
    %v2575 = vadd.f32 %v2267, %v2574
    %v2576 = vpop.f32.mrb[0].mxu0
    %v2577 = vpop.f32.mrb[0].mxu0
    %v2578 = vadd.f32 %v2268, %v2577
    %v2579 = vpop.f32.mrb[0].mxu0
    %2580 = vdwg.mxu0
    %2582 = vrot.lane.b32.xlu0 %v2264, 112
    %v2583 = vpop.permute.xlu0 %2582
    %2584 = vrot.lane.b32.xlu0 %v2264, 80
    %v2585 = vpop.permute.xlu0 %2584
    %v2587 = vsel %vm280, %v2583, 0
    %v2590 = vsel %vm280, %v2585, 0
    %2592 = vmatprep.subr.bf16.mxu0 0
    %2593 = vmatpush1.bf16.xpose.msra.mxu0 %v2590
    %2594 = vmatprep.subr.bf16.mxu0 0
    %2595 = vmatpush1.bf16.xpose.msra.mxu0 0
    %2596 = vmatprep.subr.bf16.mxu0 0
    %2597 = vmatpush1.bf16.xpose.msra.mxu0 0
    %2598 = vmatprep.subr.bf16.mxu0 0
    %2599 = vmatpush1.bf16.xpose.msra.mxu0 0
    %2600 = vmatprep.subr.bf16.mxu0 0
    %2601 = vmatpush1.bf16.xpose.msra.mxu0 0
    %2602 = vmatprep.subr.bf16.mxu0 0
    %2603 = vmatpush1.bf16.xpose.msra.mxu0 0
    %2604 = vmatprep.subr.bf16.mxu0 0
    %2605 = vmatpush1.bf16.xpose.msra.mxu0 0
    %2606 = vmatprep.subr.bf16.mxu0 0
    %2607 = vmatpush1.bf16.xpose.msra.mxu0 0
    %2608 = vmatprep.subr.bf16.mxu0 0
    %2609 = vmatpush1.bf16.xpose.msra.mxu0 0
    %2610 = vmatprep.subr.bf16.mxu0 0
    %2611 = vmatpush1.bf16.xpose.msra.mxu0 0
    %2612 = vmatprep.subr.bf16.mxu0 0
    %2613 = vmatpush1.bf16.xpose.msra.mxu0 0
    %2614 = vmatprep.subr.bf16.mxu0 0
    %2615 = vmatpush1.bf16.xpose.msra.mxu0 0
    %2616 = vmatprep.subr.bf16.mxu0 0
    %2617 = vmatpush1.bf16.xpose.msra.mxu0 0
    %2618 = vmatprep.subr.bf16.mxu0 0
    %2619 = vmatpush1.bf16.xpose.msra.mxu0 0
    %2620 = vmatprep.subr.bf16.mxu0 0
    %2621 = vmatpush1.bf16.xpose.msra.mxu0 0
    %2622 = vmatprep.subr.bf16.mxu0 0
    %2623 = vmatpush1.bf16.xpose.msra.mxu0 0
    %2624 = vmatprep.mubr.bf16.mxu0 0
    %2625 = vmatmul.mubr.bf16.gmra.mrb[0].mxu0 %v2587
    %v2626 = vpop.f32.mrb[0].mxu0
    %v2627 = vadd.f32 %v2267, %v2626
    %v2628 = vpop.f32.mrb[0].mxu0
    %v2629 = vpop.f32.mrb[0].mxu0
    %v2630 = vadd.f32 %v2268, %v2629
    %v2631 = vpop.f32.mrb[0].mxu0
    %2632 = vdwg.mxu0
    %2634 = vrot.lane.b32.xlu0 %v2265, 112
    %v2635 = vpop.permute.xlu0 %2634
    %2636 = vrot.lane.b32.xlu0 %v2265, 80
    %v2637 = vpop.permute.xlu0 %2636
    %v2639 = vsel %vm280, %v2635, 0
    %v2642 = vsel %vm280, %v2637, 0
    %2644 = vmatprep.subr.bf16.mxu0 0
    %2645 = vmatpush1.bf16.xpose.msra.mxu0 %v2642
    %2646 = vmatprep.subr.bf16.mxu0 0
    %2647 = vmatpush1.bf16.xpose.msra.mxu0 0
    %2648 = vmatprep.subr.bf16.mxu0 0
    %2649 = vmatpush1.bf16.xpose.msra.mxu0 0
    %2650 = vmatprep.subr.bf16.mxu0 0
    %2651 = vmatpush1.bf16.xpose.msra.mxu0 0
    %2652 = vmatprep.subr.bf16.mxu0 0
    %2653 = vmatpush1.bf16.xpose.msra.mxu0 0
    %2654 = vmatprep.subr.bf16.mxu0 0
    %2655 = vmatpush1.bf16.xpose.msra.mxu0 0
    %2656 = vmatprep.subr.bf16.mxu0 0
    %2657 = vmatpush1.bf16.xpose.msra.mxu0 0
    %2658 = vmatprep.subr.bf16.mxu0 0
    %2659 = vmatpush1.bf16.xpose.msra.mxu0 0
    %2660 = vmatprep.subr.bf16.mxu0 0
    %2661 = vmatpush1.bf16.xpose.msra.mxu0 0
    %2662 = vmatprep.subr.bf16.mxu0 0
    %2663 = vmatpush1.bf16.xpose.msra.mxu0 0
    %2664 = vmatprep.subr.bf16.mxu0 0
    %2665 = vmatpush1.bf16.xpose.msra.mxu0 0
    %2666 = vmatprep.subr.bf16.mxu0 0
    %2667 = vmatpush1.bf16.xpose.msra.mxu0 0
    %2668 = vmatprep.subr.bf16.mxu0 0
    %2669 = vmatpush1.bf16.xpose.msra.mxu0 0
    %2670 = vmatprep.subr.bf16.mxu0 0
    %2671 = vmatpush1.bf16.xpose.msra.mxu0 0
    %2672 = vmatprep.subr.bf16.mxu0 0
    %2673 = vmatpush1.bf16.xpose.msra.mxu0 0
    %2674 = vmatprep.subr.bf16.mxu0 0
    %2675 = vmatpush1.bf16.xpose.msra.mxu0 0
    %2676 = vmatprep.mubr.bf16.mxu0 0
    %2677 = vmatmul.mubr.bf16.gmra.mrb[0].mxu0 %v2639
    %v2678 = vpop.f32.mrb[0].mxu0
    %v2679 = vadd.f32 %v2267, %v2678
    %v2680 = vpop.f32.mrb[0].mxu0
    %v2681 = vpop.f32.mrb[0].mxu0
    %v2682 = vadd.f32 %v2268, %v2681
    %v2683 = vpop.f32.mrb[0].mxu0
    %2684 = vdwg.mxu0
    %v2685 = vadd.f32 %v2315, %v259
    %v2686 = vadd.f32 %v2318, %v260
    %v2687 = vadd.f32 %v2367, %v261
    %v2688 = vadd.f32 %v2370, %v262
    %v2689 = vadd.f32 %v2419, %v263
    %v2690 = vadd.f32 %v2422, %v264
    %v2691 = vadd.f32 %v2471, %v265
    %v2692 = vadd.f32 %v2474, %v266
    %v2693 = vadd.f32 %v2523, %v259
    %v2694 = vadd.f32 %v2526, %v260
    %v2695 = vadd.f32 %v2575, %v261
    %v2696 = vadd.f32 %v2578, %v262
    %v2697 = vadd.f32 %v2627, %v263
    %v2698 = vadd.f32 %v2630, %v264
    %v2699 = vadd.f32 %v2679, %v265
    %v2700 = vadd.f32 %v2682, %v266
    %v2701 = vsel %vm694, %v2685, -inf
    %2702 = vmax.xlane.f32.xlu0 %v2701
    %v2703 = vpop.xlane.xlu0 %2702
    %v2704 = vsel %vm694, %v2686, -inf
    %2705 = vmax.xlane.f32.xlu0 %v2704
    %v2706 = vpop.xlane.xlu0 %2705
    %v2707 = vsel %vm694, %v2687, -inf
    %2708 = vmax.xlane.f32.xlu0 %v2707
    %v2709 = vpop.xlane.xlu0 %2708
    %v2710 = vsel %vm694, %v2688, -inf
    %2711 = vmax.xlane.f32.xlu0 %v2710
    %v2712 = vpop.xlane.xlu0 %2711
    %v2713 = vsel %vm694, %v2689, -inf
    %2714 = vmax.xlane.f32.xlu0 %v2713
    %v2715 = vpop.xlane.xlu0 %2714
    %v2716 = vsel %vm694, %v2690, -inf
    %2717 = vmax.xlane.f32.xlu0 %v2716
    %v2718 = vpop.xlane.xlu0 %2717
    %v2719 = vsel %vm694, %v2691, -inf
    %2720 = vmax.xlane.f32.xlu0 %v2719
    %v2721 = vpop.xlane.xlu0 %2720
    %v2722 = vsel %vm694, %v2692, -inf
    %2723 = vmax.xlane.f32.xlu0 %v2722
    %v2724 = vpop.xlane.xlu0 %2723
    %v2725 = vsel %vm694, %v2693, -inf
    %2726 = vmax.xlane.f32.xlu0 %v2725
    %v2727 = vpop.xlane.xlu0 %2726
    %v2728 = vsel %vm694, %v2694, -inf
    %2729 = vmax.xlane.f32.xlu0 %v2728
    %v2730 = vpop.xlane.xlu0 %2729
    %v2731 = vsel %vm694, %v2695, -inf
    %2732 = vmax.xlane.f32.xlu0 %v2731
    %v2733 = vpop.xlane.xlu0 %2732
    %v2734 = vsel %vm694, %v2696, -inf
    %2735 = vmax.xlane.f32.xlu0 %v2734
    %v2736 = vpop.xlane.xlu0 %2735
    %v2737 = vsel %vm694, %v2697, -inf
    %2738 = vmax.xlane.f32.xlu0 %v2737
    %v2739 = vpop.xlane.xlu0 %2738
    %v2740 = vsel %vm694, %v2698, -inf
    %2741 = vmax.xlane.f32.xlu0 %v2740
    %v2742 = vpop.xlane.xlu0 %2741
    %v2743 = vsel %vm694, %v2699, -inf
    %2744 = vmax.xlane.f32.xlu0 %v2743
    %v2745 = vpop.xlane.xlu0 %2744
    %v2746 = vsel %vm694, %v2700, -inf
    %2747 = vmax.xlane.f32.xlu0 %v2746
    %v2748 = vpop.xlane.xlu0 %2747
    %v2749 = vsub.f32 %v2685, %v2703
    %v2750 = vsub.f32 %v2686, %v2706
    %v2751 = vsub.f32 %v2687, %v2709
    %v2752 = vsub.f32 %v2688, %v2712
    %v2753 = vsub.f32 %v2689, %v2715
    %v2754 = vsub.f32 %v2690, %v2718
    %v2755 = vsub.f32 %v2691, %v2721
    %v2756 = vsub.f32 %v2692, %v2724
    %v2757 = vsub.f32 %v2693, %v2727
    %v2758 = vsub.f32 %v2694, %v2730
    %v2759 = vsub.f32 %v2695, %v2733
    %v2760 = vsub.f32 %v2696, %v2736
    %v2761 = vsub.f32 %v2697, %v2739
    %v2762 = vsub.f32 %v2698, %v2742
    %v2763 = vsub.f32 %v2699, %v2745
    %v2764 = vsub.f32 %v2700, %v2748
    %v2765 = vmul.f32 %v2749, 1.442695
    %v2766 = vpow.pop %v2765
    %v2767 = vmul.f32 %v2750, 1.442695
    %v2768 = vpow.pop %v2767
    %v2769 = vmul.f32 %v2751, 1.442695
    %v2770 = vpow.pop %v2769
    %v2771 = vmul.f32 %v2752, 1.442695
    %v2772 = vpow.pop %v2771
    %v2773 = vmul.f32 %v2753, 1.442695
    %v2774 = vpow.pop %v2773
    %v2775 = vmul.f32 %v2754, 1.442695
    %v2776 = vpow.pop %v2775
    %v2777 = vmul.f32 %v2755, 1.442695
    %v2778 = vpow.pop %v2777
    %v2779 = vmul.f32 %v2756, 1.442695
    %v2780 = vpow.pop %v2779
    %v2781 = vmul.f32 %v2757, 1.442695
    %v2782 = vpow.pop %v2781
    %v2783 = vmul.f32 %v2758, 1.442695
    %v2784 = vpow.pop %v2783
    %v2785 = vmul.f32 %v2759, 1.442695
    %v2786 = vpow.pop %v2785
    %v2787 = vmul.f32 %v2760, 1.442695
    %v2788 = vpow.pop %v2787
    %v2789 = vmul.f32 %v2761, 1.442695
    %v2790 = vpow.pop %v2789
    %v2791 = vmul.f32 %v2762, 1.442695
    %v2792 = vpow.pop %v2791
    %v2793 = vmul.f32 %v2763, 1.442695
    %v2794 = vpow.pop %v2793
    %v2795 = vmul.f32 %v2764, 1.442695
    %v2796 = vpow.pop %v2795
    %v2797 = vsel %vm694, %v2766, 0.0
    %2798 = vadd.xlane.f32.xlu0 %v2797
    %v2799 = vpop.xlane.xlu0 %2798
    %v2800 = vsel %vm694, %v2768, 0.0
    %2801 = vadd.xlane.f32.xlu0 %v2800
    %v2802 = vpop.xlane.xlu0 %2801
    %v2803 = vsel %vm694, %v2770, 0.0
    %2804 = vadd.xlane.f32.xlu0 %v2803
    %v2805 = vpop.xlane.xlu0 %2804
    %v2806 = vsel %vm694, %v2772, 0.0
    %2807 = vadd.xlane.f32.xlu0 %v2806
    %v2808 = vpop.xlane.xlu0 %2807
    %v2809 = vsel %vm694, %v2774, 0.0
    %2810 = vadd.xlane.f32.xlu0 %v2809
    %v2811 = vpop.xlane.xlu0 %2810
    %v2812 = vsel %vm694, %v2776, 0.0
    %2813 = vadd.xlane.f32.xlu0 %v2812
    %v2814 = vpop.xlane.xlu0 %2813
    %v2815 = vsel %vm694, %v2778, 0.0
    %2816 = vadd.xlane.f32.xlu0 %v2815
    %v2817 = vpop.xlane.xlu0 %2816
    %v2818 = vsel %vm694, %v2780, 0.0
    %2819 = vadd.xlane.f32.xlu0 %v2818
    %v2820 = vpop.xlane.xlu0 %2819
    %v2821 = vsel %vm694, %v2782, 0.0
    %2822 = vadd.xlane.f32.xlu0 %v2821
    %v2823 = vpop.xlane.xlu0 %2822
    %v2824 = vsel %vm694, %v2784, 0.0
    %2825 = vadd.xlane.f32.xlu0 %v2824
    %v2826 = vpop.xlane.xlu0 %2825
    %v2827 = vsel %vm694, %v2786, 0.0
    %2828 = vadd.xlane.f32.xlu0 %v2827
    %v2829 = vpop.xlane.xlu0 %2828
    %v2830 = vsel %vm694, %v2788, 0.0
    %2831 = vadd.xlane.f32.xlu0 %v2830
    %v2832 = vpop.xlane.xlu0 %2831
    %v2833 = vsel %vm694, %v2790, 0.0
    %2834 = vadd.xlane.f32.xlu0 %v2833
    %v2835 = vpop.xlane.xlu0 %2834
    %v2836 = vsel %vm694, %v2792, 0.0
    %2837 = vadd.xlane.f32.xlu0 %v2836
    %v2838 = vpop.xlane.xlu0 %2837
    %v2839 = vsel %vm694, %v2794, 0.0
    %2840 = vadd.xlane.f32.xlu0 %v2839
    %v2841 = vpop.xlane.xlu0 %2840
    %v2842 = vsel %vm694, %v2796, 0.0
    %2843 = vadd.xlane.f32.xlu0 %v2842
    %v2844 = vpop.xlane.xlu0 %2843
    %v2845 = vrcp.pop %v2799
    %v2846 = vrcp.pop %v2802
    %v2847 = vrcp.pop %v2805
    %v2848 = vrcp.pop %v2808
    %v2849 = vrcp.pop %v2811
    %v2850 = vrcp.pop %v2814
    %v2851 = vrcp.pop %v2817
    %v2852 = vrcp.pop %v2820
    %v2853 = vrcp.pop %v2823
    %v2854 = vrcp.pop %v2826
    %v2855 = vrcp.pop %v2829
    %v2856 = vrcp.pop %v2832
    %v2857 = vrcp.pop %v2835
    %v2858 = vrcp.pop %v2838
    %v2859 = vrcp.pop %v2841
    %v2860 = vrcp.pop %v2844
    %v2861 = vmul.f32 %v2766, %v2845
    %v2862 = vmul.f32 %v2768, %v2846
    %v2863 = vmul.f32 %v2770, %v2847
    %v2864 = vmul.f32 %v2772, %v2848
    %v2865 = vmul.f32 %v2774, %v2849
    %v2866 = vmul.f32 %v2776, %v2850
    %v2867 = vmul.f32 %v2778, %v2851
    %v2868 = vmul.f32 %v2780, %v2852
    %v2869 = vmul.f32 %v2782, %v2853
    %v2870 = vmul.f32 %v2784, %v2854
    %v2871 = vmul.f32 %v2786, %v2855
    %v2872 = vmul.f32 %v2788, %v2856
    %v2873 = vmul.f32 %v2790, %v2857
    %v2874 = vmul.f32 %v2792, %v2858
    %v2875 = vmul.f32 %v2794, %v2859
    %v2876 = vmul.f32 %v2796, %v2860
    %v2877 = vpack.c.bf16 %v2862, %v2861
    %v2878 = vpack.c.bf16 %v2864, %v2863
    %v2879 = vpack.c.bf16 %v2866, %v2865
    %v2880 = vpack.c.bf16 %v2868, %v2867
    %v2881 = vpack.c.bf16 %v2870, %v2869
    %v2882 = vpack.c.bf16 %v2872, %v2871
    %v2883 = vpack.c.bf16 %v2874, %v2873
    %v2884 = vpack.c.bf16 %v2876, %v2875
    %2885 = vrot.lane.b32.xlu0 %v2258, 48
    %v2886 = vpop.permute.xlu0 %2885
    %v2889 = vsel %vm694, %v2877, 0
    %2891 = vmatprep.subr.bf16.mxu0 0
    %2892 = vmatpush1.bf16.msra.mxu0 %v2886
    %2893 = vmatprep.subr.bf16.mxu0 0
    %2894 = vmatpush1.bf16.msra.mxu0 0
    %2895 = vmatprep.subr.bf16.mxu0 0
    %2896 = vmatpush1.bf16.msra.mxu0 0
    %2897 = vmatprep.subr.bf16.mxu0 0
    %2898 = vmatpush1.bf16.msra.mxu0 0
    %2899 = vmatprep.subr.bf16.mxu0 0
    %2900 = vmatpush1.bf16.msra.mxu0 0
    %2901 = vmatprep.subr.bf16.mxu0 0
    %2902 = vmatpush1.bf16.msra.mxu0 0
    %2903 = vmatprep.subr.bf16.mxu0 0
    %2904 = vmatpush1.bf16.msra.mxu0 0
    %2905 = vmatprep.subr.bf16.mxu0 0
    %2906 = vmatpush1.bf16.msra.mxu0 0
    %2907 = vmatprep.subr.bf16.mxu0 0
    %2908 = vmatpush1.bf16.msra.mxu0 0
    %2909 = vmatprep.subr.bf16.mxu0 0
    %2910 = vmatpush1.bf16.msra.mxu0 0
    %2911 = vmatprep.subr.bf16.mxu0 0
    %2912 = vmatpush1.bf16.msra.mxu0 0
    %2913 = vmatprep.subr.bf16.mxu0 0
    %2914 = vmatpush1.bf16.msra.mxu0 0
    %2915 = vmatprep.subr.bf16.mxu0 0
    %2916 = vmatpush1.bf16.msra.mxu0 0
    %2917 = vmatprep.subr.bf16.mxu0 0
    %2918 = vmatpush1.bf16.msra.mxu0 0
    %2919 = vmatprep.subr.bf16.mxu0 0
    %2920 = vmatpush1.bf16.msra.mxu0 0
    %2921 = vmatprep.subr.bf16.mxu0 0
    %2922 = vmatpush1.bf16.msra.mxu0 0
    %2923 = vmatprep.mubr.bf16.mxu0 0
    %2924 = vmatmul.mubr.bf16.gmra.mrb[0].mxu0 %v2889
    %v2925 = vpop.f32.mrb[0].mxu0
    %v2926 = vadd.f32 0.0, %v2925
    %v2927 = vpop.f32.mrb[0].mxu0
    %v2928 = vpop.f32.mrb[0].mxu0
    %v2929 = vadd.f32 0.0, %v2928
    %v2930 = vpop.f32.mrb[0].mxu0
    %2931 = vdwg.mxu0
    %2932 = vrot.lane.b32.xlu0 %v2259, 48
    %v2933 = vpop.permute.xlu0 %2932
    %v2936 = vsel %vm694, %v2878, 0
    %2938 = vmatprep.subr.bf16.mxu0 0
    %2939 = vmatpush1.bf16.msra.mxu0 %v2933
    %2940 = vmatprep.subr.bf16.mxu0 0
    %2941 = vmatpush1.bf16.msra.mxu0 0
    %2942 = vmatprep.subr.bf16.mxu0 0
    %2943 = vmatpush1.bf16.msra.mxu0 0
    %2944 = vmatprep.subr.bf16.mxu0 0
    %2945 = vmatpush1.bf16.msra.mxu0 0
    %2946 = vmatprep.subr.bf16.mxu0 0
    %2947 = vmatpush1.bf16.msra.mxu0 0
    %2948 = vmatprep.subr.bf16.mxu0 0
    %2949 = vmatpush1.bf16.msra.mxu0 0
    %2950 = vmatprep.subr.bf16.mxu0 0
    %2951 = vmatpush1.bf16.msra.mxu0 0
    %2952 = vmatprep.subr.bf16.mxu0 0
    %2953 = vmatpush1.bf16.msra.mxu0 0
    %2954 = vmatprep.subr.bf16.mxu0 0
    %2955 = vmatpush1.bf16.msra.mxu0 0
    %2956 = vmatprep.subr.bf16.mxu0 0
    %2957 = vmatpush1.bf16.msra.mxu0 0
    %2958 = vmatprep.subr.bf16.mxu0 0
    %2959 = vmatpush1.bf16.msra.mxu0 0
    %2960 = vmatprep.subr.bf16.mxu0 0
    %2961 = vmatpush1.bf16.msra.mxu0 0
    %2962 = vmatprep.subr.bf16.mxu0 0
    %2963 = vmatpush1.bf16.msra.mxu0 0
    %2964 = vmatprep.subr.bf16.mxu0 0
    %2965 = vmatpush1.bf16.msra.mxu0 0
    %2966 = vmatprep.subr.bf16.mxu0 0
    %2967 = vmatpush1.bf16.msra.mxu0 0
    %2968 = vmatprep.subr.bf16.mxu0 0
    %2969 = vmatpush1.bf16.msra.mxu0 0
    %2970 = vmatprep.mubr.bf16.mxu0 0
    %2971 = vmatmul.mubr.bf16.gmra.mrb[0].mxu0 %v2936
    %v2972 = vpop.f32.mrb[0].mxu0
    %v2973 = vadd.f32 0.0, %v2972
    %v2974 = vpop.f32.mrb[0].mxu0
    %v2975 = vpop.f32.mrb[0].mxu0
    %v2976 = vadd.f32 0.0, %v2975
    %v2977 = vpop.f32.mrb[0].mxu0
    %2978 = vdwg.mxu0
    %2979 = vrot.lane.b32.xlu0 %v2260, 48
    %v2980 = vpop.permute.xlu0 %2979
    %v2983 = vsel %vm694, %v2879, 0
    %2985 = vmatprep.subr.bf16.mxu0 0
    %2986 = vmatpush1.bf16.msra.mxu0 %v2980
    %2987 = vmatprep.subr.bf16.mxu0 0
    %2988 = vmatpush1.bf16.msra.mxu0 0
    %2989 = vmatprep.subr.bf16.mxu0 0
    %2990 = vmatpush1.bf16.msra.mxu0 0
    %2991 = vmatprep.subr.bf16.mxu0 0
    %2992 = vmatpush1.bf16.msra.mxu0 0
    %2993 = vmatprep.subr.bf16.mxu0 0
    %2994 = vmatpush1.bf16.msra.mxu0 0
    %2995 = vmatprep.subr.bf16.mxu0 0
    %2996 = vmatpush1.bf16.msra.mxu0 0
    %2997 = vmatprep.subr.bf16.mxu0 0
    %2998 = vmatpush1.bf16.msra.mxu0 0
    %2999 = vmatprep.subr.bf16.mxu0 0
    %3000 = vmatpush1.bf16.msra.mxu0 0
    %3001 = vmatprep.subr.bf16.mxu0 0
    %3002 = vmatpush1.bf16.msra.mxu0 0
    %3003 = vmatprep.subr.bf16.mxu0 0
    %3004 = vmatpush1.bf16.msra.mxu0 0
    %3005 = vmatprep.subr.bf16.mxu0 0
    %3006 = vmatpush1.bf16.msra.mxu0 0
    %3007 = vmatprep.subr.bf16.mxu0 0
    %3008 = vmatpush1.bf16.msra.mxu0 0
    %3009 = vmatprep.subr.bf16.mxu0 0
    %3010 = vmatpush1.bf16.msra.mxu0 0
    %3011 = vmatprep.subr.bf16.mxu0 0
    %3012 = vmatpush1.bf16.msra.mxu0 0
    %3013 = vmatprep.subr.bf16.mxu0 0
    %3014 = vmatpush1.bf16.msra.mxu0 0
    %3015 = vmatprep.subr.bf16.mxu0 0
    %3016 = vmatpush1.bf16.msra.mxu0 0
    %3017 = vmatprep.mubr.bf16.mxu0 0
    %3018 = vmatmul.mubr.bf16.gmra.mrb[0].mxu0 %v2983
    %v3019 = vpop.f32.mrb[0].mxu0
    %v3020 = vadd.f32 0.0, %v3019
    %v3021 = vpop.f32.mrb[0].mxu0
    %v3022 = vpop.f32.mrb[0].mxu0
    %v3023 = vadd.f32 0.0, %v3022
    %v3024 = vpop.f32.mrb[0].mxu0
    %3025 = vdwg.mxu0
    %3026 = vrot.lane.b32.xlu0 %v2261, 48
    %v3027 = vpop.permute.xlu0 %3026
    %v3030 = vsel %vm694, %v2880, 0
    %3032 = vmatprep.subr.bf16.mxu0 0
    %3033 = vmatpush1.bf16.msra.mxu0 %v3027
    %3034 = vmatprep.subr.bf16.mxu0 0
    %3035 = vmatpush1.bf16.msra.mxu0 0
    %3036 = vmatprep.subr.bf16.mxu0 0
    %3037 = vmatpush1.bf16.msra.mxu0 0
    %3038 = vmatprep.subr.bf16.mxu0 0
    %3039 = vmatpush1.bf16.msra.mxu0 0
    %3040 = vmatprep.subr.bf16.mxu0 0
    %3041 = vmatpush1.bf16.msra.mxu0 0
    %3042 = vmatprep.subr.bf16.mxu0 0
    %3043 = vmatpush1.bf16.msra.mxu0 0
    %3044 = vmatprep.subr.bf16.mxu0 0
    %3045 = vmatpush1.bf16.msra.mxu0 0
    %3046 = vmatprep.subr.bf16.mxu0 0
    %3047 = vmatpush1.bf16.msra.mxu0 0
    %3048 = vmatprep.subr.bf16.mxu0 0
    %3049 = vmatpush1.bf16.msra.mxu0 0
    %3050 = vmatprep.subr.bf16.mxu0 0
    %3051 = vmatpush1.bf16.msra.mxu0 0
    %3052 = vmatprep.subr.bf16.mxu0 0
    %3053 = vmatpush1.bf16.msra.mxu0 0
    %3054 = vmatprep.subr.bf16.mxu0 0
    %3055 = vmatpush1.bf16.msra.mxu0 0
    %3056 = vmatprep.subr.bf16.mxu0 0
    %3057 = vmatpush1.bf16.msra.mxu0 0
    %3058 = vmatprep.subr.bf16.mxu0 0
    %3059 = vmatpush1.bf16.msra.mxu0 0
    %3060 = vmatprep.subr.bf16.mxu0 0
    %3061 = vmatpush1.bf16.msra.mxu0 0
    %3062 = vmatprep.subr.bf16.mxu0 0
    %3063 = vmatpush1.bf16.msra.mxu0 0
    %3064 = vmatprep.mubr.bf16.mxu0 0
    %3065 = vmatmul.mubr.bf16.gmra.mrb[0].mxu0 %v3030
    %v3066 = vpop.f32.mrb[0].mxu0
    %v3067 = vadd.f32 0.0, %v3066
    %v3068 = vpop.f32.mrb[0].mxu0
    %v3069 = vpop.f32.mrb[0].mxu0
    %v3070 = vadd.f32 0.0, %v3069
    %v3071 = vpop.f32.mrb[0].mxu0
    %3072 = vdwg.mxu0
    %3073 = vrot.lane.b32.xlu0 %v2262, 48
    %v3074 = vpop.permute.xlu0 %3073
    %v3077 = vsel %vm694, %v2881, 0
    %3079 = vmatprep.subr.bf16.mxu0 0
    %3080 = vmatpush1.bf16.msra.mxu0 %v3074
    %3081 = vmatprep.subr.bf16.mxu0 0
    %3082 = vmatpush1.bf16.msra.mxu0 0
    %3083 = vmatprep.subr.bf16.mxu0 0
    %3084 = vmatpush1.bf16.msra.mxu0 0
    %3085 = vmatprep.subr.bf16.mxu0 0
    %3086 = vmatpush1.bf16.msra.mxu0 0
    %3087 = vmatprep.subr.bf16.mxu0 0
    %3088 = vmatpush1.bf16.msra.mxu0 0
    %3089 = vmatprep.subr.bf16.mxu0 0
    %3090 = vmatpush1.bf16.msra.mxu0 0
    %3091 = vmatprep.subr.bf16.mxu0 0
    %3092 = vmatpush1.bf16.msra.mxu0 0
    %3093 = vmatprep.subr.bf16.mxu0 0
    %3094 = vmatpush1.bf16.msra.mxu0 0
    %3095 = vmatprep.subr.bf16.mxu0 0
    %3096 = vmatpush1.bf16.msra.mxu0 0
    %3097 = vmatprep.subr.bf16.mxu0 0
    %3098 = vmatpush1.bf16.msra.mxu0 0
    %3099 = vmatprep.subr.bf16.mxu0 0
    %3100 = vmatpush1.bf16.msra.mxu0 0
    %3101 = vmatprep.subr.bf16.mxu0 0
    %3102 = vmatpush1.bf16.msra.mxu0 0
    %3103 = vmatprep.subr.bf16.mxu0 0
    %3104 = vmatpush1.bf16.msra.mxu0 0
    %3105 = vmatprep.subr.bf16.mxu0 0
    %3106 = vmatpush1.bf16.msra.mxu0 0
    %3107 = vmatprep.subr.bf16.mxu0 0
    %3108 = vmatpush1.bf16.msra.mxu0 0
    %3109 = vmatprep.subr.bf16.mxu0 0
    %3110 = vmatpush1.bf16.msra.mxu0 0
    %3111 = vmatprep.mubr.bf16.mxu0 0
    %3112 = vmatmul.mubr.bf16.gmra.mrb[0].mxu0 %v3077
    %v3113 = vpop.f32.mrb[0].mxu0
    %v3114 = vadd.f32 0.0, %v3113
    %v3115 = vpop.f32.mrb[0].mxu0
    %v3116 = vpop.f32.mrb[0].mxu0
    %v3117 = vadd.f32 0.0, %v3116
    %v3118 = vpop.f32.mrb[0].mxu0
    %3119 = vdwg.mxu0
    %3120 = vrot.lane.b32.xlu0 %v2263, 48
    %v3121 = vpop.permute.xlu0 %3120
    %v3124 = vsel %vm694, %v2882, 0
    %3126 = vmatprep.subr.bf16.mxu0 0
    %3127 = vmatpush1.bf16.msra.mxu0 %v3121
    %3128 = vmatprep.subr.bf16.mxu0 0
    %3129 = vmatpush1.bf16.msra.mxu0 0
    %3130 = vmatprep.subr.bf16.mxu0 0
    %3131 = vmatpush1.bf16.msra.mxu0 0
    %3132 = vmatprep.subr.bf16.mxu0 0
    %3133 = vmatpush1.bf16.msra.mxu0 0
    %3134 = vmatprep.subr.bf16.mxu0 0
    %3135 = vmatpush1.bf16.msra.mxu0 0
    %3136 = vmatprep.subr.bf16.mxu0 0
    %3137 = vmatpush1.bf16.msra.mxu0 0
    %3138 = vmatprep.subr.bf16.mxu0 0
    %3139 = vmatpush1.bf16.msra.mxu0 0
    %3140 = vmatprep.subr.bf16.mxu0 0
    %3141 = vmatpush1.bf16.msra.mxu0 0
    %3142 = vmatprep.subr.bf16.mxu0 0
    %3143 = vmatpush1.bf16.msra.mxu0 0
    %3144 = vmatprep.subr.bf16.mxu0 0
    %3145 = vmatpush1.bf16.msra.mxu0 0
    %3146 = vmatprep.subr.bf16.mxu0 0
    %3147 = vmatpush1.bf16.msra.mxu0 0
    %3148 = vmatprep.subr.bf16.mxu0 0
    %3149 = vmatpush1.bf16.msra.mxu0 0
    %3150 = vmatprep.subr.bf16.mxu0 0
    %3151 = vmatpush1.bf16.msra.mxu0 0
    %3152 = vmatprep.subr.bf16.mxu0 0
    %3153 = vmatpush1.bf16.msra.mxu0 0
    %3154 = vmatprep.subr.bf16.mxu0 0
    %3155 = vmatpush1.bf16.msra.mxu0 0
    %3156 = vmatprep.subr.bf16.mxu0 0
    %3157 = vmatpush1.bf16.msra.mxu0 0
    %3158 = vmatprep.mubr.bf16.mxu0 0
    %3159 = vmatmul.mubr.bf16.gmra.mrb[0].mxu0 %v3124
    %v3160 = vpop.f32.mrb[0].mxu0
    %v3161 = vadd.f32 0.0, %v3160
    %v3162 = vpop.f32.mrb[0].mxu0
    %v3163 = vpop.f32.mrb[0].mxu0
    %v3164 = vadd.f32 0.0, %v3163
    %v3165 = vpop.f32.mrb[0].mxu0
    %3166 = vdwg.mxu0
    %3167 = vrot.lane.b32.xlu0 %v2264, 48
    %v3168 = vpop.permute.xlu0 %3167
    %v3171 = vsel %vm694, %v2883, 0
    %3173 = vmatprep.subr.bf16.mxu0 0
    %3174 = vmatpush1.bf16.msra.mxu0 %v3168
    %3175 = vmatprep.subr.bf16.mxu0 0
    %3176 = vmatpush1.bf16.msra.mxu0 0
    %3177 = vmatprep.subr.bf16.mxu0 0
    %3178 = vmatpush1.bf16.msra.mxu0 0
    %3179 = vmatprep.subr.bf16.mxu0 0
    %3180 = vmatpush1.bf16.msra.mxu0 0
    %3181 = vmatprep.subr.bf16.mxu0 0
    %3182 = vmatpush1.bf16.msra.mxu0 0
    %3183 = vmatprep.subr.bf16.mxu0 0
    %3184 = vmatpush1.bf16.msra.mxu0 0
    %3185 = vmatprep.subr.bf16.mxu0 0
    %3186 = vmatpush1.bf16.msra.mxu0 0
    %3187 = vmatprep.subr.bf16.mxu0 0
    %3188 = vmatpush1.bf16.msra.mxu0 0
    %3189 = vmatprep.subr.bf16.mxu0 0
    %3190 = vmatpush1.bf16.msra.mxu0 0
    %3191 = vmatprep.subr.bf16.mxu0 0
    %3192 = vmatpush1.bf16.msra.mxu0 0
    %3193 = vmatprep.subr.bf16.mxu0 0
    %3194 = vmatpush1.bf16.msra.mxu0 0
    %3195 = vmatprep.subr.bf16.mxu0 0
    %3196 = vmatpush1.bf16.msra.mxu0 0
    %3197 = vmatprep.subr.bf16.mxu0 0
    %3198 = vmatpush1.bf16.msra.mxu0 0
    %3199 = vmatprep.subr.bf16.mxu0 0
    %3200 = vmatpush1.bf16.msra.mxu0 0
    %3201 = vmatprep.subr.bf16.mxu0 0
    %3202 = vmatpush1.bf16.msra.mxu0 0
    %3203 = vmatprep.subr.bf16.mxu0 0
    %3204 = vmatpush1.bf16.msra.mxu0 0
    %3205 = vmatprep.mubr.bf16.mxu0 0
    %3206 = vmatmul.mubr.bf16.gmra.mrb[0].mxu0 %v3171
    %v3207 = vpop.f32.mrb[0].mxu0
    %v3208 = vadd.f32 0.0, %v3207
    %v3209 = vpop.f32.mrb[0].mxu0
    %v3210 = vpop.f32.mrb[0].mxu0
    %v3211 = vadd.f32 0.0, %v3210
    %v3212 = vpop.f32.mrb[0].mxu0
    %3213 = vdwg.mxu0
    %3214 = vrot.lane.b32.xlu0 %v2265, 48
    %v3215 = vpop.permute.xlu0 %3214
    %v3218 = vsel %vm694, %v2884, 0
    %3220 = vmatprep.subr.bf16.mxu0 0
    %3221 = vmatpush1.bf16.msra.mxu0 %v3215
    %3222 = vmatprep.subr.bf16.mxu0 0
    %3223 = vmatpush1.bf16.msra.mxu0 0
    %3224 = vmatprep.subr.bf16.mxu0 0
    %3225 = vmatpush1.bf16.msra.mxu0 0
    %3226 = vmatprep.subr.bf16.mxu0 0
    %3227 = vmatpush1.bf16.msra.mxu0 0
    %3228 = vmatprep.subr.bf16.mxu0 0
    %3229 = vmatpush1.bf16.msra.mxu0 0
    %3230 = vmatprep.subr.bf16.mxu0 0
    %3231 = vmatpush1.bf16.msra.mxu0 0
    %3232 = vmatprep.subr.bf16.mxu0 0
    %3233 = vmatpush1.bf16.msra.mxu0 0
    %3234 = vmatprep.subr.bf16.mxu0 0
    %3235 = vmatpush1.bf16.msra.mxu0 0
    %3236 = vmatprep.subr.bf16.mxu0 0
    %3237 = vmatpush1.bf16.msra.mxu0 0
    %3238 = vmatprep.subr.bf16.mxu0 0
    %3239 = vmatpush1.bf16.msra.mxu0 0
    %3240 = vmatprep.subr.bf16.mxu0 0
    %3241 = vmatpush1.bf16.msra.mxu0 0
    %3242 = vmatprep.subr.bf16.mxu0 0
    %3243 = vmatpush1.bf16.msra.mxu0 0
    %3244 = vmatprep.subr.bf16.mxu0 0
    %3245 = vmatpush1.bf16.msra.mxu0 0
    %3246 = vmatprep.subr.bf16.mxu0 0
    %3247 = vmatpush1.bf16.msra.mxu0 0
    %3248 = vmatprep.subr.bf16.mxu0 0
    %3249 = vmatpush1.bf16.msra.mxu0 0
    %3250 = vmatprep.subr.bf16.mxu0 0
    %3251 = vmatpush1.bf16.msra.mxu0 0
    %3252 = vmatprep.mubr.bf16.mxu0 0
    %3253 = vmatmul.mubr.bf16.gmra.mrb[0].mxu0 %v3218
    %v3254 = vpop.f32.mrb[0].mxu0
    %v3255 = vadd.f32 0.0, %v3254
    %v3256 = vpop.f32.mrb[0].mxu0
    %v3257 = vpop.f32.mrb[0].mxu0
    %v3258 = vadd.f32 0.0, %v3257
    %v3259 = vpop.f32.mrb[0].mxu0
    %3260 = vdwg.mxu0
    %v3261 = vld [vmem:[#allocation2] sm:$0xff]
    %v3262 = vld [vmem:[#allocation2 + $0x8] sm:$0xff]
    %v3263 = vld [vmem:[#allocation2 + $0x10] sm:$0xff]
    %v3264 = vld [vmem:[#allocation2 + $0x18] sm:$0xff]
    %v3265 = vld [vmem:[#allocation2 + $0x20] sm:$0xff]
    %v3266 = vld [vmem:[#allocation2 + $0x28] sm:$0xff]
    %v3267 = vld [vmem:[#allocation2 + $0x30] sm:$0xff]
    %v3268 = vld [vmem:[#allocation2 + $0x38] sm:$0xff]
    %s3269 = scalar_lea.vmem %s3, 48
    %v3270 = vld [vmem:[%s3269] sm:$0xff]
    %v3271 = vld [vmem:[%s3269 + $0x8] sm:$0xff]
    %3273 = vrot.lane.b32.xlu0 %v3261, 104
    %v3274 = vpop.permute.xlu0 %3273
    %3275 = vrot.lane.b32.xlu0 %v3261, 72
    %v3276 = vpop.permute.xlu0 %3275
    %v3278 = vsel %vm280, %v3274, 0
    %v3281 = vsel %vm280, %v3276, 0
    %3283 = vmatprep.subr.bf16.mxu0 0
    %3284 = vmatpush1.bf16.xpose.msra.mxu0 %v3281
    %3285 = vmatprep.subr.bf16.mxu0 0
    %3286 = vmatpush1.bf16.xpose.msra.mxu0 0
    %3287 = vmatprep.subr.bf16.mxu0 0
    %3288 = vmatpush1.bf16.xpose.msra.mxu0 0
    %3289 = vmatprep.subr.bf16.mxu0 0
    %3290 = vmatpush1.bf16.xpose.msra.mxu0 0
    %3291 = vmatprep.subr.bf16.mxu0 0
    %3292 = vmatpush1.bf16.xpose.msra.mxu0 0
    %3293 = vmatprep.subr.bf16.mxu0 0
    %3294 = vmatpush1.bf16.xpose.msra.mxu0 0
    %3295 = vmatprep.subr.bf16.mxu0 0
    %3296 = vmatpush1.bf16.xpose.msra.mxu0 0
    %3297 = vmatprep.subr.bf16.mxu0 0
    %3298 = vmatpush1.bf16.xpose.msra.mxu0 0
    %3299 = vmatprep.subr.bf16.mxu0 0
    %3300 = vmatpush1.bf16.xpose.msra.mxu0 0
    %3301 = vmatprep.subr.bf16.mxu0 0
    %3302 = vmatpush1.bf16.xpose.msra.mxu0 0
    %3303 = vmatprep.subr.bf16.mxu0 0
    %3304 = vmatpush1.bf16.xpose.msra.mxu0 0
    %3305 = vmatprep.subr.bf16.mxu0 0
    %3306 = vmatpush1.bf16.xpose.msra.mxu0 0
    %3307 = vmatprep.subr.bf16.mxu0 0
    %3308 = vmatpush1.bf16.xpose.msra.mxu0 0
    %3309 = vmatprep.subr.bf16.mxu0 0
    %3310 = vmatpush1.bf16.xpose.msra.mxu0 0
    %3311 = vmatprep.subr.bf16.mxu0 0
    %3312 = vmatpush1.bf16.xpose.msra.mxu0 0
    %3313 = vmatprep.subr.bf16.mxu0 0
    %3314 = vmatpush1.bf16.xpose.msra.mxu0 0
    %3315 = vmatprep.mubr.bf16.mxu0 0
    %3316 = vmatmul.mubr.bf16.gmra.mrb[0].mxu0 %v3278
    %v3317 = vpop.f32.mrb[0].mxu0
    %v3318 = vadd.f32 %v3270, %v3317
    %v3319 = vpop.f32.mrb[0].mxu0
    %v3320 = vpop.f32.mrb[0].mxu0
    %v3321 = vadd.f32 %v3271, %v3320
    %v3322 = vpop.f32.mrb[0].mxu0
    %3323 = vdwg.mxu0
    %3325 = vrot.lane.b32.xlu0 %v3262, 104
    %v3326 = vpop.permute.xlu0 %3325
    %3327 = vrot.lane.b32.xlu0 %v3262, 72
    %v3328 = vpop.permute.xlu0 %3327
    %v3330 = vsel %vm280, %v3326, 0
    %v3333 = vsel %vm280, %v3328, 0
    %3335 = vmatprep.subr.bf16.mxu0 0
    %3336 = vmatpush1.bf16.xpose.msra.mxu0 %v3333
    %3337 = vmatprep.subr.bf16.mxu0 0
    %3338 = vmatpush1.bf16.xpose.msra.mxu0 0
    %3339 = vmatprep.subr.bf16.mxu0 0
    %3340 = vmatpush1.bf16.xpose.msra.mxu0 0
    %3341 = vmatprep.subr.bf16.mxu0 0
    %3342 = vmatpush1.bf16.xpose.msra.mxu0 0
    %3343 = vmatprep.subr.bf16.mxu0 0
    %3344 = vmatpush1.bf16.xpose.msra.mxu0 0
    %3345 = vmatprep.subr.bf16.mxu0 0
    %3346 = vmatpush1.bf16.xpose.msra.mxu0 0
    %3347 = vmatprep.subr.bf16.mxu0 0
    %3348 = vmatpush1.bf16.xpose.msra.mxu0 0
    %3349 = vmatprep.subr.bf16.mxu0 0
    %3350 = vmatpush1.bf16.xpose.msra.mxu0 0
    %3351 = vmatprep.subr.bf16.mxu0 0
    %3352 = vmatpush1.bf16.xpose.msra.mxu0 0
    %3353 = vmatprep.subr.bf16.mxu0 0
    %3354 = vmatpush1.bf16.xpose.msra.mxu0 0
    %3355 = vmatprep.subr.bf16.mxu0 0
    %3356 = vmatpush1.bf16.xpose.msra.mxu0 0
    %3357 = vmatprep.subr.bf16.mxu0 0
    %3358 = vmatpush1.bf16.xpose.msra.mxu0 0
    %3359 = vmatprep.subr.bf16.mxu0 0
    %3360 = vmatpush1.bf16.xpose.msra.mxu0 0
    %3361 = vmatprep.subr.bf16.mxu0 0
    %3362 = vmatpush1.bf16.xpose.msra.mxu0 0
    %3363 = vmatprep.subr.bf16.mxu0 0
    %3364 = vmatpush1.bf16.xpose.msra.mxu0 0
    %3365 = vmatprep.subr.bf16.mxu0 0
    %3366 = vmatpush1.bf16.xpose.msra.mxu0 0
    %3367 = vmatprep.mubr.bf16.mxu0 0
    %3368 = vmatmul.mubr.bf16.gmra.mrb[0].mxu0 %v3330
    %v3369 = vpop.f32.mrb[0].mxu0
    %v3370 = vadd.f32 %v3270, %v3369
    %v3371 = vpop.f32.mrb[0].mxu0
    %v3372 = vpop.f32.mrb[0].mxu0
    %v3373 = vadd.f32 %v3271, %v3372
    %v3374 = vpop.f32.mrb[0].mxu0
    %3375 = vdwg.mxu0
    %3377 = vrot.lane.b32.xlu0 %v3263, 104
    %v3378 = vpop.permute.xlu0 %3377
    %3379 = vrot.lane.b32.xlu0 %v3263, 72
    %v3380 = vpop.permute.xlu0 %3379
    %v3382 = vsel %vm280, %v3378, 0
    %v3385 = vsel %vm280, %v3380, 0
    %3387 = vmatprep.subr.bf16.mxu0 0
    %3388 = vmatpush1.bf16.xpose.msra.mxu0 %v3385
    %3389 = vmatprep.subr.bf16.mxu0 0
    %3390 = vmatpush1.bf16.xpose.msra.mxu0 0
    %3391 = vmatprep.subr.bf16.mxu0 0
    %3392 = vmatpush1.bf16.xpose.msra.mxu0 0
    %3393 = vmatprep.subr.bf16.mxu0 0
    %3394 = vmatpush1.bf16.xpose.msra.mxu0 0
    %3395 = vmatprep.subr.bf16.mxu0 0
    %3396 = vmatpush1.bf16.xpose.msra.mxu0 0
    %3397 = vmatprep.subr.bf16.mxu0 0
    %3398 = vmatpush1.bf16.xpose.msra.mxu0 0
    %3399 = vmatprep.subr.bf16.mxu0 0
    %3400 = vmatpush1.bf16.xpose.msra.mxu0 0
    %3401 = vmatprep.subr.bf16.mxu0 0
    %3402 = vmatpush1.bf16.xpose.msra.mxu0 0
    %3403 = vmatprep.subr.bf16.mxu0 0
    %3404 = vmatpush1.bf16.xpose.msra.mxu0 0
    %3405 = vmatprep.subr.bf16.mxu0 0
    %3406 = vmatpush1.bf16.xpose.msra.mxu0 0
    %3407 = vmatprep.subr.bf16.mxu0 0
    %3408 = vmatpush1.bf16.xpose.msra.mxu0 0
    %3409 = vmatprep.subr.bf16.mxu0 0
    %3410 = vmatpush1.bf16.xpose.msra.mxu0 0
    %3411 = vmatprep.subr.bf16.mxu0 0
    %3412 = vmatpush1.bf16.xpose.msra.mxu0 0
    %3413 = vmatprep.subr.bf16.mxu0 0
    %3414 = vmatpush1.bf16.xpose.msra.mxu0 0
    %3415 = vmatprep.subr.bf16.mxu0 0
    %3416 = vmatpush1.bf16.xpose.msra.mxu0 0
    %3417 = vmatprep.subr.bf16.mxu0 0
    %3418 = vmatpush1.bf16.xpose.msra.mxu0 0
    %3419 = vmatprep.mubr.bf16.mxu0 0
    %3420 = vmatmul.mubr.bf16.gmra.mrb[0].mxu0 %v3382
    %v3421 = vpop.f32.mrb[0].mxu0
    %v3422 = vadd.f32 %v3270, %v3421
    %v3423 = vpop.f32.mrb[0].mxu0
    %v3424 = vpop.f32.mrb[0].mxu0
    %v3425 = vadd.f32 %v3271, %v3424
    %v3426 = vpop.f32.mrb[0].mxu0
    %3427 = vdwg.mxu0
    %3429 = vrot.lane.b32.xlu0 %v3264, 104
    %v3430 = vpop.permute.xlu0 %3429
    %3431 = vrot.lane.b32.xlu0 %v3264, 72
    %v3432 = vpop.permute.xlu0 %3431
    %v3434 = vsel %vm280, %v3430, 0
    %v3437 = vsel %vm280, %v3432, 0
    %3439 = vmatprep.subr.bf16.mxu0 0
    %3440 = vmatpush1.bf16.xpose.msra.mxu0 %v3437
    %3441 = vmatprep.subr.bf16.mxu0 0
    %3442 = vmatpush1.bf16.xpose.msra.mxu0 0
    %3443 = vmatprep.subr.bf16.mxu0 0
    %3444 = vmatpush1.bf16.xpose.msra.mxu0 0
    %3445 = vmatprep.subr.bf16.mxu0 0
    %3446 = vmatpush1.bf16.xpose.msra.mxu0 0
    %3447 = vmatprep.subr.bf16.mxu0 0
    %3448 = vmatpush1.bf16.xpose.msra.mxu0 0
    %3449 = vmatprep.subr.bf16.mxu0 0
    %3450 = vmatpush1.bf16.xpose.msra.mxu0 0
    %3451 = vmatprep.subr.bf16.mxu0 0
    %3452 = vmatpush1.bf16.xpose.msra.mxu0 0
    %3453 = vmatprep.subr.bf16.mxu0 0
    %3454 = vmatpush1.bf16.xpose.msra.mxu0 0
    %3455 = vmatprep.subr.bf16.mxu0 0
    %3456 = vmatpush1.bf16.xpose.msra.mxu0 0
    %3457 = vmatprep.subr.bf16.mxu0 0
    %3458 = vmatpush1.bf16.xpose.msra.mxu0 0
    %3459 = vmatprep.subr.bf16.mxu0 0
    %3460 = vmatpush1.bf16.xpose.msra.mxu0 0
    %3461 = vmatprep.subr.bf16.mxu0 0
    %3462 = vmatpush1.bf16.xpose.msra.mxu0 0
    %3463 = vmatprep.subr.bf16.mxu0 0
    %3464 = vmatpush1.bf16.xpose.msra.mxu0 0
    %3465 = vmatprep.subr.bf16.mxu0 0
    %3466 = vmatpush1.bf16.xpose.msra.mxu0 0
    %3467 = vmatprep.subr.bf16.mxu0 0
    %3468 = vmatpush1.bf16.xpose.msra.mxu0 0
    %3469 = vmatprep.subr.bf16.mxu0 0
    %3470 = vmatpush1.bf16.xpose.msra.mxu0 0
    %3471 = vmatprep.mubr.bf16.mxu0 0
    %3472 = vmatmul.mubr.bf16.gmra.mrb[0].mxu0 %v3434
    %v3473 = vpop.f32.mrb[0].mxu0
    %v3474 = vadd.f32 %v3270, %v3473
    %v3475 = vpop.f32.mrb[0].mxu0
    %v3476 = vpop.f32.mrb[0].mxu0
    %v3477 = vadd.f32 %v3271, %v3476
    %v3478 = vpop.f32.mrb[0].mxu0
    %3479 = vdwg.mxu0
    %3481 = vrot.lane.b32.xlu0 %v3265, 104
    %v3482 = vpop.permute.xlu0 %3481
    %3483 = vrot.lane.b32.xlu0 %v3265, 72
    %v3484 = vpop.permute.xlu0 %3483
    %v3486 = vsel %vm280, %v3482, 0
    %v3489 = vsel %vm280, %v3484, 0
    %3491 = vmatprep.subr.bf16.mxu0 0
    %3492 = vmatpush1.bf16.xpose.msra.mxu0 %v3489
    %3493 = vmatprep.subr.bf16.mxu0 0
    %3494 = vmatpush1.bf16.xpose.msra.mxu0 0
    %3495 = vmatprep.subr.bf16.mxu0 0
    %3496 = vmatpush1.bf16.xpose.msra.mxu0 0
    %3497 = vmatprep.subr.bf16.mxu0 0
    %3498 = vmatpush1.bf16.xpose.msra.mxu0 0
    %3499 = vmatprep.subr.bf16.mxu0 0
    %3500 = vmatpush1.bf16.xpose.msra.mxu0 0
    %3501 = vmatprep.subr.bf16.mxu0 0
    %3502 = vmatpush1.bf16.xpose.msra.mxu0 0
    %3503 = vmatprep.subr.bf16.mxu0 0
    %3504 = vmatpush1.bf16.xpose.msra.mxu0 0
    %3505 = vmatprep.subr.bf16.mxu0 0
    %3506 = vmatpush1.bf16.xpose.msra.mxu0 0
    %3507 = vmatprep.subr.bf16.mxu0 0
    %3508 = vmatpush1.bf16.xpose.msra.mxu0 0
    %3509 = vmatprep.subr.bf16.mxu0 0
    %3510 = vmatpush1.bf16.xpose.msra.mxu0 0
    %3511 = vmatprep.subr.bf16.mxu0 0
    %3512 = vmatpush1.bf16.xpose.msra.mxu0 0
    %3513 = vmatprep.subr.bf16.mxu0 0
    %3514 = vmatpush1.bf16.xpose.msra.mxu0 0
    %3515 = vmatprep.subr.bf16.mxu0 0
    %3516 = vmatpush1.bf16.xpose.msra.mxu0 0
    %3517 = vmatprep.subr.bf16.mxu0 0
    %3518 = vmatpush1.bf16.xpose.msra.mxu0 0
    %3519 = vmatprep.subr.bf16.mxu0 0
    %3520 = vmatpush1.bf16.xpose.msra.mxu0 0
    %3521 = vmatprep.subr.bf16.mxu0 0
    %3522 = vmatpush1.bf16.xpose.msra.mxu0 0
    %3523 = vmatprep.mubr.bf16.mxu0 0
    %3524 = vmatmul.mubr.bf16.gmra.mrb[0].mxu0 %v3486
    %v3525 = vpop.f32.mrb[0].mxu0
    %v3526 = vadd.f32 %v3270, %v3525
    %v3527 = vpop.f32.mrb[0].mxu0
    %v3528 = vpop.f32.mrb[0].mxu0
    %v3529 = vadd.f32 %v3271, %v3528
    %v3530 = vpop.f32.mrb[0].mxu0
    %3531 = vdwg.mxu0
    %3533 = vrot.lane.b32.xlu0 %v3266, 104
    %v3534 = vpop.permute.xlu0 %3533
    %3535 = vrot.lane.b32.xlu0 %v3266, 72
    %v3536 = vpop.permute.xlu0 %3535
    %v3538 = vsel %vm280, %v3534, 0
    %v3541 = vsel %vm280, %v3536, 0
    %3543 = vmatprep.subr.bf16.mxu0 0
    %3544 = vmatpush1.bf16.xpose.msra.mxu0 %v3541
    %3545 = vmatprep.subr.bf16.mxu0 0
    %3546 = vmatpush1.bf16.xpose.msra.mxu0 0
    %3547 = vmatprep.subr.bf16.mxu0 0
    %3548 = vmatpush1.bf16.xpose.msra.mxu0 0
    %3549 = vmatprep.subr.bf16.mxu0 0
    %3550 = vmatpush1.bf16.xpose.msra.mxu0 0
    %3551 = vmatprep.subr.bf16.mxu0 0
    %3552 = vmatpush1.bf16.xpose.msra.mxu0 0
    %3553 = vmatprep.subr.bf16.mxu0 0
    %3554 = vmatpush1.bf16.xpose.msra.mxu0 0
    %3555 = vmatprep.subr.bf16.mxu0 0
    %3556 = vmatpush1.bf16.xpose.msra.mxu0 0
    %3557 = vmatprep.subr.bf16.mxu0 0
    %3558 = vmatpush1.bf16.xpose.msra.mxu0 0
    %3559 = vmatprep.subr.bf16.mxu0 0
    %3560 = vmatpush1.bf16.xpose.msra.mxu0 0
    %3561 = vmatprep.subr.bf16.mxu0 0
    %3562 = vmatpush1.bf16.xpose.msra.mxu0 0
    %3563 = vmatprep.subr.bf16.mxu0 0
    %3564 = vmatpush1.bf16.xpose.msra.mxu0 0
    %3565 = vmatprep.subr.bf16.mxu0 0
    %3566 = vmatpush1.bf16.xpose.msra.mxu0 0
    %3567 = vmatprep.subr.bf16.mxu0 0
    %3568 = vmatpush1.bf16.xpose.msra.mxu0 0
    %3569 = vmatprep.subr.bf16.mxu0 0
    %3570 = vmatpush1.bf16.xpose.msra.mxu0 0
    %3571 = vmatprep.subr.bf16.mxu0 0
    %3572 = vmatpush1.bf16.xpose.msra.mxu0 0
    %3573 = vmatprep.subr.bf16.mxu0 0
    %3574 = vmatpush1.bf16.xpose.msra.mxu0 0
    %3575 = vmatprep.mubr.bf16.mxu0 0
    %3576 = vmatmul.mubr.bf16.gmra.mrb[0].mxu0 %v3538
    %v3577 = vpop.f32.mrb[0].mxu0
    %v3578 = vadd.f32 %v3270, %v3577
    %v3579 = vpop.f32.mrb[0].mxu0
    %v3580 = vpop.f32.mrb[0].mxu0
    %v3581 = vadd.f32 %v3271, %v3580
    %v3582 = vpop.f32.mrb[0].mxu0
    %3583 = vdwg.mxu0
    %3585 = vrot.lane.b32.xlu0 %v3267, 104
    %v3586 = vpop.permute.xlu0 %3585
    %3587 = vrot.lane.b32.xlu0 %v3267, 72
    %v3588 = vpop.permute.xlu0 %3587
    %v3590 = vsel %vm280, %v3586, 0
    %v3593 = vsel %vm280, %v3588, 0
    %3595 = vmatprep.subr.bf16.mxu0 0
    %3596 = vmatpush1.bf16.xpose.msra.mxu0 %v3593
    %3597 = vmatprep.subr.bf16.mxu0 0
    %3598 = vmatpush1.bf16.xpose.msra.mxu0 0
    %3599 = vmatprep.subr.bf16.mxu0 0
    %3600 = vmatpush1.bf16.xpose.msra.mxu0 0
    %3601 = vmatprep.subr.bf16.mxu0 0
    %3602 = vmatpush1.bf16.xpose.msra.mxu0 0
    %3603 = vmatprep.subr.bf16.mxu0 0
    %3604 = vmatpush1.bf16.xpose.msra.mxu0 0
    %3605 = vmatprep.subr.bf16.mxu0 0
    %3606 = vmatpush1.bf16.xpose.msra.mxu0 0
    %3607 = vmatprep.subr.bf16.mxu0 0
    %3608 = vmatpush1.bf16.xpose.msra.mxu0 0
    %3609 = vmatprep.subr.bf16.mxu0 0
    %3610 = vmatpush1.bf16.xpose.msra.mxu0 0
    %3611 = vmatprep.subr.bf16.mxu0 0
    %3612 = vmatpush1.bf16.xpose.msra.mxu0 0
    %3613 = vmatprep.subr.bf16.mxu0 0
    %3614 = vmatpush1.bf16.xpose.msra.mxu0 0
    %3615 = vmatprep.subr.bf16.mxu0 0
    %3616 = vmatpush1.bf16.xpose.msra.mxu0 0
    %3617 = vmatprep.subr.bf16.mxu0 0
    %3618 = vmatpush1.bf16.xpose.msra.mxu0 0
    %3619 = vmatprep.subr.bf16.mxu0 0
    %3620 = vmatpush1.bf16.xpose.msra.mxu0 0
    %3621 = vmatprep.subr.bf16.mxu0 0
    %3622 = vmatpush1.bf16.xpose.msra.mxu0 0
    %3623 = vmatprep.subr.bf16.mxu0 0
    %3624 = vmatpush1.bf16.xpose.msra.mxu0 0
    %3625 = vmatprep.subr.bf16.mxu0 0
    %3626 = vmatpush1.bf16.xpose.msra.mxu0 0
    %3627 = vmatprep.mubr.bf16.mxu0 0
    %3628 = vmatmul.mubr.bf16.gmra.mrb[0].mxu0 %v3590
    %v3629 = vpop.f32.mrb[0].mxu0
    %v3630 = vadd.f32 %v3270, %v3629
    %v3631 = vpop.f32.mrb[0].mxu0
    %v3632 = vpop.f32.mrb[0].mxu0
    %v3633 = vadd.f32 %v3271, %v3632
    %v3634 = vpop.f32.mrb[0].mxu0
    %3635 = vdwg.mxu0
    %3637 = vrot.lane.b32.xlu0 %v3268, 104
    %v3638 = vpop.permute.xlu0 %3637
    %3639 = vrot.lane.b32.xlu0 %v3268, 72
    %v3640 = vpop.permute.xlu0 %3639
    %v3642 = vsel %vm280, %v3638, 0
    %v3645 = vsel %vm280, %v3640, 0
    %3647 = vmatprep.subr.bf16.mxu0 0
    %3648 = vmatpush1.bf16.xpose.msra.mxu0 %v3645
    %3649 = vmatprep.subr.bf16.mxu0 0
    %3650 = vmatpush1.bf16.xpose.msra.mxu0 0
    %3651 = vmatprep.subr.bf16.mxu0 0
    %3652 = vmatpush1.bf16.xpose.msra.mxu0 0
    %3653 = vmatprep.subr.bf16.mxu0 0
    %3654 = vmatpush1.bf16.xpose.msra.mxu0 0
    %3655 = vmatprep.subr.bf16.mxu0 0
    %3656 = vmatpush1.bf16.xpose.msra.mxu0 0
    %3657 = vmatprep.subr.bf16.mxu0 0
    %3658 = vmatpush1.bf16.xpose.msra.mxu0 0
    %3659 = vmatprep.subr.bf16.mxu0 0
    %3660 = vmatpush1.bf16.xpose.msra.mxu0 0
    %3661 = vmatprep.subr.bf16.mxu0 0
    %3662 = vmatpush1.bf16.xpose.msra.mxu0 0
    %3663 = vmatprep.subr.bf16.mxu0 0
    %3664 = vmatpush1.bf16.xpose.msra.mxu0 0
    %3665 = vmatprep.subr.bf16.mxu0 0
    %3666 = vmatpush1.bf16.xpose.msra.mxu0 0
    %3667 = vmatprep.subr.bf16.mxu0 0
    %3668 = vmatpush1.bf16.xpose.msra.mxu0 0
    %3669 = vmatprep.subr.bf16.mxu0 0
    %3670 = vmatpush1.bf16.xpose.msra.mxu0 0
    %3671 = vmatprep.subr.bf16.mxu0 0
    %3672 = vmatpush1.bf16.xpose.msra.mxu0 0
    %3673 = vmatprep.subr.bf16.mxu0 0
    %3674 = vmatpush1.bf16.xpose.msra.mxu0 0
    %3675 = vmatprep.subr.bf16.mxu0 0
    %3676 = vmatpush1.bf16.xpose.msra.mxu0 0
    %3677 = vmatprep.subr.bf16.mxu0 0
    %3678 = vmatpush1.bf16.xpose.msra.mxu0 0
    %3679 = vmatprep.mubr.bf16.mxu0 0
    %3680 = vmatmul.mubr.bf16.gmra.mrb[0].mxu0 %v3642
    %v3681 = vpop.f32.mrb[0].mxu0
    %v3682 = vadd.f32 %v3270, %v3681
    %v3683 = vpop.f32.mrb[0].mxu0
    %v3684 = vpop.f32.mrb[0].mxu0
    %v3685 = vadd.f32 %v3271, %v3684
    %v3686 = vpop.f32.mrb[0].mxu0
    %3687 = vdwg.mxu0
    %v3688 = vadd.f32 %v3318, %v259
    %v3689 = vadd.f32 %v3321, %v260
    %v3690 = vadd.f32 %v3370, %v261
    %v3691 = vadd.f32 %v3373, %v262
    %v3692 = vadd.f32 %v3422, %v263
    %v3693 = vadd.f32 %v3425, %v264
    %v3694 = vadd.f32 %v3474, %v265
    %v3695 = vadd.f32 %v3477, %v266
    %v3696 = vadd.f32 %v3526, %v259
    %v3697 = vadd.f32 %v3529, %v260
    %v3698 = vadd.f32 %v3578, %v261
    %v3699 = vadd.f32 %v3581, %v262
    %v3700 = vadd.f32 %v3630, %v263
    %v3701 = vadd.f32 %v3633, %v264
    %v3702 = vadd.f32 %v3682, %v265
    %v3703 = vadd.f32 %v3685, %v266
    %v3704 = vsel %vm694, %v3688, -inf
    %3705 = vmax.xlane.f32.xlu0 %v3704
    %v3706 = vpop.xlane.xlu0 %3705
    %v3707 = vsel %vm694, %v3689, -inf
    %3708 = vmax.xlane.f32.xlu0 %v3707
    %v3709 = vpop.xlane.xlu0 %3708
    %v3710 = vsel %vm694, %v3690, -inf
    %3711 = vmax.xlane.f32.xlu0 %v3710
    %v3712 = vpop.xlane.xlu0 %3711
    %v3713 = vsel %vm694, %v3691, -inf
    %3714 = vmax.xlane.f32.xlu0 %v3713
    %v3715 = vpop.xlane.xlu0 %3714
    %v3716 = vsel %vm694, %v3692, -inf
    %3717 = vmax.xlane.f32.xlu0 %v3716
    %v3718 = vpop.xlane.xlu0 %3717
    %v3719 = vsel %vm694, %v3693, -inf
    %3720 = vmax.xlane.f32.xlu0 %v3719
    %v3721 = vpop.xlane.xlu0 %3720
    %v3722 = vsel %vm694, %v3694, -inf
    %3723 = vmax.xlane.f32.xlu0 %v3722
    %v3724 = vpop.xlane.xlu0 %3723
    %v3725 = vsel %vm694, %v3695, -inf
    %3726 = vmax.xlane.f32.xlu0 %v3725
    %v3727 = vpop.xlane.xlu0 %3726
    %v3728 = vsel %vm694, %v3696, -inf
    %3729 = vmax.xlane.f32.xlu0 %v3728
    %v3730 = vpop.xlane.xlu0 %3729
    %v3731 = vsel %vm694, %v3697, -inf
    %3732 = vmax.xlane.f32.xlu0 %v3731
    %v3733 = vpop.xlane.xlu0 %3732
    %v3734 = vsel %vm694, %v3698, -inf
    %3735 = vmax.xlane.f32.xlu0 %v3734
    %v3736 = vpop.xlane.xlu0 %3735
    %v3737 = vsel %vm694, %v3699, -inf
    %3738 = vmax.xlane.f32.xlu0 %v3737
    %v3739 = vpop.xlane.xlu0 %3738
    %v3740 = vsel %vm694, %v3700, -inf
    %3741 = vmax.xlane.f32.xlu0 %v3740
    %v3742 = vpop.xlane.xlu0 %3741
    %v3743 = vsel %vm694, %v3701, -inf
    %3744 = vmax.xlane.f32.xlu0 %v3743
    %v3745 = vpop.xlane.xlu0 %3744
    %v3746 = vsel %vm694, %v3702, -inf
    %3747 = vmax.xlane.f32.xlu0 %v3746
    %v3748 = vpop.xlane.xlu0 %3747
    %v3749 = vsel %vm694, %v3703, -inf
    %3750 = vmax.xlane.f32.xlu0 %v3749
    %v3751 = vpop.xlane.xlu0 %3750
    %v3752 = vsub.f32 %v3688, %v3706
    %v3753 = vsub.f32 %v3689, %v3709
    %v3754 = vsub.f32 %v3690, %v3712
    %v3755 = vsub.f32 %v3691, %v3715
    %v3756 = vsub.f32 %v3692, %v3718
    %v3757 = vsub.f32 %v3693, %v3721
    %v3758 = vsub.f32 %v3694, %v3724
    %v3759 = vsub.f32 %v3695, %v3727
    %v3760 = vsub.f32 %v3696, %v3730
    %v3761 = vsub.f32 %v3697, %v3733
    %v3762 = vsub.f32 %v3698, %v3736
    %v3763 = vsub.f32 %v3699, %v3739
    %v3764 = vsub.f32 %v3700, %v3742
    %v3765 = vsub.f32 %v3701, %v3745
    %v3766 = vsub.f32 %v3702, %v3748
    %v3767 = vsub.f32 %v3703, %v3751
    %v3768 = vmul.f32 %v3752, 1.442695
    %v3769 = vpow.pop %v3768
    %v3770 = vmul.f32 %v3753, 1.442695
    %v3771 = vpow.pop %v3770
    %v3772 = vmul.f32 %v3754, 1.442695
    %v3773 = vpow.pop %v3772
    %v3774 = vmul.f32 %v3755, 1.442695
    %v3775 = vpow.pop %v3774
    %v3776 = vmul.f32 %v3756, 1.442695
    %v3777 = vpow.pop %v3776
    %v3778 = vmul.f32 %v3757, 1.442695
    %v3779 = vpow.pop %v3778
    %v3780 = vmul.f32 %v3758, 1.442695
    %v3781 = vpow.pop %v3780
    %v3782 = vmul.f32 %v3759, 1.442695
    %v3783 = vpow.pop %v3782
    %v3784 = vmul.f32 %v3760, 1.442695
    %v3785 = vpow.pop %v3784
    %v3786 = vmul.f32 %v3761, 1.442695
    %v3787 = vpow.pop %v3786
    %v3788 = vmul.f32 %v3762, 1.442695
    %v3789 = vpow.pop %v3788
    %v3790 = vmul.f32 %v3763, 1.442695
    %v3791 = vpow.pop %v3790
    %v3792 = vmul.f32 %v3764, 1.442695
    %v3793 = vpow.pop %v3792
    %v3794 = vmul.f32 %v3765, 1.442695
    %v3795 = vpow.pop %v3794
    %v3796 = vmul.f32 %v3766, 1.442695
    %v3797 = vpow.pop %v3796
    %v3798 = vmul.f32 %v3767, 1.442695
    %v3799 = vpow.pop %v3798
    %v3800 = vsel %vm694, %v3769, 0.0
    %3801 = vadd.xlane.f32.xlu0 %v3800
    %v3802 = vpop.xlane.xlu0 %3801
    %v3803 = vsel %vm694, %v3771, 0.0
    %3804 = vadd.xlane.f32.xlu0 %v3803
    %v3805 = vpop.xlane.xlu0 %3804
    %v3806 = vsel %vm694, %v3773, 0.0
    %3807 = vadd.xlane.f32.xlu0 %v3806
    %v3808 = vpop.xlane.xlu0 %3807
    %v3809 = vsel %vm694, %v3775, 0.0
    %3810 = vadd.xlane.f32.xlu0 %v3809
    %v3811 = vpop.xlane.xlu0 %3810
    %v3812 = vsel %vm694, %v3777, 0.0
    %3813 = vadd.xlane.f32.xlu0 %v3812
    %v3814 = vpop.xlane.xlu0 %3813
    %v3815 = vsel %vm694, %v3779, 0.0
    %3816 = vadd.xlane.f32.xlu0 %v3815
    %v3817 = vpop.xlane.xlu0 %3816
    %v3818 = vsel %vm694, %v3781, 0.0
    %3819 = vadd.xlane.f32.xlu0 %v3818
    %v3820 = vpop.xlane.xlu0 %3819
    %v3821 = vsel %vm694, %v3783, 0.0
    %3822 = vadd.xlane.f32.xlu0 %v3821
    %v3823 = vpop.xlane.xlu0 %3822
    %v3824 = vsel %vm694, %v3785, 0.0
    %3825 = vadd.xlane.f32.xlu0 %v3824
    %v3826 = vpop.xlane.xlu0 %3825
    %v3827 = vsel %vm694, %v3787, 0.0
    %3828 = vadd.xlane.f32.xlu0 %v3827
    %v3829 = vpop.xlane.xlu0 %3828
    %v3830 = vsel %vm694, %v3789, 0.0
    %3831 = vadd.xlane.f32.xlu0 %v3830
    %v3832 = vpop.xlane.xlu0 %3831
    %v3833 = vsel %vm694, %v3791, 0.0
    %3834 = vadd.xlane.f32.xlu0 %v3833
    %v3835 = vpop.xlane.xlu0 %3834
    %v3836 = vsel %vm694, %v3793, 0.0
    %3837 = vadd.xlane.f32.xlu0 %v3836
    %v3838 = vpop.xlane.xlu0 %3837
    %v3839 = vsel %vm694, %v3795, 0.0
    %3840 = vadd.xlane.f32.xlu0 %v3839
    %v3841 = vpop.xlane.xlu0 %3840
    %v3842 = vsel %vm694, %v3797, 0.0
    %3843 = vadd.xlane.f32.xlu0 %v3842
    %v3844 = vpop.xlane.xlu0 %3843
    %v3845 = vsel %vm694, %v3799, 0.0
    %3846 = vadd.xlane.f32.xlu0 %v3845
    %v3847 = vpop.xlane.xlu0 %3846
    %v3848 = vrcp.pop %v3802
    %v3849 = vrcp.pop %v3805
    %v3850 = vrcp.pop %v3808
    %v3851 = vrcp.pop %v3811
    %v3852 = vrcp.pop %v3814
    %v3853 = vrcp.pop %v3817
    %v3854 = vrcp.pop %v3820
    %v3855 = vrcp.pop %v3823
    %v3856 = vrcp.pop %v3826
    %v3857 = vrcp.pop %v3829
    %v3858 = vrcp.pop %v3832
    %v3859 = vrcp.pop %v3835
    %v3860 = vrcp.pop %v3838
    %v3861 = vrcp.pop %v3841
    %v3862 = vrcp.pop %v3844
    %v3863 = vrcp.pop %v3847
    %v3864 = vmul.f32 %v3769, %v3848
    %v3865 = vmul.f32 %v3771, %v3849
    %v3866 = vmul.f32 %v3773, %v3850
    %v3867 = vmul.f32 %v3775, %v3851
    %v3868 = vmul.f32 %v3777, %v3852
    %v3869 = vmul.f32 %v3779, %v3853
    %v3870 = vmul.f32 %v3781, %v3854
    %v3871 = vmul.f32 %v3783, %v3855
    %v3872 = vmul.f32 %v3785, %v3856
    %v3873 = vmul.f32 %v3787, %v3857
    %v3874 = vmul.f32 %v3789, %v3858
    %v3875 = vmul.f32 %v3791, %v3859
    %v3876 = vmul.f32 %v3793, %v3860
    %v3877 = vmul.f32 %v3795, %v3861
    %v3878 = vmul.f32 %v3797, %v3862
    %v3879 = vmul.f32 %v3799, %v3863
    %v3880 = vpack.c.bf16 %v3865, %v3864
    %v3881 = vpack.c.bf16 %v3867, %v3866
    %v3882 = vpack.c.bf16 %v3869, %v3868
    %v3883 = vpack.c.bf16 %v3871, %v3870
    %v3884 = vpack.c.bf16 %v3873, %v3872
    %v3885 = vpack.c.bf16 %v3875, %v3874
    %v3886 = vpack.c.bf16 %v3877, %v3876
    %v3887 = vpack.c.bf16 %v3879, %v3878
    %3888 = vrot.lane.b32.xlu0 %v3261, 40
    %v3889 = vpop.permute.xlu0 %3888
    %v3892 = vsel %vm694, %v3880, 0
    %3894 = vmatprep.subr.bf16.mxu0 0
    %3895 = vmatpush1.bf16.msra.mxu0 %v3889
    %3896 = vmatprep.subr.bf16.mxu0 0
    %3897 = vmatpush1.bf16.msra.mxu0 0
    %3898 = vmatprep.subr.bf16.mxu0 0
    %3899 = vmatpush1.bf16.msra.mxu0 0
    %3900 = vmatprep.subr.bf16.mxu0 0
    %3901 = vmatpush1.bf16.msra.mxu0 0
    %3902 = vmatprep.subr.bf16.mxu0 0
    %3903 = vmatpush1.bf16.msra.mxu0 0
    %3904 = vmatprep.subr.bf16.mxu0 0
    %3905 = vmatpush1.bf16.msra.mxu0 0
    %3906 = vmatprep.subr.bf16.mxu0 0
    %3907 = vmatpush1.bf16.msra.mxu0 0
    %3908 = vmatprep.subr.bf16.mxu0 0
    %3909 = vmatpush1.bf16.msra.mxu0 0
    %3910 = vmatprep.subr.bf16.mxu0 0
    %3911 = vmatpush1.bf16.msra.mxu0 0
    %3912 = vmatprep.subr.bf16.mxu0 0
    %3913 = vmatpush1.bf16.msra.mxu0 0
    %3914 = vmatprep.subr.bf16.mxu0 0
    %3915 = vmatpush1.bf16.msra.mxu0 0
    %3916 = vmatprep.subr.bf16.mxu0 0
    %3917 = vmatpush1.bf16.msra.mxu0 0
    %3918 = vmatprep.subr.bf16.mxu0 0
    %3919 = vmatpush1.bf16.msra.mxu0 0
    %3920 = vmatprep.subr.bf16.mxu0 0
    %3921 = vmatpush1.bf16.msra.mxu0 0
    %3922 = vmatprep.subr.bf16.mxu0 0
    %3923 = vmatpush1.bf16.msra.mxu0 0
    %3924 = vmatprep.subr.bf16.mxu0 0
    %3925 = vmatpush1.bf16.msra.mxu0 0
    %3926 = vmatprep.mubr.bf16.mxu0 0
    %3927 = vmatmul.mubr.bf16.gmra.mrb[0].mxu0 %v3892
    %v3928 = vpop.f32.mrb[0].mxu0
    %v3929 = vadd.f32 0.0, %v3928
    %v3930 = vpop.f32.mrb[0].mxu0
    %v3931 = vpop.f32.mrb[0].mxu0
    %v3932 = vadd.f32 0.0, %v3931
    %v3933 = vpop.f32.mrb[0].mxu0
    %3934 = vdwg.mxu0
    %3935 = vrot.lane.b32.xlu0 %v3262, 40
    %v3936 = vpop.permute.xlu0 %3935
    %v3939 = vsel %vm694, %v3881, 0
    %3941 = vmatprep.subr.bf16.mxu0 0
    %3942 = vmatpush1.bf16.msra.mxu0 %v3936
    %3943 = vmatprep.subr.bf16.mxu0 0
    %3944 = vmatpush1.bf16.msra.mxu0 0
    %3945 = vmatprep.subr.bf16.mxu0 0
    %3946 = vmatpush1.bf16.msra.mxu0 0
    %3947 = vmatprep.subr.bf16.mxu0 0
    %3948 = vmatpush1.bf16.msra.mxu0 0
    %3949 = vmatprep.subr.bf16.mxu0 0
    %3950 = vmatpush1.bf16.msra.mxu0 0
    %3951 = vmatprep.subr.bf16.mxu0 0
    %3952 = vmatpush1.bf16.msra.mxu0 0
    %3953 = vmatprep.subr.bf16.mxu0 0
    %3954 = vmatpush1.bf16.msra.mxu0 0
    %3955 = vmatprep.subr.bf16.mxu0 0
    %3956 = vmatpush1.bf16.msra.mxu0 0
    %3957 = vmatprep.subr.bf16.mxu0 0
    %3958 = vmatpush1.bf16.msra.mxu0 0
    %3959 = vmatprep.subr.bf16.mxu0 0
    %3960 = vmatpush1.bf16.msra.mxu0 0
    %3961 = vmatprep.subr.bf16.mxu0 0
    %3962 = vmatpush1.bf16.msra.mxu0 0
    %3963 = vmatprep.subr.bf16.mxu0 0
    %3964 = vmatpush1.bf16.msra.mxu0 0
    %3965 = vmatprep.subr.bf16.mxu0 0
    %3966 = vmatpush1.bf16.msra.mxu0 0
    %3967 = vmatprep.subr.bf16.mxu0 0
    %3968 = vmatpush1.bf16.msra.mxu0 0
    %3969 = vmatprep.subr.bf16.mxu0 0
    %3970 = vmatpush1.bf16.msra.mxu0 0
    %3971 = vmatprep.subr.bf16.mxu0 0
    %3972 = vmatpush1.bf16.msra.mxu0 0
    %3973 = vmatprep.mubr.bf16.mxu0 0
    %3974 = vmatmul.mubr.bf16.gmra.mrb[0].mxu0 %v3939
    %v3975 = vpop.f32.mrb[0].mxu0
    %v3976 = vadd.f32 0.0, %v3975
    %v3977 = vpop.f32.mrb[0].mxu0
    %v3978 = vpop.f32.mrb[0].mxu0
    %v3979 = vadd.f32 0.0, %v3978
    %v3980 = vpop.f32.mrb[0].mxu0
    %3981 = vdwg.mxu0
    %3982 = vrot.lane.b32.xlu0 %v3263, 40
    %v3983 = vpop.permute.xlu0 %3982
    %v3986 = vsel %vm694, %v3882, 0
    %3988 = vmatprep.subr.bf16.mxu0 0
    %3989 = vmatpush1.bf16.msra.mxu0 %v3983
    %3990 = vmatprep.subr.bf16.mxu0 0
    %3991 = vmatpush1.bf16.msra.mxu0 0
    %3992 = vmatprep.subr.bf16.mxu0 0
    %3993 = vmatpush1.bf16.msra.mxu0 0
    %3994 = vmatprep.subr.bf16.mxu0 0
    %3995 = vmatpush1.bf16.msra.mxu0 0
    %3996 = vmatprep.subr.bf16.mxu0 0
    %3997 = vmatpush1.bf16.msra.mxu0 0
    %3998 = vmatprep.subr.bf16.mxu0 0
    %3999 = vmatpush1.bf16.msra.mxu0 0
    %4000 = vmatprep.subr.bf16.mxu0 0
    %4001 = vmatpush1.bf16.msra.mxu0 0
    %4002 = vmatprep.subr.bf16.mxu0 0
    %4003 = vmatpush1.bf16.msra.mxu0 0
    %4004 = vmatprep.subr.bf16.mxu0 0
    %4005 = vmatpush1.bf16.msra.mxu0 0
    %4006 = vmatprep.subr.bf16.mxu0 0
    %4007 = vmatpush1.bf16.msra.mxu0 0
    %4008 = vmatprep.subr.bf16.mxu0 0
    %4009 = vmatpush1.bf16.msra.mxu0 0
    %4010 = vmatprep.subr.bf16.mxu0 0
    %4011 = vmatpush1.bf16.msra.mxu0 0
    %4012 = vmatprep.subr.bf16.mxu0 0
    %4013 = vmatpush1.bf16.msra.mxu0 0
    %4014 = vmatprep.subr.bf16.mxu0 0
    %4015 = vmatpush1.bf16.msra.mxu0 0
    %4016 = vmatprep.subr.bf16.mxu0 0
    %4017 = vmatpush1.bf16.msra.mxu0 0
    %4018 = vmatprep.subr.bf16.mxu0 0
    %4019 = vmatpush1.bf16.msra.mxu0 0
    %4020 = vmatprep.mubr.bf16.mxu0 0
    %4021 = vmatmul.mubr.bf16.gmra.mrb[0].mxu0 %v3986
    %v4022 = vpop.f32.mrb[0].mxu0
    %v4023 = vadd.f32 0.0, %v4022
    %v4024 = vpop.f32.mrb[0].mxu0
    %v4025 = vpop.f32.mrb[0].mxu0
    %v4026 = vadd.f32 0.0, %v4025
    %v4027 = vpop.f32.mrb[0].mxu0
    %4028 = vdwg.mxu0
    %4029 = vrot.lane.b32.xlu0 %v3264, 40
    %v4030 = vpop.permute.xlu0 %4029
    %v4033 = vsel %vm694, %v3883, 0
    %4035 = vmatprep.subr.bf16.mxu0 0
    %4036 = vmatpush1.bf16.msra.mxu0 %v4030
    %4037 = vmatprep.subr.bf16.mxu0 0
    %4038 = vmatpush1.bf16.msra.mxu0 0
    %4039 = vmatprep.subr.bf16.mxu0 0
    %4040 = vmatpush1.bf16.msra.mxu0 0
    %4041 = vmatprep.subr.bf16.mxu0 0
    %4042 = vmatpush1.bf16.msra.mxu0 0
    %4043 = vmatprep.subr.bf16.mxu0 0
    %4044 = vmatpush1.bf16.msra.mxu0 0
    %4045 = vmatprep.subr.bf16.mxu0 0
    %4046 = vmatpush1.bf16.msra.mxu0 0
    %4047 = vmatprep.subr.bf16.mxu0 0
    %4048 = vmatpush1.bf16.msra.mxu0 0
    %4049 = vmatprep.subr.bf16.mxu0 0
    %4050 = vmatpush1.bf16.msra.mxu0 0
    %4051 = vmatprep.subr.bf16.mxu0 0
    %4052 = vmatpush1.bf16.msra.mxu0 0
    %4053 = vmatprep.subr.bf16.mxu0 0
    %4054 = vmatpush1.bf16.msra.mxu0 0
    %4055 = vmatprep.subr.bf16.mxu0 0
    %4056 = vmatpush1.bf16.msra.mxu0 0
    %4057 = vmatprep.subr.bf16.mxu0 0
    %4058 = vmatpush1.bf16.msra.mxu0 0
    %4059 = vmatprep.subr.bf16.mxu0 0
    %4060 = vmatpush1.bf16.msra.mxu0 0
    %4061 = vmatprep.subr.bf16.mxu0 0
    %4062 = vmatpush1.bf16.msra.mxu0 0
    %4063 = vmatprep.subr.bf16.mxu0 0
    %4064 = vmatpush1.bf16.msra.mxu0 0
    %4065 = vmatprep.subr.bf16.mxu0 0
    %4066 = vmatpush1.bf16.msra.mxu0 0
    %4067 = vmatprep.mubr.bf16.mxu0 0
    %4068 = vmatmul.mubr.bf16.gmra.mrb[0].mxu0 %v4033
    %v4069 = vpop.f32.mrb[0].mxu0
    %v4070 = vadd.f32 0.0, %v4069
    %v4071 = vpop.f32.mrb[0].mxu0
    %v4072 = vpop.f32.mrb[0].mxu0
    %v4073 = vadd.f32 0.0, %v4072
    %v4074 = vpop.f32.mrb[0].mxu0
    %4075 = vdwg.mxu0
    %4076 = vrot.lane.b32.xlu0 %v3265, 40
    %v4077 = vpop.permute.xlu0 %4076
    %v4080 = vsel %vm694, %v3884, 0
    %4082 = vmatprep.subr.bf16.mxu0 0
    %4083 = vmatpush1.bf16.msra.mxu0 %v4077
    %4084 = vmatprep.subr.bf16.mxu0 0
    %4085 = vmatpush1.bf16.msra.mxu0 0
    %4086 = vmatprep.subr.bf16.mxu0 0
    %4087 = vmatpush1.bf16.msra.mxu0 0
    %4088 = vmatprep.subr.bf16.mxu0 0
    %4089 = vmatpush1.bf16.msra.mxu0 0
    %4090 = vmatprep.subr.bf16.mxu0 0
    %4091 = vmatpush1.bf16.msra.mxu0 0
    %4092 = vmatprep.subr.bf16.mxu0 0
    %4093 = vmatpush1.bf16.msra.mxu0 0
    %4094 = vmatprep.subr.bf16.mxu0 0
    %4095 = vmatpush1.bf16.msra.mxu0 0
    %4096 = vmatprep.subr.bf16.mxu0 0
    %4097 = vmatpush1.bf16.msra.mxu0 0
    %4098 = vmatprep.subr.bf16.mxu0 0
    %4099 = vmatpush1.bf16.msra.mxu0 0
    %4100 = vmatprep.subr.bf16.mxu0 0
    %4101 = vmatpush1.bf16.msra.mxu0 0
    %4102 = vmatprep.subr.bf16.mxu0 0
    %4103 = vmatpush1.bf16.msra.mxu0 0
    %4104 = vmatprep.subr.bf16.mxu0 0
    %4105 = vmatpush1.bf16.msra.mxu0 0
    %4106 = vmatprep.subr.bf16.mxu0 0
    %4107 = vmatpush1.bf16.msra.mxu0 0
    %4108 = vmatprep.subr.bf16.mxu0 0
    %4109 = vmatpush1.bf16.msra.mxu0 0
    %4110 = vmatprep.subr.bf16.mxu0 0
    %4111 = vmatpush1.bf16.msra.mxu0 0
    %4112 = vmatprep.subr.bf16.mxu0 0
    %4113 = vmatpush1.bf16.msra.mxu0 0
    %4114 = vmatprep.mubr.bf16.mxu0 0
    %4115 = vmatmul.mubr.bf16.gmra.mrb[0].mxu0 %v4080
    %v4116 = vpop.f32.mrb[0].mxu0
    %v4117 = vadd.f32 0.0, %v4116
    %v4118 = vpop.f32.mrb[0].mxu0
    %v4119 = vpop.f32.mrb[0].mxu0
    %v4120 = vadd.f32 0.0, %v4119
    %v4121 = vpop.f32.mrb[0].mxu0
    %4122 = vdwg.mxu0
    %4123 = vrot.lane.b32.xlu0 %v3266, 40
    %v4124 = vpop.permute.xlu0 %4123
    %v4127 = vsel %vm694, %v3885, 0
    %4129 = vmatprep.subr.bf16.mxu0 0
    %4130 = vmatpush1.bf16.msra.mxu0 %v4124
    %4131 = vmatprep.subr.bf16.mxu0 0
    %4132 = vmatpush1.bf16.msra.mxu0 0
    %4133 = vmatprep.subr.bf16.mxu0 0
    %4134 = vmatpush1.bf16.msra.mxu0 0
    %4135 = vmatprep.subr.bf16.mxu0 0
    %4136 = vmatpush1.bf16.msra.mxu0 0
    %4137 = vmatprep.subr.bf16.mxu0 0
    %4138 = vmatpush1.bf16.msra.mxu0 0
    %4139 = vmatprep.subr.bf16.mxu0 0
    %4140 = vmatpush1.bf16.msra.mxu0 0
    %4141 = vmatprep.subr.bf16.mxu0 0
    %4142 = vmatpush1.bf16.msra.mxu0 0
    %4143 = vmatprep.subr.bf16.mxu0 0
    %4144 = vmatpush1.bf16.msra.mxu0 0
    %4145 = vmatprep.subr.bf16.mxu0 0
    %4146 = vmatpush1.bf16.msra.mxu0 0
    %4147 = vmatprep.subr.bf16.mxu0 0
    %4148 = vmatpush1.bf16.msra.mxu0 0
    %4149 = vmatprep.subr.bf16.mxu0 0
    %4150 = vmatpush1.bf16.msra.mxu0 0
    %4151 = vmatprep.subr.bf16.mxu0 0
    %4152 = vmatpush1.bf16.msra.mxu0 0
    %4153 = vmatprep.subr.bf16.mxu0 0
    %4154 = vmatpush1.bf16.msra.mxu0 0
    %4155 = vmatprep.subr.bf16.mxu0 0
    %4156 = vmatpush1.bf16.msra.mxu0 0
    %4157 = vmatprep.subr.bf16.mxu0 0
    %4158 = vmatpush1.bf16.msra.mxu0 0
    %4159 = vmatprep.subr.bf16.mxu0 0
    %4160 = vmatpush1.bf16.msra.mxu0 0
    %4161 = vmatprep.mubr.bf16.mxu0 0
    %4162 = vmatmul.mubr.bf16.gmra.mrb[0].mxu0 %v4127
    %v4163 = vpop.f32.mrb[0].mxu0
    %v4164 = vadd.f32 0.0, %v4163
    %v4165 = vpop.f32.mrb[0].mxu0
    %v4166 = vpop.f32.mrb[0].mxu0
    %v4167 = vadd.f32 0.0, %v4166
    %v4168 = vpop.f32.mrb[0].mxu0
    %4169 = vdwg.mxu0
    %4170 = vrot.lane.b32.xlu0 %v3267, 40
    %v4171 = vpop.permute.xlu0 %4170
    %v4174 = vsel %vm694, %v3886, 0
    %4176 = vmatprep.subr.bf16.mxu0 0
    %4177 = vmatpush1.bf16.msra.mxu0 %v4171
    %4178 = vmatprep.subr.bf16.mxu0 0
    %4179 = vmatpush1.bf16.msra.mxu0 0
    %4180 = vmatprep.subr.bf16.mxu0 0
    %4181 = vmatpush1.bf16.msra.mxu0 0
    %4182 = vmatprep.subr.bf16.mxu0 0
    %4183 = vmatpush1.bf16.msra.mxu0 0
    %4184 = vmatprep.subr.bf16.mxu0 0
    %4185 = vmatpush1.bf16.msra.mxu0 0
    %4186 = vmatprep.subr.bf16.mxu0 0
    %4187 = vmatpush1.bf16.msra.mxu0 0
    %4188 = vmatprep.subr.bf16.mxu0 0
    %4189 = vmatpush1.bf16.msra.mxu0 0
    %4190 = vmatprep.subr.bf16.mxu0 0
    %4191 = vmatpush1.bf16.msra.mxu0 0
    %4192 = vmatprep.subr.bf16.mxu0 0
    %4193 = vmatpush1.bf16.msra.mxu0 0
    %4194 = vmatprep.subr.bf16.mxu0 0
    %4195 = vmatpush1.bf16.msra.mxu0 0
    %4196 = vmatprep.subr.bf16.mxu0 0
    %4197 = vmatpush1.bf16.msra.mxu0 0
    %4198 = vmatprep.subr.bf16.mxu0 0
    %4199 = vmatpush1.bf16.msra.mxu0 0
    %4200 = vmatprep.subr.bf16.mxu0 0
    %4201 = vmatpush1.bf16.msra.mxu0 0
    %4202 = vmatprep.subr.bf16.mxu0 0
    %4203 = vmatpush1.bf16.msra.mxu0 0
    %4204 = vmatprep.subr.bf16.mxu0 0
    %4205 = vmatpush1.bf16.msra.mxu0 0
    %4206 = vmatprep.subr.bf16.mxu0 0
    %4207 = vmatpush1.bf16.msra.mxu0 0
    %4208 = vmatprep.mubr.bf16.mxu0 0
    %4209 = vmatmul.mubr.bf16.gmra.mrb[0].mxu0 %v4174
    %v4210 = vpop.f32.mrb[0].mxu0
    %v4211 = vadd.f32 0.0, %v4210
    %v4212 = vpop.f32.mrb[0].mxu0
    %v4213 = vpop.f32.mrb[0].mxu0
    %v4214 = vadd.f32 0.0, %v4213
    %v4215 = vpop.f32.mrb[0].mxu0
    %4216 = vdwg.mxu0
    %4217 = vrot.lane.b32.xlu0 %v3268, 40
    %v4218 = vpop.permute.xlu0 %4217
    %v4221 = vsel %vm694, %v3887, 0
    %4223 = vmatprep.subr.bf16.mxu0 0
    %4224 = vmatpush1.bf16.msra.mxu0 %v4218
    %4225 = vmatprep.subr.bf16.mxu0 0
    %4226 = vmatpush1.bf16.msra.mxu0 0
    %4227 = vmatprep.subr.bf16.mxu0 0
    %4228 = vmatpush1.bf16.msra.mxu0 0
    %4229 = vmatprep.subr.bf16.mxu0 0
    %4230 = vmatpush1.bf16.msra.mxu0 0
    %4231 = vmatprep.subr.bf16.mxu0 0
    %4232 = vmatpush1.bf16.msra.mxu0 0
    %4233 = vmatprep.subr.bf16.mxu0 0
    %4234 = vmatpush1.bf16.msra.mxu0 0
    %4235 = vmatprep.subr.bf16.mxu0 0
    %4236 = vmatpush1.bf16.msra.mxu0 0
    %4237 = vmatprep.subr.bf16.mxu0 0
    %4238 = vmatpush1.bf16.msra.mxu0 0
    %4239 = vmatprep.subr.bf16.mxu0 0
    %4240 = vmatpush1.bf16.msra.mxu0 0
    %4241 = vmatprep.subr.bf16.mxu0 0
    %4242 = vmatpush1.bf16.msra.mxu0 0
    %4243 = vmatprep.subr.bf16.mxu0 0
    %4244 = vmatpush1.bf16.msra.mxu0 0
    %4245 = vmatprep.subr.bf16.mxu0 0
    %4246 = vmatpush1.bf16.msra.mxu0 0
    %4247 = vmatprep.subr.bf16.mxu0 0
    %4248 = vmatpush1.bf16.msra.mxu0 0
    %4249 = vmatprep.subr.bf16.mxu0 0
    %4250 = vmatpush1.bf16.msra.mxu0 0
    %4251 = vmatprep.subr.bf16.mxu0 0
    %4252 = vmatpush1.bf16.msra.mxu0 0
    %4253 = vmatprep.subr.bf16.mxu0 0
    %4254 = vmatpush1.bf16.msra.mxu0 0
    %4255 = vmatprep.mubr.bf16.mxu0 0
    %4256 = vmatmul.mubr.bf16.gmra.mrb[0].mxu0 %v4221
    %v4257 = vpop.f32.mrb[0].mxu0
    %v4258 = vadd.f32 0.0, %v4257
    %v4259 = vpop.f32.mrb[0].mxu0
    %v4260 = vpop.f32.mrb[0].mxu0
    %v4261 = vadd.f32 0.0, %v4260
    %v4262 = vpop.f32.mrb[0].mxu0
    %4263 = vdwg.mxu0
    %4280 = vrot.lane.b32.xlu0 %v1923, 8
    %v4281 = vpop.permute.xlu0 %4280
    %4282 = vrot.lane.b32.xlu0 %v1926, 8
    %v4283 = vpop.permute.xlu0 %4282
    %4284 = vrot.lane.b32.xlu0 %v1970, 8
    %v4285 = vpop.permute.xlu0 %4284
    %4286 = vrot.lane.b32.xlu0 %v1973, 8
    %v4287 = vpop.permute.xlu0 %4286
    %4288 = vrot.lane.b32.xlu0 %v2017, 8
    %v4289 = vpop.permute.xlu0 %4288
    %4290 = vrot.lane.b32.xlu0 %v2020, 8
    %v4291 = vpop.permute.xlu0 %4290
    %4292 = vrot.lane.b32.xlu0 %v2064, 8
    %v4293 = vpop.permute.xlu0 %4292
    %4294 = vrot.lane.b32.xlu0 %v2067, 8
    %v4295 = vpop.permute.xlu0 %4294
    %4296 = vrot.lane.b32.xlu0 %v2111, 8
    %v4297 = vpop.permute.xlu0 %4296
    %4298 = vrot.lane.b32.xlu0 %v2114, 8
    %v4299 = vpop.permute.xlu0 %4298
    %4300 = vrot.lane.b32.xlu0 %v2158, 8
    %v4301 = vpop.permute.xlu0 %4300
    %4302 = vrot.lane.b32.xlu0 %v2161, 8
    %v4303 = vpop.permute.xlu0 %4302
    %4304 = vrot.lane.b32.xlu0 %v2205, 8
    %v4305 = vpop.permute.xlu0 %4304
    %4306 = vrot.lane.b32.xlu0 %v2208, 8
    %v4307 = vpop.permute.xlu0 %4306
    %4308 = vrot.lane.b32.xlu0 %v2252, 8
    %v4309 = vpop.permute.xlu0 %4308
    %4310 = vrot.lane.b32.xlu0 %v2255, 8
    %v4311 = vpop.permute.xlu0 %4310
    %4344 = vrot.lane.b32.xlu0 %v2926, 16
    %v4345 = vpop.permute.xlu0 %4344
    %4346 = vrot.lane.b32.xlu0 %v2929, 16
    %v4347 = vpop.permute.xlu0 %4346
    %4348 = vrot.lane.b32.xlu0 %v2973, 16
    %v4349 = vpop.permute.xlu0 %4348
    %4350 = vrot.lane.b32.xlu0 %v2976, 16
    %v4351 = vpop.permute.xlu0 %4350
    %4352 = vrot.lane.b32.xlu0 %v3020, 16
    %v4353 = vpop.permute.xlu0 %4352
    %4354 = vrot.lane.b32.xlu0 %v3023, 16
    %v4355 = vpop.permute.xlu0 %4354
    %4356 = vrot.lane.b32.xlu0 %v3067, 16
    %v4357 = vpop.permute.xlu0 %4356
    %4358 = vrot.lane.b32.xlu0 %v3070, 16
    %v4359 = vpop.permute.xlu0 %4358
    %4360 = vrot.lane.b32.xlu0 %v3114, 16
    %v4361 = vpop.permute.xlu0 %4360
    %4362 = vrot.lane.b32.xlu0 %v3117, 16
    %v4363 = vpop.permute.xlu0 %4362
    %4364 = vrot.lane.b32.xlu0 %v3161, 16
    %v4365 = vpop.permute.xlu0 %4364
    %4366 = vrot.lane.b32.xlu0 %v3164, 16
    %v4367 = vpop.permute.xlu0 %4366
    %4368 = vrot.lane.b32.xlu0 %v3208, 16
    %v4369 = vpop.permute.xlu0 %4368
    %4370 = vrot.lane.b32.xlu0 %v3211, 16
    %v4371 = vpop.permute.xlu0 %4370
    %4372 = vrot.lane.b32.xlu0 %v3255, 16
    %v4373 = vpop.permute.xlu0 %4372
    %4374 = vrot.lane.b32.xlu0 %v3258, 16
    %v4375 = vpop.permute.xlu0 %4374
    %4408 = vrot.lane.b32.xlu0 %v3929, 24
    %v4409 = vpop.permute.xlu0 %4408
    %4410 = vrot.lane.b32.xlu0 %v3932, 24
    %v4411 = vpop.permute.xlu0 %4410
    %4412 = vrot.lane.b32.xlu0 %v3976, 24
    %v4413 = vpop.permute.xlu0 %4412
    %4414 = vrot.lane.b32.xlu0 %v3979, 24
    %v4415 = vpop.permute.xlu0 %4414
    %4416 = vrot.lane.b32.xlu0 %v4023, 24
    %v4417 = vpop.permute.xlu0 %4416
    %4418 = vrot.lane.b32.xlu0 %v4026, 24
    %v4419 = vpop.permute.xlu0 %4418
    %4420 = vrot.lane.b32.xlu0 %v4070, 24
    %v4421 = vpop.permute.xlu0 %4420
    %4422 = vrot.lane.b32.xlu0 %v4073, 24
    %v4423 = vpop.permute.xlu0 %4422
    %4424 = vrot.lane.b32.xlu0 %v4117, 24
    %v4425 = vpop.permute.xlu0 %4424
    %4426 = vrot.lane.b32.xlu0 %v4120, 24
    %v4427 = vpop.permute.xlu0 %4426
    %4428 = vrot.lane.b32.xlu0 %v4164, 24
    %v4429 = vpop.permute.xlu0 %4428
    %4430 = vrot.lane.b32.xlu0 %v4167, 24
    %v4431 = vpop.permute.xlu0 %4430
    %4432 = vrot.lane.b32.xlu0 %v4211, 24
    %v4433 = vpop.permute.xlu0 %4432
    %4434 = vrot.lane.b32.xlu0 %v4214, 24
    %v4435 = vpop.permute.xlu0 %4434
    %4436 = vrot.lane.b32.xlu0 %v4258, 24
    %v4437 = vpop.permute.xlu0 %4436
    %4438 = vrot.lane.b32.xlu0 %v4261, 24
    %v4439 = vpop.permute.xlu0 %4438
    %v4456 = vsel %vm280, %v920, %v4281
    %v4457 = vsel %vm280, %v923, %v4283
    %v4458 = vsel %vm280, %v967, %v4285
    %v4459 = vsel %vm280, %v970, %v4287
    %v4460 = vsel %vm280, %v1014, %v4289
    %v4461 = vsel %vm280, %v1017, %v4291
    %v4462 = vsel %vm280, %v1061, %v4293
    %v4463 = vsel %vm280, %v1064, %v4295
    %v4464 = vsel %vm280, %v1108, %v4297
    %v4465 = vsel %vm280, %v1111, %v4299
    %v4466 = vsel %vm280, %v1155, %v4301
    %v4467 = vsel %vm280, %v1158, %v4303
    %v4468 = vsel %vm280, %v1202, %v4305
    %v4469 = vsel %vm280, %v1205, %v4307
    %v4470 = vsel %vm280, %v1249, %v4309
    %v4471 = vsel %vm280, %v1252, %v4311
    %v4472 = vsel %vm694, %v4456, %v4345
    %v4473 = vsel %vm694, %v4457, %v4347
    %v4474 = vsel %vm694, %v4458, %v4349
    %v4475 = vsel %vm694, %v4459, %v4351
    %v4476 = vsel %vm694, %v4460, %v4353
    %v4477 = vsel %vm694, %v4461, %v4355
    %v4478 = vsel %vm694, %v4462, %v4357
    %v4479 = vsel %vm694, %v4463, %v4359
    %v4480 = vsel %vm694, %v4464, %v4361
    %v4481 = vsel %vm694, %v4465, %v4363
    %v4482 = vsel %vm694, %v4466, %v4365
    %v4483 = vsel %vm694, %v4467, %v4367
    %v4484 = vsel %vm694, %v4468, %v4369
    %v4485 = vsel %vm694, %v4469, %v4371
    %v4486 = vsel %vm694, %v4470, %v4373
    %v4487 = vsel %vm694, %v4471, %v4375
    %vm4488 = vcmask 195584
    %v4489 = vsel %vm4488, %v4472, %v4409
    %v4490 = vsel %vm4488, %v4473, %v4411
    %v4491 = vsel %vm4488, %v4474, %v4413
    %v4492 = vsel %vm4488, %v4475, %v4415
    %v4493 = vsel %vm4488, %v4476, %v4417
    %v4494 = vsel %vm4488, %v4477, %v4419
    %v4495 = vsel %vm4488, %v4478, %v4421
    %v4496 = vsel %vm4488, %v4479, %v4423
    %v4497 = vsel %vm4488, %v4480, %v4425
    %v4498 = vsel %vm4488, %v4481, %v4427
    %v4499 = vsel %vm4488, %v4482, %v4429
    %v4500 = vsel %vm4488, %v4483, %v4431
    %v4501 = vsel %vm4488, %v4484, %v4433
    %v4502 = vsel %vm4488, %v4485, %v4435
    %v4503 = vsel %vm4488, %v4486, %v4437
    %v4504 = vsel %vm4488, %v4487, %v4439
    %v4505 = vpack.c.bf16 %v4490, %v4489
    %v4506 = vpack.c.bf16 %v4492, %v4491
    %v4507 = vpack.c.bf16 %v4494, %v4493
    %v4508 = vpack.c.bf16 %v4496, %v4495
    %v4509 = vpack.c.bf16 %v4498, %v4497
    %v4510 = vpack.c.bf16 %v4500, %v4499
    %v4511 = vpack.c.bf16 %v4502, %v4501
    %v4512 = vpack.c.bf16 %v4504, %v4503
    %4513 = vst.msk [vmem:[#allocation3] sm:$0xff] %vm120, %v4505
    %4514 = vst.msk [vmem:[#allocation3 + $0x8] sm:$0xff] %vm120, %v4506
    %4515 = vst.msk [vmem:[#allocation3 + $0x10] sm:$0xff] %vm120, %v4507
    %4516 = vst.msk [vmem:[#allocation3 + $0x18] sm:$0xff] %vm120, %v4508
    %4517 = vst.msk [vmem:[#allocation3 + $0x20] sm:$0xff] %vm120, %v4509
    %4518 = vst.msk [vmem:[#allocation3 + $0x28] sm:$0xff] %vm120, %v4510
    %4519 = vst.msk [vmem:[#allocation3 + $0x30] sm:$0xff] %vm120, %v4511
    %4520 = vst.msk [vmem:[#allocation3 + $0x38] sm:$0xff] %vm120, %v4512
    %v4521 = vld [vmem:[#allocation3] sm:$0xff]
    %v4522 = vld [vmem:[#allocation3 + $0x8] sm:$0xff]
    %v4523 = vld [vmem:[#allocation3 + $0x10] sm:$0xff]
    %v4524 = vld [vmem:[#allocation3 + $0x18] sm:$0xff]
    %v4525 = vld [vmem:[#allocation3 + $0x20] sm:$0xff]
    %v4526 = vld [vmem:[#allocation3 + $0x28] sm:$0xff]
    %v4527 = vld [vmem:[#allocation3 + $0x30] sm:$0xff]
    %v4528 = vld [vmem:[#allocation3 + $0x38] sm:$0xff]
    %v4529 = vld [vmem:[%s5] sm:$0xf]
    %v4530 = vld [vmem:[%s5 + $0x4] sm:$0xf]
    %v4531 = vld [vmem:[%s5 + $0x8] sm:$0xf]
    %v4532 = vld [vmem:[%s5 + $0xc] sm:$0xf]
    %v4533 = vld [vmem:[%s6] sm:$0x1]
    %v4535 = vlaneseq
    %v4536 = vshrl.u32 %v4535, 7
    %v4537 = vsub.s32 0, %v4536
    %v4538 = vrot.slane %v4533, %v4537
    %v4544 = vunpack.c.l.b16 %v4529
    %v4545 = vunpack.c.l.b16 %v4530
    %v4546 = vunpack.c.l.b16 %v4531
    %v4547 = vunpack.c.l.b16 %v4532
    %v4548 = vpack.c.b16 %v4545, %v4544
    %v4549 = vpack.c.b16 %v4547, %v4546
    %v4553 = vsel %vm120, %v4521, 0
    %v4556 = vsel %vm120, %v4522, 0
    %v4559 = vsel %vm120, %v4523, 0
    %v4562 = vsel %vm120, %v4524, 0
    %v4565 = vsel %vm120, %v4525, 0
    %v4568 = vsel %vm120, %v4526, 0
    %v4571 = vsel %vm120, %v4527, 0
    %v4574 = vsel %vm120, %v4528, 0
    %4576 = vmatprep.subr.bf16.mxu0 0
    %4577 = vmatpush1.bf16.msra.mxu0 %v4548
    %4578 = vmatprep.subr.bf16.mxu0 0
    %4579 = vmatpush1.bf16.msra.mxu0 %v4549
    %4580 = vmatprep.subr.bf16.mxu0 0
    %4581 = vmatpush1.bf16.msra.mxu0 0
    %4582 = vmatprep.subr.bf16.mxu0 0
    %4583 = vmatpush1.bf16.msra.mxu0 0
    %4584 = vmatprep.subr.bf16.mxu0 0
    %4585 = vmatpush1.bf16.msra.mxu0 0
    %4586 = vmatprep.subr.bf16.mxu0 0
    %4587 = vmatpush1.bf16.msra.mxu0 0
    %4588 = vmatprep.subr.bf16.mxu0 0
    %4589 = vmatpush1.bf16.msra.mxu0 0
    %4590 = vmatprep.subr.bf16.mxu0 0
    %4591 = vmatpush1.bf16.msra.mxu0 0
    %4592 = vmatprep.subr.bf16.mxu0 0
    %4593 = vmatpush1.bf16.msra.mxu0 0
    %4594 = vmatprep.subr.bf16.mxu0 0
    %4595 = vmatpush1.bf16.msra.mxu0 0
    %4596 = vmatprep.subr.bf16.mxu0 0
    %4597 = vmatpush1.bf16.msra.mxu0 0
    %4598 = vmatprep.subr.bf16.mxu0 0
    %4599 = vmatpush1.bf16.msra.mxu0 0
    %4600 = vmatprep.subr.bf16.mxu0 0
    %4601 = vmatpush1.bf16.msra.mxu0 0
    %4602 = vmatprep.subr.bf16.mxu0 0
    %4603 = vmatpush1.bf16.msra.mxu0 0
    %4604 = vmatprep.subr.bf16.mxu0 0
    %4605 = vmatpush1.bf16.msra.mxu0 0
    %4606 = vmatprep.subr.bf16.mxu0 0
    %4607 = vmatpush1.bf16.msra.mxu0 0
    %4608 = vmatprep.mubr.bf16.mxu0 0
    %4609 = vmatmul.mubr.bf16.gmra.mrb[0].mxu0 %v4553
    %v4610 = vpop.f32.mrb[0].mxu0
    %v4611 = vadd.f32 %v4538, %v4610
    %v4612 = vpop.f32.mrb[0].mxu0
    %v4613 = vpop.f32.mrb[0].mxu0
    %v4614 = vadd.f32 %v4538, %v4613
    %v4615 = vpop.f32.mrb[0].mxu0
    %4616 = vmatprep.mubr.bf16.mxu0 0
    %4617 = vmatmul.mubr.bf16.gmra.mrb[0].mxu0 %v4556
    %v4618 = vpop.f32.mrb[0].mxu0
    %v4619 = vadd.f32 %v4538, %v4618
    %v4620 = vpop.f32.mrb[0].mxu0
    %v4621 = vpop.f32.mrb[0].mxu0
    %v4622 = vadd.f32 %v4538, %v4621
    %v4623 = vpop.f32.mrb[0].mxu0
    %4624 = vmatprep.mubr.bf16.mxu0 0
    %4625 = vmatmul.mubr.bf16.gmra.mrb[0].mxu0 %v4559
    %v4626 = vpop.f32.mrb[0].mxu0
    %v4627 = vadd.f32 %v4538, %v4626
    %v4628 = vpop.f32.mrb[0].mxu0
    %v4629 = vpop.f32.mrb[0].mxu0
    %v4630 = vadd.f32 %v4538, %v4629
    %v4631 = vpop.f32.mrb[0].mxu0
    %4632 = vmatprep.mubr.bf16.mxu0 0
    %4633 = vmatmul.mubr.bf16.gmra.mrb[0].mxu0 %v4562
    %v4634 = vpop.f32.mrb[0].mxu0
    %v4635 = vadd.f32 %v4538, %v4634
    %v4636 = vpop.f32.mrb[0].mxu0
    %v4637 = vpop.f32.mrb[0].mxu0
    %v4638 = vadd.f32 %v4538, %v4637
    %v4639 = vpop.f32.mrb[0].mxu0
    %4640 = vmatprep.mubr.bf16.mxu0 0
    %4641 = vmatmul.mubr.bf16.gmra.mrb[0].mxu0 %v4565
    %v4642 = vpop.f32.mrb[0].mxu0
    %v4643 = vadd.f32 %v4538, %v4642
    %v4644 = vpop.f32.mrb[0].mxu0
    %v4645 = vpop.f32.mrb[0].mxu0
    %v4646 = vadd.f32 %v4538, %v4645
    %v4647 = vpop.f32.mrb[0].mxu0
    %4648 = vmatprep.mubr.bf16.mxu0 0
    %4649 = vmatmul.mubr.bf16.gmra.mrb[0].mxu0 %v4568
    %v4650 = vpop.f32.mrb[0].mxu0
    %v4651 = vadd.f32 %v4538, %v4650
    %v4652 = vpop.f32.mrb[0].mxu0
    %v4653 = vpop.f32.mrb[0].mxu0
    %v4654 = vadd.f32 %v4538, %v4653
    %v4655 = vpop.f32.mrb[0].mxu0
    %4656 = vmatprep.mubr.bf16.mxu0 0
    %4657 = vmatmul.mubr.bf16.gmra.mrb[0].mxu0 %v4571
    %v4658 = vpop.f32.mrb[0].mxu0
    %v4659 = vadd.f32 %v4538, %v4658
    %v4660 = vpop.f32.mrb[0].mxu0
    %v4661 = vpop.f32.mrb[0].mxu0
    %v4662 = vadd.f32 %v4538, %v4661
    %v4663 = vpop.f32.mrb[0].mxu0
    %4664 = vmatprep.mubr.bf16.mxu0 0
    %4665 = vmatmul.mubr.bf16.gmra.mrb[0].mxu0 %v4574
    %v4666 = vpop.f32.mrb[0].mxu0
    %v4667 = vadd.f32 %v4538, %v4666
    %v4668 = vpop.f32.mrb[0].mxu0
    %v4669 = vpop.f32.mrb[0].mxu0
    %v4670 = vadd.f32 %v4538, %v4669
    %v4671 = vpop.f32.mrb[0].mxu0
    %4672 = vdwg.mxu0
    %4673 = vst.msk [vmem:[%s7] sm:$0xff] %vm120, %v4611
    %4674 = vst.msk [vmem:[%s7 + $0x8] sm:$0xff] %vm120, %v4614
    %4675 = vst.msk [vmem:[%s7 + $0x10] sm:$0xff] %vm120, %v4619
    %4676 = vst.msk [vmem:[%s7 + $0x18] sm:$0xff] %vm120, %v4622
    %4677 = vst.msk [vmem:[%s7 + $0x20] sm:$0xff] %vm120, %v4627
    %4678 = vst.msk [vmem:[%s7 + $0x28] sm:$0xff] %vm120, %v4630
    %4679 = vst.msk [vmem:[%s7 + $0x30] sm:$0xff] %vm120, %v4635
    %4680 = vst.msk [vmem:[%s7 + $0x38] sm:$0xff] %vm120, %v4638
    %4681 = vst.msk [vmem:[%s7 + $0x40] sm:$0xff] %vm120, %v4643
    %4682 = vst.msk [vmem:[%s7 + $0x48] sm:$0xff] %vm120, %v4646
    %4683 = vst.msk [vmem:[%s7 + $0x50] sm:$0xff] %vm120, %v4651
    %4684 = vst.msk [vmem:[%s7 + $0x58] sm:$0xff] %vm120, %v4654
    %4685 = vst.msk [vmem:[%s7 + $0x60] sm:$0xff] %vm120, %v4659
    %4686 = vst.msk [vmem:[%s7 + $0x68] sm:$0xff] %vm120, %v4662
    %4687 = vst.msk [vmem:[%s7 + $0x70] sm:$0xff] %vm120, %v4667
    %4688 = vst.msk [vmem:[%s7 + $0x78] sm:$0xff] %vm120, %v4670
    // Predicated region
    $region34: #{tpu_custom_call.1} parent=1 // pred_check
      _
    $region35: #{tpu_custom_call.1} parent=1 // pred_check_branch
      %4690 = sbr.rel (0) target = $region37
    $region36: #{tpu_custom_call.1} parent=1 // pred_region
      _
    $region37: #{tpu_custom_call.1} parent=1 // pred_fallthru
      _
    // Predicated region
    $region38: #{tpu_custom_call.1} parent=1 // pred_check
      _
    $region39: #{tpu_custom_call.1} parent=1 // pred_check_branch
      %4692 = sbr.rel (0) target = $region41
    $region40: #{tpu_custom_call.1} parent=1 // pred_region
      _
    $region41: #{tpu_custom_call.1} parent=1 // pred_fallthru
      _
    %4693 = vsyncpa [#allocation5], 1

// kernel: tpu_custom_call.1
$region0: #{tpu_custom_call.1}
  #allocation0 [shape = 'u32[]', space=smem, size = 0x4, offset = 0x4, fixed_abs, tag = 'smem constant byte address 0x4 - core index']
  #allocation1 [shape = 'u32[144,128]{1,0:T(1,128)}', space=vmem, size = 0x12000, scoped, tag = 'internal scratch']
  #allocation2 [shape = 'bf16[128,96]{1,0:T(16,128)(2,1)}', space=vmem, size = 0x8000, scoped, tag = 'scratch operand']
  #allocation3 [shape = 'bf16[128,32]{1,0:T(16,128)(2,1)}', space=vmem, size = 0x8000, scoped, tag = 'scratch operand']
  %s0 = inlined_call_operand.vmem [shape: bf16[128,32], index: 0, kind: input, shape index: {}]
  %s1 = inlined_call_operand.vmem [shape: bf16[32,96], index: 1, kind: input, shape index: {}]
  %s2 = inlined_call_operand.vmem [shape: f32[1,96], index: 2, kind: input, shape index: {}]
  %s3 = inlined_call_operand.vmem [shape: f32[4,16,16], index: 3, kind: input, shape index: {}]
  %s4 = inlined_call_operand.hbm [shape: f32[4,16,16], index: 4, kind: input, shape index: {}]
  %s5 = inlined_call_operand.vmem [shape: bf16[32,32], index: 5, kind: input, shape index: {}]
  %s6 = inlined_call_operand.vmem [shape: f32[1,32], index: 6, kind: input, shape index: {}]
  %s7 = inlined_call_operand.vmem [shape: f32[128,32], index: 7, kind: output, shape index: {}]
  %s8 = sld [smem:[#allocation0]]
  $region42: #{tpu_custom_call.1} parent=0
    _
  %s10 = ssub.s32 1, %s8
  %s11 = scalar_select 0, %s10, %s8
  $region1: #{tpu_custom_call.1} parent=0
    #allocation4 [shape = 'u8[32768]{0}', space=vmem, size = 0x8000, scoped, tag = 'input window, operand 4, single buffered']
    #allocation5 [shape = 's32[1]{0}', space=sflag, size = 0x4, scoped, tag = 'scoped memory for tpu_custom_call.1']
    %12 = vsyncpa [#allocation5], 0
    // Predicated region
    $region2: #{tpu_custom_call.1} parent=1 // pred_check
      _
    $region3: #{tpu_custom_call.1} parent=1 // pred_check_branch
      %14 = sbr.rel (0) target = $region5
    $region4: #{tpu_custom_call.1} parent=1 // pred_region
      _
    $region5: #{tpu_custom_call.1} parent=1 // pred_fallthru
      _
    // Predicated region
    $region6: #{tpu_custom_call.1} parent=1 // pred_check
      _
    $region7: #{tpu_custom_call.1} parent=1 // pred_check_branch
      %16 = sbr.rel (0) target = $region9
    $region8: #{tpu_custom_call.1} parent=1 // pred_region
      _
    $region9: #{tpu_custom_call.1} parent=1 // pred_fallthru
      _
    // Predicated region
    $region10: #{tpu_custom_call.1} parent=1 // pred_check
      _
    $region11: #{tpu_custom_call.1} parent=1 // pred_check_branch
      %18 = sbr.rel (0) target = $region13
    $region12: #{tpu_custom_call.1} parent=1 // pred_region
      _
    $region13: #{tpu_custom_call.1} parent=1 // pred_fallthru
      _
    // Predicated region
    $region14: #{tpu_custom_call.1} parent=1 // pred_check
      _
    $region15: #{tpu_custom_call.1} parent=1 // pred_check_branch
      %20 = sbr.rel (0) target = $region17
    $region16: #{tpu_custom_call.1} parent=1 // pred_region
      _
    $region17: #{tpu_custom_call.1} parent=1 // pred_fallthru
      _
    // Predicated region
    $region18: #{tpu_custom_call.1} parent=1 // pred_check
      _
    $region19: #{tpu_custom_call.1} parent=1 // pred_check_branch
      %22 = sbr.rel (0) target = $region21
    $region20: #{tpu_custom_call.1} parent=1 // pred_region
      %s24 = ssub.s32 1024, 1024
      %25 = vsyncadd [#allocation5], %s24
      %s26 = sshll.u32 [#allocation4], 4
      %s27 = int_to_ptr.vmem [resolvable:$true] %s26
      %32 = dma.hbm_to_vmem [thread:$0]  %s4, 1024, %s27, [#allocation5], 128, 128, 8
    $region21: #{tpu_custom_call.1} parent=1 // pred_fallthru
      _
    // Predicated region
    $region22: #{tpu_custom_call.1} parent=1 // pred_check
      _
    $region23: #{tpu_custom_call.1} parent=1 // pred_check_branch
      %34 = sbr.rel (0) target = $region25
    $region24: #{tpu_custom_call.1} parent=1 // pred_region
      _
    $region25: #{tpu_custom_call.1} parent=1 // pred_fallthru
      _
    // Predicated region
    $region26: #{tpu_custom_call.1} parent=1 // pred_check
      _
    $region27: #{tpu_custom_call.1} parent=1 // pred_check_branch
      %36 = sbr.rel (0) target = $region29
    $region28: #{tpu_custom_call.1} parent=1 // pred_region
      _
    $region29: #{tpu_custom_call.1} parent=1 // pred_fallthru
      _
    // Predicated region
    $region30: #{tpu_custom_call.1} parent=1 // pred_check
      _
    $region31: #{tpu_custom_call.1} parent=1 // pred_check_branch
      %38 = sbr.rel (0) target = $region33
    $region32: #{tpu_custom_call.1} parent=1 // pred_region
      %39 = dma.done [#allocation5], 1024
    $region33: #{tpu_custom_call.1} parent=1 // pred_fallthru
      _
    %v41 = vld [vmem:[%s0] sm:$0xf]
    %v42 = vld [vmem:[%s0 + $0x4] sm:$0xf]
    %v43 = vld [vmem:[%s0 + $0x8] sm:$0xf]
    %v44 = vld [vmem:[%s0 + $0xc] sm:$0xf]
    %v45 = vld [vmem:[%s0 + $0x10] sm:$0xf]
    %v46 = vld [vmem:[%s0 + $0x14] sm:$0xf]
    %v47 = vld [vmem:[%s0 + $0x18] sm:$0xf]
    %v48 = vld [vmem:[%s0 + $0x1c] sm:$0xf]
    %v49 = vld [vmem:[%s0 + $0x20] sm:$0xf]
    %v50 = vld [vmem:[%s0 + $0x24] sm:$0xf]
    %v51 = vld [vmem:[%s0 + $0x28] sm:$0xf]
    %v52 = vld [vmem:[%s0 + $0x2c] sm:$0xf]
    %v53 = vld [vmem:[%s0 + $0x30] sm:$0xf]
    %v54 = vld [vmem:[%s0 + $0x34] sm:$0xf]
    %v55 = vld [vmem:[%s0 + $0x38] sm:$0xf]
    %v56 = vld [vmem:[%s0 + $0x3c] sm:$0xf]
    %v57 = vld [vmem:[%s1] sm:$0xf]
    %v58 = vld [vmem:[%s1 + $0x4] sm:$0xf]
    %v59 = vld [vmem:[%s1 + $0x8] sm:$0xf]
    %v60 = vld [vmem:[%s1 + $0xc] sm:$0xf]
    %v61 = vld [vmem:[%s2] sm:$0x1]
    %v63 = vlaneseq
    %v64 = vshrl.u32 %v63, 7
    %v65 = vsub.s32 0, %v64
    %v66 = vrot.slane %v61, %v65
    %v84 = vunpack.c.l.b16 %v41
    %v85 = vunpack.c.l.b16 %v42
    %v86 = vunpack.c.l.b16 %v43
    %v87 = vunpack.c.l.b16 %v44
    %v88 = vunpack.c.l.b16 %v45
    %v89 = vunpack.c.l.b16 %v46
    %v90 = vunpack.c.l.b16 %v47
    %v91 = vunpack.c.l.b16 %v48
    %v92 = vunpack.c.l.b16 %v49
    %v93 = vunpack.c.l.b16 %v50
    %v94 = vunpack.c.l.b16 %v51
    %v95 = vunpack.c.l.b16 %v52
    %v96 = vunpack.c.l.b16 %v53
    %v97 = vunpack.c.l.b16 %v54
    %v98 = vunpack.c.l.b16 %v55
    %v99 = vunpack.c.l.b16 %v56
    %v100 = vpack.c.b16 %v85, %v84
    %v101 = vpack.c.b16 %v87, %v86
    %v102 = vpack.c.b16 %v89, %v88
    %v103 = vpack.c.b16 %v91, %v90
    %v104 = vpack.c.b16 %v93, %v92
    %v105 = vpack.c.b16 %v95, %v94
    %v106 = vpack.c.b16 %v97, %v96
    %v107 = vpack.c.b16 %v99, %v98
    %v112 = vunpack.c.l.b16 %v57
    %v113 = vunpack.c.l.b16 %v58
    %v114 = vunpack.c.l.b16 %v59
    %v115 = vunpack.c.l.b16 %v60
    %v116 = vpack.c.b16 %v113, %v112
    %v117 = vpack.c.b16 %v115, %v114
    %vm120 = vcmask 261120
    %v122 = vsel %vm120, %v100, 0
    %v125 = vsel %vm120, %v101, 0
    %v128 = vsel %vm120, %v102, 0
    %v131 = vsel %vm120, %v103, 0
    %v134 = vsel %vm120, %v104, 0
    %v137 = vsel %vm120, %v105, 0
    %v140 = vsel %vm120, %v106, 0
    %v143 = vsel %vm120, %v107, 0
    %145 = vmatprep.subr.bf16.mxu0 0
    %146 = vmatpush1.bf16.msra.mxu0 %v116
    %147 = vmatprep.subr.bf16.mxu0 0
    %148 = vmatpush1.bf16.msra.mxu0 %v117
    %149 = vmatprep.subr.bf16.mxu0 0
    %150 = vmatpush1.bf16.msra.mxu0 0
    %151 = vmatprep.subr.bf16.mxu0 0
    %152 = vmatpush1.bf16.msra.mxu0 0
    %153 = vmatprep.subr.bf16.mxu0 0
    %154 = vmatpush1.bf16.msra.mxu0 0
    %155 = vmatprep.subr.bf16.mxu0 0
    %156 = vmatpush1.bf16.msra.mxu0 0
    %157 = vmatprep.subr.bf16.mxu0 0
    %158 = vmatpush1.bf16.msra.mxu0 0
    %159 = vmatprep.subr.bf16.mxu0 0
    %160 = vmatpush1.bf16.msra.mxu0 0
    %161 = vmatprep.subr.bf16.mxu0 0
    %162 = vmatpush1.bf16.msra.mxu0 0
    %163 = vmatprep.subr.bf16.mxu0 0
    %164 = vmatpush1.bf16.msra.mxu0 0
    %165 = vmatprep.subr.bf16.mxu0 0
    %166 = vmatpush1.bf16.msra.mxu0 0
    %167 = vmatprep.subr.bf16.mxu0 0
    %168 = vmatpush1.bf16.msra.mxu0 0
    %169 = vmatprep.subr.bf16.mxu0 0
    %170 = vmatpush1.bf16.msra.mxu0 0
    %171 = vmatprep.subr.bf16.mxu0 0
    %172 = vmatpush1.bf16.msra.mxu0 0
    %173 = vmatprep.subr.bf16.mxu0 0
    %174 = vmatpush1.bf16.msra.mxu0 0
    %175 = vmatprep.subr.bf16.mxu0 0
    %176 = vmatpush1.bf16.msra.mxu0 0
    %177 = vmatprep.mubr.bf16.mxu0 0
    %178 = vmatmul.mubr.bf16.gmra.mrb[0].mxu0 %v122
    %v179 = vpop.f32.mrb[0].mxu0
    %v180 = vadd.f32 %v66, %v179
    %v181 = vpop.f32.mrb[0].mxu0
    %v182 = vpop.f32.mrb[0].mxu0
    %v183 = vadd.f32 %v66, %v182
    %v184 = vpop.f32.mrb[0].mxu0
    %185 = vmatprep.mubr.bf16.mxu0 0
    %186 = vmatmul.mubr.bf16.gmra.mrb[0].mxu0 %v125
    %v187 = vpop.f32.mrb[0].mxu0
    %v188 = vadd.f32 %v66, %v187
    %v189 = vpop.f32.mrb[0].mxu0
    %v190 = vpop.f32.mrb[0].mxu0
    %v191 = vadd.f32 %v66, %v190
    %v192 = vpop.f32.mrb[0].mxu0
    %193 = vmatprep.mubr.bf16.mxu0 0
    %194 = vmatmul.mubr.bf16.gmra.mrb[0].mxu0 %v128
    %v195 = vpop.f32.mrb[0].mxu0
    %v196 = vadd.f32 %v66, %v195
    %v197 = vpop.f32.mrb[0].mxu0
    %v198 = vpop.f32.mrb[0].mxu0
    %v199 = vadd.f32 %v66, %v198
    %v200 = vpop.f32.mrb[0].mxu0
    %201 = vmatprep.mubr.bf16.mxu0 0
    %202 = vmatmul.mubr.bf16.gmra.mrb[0].mxu0 %v131
    %v203 = vpop.f32.mrb[0].mxu0
    %v204 = vadd.f32 %v66, %v203
    %v205 = vpop.f32.mrb[0].mxu0
    %v206 = vpop.f32.mrb[0].mxu0
    %v207 = vadd.f32 %v66, %v206
    %v208 = vpop.f32.mrb[0].mxu0
    %209 = vmatprep.mubr.bf16.mxu0 0
    %210 = vmatmul.mubr.bf16.gmra.mrb[0].mxu0 %v134
    %v211 = vpop.f32.mrb[0].mxu0
    %v212 = vadd.f32 %v66, %v211
    %v213 = vpop.f32.mrb[0].mxu0
    %v214 = vpop.f32.mrb[0].mxu0
    %v215 = vadd.f32 %v66, %v214
    %v216 = vpop.f32.mrb[0].mxu0
    %217 = vmatprep.mubr.bf16.mxu0 0
    %218 = vmatmul.mubr.bf16.gmra.mrb[0].mxu0 %v137
    %v219 = vpop.f32.mrb[0].mxu0
    %v220 = vadd.f32 %v66, %v219
    %v221 = vpop.f32.mrb[0].mxu0
    %v222 = vpop.f32.mrb[0].mxu0
    %v223 = vadd.f32 %v66, %v222
    %v224 = vpop.f32.mrb[0].mxu0
    %225 = vmatprep.mubr.bf16.mxu0 0
    %226 = vmatmul.mubr.bf16.gmra.mrb[0].mxu0 %v140
    %v227 = vpop.f32.mrb[0].mxu0
    %v228 = vadd.f32 %v66, %v227
    %v229 = vpop.f32.mrb[0].mxu0
    %v230 = vpop.f32.mrb[0].mxu0
    %v231 = vadd.f32 %v66, %v230
    %v232 = vpop.f32.mrb[0].mxu0
    %233 = vmatprep.mubr.bf16.mxu0 0
    %234 = vmatmul.mubr.bf16.gmra.mrb[0].mxu0 %v143
    %v235 = vpop.f32.mrb[0].mxu0
    %v236 = vadd.f32 %v66, %v235
    %v237 = vpop.f32.mrb[0].mxu0
    %v238 = vpop.f32.mrb[0].mxu0
    %v239 = vadd.f32 %v66, %v238
    %v240 = vpop.f32.mrb[0].mxu0
    %241 = vdwg.mxu0
    %v242 = vpack.c.bf16 %v183, %v180
    %v243 = vpack.c.bf16 %v191, %v188
    %v244 = vpack.c.bf16 %v199, %v196
    %v245 = vpack.c.bf16 %v207, %v204
    %v246 = vpack.c.bf16 %v215, %v212
    %v247 = vpack.c.bf16 %v223, %v220
    %v248 = vpack.c.bf16 %v231, %v228
    %v249 = vpack.c.bf16 %v239, %v236
    %vm250 = vcmask 785408
    %251 = vst.msk [vmem:[#allocation2] sm:$0xff] %vm250, %v242
    %252 = vst.msk [vmem:[#allocation2 + $0x8] sm:$0xff] %vm250, %v243
    %253 = vst.msk [vmem:[#allocation2 + $0x10] sm:$0xff] %vm250, %v244
    %254 = vst.msk [vmem:[#allocation2 + $0x18] sm:$0xff] %vm250, %v245
    %255 = vst.msk [vmem:[#allocation2 + $0x20] sm:$0xff] %vm250, %v246
    %256 = vst.msk [vmem:[#allocation2 + $0x28] sm:$0xff] %vm250, %v247
    %257 = vst.msk [vmem:[#allocation2 + $0x30] sm:$0xff] %vm250, %v248
    %258 = vst.msk [vmem:[#allocation2 + $0x38] sm:$0xff] %vm250, %v249
    %v259 = vld [vmem:[#allocation4] sm:$0xff]
    %v260 = vld [vmem:[#allocation4 + $0x8] sm:$0xff]
    %v261 = vld [vmem:[#allocation4 + $0x10] sm:$0xff]
    %v262 = vld [vmem:[#allocation4 + $0x18] sm:$0xff]
    %v263 = vld [vmem:[#allocation4 + $0x20] sm:$0xff]
    %v264 = vld [vmem:[#allocation4 + $0x28] sm:$0xff]
    %v265 = vld [vmem:[#allocation4 + $0x30] sm:$0xff]
    %v266 = vld [vmem:[#allocation4 + $0x38] sm:$0xff]
    %v267 = vld [vmem:[#allocation2] sm:$0xff]
    %v268 = vld [vmem:[#allocation2 + $0x8] sm:$0xff]
    %v269 = vld [vmem:[#allocation2 + $0x10] sm:$0xff]
    %v270 = vld [vmem:[#allocation2 + $0x18] sm:$0xff]
    %v271 = vld [vmem:[#allocation2 + $0x20] sm:$0xff]
    %v272 = vld [vmem:[#allocation2 + $0x28] sm:$0xff]
    %v273 = vld [vmem:[#allocation2 + $0x30] sm:$0xff]
    %v274 = vld [vmem:[#allocation2 + $0x38] sm:$0xff]
    %v275 = vld [vmem:[%s3] sm:$0xff]
    %v276 = vld [vmem:[%s3 + $0x8] sm:$0xff]
    %278 = vrot.lane.b32.xlu0 %v267, 96
    %v279 = vpop.permute.xlu0 %278
    %vm280 = vcmask 64512
    %v282 = vsel %vm280, %v267, 0
    %v285 = vsel %vm280, %v279, 0
    %287 = vmatprep.subr.bf16.mxu0 0
    %288 = vmatpush1.bf16.xpose.msra.mxu0 %v285
    %289 = vmatprep.subr.bf16.mxu0 0
    %290 = vmatpush1.bf16.xpose.msra.mxu0 0
    %291 = vmatprep.subr.bf16.mxu0 0
    %292 = vmatpush1.bf16.xpose.msra.mxu0 0
    %293 = vmatprep.subr.bf16.mxu0 0
    %294 = vmatpush1.bf16.xpose.msra.mxu0 0
    %295 = vmatprep.subr.bf16.mxu0 0
    %296 = vmatpush1.bf16.xpose.msra.mxu0 0
    %297 = vmatprep.subr.bf16.mxu0 0
    %298 = vmatpush1.bf16.xpose.msra.mxu0 0
    %299 = vmatprep.subr.bf16.mxu0 0
    %300 = vmatpush1.bf16.xpose.msra.mxu0 0
    %301 = vmatprep.subr.bf16.mxu0 0
    %302 = vmatpush1.bf16.xpose.msra.mxu0 0
    %303 = vmatprep.subr.bf16.mxu0 0
    %304 = vmatpush1.bf16.xpose.msra.mxu0 0
    %305 = vmatprep.subr.bf16.mxu0 0
    %306 = vmatpush1.bf16.xpose.msra.mxu0 0
    %307 = vmatprep.subr.bf16.mxu0 0
    %308 = vmatpush1.bf16.xpose.msra.mxu0 0
    %309 = vmatprep.subr.bf16.mxu0 0
    %310 = vmatpush1.bf16.xpose.msra.mxu0 0
    %311 = vmatprep.subr.bf16.mxu0 0
    %312 = vmatpush1.bf16.xpose.msra.mxu0 0
    %313 = vmatprep.subr.bf16.mxu0 0
    %314 = vmatpush1.bf16.xpose.msra.mxu0 0
    %315 = vmatprep.subr.bf16.mxu0 0
    %316 = vmatpush1.bf16.xpose.msra.mxu0 0
    %317 = vmatprep.subr.bf16.mxu0 0
    %318 = vmatpush1.bf16.xpose.msra.mxu0 0
    %319 = vmatprep.mubr.bf16.mxu0 0
    %320 = vmatmul.mubr.bf16.gmra.mrb[0].mxu0 %v282
    %v321 = vpop.f32.mrb[0].mxu0
    %v322 = vadd.f32 %v275, %v321
    %v323 = vpop.f32.mrb[0].mxu0
    %v324 = vpop.f32.mrb[0].mxu0
    %v325 = vadd.f32 %v276, %v324
    %v326 = vpop.f32.mrb[0].mxu0
    %327 = vdwg.mxu0
    %329 = vrot.lane.b32.xlu0 %v268, 96
    %v330 = vpop.permute.xlu0 %329
    %v332 = vsel %vm280, %v268, 0
    %v335 = vsel %vm280, %v330, 0
    %337 = vmatprep.subr.bf16.mxu0 0
    %338 = vmatpush1.bf16.xpose.msra.mxu0 %v335
    %339 = vmatprep.subr.bf16.mxu0 0
    %340 = vmatpush1.bf16.xpose.msra.mxu0 0
    %341 = vmatprep.subr.bf16.mxu0 0
    %342 = vmatpush1.bf16.xpose.msra.mxu0 0
    %343 = vmatprep.subr.bf16.mxu0 0
    %344 = vmatpush1.bf16.xpose.msra.mxu0 0
    %345 = vmatprep.subr.bf16.mxu0 0
    %346 = vmatpush1.bf16.xpose.msra.mxu0 0
    %347 = vmatprep.subr.bf16.mxu0 0
    %348 = vmatpush1.bf16.xpose.msra.mxu0 0
    %349 = vmatprep.subr.bf16.mxu0 0
    %350 = vmatpush1.bf16.xpose.msra.mxu0 0
    %351 = vmatprep.subr.bf16.mxu0 0
    %352 = vmatpush1.bf16.xpose.msra.mxu0 0
    %353 = vmatprep.subr.bf16.mxu0 0
    %354 = vmatpush1.bf16.xpose.msra.mxu0 0
    %355 = vmatprep.subr.bf16.mxu0 0
    %356 = vmatpush1.bf16.xpose.msra.mxu0 0
    %357 = vmatprep.subr.bf16.mxu0 0
    %358 = vmatpush1.bf16.xpose.msra.mxu0 0
    %359 = vmatprep.subr.bf16.mxu0 0
    %360 = vmatpush1.bf16.xpose.msra.mxu0 0
    %361 = vmatprep.subr.bf16.mxu0 0
    %362 = vmatpush1.bf16.xpose.msra.mxu0 0
    %363 = vmatprep.subr.bf16.mxu0 0
    %364 = vmatpush1.bf16.xpose.msra.mxu0 0
    %365 = vmatprep.subr.bf16.mxu0 0
    %366 = vmatpush1.bf16.xpose.msra.mxu0 0
    %367 = vmatprep.subr.bf16.mxu0 0
    %368 = vmatpush1.bf16.xpose.msra.mxu0 0
    %369 = vmatprep.mubr.bf16.mxu0 0
    %370 = vmatmul.mubr.bf16.gmra.mrb[0].mxu0 %v332
    %v371 = vpop.f32.mrb[0].mxu0
    %v372 = vadd.f32 %v275, %v371
    %v373 = vpop.f32.mrb[0].mxu0
    %v374 = vpop.f32.mrb[0].mxu0
    %v375 = vadd.f32 %v276, %v374
    %v376 = vpop.f32.mrb[0].mxu0
    %377 = vdwg.mxu0
    %379 = vrot.lane.b32.xlu0 %v269, 96
    %v380 = vpop.permute.xlu0 %379
    %v382 = vsel %vm280, %v269, 0
    %v385 = vsel %vm280, %v380, 0
    %387 = vmatprep.subr.bf16.mxu0 0
    %388 = vmatpush1.bf16.xpose.msra.mxu0 %v385
    %389 = vmatprep.subr.bf16.mxu0 0
    %390 = vmatpush1.bf16.xpose.msra.mxu0 0
    %391 = vmatprep.subr.bf16.mxu0 0
    %392 = vmatpush1.bf16.xpose.msra.mxu0 0
    %393 = vmatprep.subr.bf16.mxu0 0
    %394 = vmatpush1.bf16.xpose.msra.mxu0 0
    %395 = vmatprep.subr.bf16.mxu0 0
    %396 = vmatpush1.bf16.xpose.msra.mxu0 0
    %397 = vmatprep.subr.bf16.mxu0 0
    %398 = vmatpush1.bf16.xpose.msra.mxu0 0
    %399 = vmatprep.subr.bf16.mxu0 0
    %400 = vmatpush1.bf16.xpose.msra.mxu0 0
    %401 = vmatprep.subr.bf16.mxu0 0
    %402 = vmatpush1.bf16.xpose.msra.mxu0 0
    %403 = vmatprep.subr.bf16.mxu0 0
    %404 = vmatpush1.bf16.xpose.msra.mxu0 0
    %405 = vmatprep.subr.bf16.mxu0 0
    %406 = vmatpush1.bf16.xpose.msra.mxu0 0
    %407 = vmatprep.subr.bf16.mxu0 0
    %408 = vmatpush1.bf16.xpose.msra.mxu0 0
    %409 = vmatprep.subr.bf16.mxu0 0
    %410 = vmatpush1.bf16.xpose.msra.mxu0 0
    %411 = vmatprep.subr.bf16.mxu0 0
    %412 = vmatpush1.bf16.xpose.msra.mxu0 0
    %413 = vmatprep.subr.bf16.mxu0 0
    %414 = vmatpush1.bf16.xpose.msra.mxu0 0
    %415 = vmatprep.subr.bf16.mxu0 0
    %416 = vmatpush1.bf16.xpose.msra.mxu0 0
    %417 = vmatprep.subr.bf16.mxu0 0
    %418 = vmatpush1.bf16.xpose.msra.mxu0 0
    %419 = vmatprep.mubr.bf16.mxu0 0
    %420 = vmatmul.mubr.bf16.gmra.mrb[0].mxu0 %v382
    %v421 = vpop.f32.mrb[0].mxu0
    %v422 = vadd.f32 %v275, %v421
    %v423 = vpop.f32.mrb[0].mxu0
    %v424 = vpop.f32.mrb[0].mxu0
    %v425 = vadd.f32 %v276, %v424
    %v426 = vpop.f32.mrb[0].mxu0
    %427 = vdwg.mxu0
    %429 = vrot.lane.b32.xlu0 %v270, 96
    %v430 = vpop.permute.xlu0 %429
    %v432 = vsel %vm280, %v270, 0
    %v435 = vsel %vm280, %v430, 0
    %437 = vmatprep.subr.bf16.mxu0 0
    %438 = vmatpush1.bf16.xpose.msra.mxu0 %v435
    %439 = vmatprep.subr.bf16.mxu0 0
    %440 = vmatpush1.bf16.xpose.msra.mxu0 0
    %441 = vmatprep.subr.bf16.mxu0 0
    %442 = vmatpush1.bf16.xpose.msra.mxu0 0
    %443 = vmatprep.subr.bf16.mxu0 0
    %444 = vmatpush1.bf16.xpose.msra.mxu0 0
    %445 = vmatprep.subr.bf16.mxu0 0
    %446 = vmatpush1.bf16.xpose.msra.mxu0 0
    %447 = vmatprep.subr.bf16.mxu0 0
    %448 = vmatpush1.bf16.xpose.msra.mxu0 0
    %449 = vmatprep.subr.bf16.mxu0 0
    %450 = vmatpush1.bf16.xpose.msra.mxu0 0
    %451 = vmatprep.subr.bf16.mxu0 0
    %452 = vmatpush1.bf16.xpose.msra.mxu0 0
    %453 = vmatprep.subr.bf16.mxu0 0
    %454 = vmatpush1.bf16.xpose.msra.mxu0 0
    %455 = vmatprep.subr.bf16.mxu0 0
    %456 = vmatpush1.bf16.xpose.msra.mxu0 0
    %457 = vmatprep.subr.bf16.mxu0 0
    %458 = vmatpush1.bf16.xpose.msra.mxu0 0
    %459 = vmatprep.subr.bf16.mxu0 0
    %460 = vmatpush1.bf16.xpose.msra.mxu0 0
    %461 = vmatprep.subr.bf16.mxu0 0
    %462 = vmatpush1.bf16.xpose.msra.mxu0 0
    %463 = vmatprep.subr.bf16.mxu0 0
    %464 = vmatpush1.bf16.xpose.msra.mxu0 0
    %465 = vmatprep.subr.bf16.mxu0 0
    %466 = vmatpush1.bf16.xpose.msra.mxu0 0
    %467 = vmatprep.subr.bf16.mxu0 0
    %468 = vmatpush1.bf16.xpose.msra.mxu0 0
    %469 = vmatprep.mubr.bf16.mxu0 0
    %470 = vmatmul.mubr.bf16.gmra.mrb[0].mxu0 %v432
    %v471 = vpop.f32.mrb[0].mxu0
    %v472 = vadd.f32 %v275, %v471
    %v473 = vpop.f32.mrb[0].mxu0
    %v474 = vpop.f32.mrb[0].mxu0
    %v475 = vadd.f32 %v276, %v474
    %v476 = vpop.f32.mrb[0].mxu0
    %477 = vdwg.mxu0
    %479 = vrot.lane.b32.xlu0 %v271, 96
    %v480 = vpop.permute.xlu0 %479
    %v482 = vsel %vm280, %v271, 0
    %v485 = vsel %vm280, %v480, 0
    %487 = vmatprep.subr.bf16.mxu0 0
    %488 = vmatpush1.bf16.xpose.msra.mxu0 %v485
    %489 = vmatprep.subr.bf16.mxu0 0
    %490 = vmatpush1.bf16.xpose.msra.mxu0 0
    %491 = vmatprep.subr.bf16.mxu0 0
    %492 = vmatpush1.bf16.xpose.msra.mxu0 0
    %493 = vmatprep.subr.bf16.mxu0 0
    %494 = vmatpush1.bf16.xpose.msra.mxu0 0
    %495 = vmatprep.subr.bf16.mxu0 0
    %496 = vmatpush1.bf16.xpose.msra.mxu0 0
    %497 = vmatprep.subr.bf16.mxu0 0
    %498 = vmatpush1.bf16.xpose.msra.mxu0 0
    %499 = vmatprep.subr.bf16.mxu0 0
    %500 = vmatpush1.bf16.xpose.msra.mxu0 0
    %501 = vmatprep.subr.bf16.mxu0 0
    %502 = vmatpush1.bf16.xpose.msra.mxu0 0
    %503 = vmatprep.subr.bf16.mxu0 0
    %504 = vmatpush1.bf16.xpose.msra.mxu0 0
    %505 = vmatprep.subr.bf16.mxu0 0
    %506 = vmatpush1.bf16.xpose.msra.mxu0 0
    %507 = vmatprep.subr.bf16.mxu0 0
    %508 = vmatpush1.bf16.xpose.msra.mxu0 0
    %509 = vmatprep.subr.bf16.mxu0 0
    %510 = vmatpush1.bf16.xpose.msra.mxu0 0
    %511 = vmatprep.subr.bf16.mxu0 0
    %512 = vmatpush1.bf16.xpose.msra.mxu0 0
    %513 = vmatprep.subr.bf16.mxu0 0
    %514 = vmatpush1.bf16.xpose.msra.mxu0 0
    %515 = vmatprep.subr.bf16.mxu0 0
    %516 = vmatpush1.bf16.xpose.msra.mxu0 0
    %517 = vmatprep.subr.bf16.mxu0 0
    %518 = vmatpush1.bf16.xpose.msra.mxu0 0
    %519 = vmatprep.mubr.bf16.mxu0 0
    %520 = vmatmul.mubr.bf16.gmra.mrb[0].mxu0 %v482
    %v521 = vpop.f32.mrb[0].mxu0
    %v522 = vadd.f32 %v275, %v521
    %v523 = vpop.f32.mrb[0].mxu0
    %v524 = vpop.f32.mrb[0].mxu0
    %v525 = vadd.f32 %v276, %v524
    %v526 = vpop.f32.mrb[0].mxu0
    %527 = vdwg.mxu0
    %529 = vrot.lane.b32.xlu0 %v272, 96
    %v530 = vpop.permute.xlu0 %529
    %v532 = vsel %vm280, %v272, 0
    %v535 = vsel %vm280, %v530, 0
    %537 = vmatprep.subr.bf16.mxu0 0
    %538 = vmatpush1.bf16.xpose.msra.mxu0 %v535
    %539 = vmatprep.subr.bf16.mxu0 0
    %540 = vmatpush1.bf16.xpose.msra.mxu0 0
    %541 = vmatprep.subr.bf16.mxu0 0
    %542 = vmatpush1.bf16.xpose.msra.mxu0 0
    %543 = vmatprep.subr.bf16.mxu0 0
    %544 = vmatpush1.bf16.xpose.msra.mxu0 0
    %545 = vmatprep.subr.bf16.mxu0 0
    %546 = vmatpush1.bf16.xpose.msra.mxu0 0
    %547 = vmatprep.subr.bf16.mxu0 0
    %548 = vmatpush1.bf16.xpose.msra.mxu0 0
    %549 = vmatprep.subr.bf16.mxu0 0
    %550 = vmatpush1.bf16.xpose.msra.mxu0 0
    %551 = vmatprep.subr.bf16.mxu0 0
    %552 = vmatpush1.bf16.xpose.msra.mxu0 0
    %553 = vmatprep.subr.bf16.mxu0 0
    %554 = vmatpush1.bf16.xpose.msra.mxu0 0
    %555 = vmatprep.subr.bf16.mxu0 0
    %556 = vmatpush1.bf16.xpose.msra.mxu0 0
    %557 = vmatprep.subr.bf16.mxu0 0
    %558 = vmatpush1.bf16.xpose.msra.mxu0 0
    %559 = vmatprep.subr.bf16.mxu0 0
    %560 = vmatpush1.bf16.xpose.msra.mxu0 0
    %561 = vmatprep.subr.bf16.mxu0 0
    %562 = vmatpush1.bf16.xpose.msra.mxu0 0
    %563 = vmatprep.subr.bf16.mxu0 0
    %564 = vmatpush1.bf16.xpose.msra.mxu0 0
    %565 = vmatprep.subr.bf16.mxu0 0
    %566 = vmatpush1.bf16.xpose.msra.mxu0 0
    %567 = vmatprep.subr.bf16.mxu0 0
    %568 = vmatpush1.bf16.xpose.msra.mxu0 0
    %569 = vmatprep.mubr.bf16.mxu0 0
    %570 = vmatmul.mubr.bf16.gmra.mrb[0].mxu0 %v532
    %v571 = vpop.f32.mrb[0].mxu0
    %v572 = vadd.f32 %v275, %v571
    %v573 = vpop.f32.mrb[0].mxu0
    %v574 = vpop.f32.mrb[0].mxu0
    %v575 = vadd.f32 %v276, %v574
    %v576 = vpop.f32.mrb[0].mxu0
    %577 = vdwg.mxu0
    %579 = vrot.lane.b32.xlu0 %v273, 96
    %v580 = vpop.permute.xlu0 %579
    %v582 = vsel %vm280, %v273, 0
    %v585 = vsel %vm280, %v580, 0
    %587 = vmatprep.subr.bf16.mxu0 0
    %588 = vmatpush1.bf16.xpose.msra.mxu0 %v585
    %589 = vmatprep.subr.bf16.mxu0 0
    %590 = vmatpush1.bf16.xpose.msra.mxu0 0
    %591 = vmatprep.subr.bf16.mxu0 0
    %592 = vmatpush1.bf16.xpose.msra.mxu0 0
    %593 = vmatprep.subr.bf16.mxu0 0
    %594 = vmatpush1.bf16.xpose.msra.mxu0 0
    %595 = vmatprep.subr.bf16.mxu0 0
    %596 = vmatpush1.bf16.xpose.msra.mxu0 0
    %597 = vmatprep.subr.bf16.mxu0 0
    %598 = vmatpush1.bf16.xpose.msra.mxu0 0
    %599 = vmatprep.subr.bf16.mxu0 0
    %600 = vmatpush1.bf16.xpose.msra.mxu0 0
    %601 = vmatprep.subr.bf16.mxu0 0
    %602 = vmatpush1.bf16.xpose.msra.mxu0 0
    %603 = vmatprep.subr.bf16.mxu0 0
    %604 = vmatpush1.bf16.xpose.msra.mxu0 0
    %605 = vmatprep.subr.bf16.mxu0 0
    %606 = vmatpush1.bf16.xpose.msra.mxu0 0
    %607 = vmatprep.subr.bf16.mxu0 0
    %608 = vmatpush1.bf16.xpose.msra.mxu0 0
    %609 = vmatprep.subr.bf16.mxu0 0
    %610 = vmatpush1.bf16.xpose.msra.mxu0 0
    %611 = vmatprep.subr.bf16.mxu0 0
    %612 = vmatpush1.bf16.xpose.msra.mxu0 0
    %613 = vmatprep.subr.bf16.mxu0 0
    %614 = vmatpush1.bf16.xpose.msra.mxu0 0
    %615 = vmatprep.subr.bf16.mxu0 0
    %616 = vmatpush1.bf16.xpose.msra.mxu0 0
    %617 = vmatprep.subr.bf16.mxu0 0
    %618 = vmatpush1.bf16.xpose.msra.mxu0 0
    %619 = vmatprep.mubr.bf16.mxu0 0
    %620 = vmatmul.mubr.bf16.gmra.mrb[0].mxu0 %v582
    %v621 = vpop.f32.mrb[0].mxu0
    %v622 = vadd.f32 %v275, %v621
    %v623 = vpop.f32.mrb[0].mxu0
    %v624 = vpop.f32.mrb[0].mxu0
    %v625 = vadd.f32 %v276, %v624
    %v626 = vpop.f32.mrb[0].mxu0
    %627 = vdwg.mxu0
    %629 = vrot.lane.b32.xlu0 %v274, 96
    %v630 = vpop.permute.xlu0 %629
    %v632 = vsel %vm280, %v274, 0
    %v635 = vsel %vm280, %v630, 0
    %637 = vmatprep.subr.bf16.mxu0 0
    %638 = vmatpush1.bf16.xpose.msra.mxu0 %v635
    %639 = vmatprep.subr.bf16.mxu0 0
    %640 = vmatpush1.bf16.xpose.msra.mxu0 0
    %641 = vmatprep.subr.bf16.mxu0 0
    %642 = vmatpush1.bf16.xpose.msra.mxu0 0
    %643 = vmatprep.subr.bf16.mxu0 0
    %644 = vmatpush1.bf16.xpose.msra.mxu0 0
    %645 = vmatprep.subr.bf16.mxu0 0
    %646 = vmatpush1.bf16.xpose.msra.mxu0 0
    %647 = vmatprep.subr.bf16.mxu0 0
    %648 = vmatpush1.bf16.xpose.msra.mxu0 0
    %649 = vmatprep.subr.bf16.mxu0 0
    %650 = vmatpush1.bf16.xpose.msra.mxu0 0
    %651 = vmatprep.subr.bf16.mxu0 0
    %652 = vmatpush1.bf16.xpose.msra.mxu0 0
    %653 = vmatprep.subr.bf16.mxu0 0
    %654 = vmatpush1.bf16.xpose.msra.mxu0 0
    %655 = vmatprep.subr.bf16.mxu0 0
    %656 = vmatpush1.bf16.xpose.msra.mxu0 0
    %657 = vmatprep.subr.bf16.mxu0 0
    %658 = vmatpush1.bf16.xpose.msra.mxu0 0
    %659 = vmatprep.subr.bf16.mxu0 0
    %660 = vmatpush1.bf16.xpose.msra.mxu0 0
    %661 = vmatprep.subr.bf16.mxu0 0
    %662 = vmatpush1.bf16.xpose.msra.mxu0 0
    %663 = vmatprep.subr.bf16.mxu0 0
    %664 = vmatpush1.bf16.xpose.msra.mxu0 0
    %665 = vmatprep.subr.bf16.mxu0 0
    %666 = vmatpush1.bf16.xpose.msra.mxu0 0
    %667 = vmatprep.subr.bf16.mxu0 0
    %668 = vmatpush1.bf16.xpose.msra.mxu0 0
    %669 = vmatprep.mubr.bf16.mxu0 0
    %670 = vmatmul.mubr.bf16.gmra.mrb[0].mxu0 %v632
    %v671 = vpop.f32.mrb[0].mxu0
    %v672 = vadd.f32 %v275, %v671
    %v673 = vpop.f32.mrb[0].mxu0
    %v674 = vpop.f32.mrb[0].mxu0
    %v675 = vadd.f32 %v276, %v674
    %v676 = vpop.f32.mrb[0].mxu0
    %677 = vdwg.mxu0
    %v678 = vadd.f32 %v322, %v259
    %v679 = vadd.f32 %v325, %v260
    %v680 = vadd.f32 %v372, %v261
    %v681 = vadd.f32 %v375, %v262
    %v682 = vadd.f32 %v422, %v263
    %v683 = vadd.f32 %v425, %v264
    %v684 = vadd.f32 %v472, %v265
    %v685 = vadd.f32 %v475, %v266
    %v686 = vadd.f32 %v522, %v259
    %v687 = vadd.f32 %v525, %v260
    %v688 = vadd.f32 %v572, %v261
    %v689 = vadd.f32 %v575, %v262
    %v690 = vadd.f32 %v622, %v263
    %v691 = vadd.f32 %v625, %v264
    %v692 = vadd.f32 %v672, %v265
    %v693 = vadd.f32 %v675, %v266
    %vm694 = vcmask 130048
    %v695 = vsel %vm694, %v678, -inf
    %696 = vmax.xlane.f32.xlu0 %v695
    %v697 = vpop.xlane.xlu0 %696
    %v698 = vsel %vm694, %v679, -inf
    %699 = vmax.xlane.f32.xlu0 %v698
    %v700 = vpop.xlane.xlu0 %699
    %v701 = vsel %vm694, %v680, -inf
    %702 = vmax.xlane.f32.xlu0 %v701
    %v703 = vpop.xlane.xlu0 %702
    %v704 = vsel %vm694, %v681, -inf
    %705 = vmax.xlane.f32.xlu0 %v704
    %v706 = vpop.xlane.xlu0 %705
    %v707 = vsel %vm694, %v682, -inf
    %708 = vmax.xlane.f32.xlu0 %v707
    %v709 = vpop.xlane.xlu0 %708
    %v710 = vsel %vm694, %v683, -inf
    %711 = vmax.xlane.f32.xlu0 %v710
    %v712 = vpop.xlane.xlu0 %711
    %v713 = vsel %vm694, %v684, -inf
    %714 = vmax.xlane.f32.xlu0 %v713
    %v715 = vpop.xlane.xlu0 %714
    %v716 = vsel %vm694, %v685, -inf
    %717 = vmax.xlane.f32.xlu0 %v716
    %v718 = vpop.xlane.xlu0 %717
    %v719 = vsel %vm694, %v686, -inf
    %720 = vmax.xlane.f32.xlu0 %v719
    %v721 = vpop.xlane.xlu0 %720
    %v722 = vsel %vm694, %v687, -inf
    %723 = vmax.xlane.f32.xlu0 %v722
    %v724 = vpop.xlane.xlu0 %723
    %v725 = vsel %vm694, %v688, -inf
    %726 = vmax.xlane.f32.xlu0 %v725
    %v727 = vpop.xlane.xlu0 %726
    %v728 = vsel %vm694, %v689, -inf
    %729 = vmax.xlane.f32.xlu0 %v728
    %v730 = vpop.xlane.xlu0 %729
    %v731 = vsel %vm694, %v690, -inf
    %732 = vmax.xlane.f32.xlu0 %v731
    %v733 = vpop.xlane.xlu0 %732
    %v734 = vsel %vm694, %v691, -inf
    %735 = vmax.xlane.f32.xlu0 %v734
    %v736 = vpop.xlane.xlu0 %735
    %v737 = vsel %vm694, %v692, -inf
    %738 = vmax.xlane.f32.xlu0 %v737
    %v739 = vpop.xlane.xlu0 %738
    %v740 = vsel %vm694, %v693, -inf
    %741 = vmax.xlane.f32.xlu0 %v740
    %v742 = vpop.xlane.xlu0 %741
    %v743 = vsub.f32 %v678, %v697
    %v744 = vsub.f32 %v679, %v700
    %v745 = vsub.f32 %v680, %v703
    %v746 = vsub.f32 %v681, %v706
    %v747 = vsub.f32 %v682, %v709
    %v748 = vsub.f32 %v683, %v712
    %v749 = vsub.f32 %v684, %v715
    %v750 = vsub.f32 %v685, %v718
    %v751 = vsub.f32 %v686, %v721
    %v752 = vsub.f32 %v687, %v724
    %v753 = vsub.f32 %v688, %v727
    %v754 = vsub.f32 %v689, %v730
    %v755 = vsub.f32 %v690, %v733
    %v756 = vsub.f32 %v691, %v736
    %v757 = vsub.f32 %v692, %v739
    %v758 = vsub.f32 %v693, %v742
    %v759 = vmul.f32 %v743, 1.442695
    %v760 = vpow.pop %v759
    %v761 = vmul.f32 %v744, 1.442695
    %v762 = vpow.pop %v761
    %v763 = vmul.f32 %v745, 1.442695
    %v764 = vpow.pop %v763
    %v765 = vmul.f32 %v746, 1.442695
    %v766 = vpow.pop %v765
    %v767 = vmul.f32 %v747, 1.442695
    %v768 = vpow.pop %v767
    %v769 = vmul.f32 %v748, 1.442695
    %v770 = vpow.pop %v769
    %v771 = vmul.f32 %v749, 1.442695
    %v772 = vpow.pop %v771
    %v773 = vmul.f32 %v750, 1.442695
    %v774 = vpow.pop %v773
    %v775 = vmul.f32 %v751, 1.442695
    %v776 = vpow.pop %v775
    %v777 = vmul.f32 %v752, 1.442695
    %v778 = vpow.pop %v777
    %v779 = vmul.f32 %v753, 1.442695
    %v780 = vpow.pop %v779
    %v781 = vmul.f32 %v754, 1.442695
    %v782 = vpow.pop %v781
    %v783 = vmul.f32 %v755, 1.442695
    %v784 = vpow.pop %v783
    %v785 = vmul.f32 %v756, 1.442695
    %v786 = vpow.pop %v785
    %v787 = vmul.f32 %v757, 1.442695
    %v788 = vpow.pop %v787
    %v789 = vmul.f32 %v758, 1.442695
    %v790 = vpow.pop %v789
    %v791 = vsel %vm694, %v760, 0.0
    %792 = vadd.xlane.f32.xlu0 %v791
    %v793 = vpop.xlane.xlu0 %792
    %v794 = vsel %vm694, %v762, 0.0
    %795 = vadd.xlane.f32.xlu0 %v794
    %v796 = vpop.xlane.xlu0 %795
    %v797 = vsel %vm694, %v764, 0.0
    %798 = vadd.xlane.f32.xlu0 %v797
    %v799 = vpop.xlane.xlu0 %798
    %v800 = vsel %vm694, %v766, 0.0
    %801 = vadd.xlane.f32.xlu0 %v800
    %v802 = vpop.xlane.xlu0 %801
    %v803 = vsel %vm694, %v768, 0.0
    %804 = vadd.xlane.f32.xlu0 %v803
    %v805 = vpop.xlane.xlu0 %804
    %v806 = vsel %vm694, %v770, 0.0
    %807 = vadd.xlane.f32.xlu0 %v806
    %v808 = vpop.xlane.xlu0 %807
    %v809 = vsel %vm694, %v772, 0.0
    %810 = vadd.xlane.f32.xlu0 %v809
    %v811 = vpop.xlane.xlu0 %810
    %v812 = vsel %vm694, %v774, 0.0
    %813 = vadd.xlane.f32.xlu0 %v812
    %v814 = vpop.xlane.xlu0 %813
    %v815 = vsel %vm694, %v776, 0.0
    %816 = vadd.xlane.f32.xlu0 %v815
    %v817 = vpop.xlane.xlu0 %816
    %v818 = vsel %vm694, %v778, 0.0
    %819 = vadd.xlane.f32.xlu0 %v818
    %v820 = vpop.xlane.xlu0 %819
    %v821 = vsel %vm694, %v780, 0.0
    %822 = vadd.xlane.f32.xlu0 %v821
    %v823 = vpop.xlane.xlu0 %822
    %v824 = vsel %vm694, %v782, 0.0
    %825 = vadd.xlane.f32.xlu0 %v824
    %v826 = vpop.xlane.xlu0 %825
    %v827 = vsel %vm694, %v784, 0.0
    %828 = vadd.xlane.f32.xlu0 %v827
    %v829 = vpop.xlane.xlu0 %828
    %v830 = vsel %vm694, %v786, 0.0
    %831 = vadd.xlane.f32.xlu0 %v830
    %v832 = vpop.xlane.xlu0 %831
    %v833 = vsel %vm694, %v788, 0.0
    %834 = vadd.xlane.f32.xlu0 %v833
    %v835 = vpop.xlane.xlu0 %834
    %v836 = vsel %vm694, %v790, 0.0
    %837 = vadd.xlane.f32.xlu0 %v836
    %v838 = vpop.xlane.xlu0 %837
    %v839 = vrcp.pop %v793
    %v840 = vrcp.pop %v796
    %v841 = vrcp.pop %v799
    %v842 = vrcp.pop %v802
    %v843 = vrcp.pop %v805
    %v844 = vrcp.pop %v808
    %v845 = vrcp.pop %v811
    %v846 = vrcp.pop %v814
    %v847 = vrcp.pop %v817
    %v848 = vrcp.pop %v820
    %v849 = vrcp.pop %v823
    %v850 = vrcp.pop %v826
    %v851 = vrcp.pop %v829
    %v852 = vrcp.pop %v832
    %v853 = vrcp.pop %v835
    %v854 = vrcp.pop %v838
    %v855 = vmul.f32 %v760, %v839
    %v856 = vmul.f32 %v762, %v840
    %v857 = vmul.f32 %v764, %v841
    %v858 = vmul.f32 %v766, %v842
    %v859 = vmul.f32 %v768, %v843
    %v860 = vmul.f32 %v770, %v844
    %v861 = vmul.f32 %v772, %v845
    %v862 = vmul.f32 %v774, %v846
    %v863 = vmul.f32 %v776, %v847
    %v864 = vmul.f32 %v778, %v848
    %v865 = vmul.f32 %v780, %v849
    %v866 = vmul.f32 %v782, %v850
    %v867 = vmul.f32 %v784, %v851
    %v868 = vmul.f32 %v786, %v852
    %v869 = vmul.f32 %v788, %v853
    %v870 = vmul.f32 %v790, %v854
    %v871 = vpack.c.bf16 %v856, %v855
    %v872 = vpack.c.bf16 %v858, %v857
    %v873 = vpack.c.bf16 %v860, %v859
    %v874 = vpack.c.bf16 %v862, %v861
    %v875 = vpack.c.bf16 %v864, %v863
    %v876 = vpack.c.bf16 %v866, %v865
    %v877 = vpack.c.bf16 %v868, %v867
    %v878 = vpack.c.bf16 %v870, %v869
    %879 = vrot.lane.b32.xlu0 %v267, 64
    %v880 = vpop.permute.xlu0 %879
    %v883 = vsel %vm694, %v871, 0
    %885 = vmatprep.subr.bf16.mxu0 0
    %886 = vmatpush1.bf16.msra.mxu0 %v880
    %887 = vmatprep.subr.bf16.mxu0 0
    %888 = vmatpush1.bf16.msra.mxu0 0
    %889 = vmatprep.subr.bf16.mxu0 0
    %890 = vmatpush1.bf16.msra.mxu0 0
    %891 = vmatprep.subr.bf16.mxu0 0
    %892 = vmatpush1.bf16.msra.mxu0 0
    %893 = vmatprep.subr.bf16.mxu0 0
    %894 = vmatpush1.bf16.msra.mxu0 0
    %895 = vmatprep.subr.bf16.mxu0 0
    %896 = vmatpush1.bf16.msra.mxu0 0
    %897 = vmatprep.subr.bf16.mxu0 0
    %898 = vmatpush1.bf16.msra.mxu0 0
    %899 = vmatprep.subr.bf16.mxu0 0
    %900 = vmatpush1.bf16.msra.mxu0 0
    %901 = vmatprep.subr.bf16.mxu0 0
    %902 = vmatpush1.bf16.msra.mxu0 0
    %903 = vmatprep.subr.bf16.mxu0 0
    %904 = vmatpush1.bf16.msra.mxu0 0
    %905 = vmatprep.subr.bf16.mxu0 0
    %906 = vmatpush1.bf16.msra.mxu0 0
    %907 = vmatprep.subr.bf16.mxu0 0
    %908 = vmatpush1.bf16.msra.mxu0 0
    %909 = vmatprep.subr.bf16.mxu0 0
    %910 = vmatpush1.bf16.msra.mxu0 0
    %911 = vmatprep.subr.bf16.mxu0 0
    %912 = vmatpush1.bf16.msra.mxu0 0
    %913 = vmatprep.subr.bf16.mxu0 0
    %914 = vmatpush1.bf16.msra.mxu0 0
    %915 = vmatprep.subr.bf16.mxu0 0
    %916 = vmatpush1.bf16.msra.mxu0 0
    %917 = vmatprep.mubr.bf16.mxu0 0
    %918 = vmatmul.mubr.bf16.gmra.mrb[0].mxu0 %v883
    %v919 = vpop.f32.mrb[0].mxu0
    %v920 = vadd.f32 0.0, %v919
    %v921 = vpop.f32.mrb[0].mxu0
    %v922 = vpop.f32.mrb[0].mxu0
    %v923 = vadd.f32 0.0, %v922
    %v924 = vpop.f32.mrb[0].mxu0
    %925 = vdwg.mxu0
    %926 = vrot.lane.b32.xlu0 %v268, 64
    %v927 = vpop.permute.xlu0 %926
    %v930 = vsel %vm694, %v872, 0
    %932 = vmatprep.subr.bf16.mxu0 0
    %933 = vmatpush1.bf16.msra.mxu0 %v927
    %934 = vmatprep.subr.bf16.mxu0 0
    %935 = vmatpush1.bf16.msra.mxu0 0
    %936 = vmatprep.subr.bf16.mxu0 0
    %937 = vmatpush1.bf16.msra.mxu0 0
    %938 = vmatprep.subr.bf16.mxu0 0
    %939 = vmatpush1.bf16.msra.mxu0 0
    %940 = vmatprep.subr.bf16.mxu0 0
    %941 = vmatpush1.bf16.msra.mxu0 0
    %942 = vmatprep.subr.bf16.mxu0 0
    %943 = vmatpush1.bf16.msra.mxu0 0
    %944 = vmatprep.subr.bf16.mxu0 0
    %945 = vmatpush1.bf16.msra.mxu0 0
    %946 = vmatprep.subr.bf16.mxu0 0
    %947 = vmatpush1.bf16.msra.mxu0 0
    %948 = vmatprep.subr.bf16.mxu0 0
    %949 = vmatpush1.bf16.msra.mxu0 0
    %950 = vmatprep.subr.bf16.mxu0 0
    %951 = vmatpush1.bf16.msra.mxu0 0
    %952 = vmatprep.subr.bf16.mxu0 0
    %953 = vmatpush1.bf16.msra.mxu0 0
    %954 = vmatprep.subr.bf16.mxu0 0
    %955 = vmatpush1.bf16.msra.mxu0 0
    %956 = vmatprep.subr.bf16.mxu0 0
    %957 = vmatpush1.bf16.msra.mxu0 0
    %958 = vmatprep.subr.bf16.mxu0 0
    %959 = vmatpush1.bf16.msra.mxu0 0
    %960 = vmatprep.subr.bf16.mxu0 0
    %961 = vmatpush1.bf16.msra.mxu0 0
    %962 = vmatprep.subr.bf16.mxu0 0
    %963 = vmatpush1.bf16.msra.mxu0 0
    %964 = vmatprep.mubr.bf16.mxu0 0
    %965 = vmatmul.mubr.bf16.gmra.mrb[0].mxu0 %v930
    %v966 = vpop.f32.mrb[0].mxu0
    %v967 = vadd.f32 0.0, %v966
    %v968 = vpop.f32.mrb[0].mxu0
    %v969 = vpop.f32.mrb[0].mxu0
    %v970 = vadd.f32 0.0, %v969
    %v971 = vpop.f32.mrb[0].mxu0
    %972 = vdwg.mxu0
    %973 = vrot.lane.b32.xlu0 %v269, 64
    %v974 = vpop.permute.xlu0 %973
    %v977 = vsel %vm694, %v873, 0
    %979 = vmatprep.subr.bf16.mxu0 0
    %980 = vmatpush1.bf16.msra.mxu0 %v974
    %981 = vmatprep.subr.bf16.mxu0 0
    %982 = vmatpush1.bf16.msra.mxu0 0
    %983 = vmatprep.subr.bf16.mxu0 0
    %984 = vmatpush1.bf16.msra.mxu0 0
    %985 = vmatprep.subr.bf16.mxu0 0
    %986 = vmatpush1.bf16.msra.mxu0 0
    %987 = vmatprep.subr.bf16.mxu0 0
    %988 = vmatpush1.bf16.msra.mxu0 0
    %989 = vmatprep.subr.bf16.mxu0 0
    %990 = vmatpush1.bf16.msra.mxu0 0
    %991 = vmatprep.subr.bf16.mxu0 0
    %992 = vmatpush1.bf16.msra.mxu0 0
    %993 = vmatprep.subr.bf16.mxu0 0
    %994 = vmatpush1.bf16.msra.mxu0 0
    %995 = vmatprep.subr.bf16.mxu0 0
    %996 = vmatpush1.bf16.msra.mxu0 0
    %997 = vmatprep.subr.bf16.mxu0 0
    %998 = vmatpush1.bf16.msra.mxu0 0
    %999 = vmatprep.subr.bf16.mxu0 0
    %1000 = vmatpush1.bf16.msra.mxu0 0
    %1001 = vmatprep.subr.bf16.mxu0 0
    %1002 = vmatpush1.bf16.msra.mxu0 0
    %1003 = vmatprep.subr.bf16.mxu0 0
    %1004 = vmatpush1.bf16.msra.mxu0 0
    %1005 = vmatprep.subr.bf16.mxu0 0
    %1006 = vmatpush1.bf16.msra.mxu0 0
    %1007 = vmatprep.subr.bf16.mxu0 0
    %1008 = vmatpush1.bf16.msra.mxu0 0
    %1009 = vmatprep.subr.bf16.mxu0 0
    %1010 = vmatpush1.bf16.msra.mxu0 0
    %1011 = vmatprep.mubr.bf16.mxu0 0
    %1012 = vmatmul.mubr.bf16.gmra.mrb[0].mxu0 %v977
    %v1013 = vpop.f32.mrb[0].mxu0
    %v1014 = vadd.f32 0.0, %v1013
    %v1015 = vpop.f32.mrb[0].mxu0
    %v1016 = vpop.f32.mrb[0].mxu0
    %v1017 = vadd.f32 0.0, %v1016
    %v1018 = vpop.f32.mrb[0].mxu0
    %1019 = vdwg.mxu0
    %1020 = vrot.lane.b32.xlu0 %v270, 64
    %v1021 = vpop.permute.xlu0 %1020
    %v1024 = vsel %vm694, %v874, 0
    %1026 = vmatprep.subr.bf16.mxu0 0
    %1027 = vmatpush1.bf16.msra.mxu0 %v1021
    %1028 = vmatprep.subr.bf16.mxu0 0
    %1029 = vmatpush1.bf16.msra.mxu0 0
    %1030 = vmatprep.subr.bf16.mxu0 0
    %1031 = vmatpush1.bf16.msra.mxu0 0
    %1032 = vmatprep.subr.bf16.mxu0 0
    %1033 = vmatpush1.bf16.msra.mxu0 0
    %1034 = vmatprep.subr.bf16.mxu0 0
    %1035 = vmatpush1.bf16.msra.mxu0 0
    %1036 = vmatprep.subr.bf16.mxu0 0
    %1037 = vmatpush1.bf16.msra.mxu0 0
    %1038 = vmatprep.subr.bf16.mxu0 0
    %1039 = vmatpush1.bf16.msra.mxu0 0
    %1040 = vmatprep.subr.bf16.mxu0 0
    %1041 = vmatpush1.bf16.msra.mxu0 0
    %1042 = vmatprep.subr.bf16.mxu0 0
    %1043 = vmatpush1.bf16.msra.mxu0 0
    %1044 = vmatprep.subr.bf16.mxu0 0
    %1045 = vmatpush1.bf16.msra.mxu0 0
    %1046 = vmatprep.subr.bf16.mxu0 0
    %1047 = vmatpush1.bf16.msra.mxu0 0
    %1048 = vmatprep.subr.bf16.mxu0 0
    %1049 = vmatpush1.bf16.msra.mxu0 0
    %1050 = vmatprep.subr.bf16.mxu0 0
    %1051 = vmatpush1.bf16.msra.mxu0 0
    %1052 = vmatprep.subr.bf16.mxu0 0
    %1053 = vmatpush1.bf16.msra.mxu0 0
    %1054 = vmatprep.subr.bf16.mxu0 0
    %1055 = vmatpush1.bf16.msra.mxu0 0
    %1056 = vmatprep.subr.bf16.mxu0 0
    %1057 = vmatpush1.bf16.msra.mxu0 0
    %1058 = vmatprep.mubr.bf16.mxu0 0
    %1059 = vmatmul.mubr.bf16.gmra.mrb[0].mxu0 %v1024
    %v1060 = vpop.f32.mrb[0].mxu0
    %v1061 = vadd.f32 0.0, %v1060
    %v1062 = vpop.f32.mrb[0].mxu0
    %v1063 = vpop.f32.mrb[0].mxu0
    %v1064 = vadd.f32 0.0, %v1063
    %v1065 = vpop.f32.mrb[0].mxu0
    %1066 = vdwg.mxu0
    %1067 = vrot.lane.b32.xlu0 %v271, 64
    %v1068 = vpop.permute.xlu0 %1067
    %v1071 = vsel %vm694, %v875, 0
    %1073 = vmatprep.subr.bf16.mxu0 0
    %1074 = vmatpush1.bf16.msra.mxu0 %v1068
    %1075 = vmatprep.subr.bf16.mxu0 0
    %1076 = vmatpush1.bf16.msra.mxu0 0
    %1077 = vmatprep.subr.bf16.mxu0 0
    %1078 = vmatpush1.bf16.msra.mxu0 0
    %1079 = vmatprep.subr.bf16.mxu0 0
    %1080 = vmatpush1.bf16.msra.mxu0 0
    %1081 = vmatprep.subr.bf16.mxu0 0
    %1082 = vmatpush1.bf16.msra.mxu0 0
    %1083 = vmatprep.subr.bf16.mxu0 0
    %1084 = vmatpush1.bf16.msra.mxu0 0
    %1085 = vmatprep.subr.bf16.mxu0 0
    %1086 = vmatpush1.bf16.msra.mxu0 0
    %1087 = vmatprep.subr.bf16.mxu0 0
    %1088 = vmatpush1.bf16.msra.mxu0 0
    %1089 = vmatprep.subr.bf16.mxu0 0
    %1090 = vmatpush1.bf16.msra.mxu0 0
    %1091 = vmatprep.subr.bf16.mxu0 0
    %1092 = vmatpush1.bf16.msra.mxu0 0
    %1093 = vmatprep.subr.bf16.mxu0 0
    %1094 = vmatpush1.bf16.msra.mxu0 0
    %1095 = vmatprep.subr.bf16.mxu0 0
    %1096 = vmatpush1.bf16.msra.mxu0 0
    %1097 = vmatprep.subr.bf16.mxu0 0
    %1098 = vmatpush1.bf16.msra.mxu0 0
    %1099 = vmatprep.subr.bf16.mxu0 0
    %1100 = vmatpush1.bf16.msra.mxu0 0
    %1101 = vmatprep.subr.bf16.mxu0 0
    %1102 = vmatpush1.bf16.msra.mxu0 0
    %1103 = vmatprep.subr.bf16.mxu0 0
    %1104 = vmatpush1.bf16.msra.mxu0 0
    %1105 = vmatprep.mubr.bf16.mxu0 0
    %1106 = vmatmul.mubr.bf16.gmra.mrb[0].mxu0 %v1071
    %v1107 = vpop.f32.mrb[0].mxu0
    %v1108 = vadd.f32 0.0, %v1107
    %v1109 = vpop.f32.mrb[0].mxu0
    %v1110 = vpop.f32.mrb[0].mxu0
    %v1111 = vadd.f32 0.0, %v1110
    %v1112 = vpop.f32.mrb[0].mxu0
    %1113 = vdwg.mxu0
    %1114 = vrot.lane.b32.xlu0 %v272, 64
    %v1115 = vpop.permute.xlu0 %1114
    %v1118 = vsel %vm694, %v876, 0
    %1120 = vmatprep.subr.bf16.mxu0 0
    %1121 = vmatpush1.bf16.msra.mxu0 %v1115
    %1122 = vmatprep.subr.bf16.mxu0 0
    %1123 = vmatpush1.bf16.msra.mxu0 0
    %1124 = vmatprep.subr.bf16.mxu0 0
    %1125 = vmatpush1.bf16.msra.mxu0 0
    %1126 = vmatprep.subr.bf16.mxu0 0
    %1127 = vmatpush1.bf16.msra.mxu0 0
    %1128 = vmatprep.subr.bf16.mxu0 0
    %1129 = vmatpush1.bf16.msra.mxu0 0
    %1130 = vmatprep.subr.bf16.mxu0 0
    %1131 = vmatpush1.bf16.msra.mxu0 0
    %1132 = vmatprep.subr.bf16.mxu0 0
    %1133 = vmatpush1.bf16.msra.mxu0 0
    %1134 = vmatprep.subr.bf16.mxu0 0
    %1135 = vmatpush1.bf16.msra.mxu0 0
    %1136 = vmatprep.subr.bf16.mxu0 0
    %1137 = vmatpush1.bf16.msra.mxu0 0
    %1138 = vmatprep.subr.bf16.mxu0 0
    %1139 = vmatpush1.bf16.msra.mxu0 0
    %1140 = vmatprep.subr.bf16.mxu0 0
    %1141 = vmatpush1.bf16.msra.mxu0 0
    %1142 = vmatprep.subr.bf16.mxu0 0
    %1143 = vmatpush1.bf16.msra.mxu0 0
    %1144 = vmatprep.subr.bf16.mxu0 0
    %1145 = vmatpush1.bf16.msra.mxu0 0
    %1146 = vmatprep.subr.bf16.mxu0 0
    %1147 = vmatpush1.bf16.msra.mxu0 0
    %1148 = vmatprep.subr.bf16.mxu0 0
    %1149 = vmatpush1.bf16.msra.mxu0 0
    %1150 = vmatprep.subr.bf16.mxu0 0
    %1151 = vmatpush1.bf16.msra.mxu0 0
    %1152 = vmatprep.mubr.bf16.mxu0 0
    %1153 = vmatmul.mubr.bf16.gmra.mrb[0].mxu0 %v1118
    %v1154 = vpop.f32.mrb[0].mxu0
    %v1155 = vadd.f32 0.0, %v1154
    %v1156 = vpop.f32.mrb[0].mxu0
    %v1157 = vpop.f32.mrb[0].mxu0
    %v1158 = vadd.f32 0.0, %v1157
    %v1159 = vpop.f32.mrb[0].mxu0
    %1160 = vdwg.mxu0
    %1161 = vrot.lane.b32.xlu0 %v273, 64
    %v1162 = vpop.permute.xlu0 %1161
    %v1165 = vsel %vm694, %v877, 0
    %1167 = vmatprep.subr.bf16.mxu0 0
    %1168 = vmatpush1.bf16.msra.mxu0 %v1162
    %1169 = vmatprep.subr.bf16.mxu0 0
    %1170 = vmatpush1.bf16.msra.mxu0 0
    %1171 = vmatprep.subr.bf16.mxu0 0
    %1172 = vmatpush1.bf16.msra.mxu0 0
    %1173 = vmatprep.subr.bf16.mxu0 0
    %1174 = vmatpush1.bf16.msra.mxu0 0
    %1175 = vmatprep.subr.bf16.mxu0 0
    %1176 = vmatpush1.bf16.msra.mxu0 0
    %1177 = vmatprep.subr.bf16.mxu0 0
    %1178 = vmatpush1.bf16.msra.mxu0 0
    %1179 = vmatprep.subr.bf16.mxu0 0
    %1180 = vmatpush1.bf16.msra.mxu0 0
    %1181 = vmatprep.subr.bf16.mxu0 0
    %1182 = vmatpush1.bf16.msra.mxu0 0
    %1183 = vmatprep.subr.bf16.mxu0 0
    %1184 = vmatpush1.bf16.msra.mxu0 0
    %1185 = vmatprep.subr.bf16.mxu0 0
    %1186 = vmatpush1.bf16.msra.mxu0 0
    %1187 = vmatprep.subr.bf16.mxu0 0
    %1188 = vmatpush1.bf16.msra.mxu0 0
    %1189 = vmatprep.subr.bf16.mxu0 0
    %1190 = vmatpush1.bf16.msra.mxu0 0
    %1191 = vmatprep.subr.bf16.mxu0 0
    %1192 = vmatpush1.bf16.msra.mxu0 0
    %1193 = vmatprep.subr.bf16.mxu0 0
    %1194 = vmatpush1.bf16.msra.mxu0 0
    %1195 = vmatprep.subr.bf16.mxu0 0
    %1196 = vmatpush1.bf16.msra.mxu0 0
    %1197 = vmatprep.subr.bf16.mxu0 0
    %1198 = vmatpush1.bf16.msra.mxu0 0
    %1199 = vmatprep.mubr.bf16.mxu0 0
    %1200 = vmatmul.mubr.bf16.gmra.mrb[0].mxu0 %v1165
    %v1201 = vpop.f32.mrb[0].mxu0
    %v1202 = vadd.f32 0.0, %v1201
    %v1203 = vpop.f32.mrb[0].mxu0
    %v1204 = vpop.f32.mrb[0].mxu0
    %v1205 = vadd.f32 0.0, %v1204
    %v1206 = vpop.f32.mrb[0].mxu0
    %1207 = vdwg.mxu0
    %1208 = vrot.lane.b32.xlu0 %v274, 64
    %v1209 = vpop.permute.xlu0 %1208
    %v1212 = vsel %vm694, %v878, 0
    %1214 = vmatprep.subr.bf16.mxu0 0
    %1215 = vmatpush1.bf16.msra.mxu0 %v1209
    %1216 = vmatprep.subr.bf16.mxu0 0
    %1217 = vmatpush1.bf16.msra.mxu0 0
    %1218 = vmatprep.subr.bf16.mxu0 0
    %1219 = vmatpush1.bf16.msra.mxu0 0
    %1220 = vmatprep.subr.bf16.mxu0 0
    %1221 = vmatpush1.bf16.msra.mxu0 0
    %1222 = vmatprep.subr.bf16.mxu0 0
    %1223 = vmatpush1.bf16.msra.mxu0 0
    %1224 = vmatprep.subr.bf16.mxu0 0
    %1225 = vmatpush1.bf16.msra.mxu0 0
    %1226 = vmatprep.subr.bf16.mxu0 0
    %1227 = vmatpush1.bf16.msra.mxu0 0
    %1228 = vmatprep.subr.bf16.mxu0 0
    %1229 = vmatpush1.bf16.msra.mxu0 0
    %1230 = vmatprep.subr.bf16.mxu0 0
    %1231 = vmatpush1.bf16.msra.mxu0 0
    %1232 = vmatprep.subr.bf16.mxu0 0
    %1233 = vmatpush1.bf16.msra.mxu0 0
    %1234 = vmatprep.subr.bf16.mxu0 0
    %1235 = vmatpush1.bf16.msra.mxu0 0
    %1236 = vmatprep.subr.bf16.mxu0 0
    %1237 = vmatpush1.bf16.msra.mxu0 0
    %1238 = vmatprep.subr.bf16.mxu0 0
    %1239 = vmatpush1.bf16.msra.mxu0 0
    %1240 = vmatprep.subr.bf16.mxu0 0
    %1241 = vmatpush1.bf16.msra.mxu0 0
    %1242 = vmatprep.subr.bf16.mxu0 0
    %1243 = vmatpush1.bf16.msra.mxu0 0
    %1244 = vmatprep.subr.bf16.mxu0 0
    %1245 = vmatpush1.bf16.msra.mxu0 0
    %1246 = vmatprep.mubr.bf16.mxu0 0
    %1247 = vmatmul.mubr.bf16.gmra.mrb[0].mxu0 %v1212
    %v1248 = vpop.f32.mrb[0].mxu0
    %v1249 = vadd.f32 0.0, %v1248
    %v1250 = vpop.f32.mrb[0].mxu0
    %v1251 = vpop.f32.mrb[0].mxu0
    %v1252 = vadd.f32 0.0, %v1251
    %v1253 = vpop.f32.mrb[0].mxu0
    %1254 = vdwg.mxu0
    %v1255 = vld [vmem:[#allocation2] sm:$0xff]
    %v1256 = vld [vmem:[#allocation2 + $0x8] sm:$0xff]
    %v1257 = vld [vmem:[#allocation2 + $0x10] sm:$0xff]
    %v1258 = vld [vmem:[#allocation2 + $0x18] sm:$0xff]
    %v1259 = vld [vmem:[#allocation2 + $0x20] sm:$0xff]
    %v1260 = vld [vmem:[#allocation2 + $0x28] sm:$0xff]
    %v1261 = vld [vmem:[#allocation2 + $0x30] sm:$0xff]
    %v1262 = vld [vmem:[#allocation2 + $0x38] sm:$0xff]
    %s1263 = scalar_lea.vmem %s3, 16
    %v1264 = vld [vmem:[%s1263] sm:$0xff]
    %v1265 = vld [vmem:[%s1263 + $0x8] sm:$0xff]
    %1267 = vrot.lane.b32.xlu0 %v1255, 120
    %v1268 = vpop.permute.xlu0 %1267
    %1269 = vrot.lane.b32.xlu0 %v1255, 88
    %v1270 = vpop.permute.xlu0 %1269
    %v1272 = vsel %vm280, %v1268, 0
    %v1275 = vsel %vm280, %v1270, 0
    %1277 = vmatprep.subr.bf16.mxu0 0
    %1278 = vmatpush1.bf16.xpose.msra.mxu0 %v1275
    %1279 = vmatprep.subr.bf16.mxu0 0
    %1280 = vmatpush1.bf16.xpose.msra.mxu0 0
    %1281 = vmatprep.subr.bf16.mxu0 0
    %1282 = vmatpush1.bf16.xpose.msra.mxu0 0
    %1283 = vmatprep.subr.bf16.mxu0 0
    %1284 = vmatpush1.bf16.xpose.msra.mxu0 0
    %1285 = vmatprep.subr.bf16.mxu0 0
    %1286 = vmatpush1.bf16.xpose.msra.mxu0 0
    %1287 = vmatprep.subr.bf16.mxu0 0
    %1288 = vmatpush1.bf16.xpose.msra.mxu0 0
    %1289 = vmatprep.subr.bf16.mxu0 0
    %1290 = vmatpush1.bf16.xpose.msra.mxu0 0
    %1291 = vmatprep.subr.bf16.mxu0 0
    %1292 = vmatpush1.bf16.xpose.msra.mxu0 0
    %1293 = vmatprep.subr.bf16.mxu0 0
    %1294 = vmatpush1.bf16.xpose.msra.mxu0 0
    %1295 = vmatprep.subr.bf16.mxu0 0
    %1296 = vmatpush1.bf16.xpose.msra.mxu0 0
    %1297 = vmatprep.subr.bf16.mxu0 0
    %1298 = vmatpush1.bf16.xpose.msra.mxu0 0
    %1299 = vmatprep.subr.bf16.mxu0 0
    %1300 = vmatpush1.bf16.xpose.msra.mxu0 0
    %1301 = vmatprep.subr.bf16.mxu0 0
    %1302 = vmatpush1.bf16.xpose.msra.mxu0 0
    %1303 = vmatprep.subr.bf16.mxu0 0
    %1304 = vmatpush1.bf16.xpose.msra.mxu0 0
    %1305 = vmatprep.subr.bf16.mxu0 0
    %1306 = vmatpush1.bf16.xpose.msra.mxu0 0
    %1307 = vmatprep.subr.bf16.mxu0 0
    %1308 = vmatpush1.bf16.xpose.msra.mxu0 0
    %1309 = vmatprep.mubr.bf16.mxu0 0
    %1310 = vmatmul.mubr.bf16.gmra.mrb[0].mxu0 %v1272
    %v1311 = vpop.f32.mrb[0].mxu0
    %v1312 = vadd.f32 %v1264, %v1311
    %v1313 = vpop.f32.mrb[0].mxu0
    %v1314 = vpop.f32.mrb[0].mxu0
    %v1315 = vadd.f32 %v1265, %v1314
    %v1316 = vpop.f32.mrb[0].mxu0
    %1317 = vdwg.mxu0
    %1319 = vrot.lane.b32.xlu0 %v1256, 120
    %v1320 = vpop.permute.xlu0 %1319
    %1321 = vrot.lane.b32.xlu0 %v1256, 88
    %v1322 = vpop.permute.xlu0 %1321
    %v1324 = vsel %vm280, %v1320, 0
    %v1327 = vsel %vm280, %v1322, 0
    %1329 = vmatprep.subr.bf16.mxu0 0
    %1330 = vmatpush1.bf16.xpose.msra.mxu0 %v1327
    %1331 = vmatprep.subr.bf16.mxu0 0
    %1332 = vmatpush1.bf16.xpose.msra.mxu0 0
    %1333 = vmatprep.subr.bf16.mxu0 0
    %1334 = vmatpush1.bf16.xpose.msra.mxu0 0
    %1335 = vmatprep.subr.bf16.mxu0 0
    %1336 = vmatpush1.bf16.xpose.msra.mxu0 0
    %1337 = vmatprep.subr.bf16.mxu0 0
    %1338 = vmatpush1.bf16.xpose.msra.mxu0 0
    %1339 = vmatprep.subr.bf16.mxu0 0
    %1340 = vmatpush1.bf16.xpose.msra.mxu0 0
    %1341 = vmatprep.subr.bf16.mxu0 0
    %1342 = vmatpush1.bf16.xpose.msra.mxu0 0
    %1343 = vmatprep.subr.bf16.mxu0 0
    %1344 = vmatpush1.bf16.xpose.msra.mxu0 0
    %1345 = vmatprep.subr.bf16.mxu0 0
    %1346 = vmatpush1.bf16.xpose.msra.mxu0 0
    %1347 = vmatprep.subr.bf16.mxu0 0
    %1348 = vmatpush1.bf16.xpose.msra.mxu0 0
    %1349 = vmatprep.subr.bf16.mxu0 0
    %1350 = vmatpush1.bf16.xpose.msra.mxu0 0
    %1351 = vmatprep.subr.bf16.mxu0 0
    %1352 = vmatpush1.bf16.xpose.msra.mxu0 0
    %1353 = vmatprep.subr.bf16.mxu0 0
    %1354 = vmatpush1.bf16.xpose.msra.mxu0 0
    %1355 = vmatprep.subr.bf16.mxu0 0
    %1356 = vmatpush1.bf16.xpose.msra.mxu0 0
    %1357 = vmatprep.subr.bf16.mxu0 0
    %1358 = vmatpush1.bf16.xpose.msra.mxu0 0
    %1359 = vmatprep.subr.bf16.mxu0 0
    %1360 = vmatpush1.bf16.xpose.msra.mxu0 0
    %1361 = vmatprep.mubr.bf16.mxu0 0
    %1362 = vmatmul.mubr.bf16.gmra.mrb[0].mxu0 %v1324
    %v1363 = vpop.f32.mrb[0].mxu0
    %v1364 = vadd.f32 %v1264, %v1363
    %v1365 = vpop.f32.mrb[0].mxu0
    %v1366 = vpop.f32.mrb[0].mxu0
    %v1367 = vadd.f32 %v1265, %v1366
    %v1368 = vpop.f32.mrb[0].mxu0
    %1369 = vdwg.mxu0
    %1371 = vrot.lane.b32.xlu0 %v1257, 120
    %v1372 = vpop.permute.xlu0 %1371
    %1373 = vrot.lane.b32.xlu0 %v1257, 88
    %v1374 = vpop.permute.xlu0 %1373
    %v1376 = vsel %vm280, %v1372, 0
    %v1379 = vsel %vm280, %v1374, 0
    %1381 = vmatprep.subr.bf16.mxu0 0
    %1382 = vmatpush1.bf16.xpose.msra.mxu0 %v1379
    %1383 = vmatprep.subr.bf16.mxu0 0
    %1384 = vmatpush1.bf16.xpose.msra.mxu0 0
    %1385 = vmatprep.subr.bf16.mxu0 0
    %1386 = vmatpush1.bf16.xpose.msra.mxu0 0
    %1387 = vmatprep.subr.bf16.mxu0 0
    %1388 = vmatpush1.bf16.xpose.msra.mxu0 0
    %1389 = vmatprep.subr.bf16.mxu0 0
    %1390 = vmatpush1.bf16.xpose.msra.mxu0 0
    %1391 = vmatprep.subr.bf16.mxu0 0
    %1392 = vmatpush1.bf16.xpose.msra.mxu0 0
    %1393 = vmatprep.subr.bf16.mxu0 0
    %1394 = vmatpush1.bf16.xpose.msra.mxu0 0
    %1395 = vmatprep.subr.bf16.mxu0 0
    %1396 = vmatpush1.bf16.xpose.msra.mxu0 0
    %1397 = vmatprep.subr.bf16.mxu0 0
    %1398 = vmatpush1.bf16.xpose.msra.mxu0 0
    %1399 = vmatprep.subr.bf16.mxu0 0
    %1400 = vmatpush1.bf16.xpose.msra.mxu0 0
    %1401 = vmatprep.subr.bf16.mxu0 0
    %1402 = vmatpush1.bf16.xpose.msra.mxu0 0
    %1403 = vmatprep.subr.bf16.mxu0 0
    %1404 = vmatpush1.bf16.xpose.msra.mxu0 0
    %1405 = vmatprep.subr.bf16.mxu0 0
    %1406 = vmatpush1.bf16.xpose.msra.mxu0 0
    %1407 = vmatprep.subr.bf16.mxu0 0
    %1408 = vmatpush1.bf16.xpose.msra.mxu0 0
    %1409 = vmatprep.subr.bf16.mxu0 0
    %1410 = vmatpush1.bf16.xpose.msra.mxu0 0
    %1411 = vmatprep.subr.bf16.mxu0 0
    %1412 = vmatpush1.bf16.xpose.msra.mxu0 0
    %1413 = vmatprep.mubr.bf16.mxu0 0
    %1414 = vmatmul.mubr.bf16.gmra.mrb[0].mxu0 %v1376
    %v1415 = vpop.f32.mrb[0].mxu0
    %v1416 = vadd.f32 %v1264, %v1415
    %v1417 = vpop.f32.mrb[0].mxu0
    %v1418 = vpop.f32.mrb[0].mxu0
    %v1419 = vadd.f32 %v1265, %v1418
    %v1420 = vpop.f32.mrb[0].mxu0
    %1421 = vdwg.mxu0
    %1423 = vrot.lane.b32.xlu0 %v1258, 120
    %v1424 = vpop.permute.xlu0 %1423
    %1425 = vrot.lane.b32.xlu0 %v1258, 88
    %v1426 = vpop.permute.xlu0 %1425
    %v1428 = vsel %vm280, %v1424, 0
    %v1431 = vsel %vm280, %v1426, 0
    %1433 = vmatprep.subr.bf16.mxu0 0
    %1434 = vmatpush1.bf16.xpose.msra.mxu0 %v1431
    %1435 = vmatprep.subr.bf16.mxu0 0
    %1436 = vmatpush1.bf16.xpose.msra.mxu0 0
    %1437 = vmatprep.subr.bf16.mxu0 0
    %1438 = vmatpush1.bf16.xpose.msra.mxu0 0
    %1439 = vmatprep.subr.bf16.mxu0 0
    %1440 = vmatpush1.bf16.xpose.msra.mxu0 0
    %1441 = vmatprep.subr.bf16.mxu0 0
    %1442 = vmatpush1.bf16.xpose.msra.mxu0 0
    %1443 = vmatprep.subr.bf16.mxu0 0
    %1444 = vmatpush1.bf16.xpose.msra.mxu0 0
    %1445 = vmatprep.subr.bf16.mxu0 0
    %1446 = vmatpush1.bf16.xpose.msra.mxu0 0
    %1447 = vmatprep.subr.bf16.mxu0 0
    %1448 = vmatpush1.bf16.xpose.msra.mxu0 0
    %1449 = vmatprep.subr.bf16.mxu0 0
    %1450 = vmatpush1.bf16.xpose.msra.mxu0 0
    %1451 = vmatprep.subr.bf16.mxu0 0
    %1452 = vmatpush1.bf16.xpose.msra.mxu0 0
    %1453 = vmatprep.subr.bf16.mxu0 0
    %1454 = vmatpush1.bf16.xpose.msra.mxu0 0
    %1455 = vmatprep.subr.bf16.mxu0 0
    %1456 = vmatpush1.bf16.xpose.msra.mxu0 0
    %1457 = vmatprep.subr.bf16.mxu0 0
    %1458 = vmatpush1.bf16.xpose.msra.mxu0 0
    %1459 = vmatprep.subr.bf16.mxu0 0
    %1460 = vmatpush1.bf16.xpose.msra.mxu0 0
    %1461 = vmatprep.subr.bf16.mxu0 0
    %1462 = vmatpush1.bf16.xpose.msra.mxu0 0
    %1463 = vmatprep.subr.bf16.mxu0 0
    %1464 = vmatpush1.bf16.xpose.msra.mxu0 0
    %1465 = vmatprep.mubr.bf16.mxu0 0
    %1466 = vmatmul.mubr.bf16.gmra.mrb[0].mxu0 %v1428
    %v1467 = vpop.f32.mrb[0].mxu0
    %v1468 = vadd.f32 %v1264, %v1467
    %v1469 = vpop.f32.mrb[0].mxu0
    %v1470 = vpop.f32.mrb[0].mxu0
    %v1471 = vadd.f32 %v1265, %v1470
    %v1472 = vpop.f32.mrb[0].mxu0
    %1473 = vdwg.mxu0
    %1475 = vrot.lane.b32.xlu0 %v1259, 120
    %v1476 = vpop.permute.xlu0 %1475
    %1477 = vrot.lane.b32.xlu0 %v1259, 88
    %v1478 = vpop.permute.xlu0 %1477
    %v1480 = vsel %vm280, %v1476, 0
    %v1483 = vsel %vm280, %v1478, 0
    %1485 = vmatprep.subr.bf16.mxu0 0
    %1486 = vmatpush1.bf16.xpose.msra.mxu0 %v1483
    %1487 = vmatprep.subr.bf16.mxu0 0
    %1488 = vmatpush1.bf16.xpose.msra.mxu0 0
    %1489 = vmatprep.subr.bf16.mxu0 0
    %1490 = vmatpush1.bf16.xpose.msra.mxu0 0
    %1491 = vmatprep.subr.bf16.mxu0 0
    %1492 = vmatpush1.bf16.xpose.msra.mxu0 0
    %1493 = vmatprep.subr.bf16.mxu0 0
    %1494 = vmatpush1.bf16.xpose.msra.mxu0 0
    %1495 = vmatprep.subr.bf16.mxu0 0
    %1496 = vmatpush1.bf16.xpose.msra.mxu0 0
    %1497 = vmatprep.subr.bf16.mxu0 0
    %1498 = vmatpush1.bf16.xpose.msra.mxu0 0
    %1499 = vmatprep.subr.bf16.mxu0 0
    %1500 = vmatpush1.bf16.xpose.msra.mxu0 0
    %1501 = vmatprep.subr.bf16.mxu0 0
    %1502 = vmatpush1.bf16.xpose.msra.mxu0 0
    %1503 = vmatprep.subr.bf16.mxu0 0
    %1504 = vmatpush1.bf16.xpose.msra.mxu0 0
    %1505 = vmatprep.subr.bf16.mxu0 0
    %1506 = vmatpush1.bf16.xpose.msra.mxu0 0
    %1507 = vmatprep.subr.bf16.mxu0 0
    %1508 = vmatpush1.bf16.xpose.msra.mxu0 0
    %1509 = vmatprep.subr.bf16.mxu0 0
    %1510 = vmatpush1.bf16.xpose.msra.mxu0 0
    %1511 = vmatprep.subr.bf16.mxu0 0
    %1512 = vmatpush1.bf16.xpose.msra.mxu0 0
    %1513 = vmatprep.subr.bf16.mxu0 0
    %1514 = vmatpush1.bf16.xpose.msra.mxu0 0
    %1515 = vmatprep.subr.bf16.mxu0 0
    %1516 = vmatpush1.bf16.xpose.msra.mxu0 0
    %1517 = vmatprep.mubr.bf16.mxu0 0
    %1518 = vmatmul.mubr.bf16.gmra.mrb[0].mxu0 %v1480
    %v1519 = vpop.f32.mrb[0].mxu0
    %v1520 = vadd.f32 %v1264, %v1519
    %v1521 = vpop.f32.mrb[0].mxu0
    %v1522 = vpop.f32.mrb[0].mxu0
    %v1523 = vadd.f32 %v1265, %v1522
    %v1524 = vpop.f32.mrb[0].mxu0
    %1525 = vdwg.mxu0
    %1527 = vrot.lane.b32.xlu0 %v1260, 120
    %v1528 = vpop.permute.xlu0 %1527
    %1529 = vrot.lane.b32.xlu0 %v1260, 88
    %v1530 = vpop.permute.xlu0 %1529
    %v1532 = vsel %vm280, %v1528, 0
    %v1535 = vsel %vm280, %v1530, 0
    %1537 = vmatprep.subr.bf16.mxu0 0
    %1538 = vmatpush1.bf16.xpose.msra.mxu0 %v1535
    %1539 = vmatprep.subr.bf16.mxu0 0
    %1540 = vmatpush1.bf16.xpose.msra.mxu0 0
    %1541 = vmatprep.subr.bf16.mxu0 0
    %1542 = vmatpush1.bf16.xpose.msra.mxu0 0
    %1543 = vmatprep.subr.bf16.mxu0 0
    %1544 = vmatpush1.bf16.xpose.msra.mxu0 0
    %1545 = vmatprep.subr.bf16.mxu0 0
    %1546 = vmatpush1.bf16.xpose.msra.mxu0 0
    %1547 = vmatprep.subr.bf16.mxu0 0
    %1548 = vmatpush1.bf16.xpose.msra.mxu0 0
    %1549 = vmatprep.subr.bf16.mxu0 0
    %1550 = vmatpush1.bf16.xpose.msra.mxu0 0
    %1551 = vmatprep.subr.bf16.mxu0 0
    %1552 = vmatpush1.bf16.xpose.msra.mxu0 0
    %1553 = vmatprep.subr.bf16.mxu0 0
    %1554 = vmatpush1.bf16.xpose.msra.mxu0 0
    %1555 = vmatprep.subr.bf16.mxu0 0
    %1556 = vmatpush1.bf16.xpose.msra.mxu0 0
    %1557 = vmatprep.subr.bf16.mxu0 0
    %1558 = vmatpush1.bf16.xpose.msra.mxu0 0
    %1559 = vmatprep.subr.bf16.mxu0 0
    %1560 = vmatpush1.bf16.xpose.msra.mxu0 0
    %1561 = vmatprep.subr.bf16.mxu0 0
    %1562 = vmatpush1.bf16.xpose.msra.mxu0 0
    %1563 = vmatprep.subr.bf16.mxu0 0
    %1564 = vmatpush1.bf16.xpose.msra.mxu0 0
    %1565 = vmatprep.subr.bf16.mxu0 0
    %1566 = vmatpush1.bf16.xpose.msra.mxu0 0
    %1567 = vmatprep.subr.bf16.mxu0 0
    %1568 = vmatpush1.bf16.xpose.msra.mxu0 0
    %1569 = vmatprep.mubr.bf16.mxu0 0
    %1570 = vmatmul.mubr.bf16.gmra.mrb[0].mxu0 %v1532
    %v1571 = vpop.f32.mrb[0].mxu0
    %v1572 = vadd.f32 %v1264, %v1571
    %v1573 = vpop.f32.mrb[0].mxu0
    %v1574 = vpop.f32.mrb[0].mxu0
    %v1575 = vadd.f32 %v1265, %v1574
    %v1576 = vpop.f32.mrb[0].mxu0
    %1577 = vdwg.mxu0
    %1579 = vrot.lane.b32.xlu0 %v1261, 120
    %v1580 = vpop.permute.xlu0 %1579
    %1581 = vrot.lane.b32.xlu0 %v1261, 88
    %v1582 = vpop.permute.xlu0 %1581
    %v1584 = vsel %vm280, %v1580, 0
    %v1587 = vsel %vm280, %v1582, 0
    %1589 = vmatprep.subr.bf16.mxu0 0
    %1590 = vmatpush1.bf16.xpose.msra.mxu0 %v1587
    %1591 = vmatprep.subr.bf16.mxu0 0
    %1592 = vmatpush1.bf16.xpose.msra.mxu0 0
    %1593 = vmatprep.subr.bf16.mxu0 0
    %1594 = vmatpush1.bf16.xpose.msra.mxu0 0
    %1595 = vmatprep.subr.bf16.mxu0 0
    %1596 = vmatpush1.bf16.xpose.msra.mxu0 0
    %1597 = vmatprep.subr.bf16.mxu0 0
    %1598 = vmatpush1.bf16.xpose.msra.mxu0 0
    %1599 = vmatprep.subr.bf16.mxu0 0
    %1600 = vmatpush1.bf16.xpose.msra.mxu0 0
    %1601 = vmatprep.subr.bf16.mxu0 0
    %1602 = vmatpush1.bf16.xpose.msra.mxu0 0
    %1603 = vmatprep.subr.bf16.mxu0 0
    %1604 = vmatpush1.bf16.xpose.msra.mxu0 0
    %1605 = vmatprep.subr.bf16.mxu0 0
    %1606 = vmatpush1.bf16.xpose.msra.mxu0 0
    %1607 = vmatprep.subr.bf16.mxu0 0
    %1608 = vmatpush1.bf16.xpose.msra.mxu0 0
    %1609 = vmatprep.subr.bf16.mxu0 0
    %1610 = vmatpush1.bf16.xpose.msra.mxu0 0
    %1611 = vmatprep.subr.bf16.mxu0 0
    %1612 = vmatpush1.bf16.xpose.msra.mxu0 0
    %1613 = vmatprep.subr.bf16.mxu0 0
    %1614 = vmatpush1.bf16.xpose.msra.mxu0 0
    %1615 = vmatprep.subr.bf16.mxu0 0
    %1616 = vmatpush1.bf16.xpose.msra.mxu0 0
    %1617 = vmatprep.subr.bf16.mxu0 0
    %1618 = vmatpush1.bf16.xpose.msra.mxu0 0
    %1619 = vmatprep.subr.bf16.mxu0 0
    %1620 = vmatpush1.bf16.xpose.msra.mxu0 0
    %1621 = vmatprep.mubr.bf16.mxu0 0
    %1622 = vmatmul.mubr.bf16.gmra.mrb[0].mxu0 %v1584
    %v1623 = vpop.f32.mrb[0].mxu0
    %v1624 = vadd.f32 %v1264, %v1623
    %v1625 = vpop.f32.mrb[0].mxu0
    %v1626 = vpop.f32.mrb[0].mxu0
    %v1627 = vadd.f32 %v1265, %v1626
    %v1628 = vpop.f32.mrb[0].mxu0
    %1629 = vdwg.mxu0
    %1631 = vrot.lane.b32.xlu0 %v1262, 120
    %v1632 = vpop.permute.xlu0 %1631
    %1633 = vrot.lane.b32.xlu0 %v1262, 88
    %v1634 = vpop.permute.xlu0 %1633
    %v1636 = vsel %vm280, %v1632, 0
    %v1639 = vsel %vm280, %v1634, 0
    %1641 = vmatprep.subr.bf16.mxu0 0
    %1642 = vmatpush1.bf16.xpose.msra.mxu0 %v1639
    %1643 = vmatprep.subr.bf16.mxu0 0
    %1644 = vmatpush1.bf16.xpose.msra.mxu0 0
    %1645 = vmatprep.subr.bf16.mxu0 0
    %1646 = vmatpush1.bf16.xpose.msra.mxu0 0
    %1647 = vmatprep.subr.bf16.mxu0 0
    %1648 = vmatpush1.bf16.xpose.msra.mxu0 0
    %1649 = vmatprep.subr.bf16.mxu0 0
    %1650 = vmatpush1.bf16.xpose.msra.mxu0 0
    %1651 = vmatprep.subr.bf16.mxu0 0
    %1652 = vmatpush1.bf16.xpose.msra.mxu0 0
    %1653 = vmatprep.subr.bf16.mxu0 0
    %1654 = vmatpush1.bf16.xpose.msra.mxu0 0
    %1655 = vmatprep.subr.bf16.mxu0 0
    %1656 = vmatpush1.bf16.xpose.msra.mxu0 0
    %1657 = vmatprep.subr.bf16.mxu0 0
    %1658 = vmatpush1.bf16.xpose.msra.mxu0 0
    %1659 = vmatprep.subr.bf16.mxu0 0
    %1660 = vmatpush1.bf16.xpose.msra.mxu0 0
    %1661 = vmatprep.subr.bf16.mxu0 0
    %1662 = vmatpush1.bf16.xpose.msra.mxu0 0
    %1663 = vmatprep.subr.bf16.mxu0 0
    %1664 = vmatpush1.bf16.xpose.msra.mxu0 0
    %1665 = vmatprep.subr.bf16.mxu0 0
    %1666 = vmatpush1.bf16.xpose.msra.mxu0 0
    %1667 = vmatprep.subr.bf16.mxu0 0
    %1668 = vmatpush1.bf16.xpose.msra.mxu0 0
    %1669 = vmatprep.subr.bf16.mxu0 0
    %1670 = vmatpush1.bf16.xpose.msra.mxu0 0
    %1671 = vmatprep.subr.bf16.mxu0 0
    %1672 = vmatpush1.bf16.xpose.msra.mxu0 0
    %1673 = vmatprep.mubr.bf16.mxu0 0
    %1674 = vmatmul.mubr.bf16.gmra.mrb[0].mxu0 %v1636
    %v1675 = vpop.f32.mrb[0].mxu0
    %v1676 = vadd.f32 %v1264, %v1675
    %v1677 = vpop.f32.mrb[0].mxu0
    %v1678 = vpop.f32.mrb[0].mxu0
    %v1679 = vadd.f32 %v1265, %v1678
    %v1680 = vpop.f32.mrb[0].mxu0
    %1681 = vdwg.mxu0
    %v1682 = vadd.f32 %v1312, %v259
    %v1683 = vadd.f32 %v1315, %v260
    %v1684 = vadd.f32 %v1364, %v261
    %v1685 = vadd.f32 %v1367, %v262
    %v1686 = vadd.f32 %v1416, %v263
    %v1687 = vadd.f32 %v1419, %v264
    %v1688 = vadd.f32 %v1468, %v265
    %v1689 = vadd.f32 %v1471, %v266
    %v1690 = vadd.f32 %v1520, %v259
    %v1691 = vadd.f32 %v1523, %v260
    %v1692 = vadd.f32 %v1572, %v261
    %v1693 = vadd.f32 %v1575, %v262
    %v1694 = vadd.f32 %v1624, %v263
    %v1695 = vadd.f32 %v1627, %v264
    %v1696 = vadd.f32 %v1676, %v265
    %v1697 = vadd.f32 %v1679, %v266
    %v1698 = vsel %vm694, %v1682, -inf
    %1699 = vmax.xlane.f32.xlu0 %v1698
    %v1700 = vpop.xlane.xlu0 %1699
    %v1701 = vsel %vm694, %v1683, -inf
    %1702 = vmax.xlane.f32.xlu0 %v1701
    %v1703 = vpop.xlane.xlu0 %1702
    %v1704 = vsel %vm694, %v1684, -inf
    %1705 = vmax.xlane.f32.xlu0 %v1704
    %v1706 = vpop.xlane.xlu0 %1705
    %v1707 = vsel %vm694, %v1685, -inf
    %1708 = vmax.xlane.f32.xlu0 %v1707
    %v1709 = vpop.xlane.xlu0 %1708
    %v1710 = vsel %vm694, %v1686, -inf
    %1711 = vmax.xlane.f32.xlu0 %v1710
    %v1712 = vpop.xlane.xlu0 %1711
    %v1713 = vsel %vm694, %v1687, -inf
    %1714 = vmax.xlane.f32.xlu0 %v1713
    %v1715 = vpop.xlane.xlu0 %1714
    %v1716 = vsel %vm694, %v1688, -inf
    %1717 = vmax.xlane.f32.xlu0 %v1716
    %v1718 = vpop.xlane.xlu0 %1717
    %v1719 = vsel %vm694, %v1689, -inf
    %1720 = vmax.xlane.f32.xlu0 %v1719
    %v1721 = vpop.xlane.xlu0 %1720
    %v1722 = vsel %vm694, %v1690, -inf
    %1723 = vmax.xlane.f32.xlu0 %v1722
    %v1724 = vpop.xlane.xlu0 %1723
    %v1725 = vsel %vm694, %v1691, -inf
    %1726 = vmax.xlane.f32.xlu0 %v1725
    %v1727 = vpop.xlane.xlu0 %1726
    %v1728 = vsel %vm694, %v1692, -inf
    %1729 = vmax.xlane.f32.xlu0 %v1728
    %v1730 = vpop.xlane.xlu0 %1729
    %v1731 = vsel %vm694, %v1693, -inf
    %1732 = vmax.xlane.f32.xlu0 %v1731
    %v1733 = vpop.xlane.xlu0 %1732
    %v1734 = vsel %vm694, %v1694, -inf
    %1735 = vmax.xlane.f32.xlu0 %v1734
    %v1736 = vpop.xlane.xlu0 %1735
    %v1737 = vsel %vm694, %v1695, -inf
    %1738 = vmax.xlane.f32.xlu0 %v1737
    %v1739 = vpop.xlane.xlu0 %1738
    %v1740 = vsel %vm694, %v1696, -inf
    %1741 = vmax.xlane.f32.xlu0 %v1740
    %v1742 = vpop.xlane.xlu0 %1741
    %v1743 = vsel %vm694, %v1697, -inf
    %1744 = vmax.xlane.f32.xlu0 %v1743
    %v1745 = vpop.xlane.xlu0 %1744
    %v1746 = vsub.f32 %v1682, %v1700
    %v1747 = vsub.f32 %v1683, %v1703
    %v1748 = vsub.f32 %v1684, %v1706
    %v1749 = vsub.f32 %v1685, %v1709
    %v1750 = vsub.f32 %v1686, %v1712
    %v1751 = vsub.f32 %v1687, %v1715
    %v1752 = vsub.f32 %v1688, %v1718
    %v1753 = vsub.f32 %v1689, %v1721
    %v1754 = vsub.f32 %v1690, %v1724
    %v1755 = vsub.f32 %v1691, %v1727
    %v1756 = vsub.f32 %v1692, %v1730
    %v1757 = vsub.f32 %v1693, %v1733
    %v1758 = vsub.f32 %v1694, %v1736
    %v1759 = vsub.f32 %v1695, %v1739
    %v1760 = vsub.f32 %v1696, %v1742
    %v1761 = vsub.f32 %v1697, %v1745
    %v1762 = vmul.f32 %v1746, 1.442695
    %v1763 = vpow.pop %v1762
    %v1764 = vmul.f32 %v1747, 1.442695
    %v1765 = vpow.pop %v1764
    %v1766 = vmul.f32 %v1748, 1.442695
    %v1767 = vpow.pop %v1766
    %v1768 = vmul.f32 %v1749, 1.442695
    %v1769 = vpow.pop %v1768
    %v1770 = vmul.f32 %v1750, 1.442695
    %v1771 = vpow.pop %v1770
    %v1772 = vmul.f32 %v1751, 1.442695
    %v1773 = vpow.pop %v1772
    %v1774 = vmul.f32 %v1752, 1.442695
    %v1775 = vpow.pop %v1774
    %v1776 = vmul.f32 %v1753, 1.442695
    %v1777 = vpow.pop %v1776
    %v1778 = vmul.f32 %v1754, 1.442695
    %v1779 = vpow.pop %v1778
    %v1780 = vmul.f32 %v1755, 1.442695
    %v1781 = vpow.pop %v1780
    %v1782 = vmul.f32 %v1756, 1.442695
    %v1783 = vpow.pop %v1782
    %v1784 = vmul.f32 %v1757, 1.442695
    %v1785 = vpow.pop %v1784
    %v1786 = vmul.f32 %v1758, 1.442695
    %v1787 = vpow.pop %v1786
    %v1788 = vmul.f32 %v1759, 1.442695
    %v1789 = vpow.pop %v1788
    %v1790 = vmul.f32 %v1760, 1.442695
    %v1791 = vpow.pop %v1790
    %v1792 = vmul.f32 %v1761, 1.442695
    %v1793 = vpow.pop %v1792
    %v1794 = vsel %vm694, %v1763, 0.0
    %1795 = vadd.xlane.f32.xlu0 %v1794
    %v1796 = vpop.xlane.xlu0 %1795
    %v1797 = vsel %vm694, %v1765, 0.0
    %1798 = vadd.xlane.f32.xlu0 %v1797
    %v1799 = vpop.xlane.xlu0 %1798
    %v1800 = vsel %vm694, %v1767, 0.0
    %1801 = vadd.xlane.f32.xlu0 %v1800
    %v1802 = vpop.xlane.xlu0 %1801
    %v1803 = vsel %vm694, %v1769, 0.0
    %1804 = vadd.xlane.f32.xlu0 %v1803
    %v1805 = vpop.xlane.xlu0 %1804
    %v1806 = vsel %vm694, %v1771, 0.0
    %1807 = vadd.xlane.f32.xlu0 %v1806
    %v1808 = vpop.xlane.xlu0 %1807
    %v1809 = vsel %vm694, %v1773, 0.0
    %1810 = vadd.xlane.f32.xlu0 %v1809
    %v1811 = vpop.xlane.xlu0 %1810
    %v1812 = vsel %vm694, %v1775, 0.0
    %1813 = vadd.xlane.f32.xlu0 %v1812
    %v1814 = vpop.xlane.xlu0 %1813
    %v1815 = vsel %vm694, %v1777, 0.0
    %1816 = vadd.xlane.f32.xlu0 %v1815
    %v1817 = vpop.xlane.xlu0 %1816
    %v1818 = vsel %vm694, %v1779, 0.0
    %1819 = vadd.xlane.f32.xlu0 %v1818
    %v1820 = vpop.xlane.xlu0 %1819
    %v1821 = vsel %vm694, %v1781, 0.0
    %1822 = vadd.xlane.f32.xlu0 %v1821
    %v1823 = vpop.xlane.xlu0 %1822
    %v1824 = vsel %vm694, %v1783, 0.0
    %1825 = vadd.xlane.f32.xlu0 %v1824
    %v1826 = vpop.xlane.xlu0 %1825
    %v1827 = vsel %vm694, %v1785, 0.0
    %1828 = vadd.xlane.f32.xlu0 %v1827
    %v1829 = vpop.xlane.xlu0 %1828
    %v1830 = vsel %vm694, %v1787, 0.0
    %1831 = vadd.xlane.f32.xlu0 %v1830
    %v1832 = vpop.xlane.xlu0 %1831
    %v1833 = vsel %vm694, %v1789, 0.0
    %1834 = vadd.xlane.f32.xlu0 %v1833
    %v1835 = vpop.xlane.xlu0 %1834
    %v1836 = vsel %vm694, %v1791, 0.0
    %1837 = vadd.xlane.f32.xlu0 %v1836
    %v1838 = vpop.xlane.xlu0 %1837
    %v1839 = vsel %vm694, %v1793, 0.0
    %1840 = vadd.xlane.f32.xlu0 %v1839
    %v1841 = vpop.xlane.xlu0 %1840
    %v1842 = vrcp.pop %v1796
    %v1843 = vrcp.pop %v1799
    %v1844 = vrcp.pop %v1802
    %v1845 = vrcp.pop %v1805
    %v1846 = vrcp.pop %v1808
    %v1847 = vrcp.pop %v1811
    %v1848 = vrcp.pop %v1814
    %v1849 = vrcp.pop %v1817
    %v1850 = vrcp.pop %v1820
    %v1851 = vrcp.pop %v1823
    %v1852 = vrcp.pop %v1826
    %v1853 = vrcp.pop %v1829
    %v1854 = vrcp.pop %v1832
    %v1855 = vrcp.pop %v1835
    %v1856 = vrcp.pop %v1838
    %v1857 = vrcp.pop %v1841
    %v1858 = vmul.f32 %v1763, %v1842
    %v1859 = vmul.f32 %v1765, %v1843
    %v1860 = vmul.f32 %v1767, %v1844
    %v1861 = vmul.f32 %v1769, %v1845
    %v1862 = vmul.f32 %v1771, %v1846
    %v1863 = vmul.f32 %v1773, %v1847
    %v1864 = vmul.f32 %v1775, %v1848
    %v1865 = vmul.f32 %v1777, %v1849
    %v1866 = vmul.f32 %v1779, %v1850
    %v1867 = vmul.f32 %v1781, %v1851
    %v1868 = vmul.f32 %v1783, %v1852
    %v1869 = vmul.f32 %v1785, %v1853
    %v1870 = vmul.f32 %v1787, %v1854
    %v1871 = vmul.f32 %v1789, %v1855
    %v1872 = vmul.f32 %v1791, %v1856
    %v1873 = vmul.f32 %v1793, %v1857
    %v1874 = vpack.c.bf16 %v1859, %v1858
    %v1875 = vpack.c.bf16 %v1861, %v1860
    %v1876 = vpack.c.bf16 %v1863, %v1862
    %v1877 = vpack.c.bf16 %v1865, %v1864
    %v1878 = vpack.c.bf16 %v1867, %v1866
    %v1879 = vpack.c.bf16 %v1869, %v1868
    %v1880 = vpack.c.bf16 %v1871, %v1870
    %v1881 = vpack.c.bf16 %v1873, %v1872
    %1882 = vrot.lane.b32.xlu0 %v1255, 56
    %v1883 = vpop.permute.xlu0 %1882
    %v1886 = vsel %vm694, %v1874, 0
    %1888 = vmatprep.subr.bf16.mxu0 0
    %1889 = vmatpush1.bf16.msra.mxu0 %v1883
    %1890 = vmatprep.subr.bf16.mxu0 0
    %1891 = vmatpush1.bf16.msra.mxu0 0
    %1892 = vmatprep.subr.bf16.mxu0 0
    %1893 = vmatpush1.bf16.msra.mxu0 0
    %1894 = vmatprep.subr.bf16.mxu0 0
    %1895 = vmatpush1.bf16.msra.mxu0 0
    %1896 = vmatprep.subr.bf16.mxu0 0
    %1897 = vmatpush1.bf16.msra.mxu0 0
    %1898 = vmatprep.subr.bf16.mxu0 0
    %1899 = vmatpush1.bf16.msra.mxu0 0
    %1900 = vmatprep.subr.bf16.mxu0 0
    %1901 = vmatpush1.bf16.msra.mxu0 0
    %1902 = vmatprep.subr.bf16.mxu0 0
    %1903 = vmatpush1.bf16.msra.mxu0 0
    %1904 = vmatprep.subr.bf16.mxu0 0
    %1905 = vmatpush1.bf16.msra.mxu0 0
    %1906 = vmatprep.subr.bf16.mxu0 0
    %1907 = vmatpush1.bf16.msra.mxu0 0
    %1908 = vmatprep.subr.bf16.mxu0 0
    %1909 = vmatpush1.bf16.msra.mxu0 0
    %1910 = vmatprep.subr.bf16.mxu0 0
    %1911 = vmatpush1.bf16.msra.mxu0 0
    %1912 = vmatprep.subr.bf16.mxu0 0
    %1913 = vmatpush1.bf16.msra.mxu0 0
    %1914 = vmatprep.subr.bf16.mxu0 0
    %1915 = vmatpush1.bf16.msra.mxu0 0
    %1916 = vmatprep.subr.bf16.mxu0 0
    %1917 = vmatpush1.bf16.msra.mxu0 0
    %1918 = vmatprep.subr.bf16.mxu0 0
    %1919 = vmatpush1.bf16.msra.mxu0 0
    %1920 = vmatprep.mubr.bf16.mxu0 0
    %1921 = vmatmul.mubr.bf16.gmra.mrb[0].mxu0 %v1886
    %v1922 = vpop.f32.mrb[0].mxu0
    %v1923 = vadd.f32 0.0, %v1922
    %v1924 = vpop.f32.mrb[0].mxu0
    %v1925 = vpop.f32.mrb[0].mxu0
    %v1926 = vadd.f32 0.0, %v1925
    %v1927 = vpop.f32.mrb[0].mxu0
    %1928 = vdwg.mxu0
    %1929 = vrot.lane.b32.xlu0 %v1256, 56
    %v1930 = vpop.permute.xlu0 %1929
    %v1933 = vsel %vm694, %v1875, 0
    %1935 = vmatprep.subr.bf16.mxu0 0
    %1936 = vmatpush1.bf16.msra.mxu0 %v1930
    %1937 = vmatprep.subr.bf16.mxu0 0
    %1938 = vmatpush1.bf16.msra.mxu0 0
    %1939 = vmatprep.subr.bf16.mxu0 0
    %1940 = vmatpush1.bf16.msra.mxu0 0
    %1941 = vmatprep.subr.bf16.mxu0 0
    %1942 = vmatpush1.bf16.msra.mxu0 0
    %1943 = vmatprep.subr.bf16.mxu0 0
    %1944 = vmatpush1.bf16.msra.mxu0 0
    %1945 = vmatprep.subr.bf16.mxu0 0
    %1946 = vmatpush1.bf16.msra.mxu0 0
    %1947 = vmatprep.subr.bf16.mxu0 0
    %1948 = vmatpush1.bf16.msra.mxu0 0
    %1949 = vmatprep.subr.bf16.mxu0 0
    %1950 = vmatpush1.bf16.msra.mxu0 0
    %1951 = vmatprep.subr.bf16.mxu0 0
    %1952 = vmatpush1.bf16.msra.mxu0 0
    %1953 = vmatprep.subr.bf16.mxu0 0
    %1954 = vmatpush1.bf16.msra.mxu0 0
    %1955 = vmatprep.subr.bf16.mxu0 0
    %1956 = vmatpush1.bf16.msra.mxu0 0
    %1957 = vmatprep.subr.bf16.mxu0 0
    %1958 = vmatpush1.bf16.msra.mxu0 0
    %1959 = vmatprep.subr.bf16.mxu0 0
    %1960 = vmatpush1.bf16.msra.mxu0 0
    %1961 = vmatprep.subr.bf16.mxu0 0
    %1962 = vmatpush1.bf16.msra.mxu0 0
    %1963 = vmatprep.subr.bf16.mxu0 0
    %1964 = vmatpush1.bf16.msra.mxu0 0
    %1965 = vmatprep.subr.bf16.mxu0 0
    %1966 = vmatpush1.bf16.msra.mxu0 0
    %1967 = vmatprep.mubr.bf16.mxu0 0
    %1968 = vmatmul.mubr.bf16.gmra.mrb[0].mxu0 %v1933
    %v1969 = vpop.f32.mrb[0].mxu0
    %v1970 = vadd.f32 0.0, %v1969
    %v1971 = vpop.f32.mrb[0].mxu0
    %v1972 = vpop.f32.mrb[0].mxu0
    %v1973 = vadd.f32 0.0, %v1972
    %v1974 = vpop.f32.mrb[0].mxu0
    %1975 = vdwg.mxu0
    %1976 = vrot.lane.b32.xlu0 %v1257, 56
    %v1977 = vpop.permute.xlu0 %1976
    %v1980 = vsel %vm694, %v1876, 0
    %1982 = vmatprep.subr.bf16.mxu0 0
    %1983 = vmatpush1.bf16.msra.mxu0 %v1977
    %1984 = vmatprep.subr.bf16.mxu0 0
    %1985 = vmatpush1.bf16.msra.mxu0 0
    %1986 = vmatprep.subr.bf16.mxu0 0
    %1987 = vmatpush1.bf16.msra.mxu0 0
    %1988 = vmatprep.subr.bf16.mxu0 0
    %1989 = vmatpush1.bf16.msra.mxu0 0
    %1990 = vmatprep.subr.bf16.mxu0 0
    %1991 = vmatpush1.bf16.msra.mxu0 0
    %1992 = vmatprep.subr.bf16.mxu0 0
    %1993 = vmatpush1.bf16.msra.mxu0 0
    %1994 = vmatprep.subr.bf16.mxu0 0
    %1995 = vmatpush1.bf16.msra.mxu0 0
    %1996 = vmatprep.subr.bf16.mxu0 0
    %1997 = vmatpush1.bf16.msra.mxu0 0
    %1998 = vmatprep.subr.bf16.mxu0 0
    %1999 = vmatpush1.bf16.msra.mxu0 0
    %2000 = vmatprep.subr.bf16.mxu0 0
    %2001 = vmatpush1.bf16.msra.mxu0 0
    %2002 = vmatprep.subr.bf16.mxu0 0
    %2003 = vmatpush1.bf16.msra.mxu0 0
    %2004 = vmatprep.subr.bf16.mxu0 0
    %2005 = vmatpush1.bf16.msra.mxu0 0
    %2006 = vmatprep.subr.bf16.mxu0 0
    %2007 = vmatpush1.bf16.msra.mxu0 0
    %2008 = vmatprep.subr.bf16.mxu0 0
    %2009 = vmatpush1.bf16.msra.mxu0 0
    %2010 = vmatprep.subr.bf16.mxu0 0
    %2011 = vmatpush1.bf16.msra.mxu0 0
    %2012 = vmatprep.subr.bf16.mxu0 0
    %2013 = vmatpush1.bf16.msra.mxu0 0
    %2014 = vmatprep.mubr.bf16.mxu0 0
    %2015 = vmatmul.mubr.bf16.gmra.mrb[0].mxu0 %v1980
    %v2016 = vpop.f32.mrb[0].mxu0
    %v2017 = vadd.f32 0.0, %v2016
    %v2018 = vpop.f32.mrb[0].mxu0
    %v2019 = vpop.f32.mrb[0].mxu0
    %v2020 = vadd.f32 0.0, %v2019
    %v2021 = vpop.f32.mrb[0].mxu0
    %2022 = vdwg.mxu0
    %2023 = vrot.lane.b32.xlu0 %v1258, 56
    %v2024 = vpop.permute.xlu0 %2023
    %v2027 = vsel %vm694, %v1877, 0
    %2029 = vmatprep.subr.bf16.mxu0 0
    %2030 = vmatpush1.bf16.msra.mxu0 %v2024
    %2031 = vmatprep.subr.bf16.mxu0 0
    %2032 = vmatpush1.bf16.msra.mxu0 0
    %2033 = vmatprep.subr.bf16.mxu0 0
    %2034 = vmatpush1.bf16.msra.mxu0 0
    %2035 = vmatprep.subr.bf16.mxu0 0
    %2036 = vmatpush1.bf16.msra.mxu0 0
    %2037 = vmatprep.subr.bf16.mxu0 0
    %2038 = vmatpush1.bf16.msra.mxu0 0
    %2039 = vmatprep.subr.bf16.mxu0 0
    %2040 = vmatpush1.bf16.msra.mxu0 0
    %2041 = vmatprep.subr.bf16.mxu0 0
    %2042 = vmatpush1.bf16.msra.mxu0 0
    %2043 = vmatprep.subr.bf16.mxu0 0
    %2044 = vmatpush1.bf16.msra.mxu0 0
    %2045 = vmatprep.subr.bf16.mxu0 0
    %2046 = vmatpush1.bf16.msra.mxu0 0
    %2047 = vmatprep.subr.bf16.mxu0 0
    %2048 = vmatpush1.bf16.msra.mxu0 0
    %2049 = vmatprep.subr.bf16.mxu0 0
    %2050 = vmatpush1.bf16.msra.mxu0 0
    %2051 = vmatprep.subr.bf16.mxu0 0
    %2052 = vmatpush1.bf16.msra.mxu0 0
    %2053 = vmatprep.subr.bf16.mxu0 0
    %2054 = vmatpush1.bf16.msra.mxu0 0
    %2055 = vmatprep.subr.bf16.mxu0 0
    %2056 = vmatpush1.bf16.msra.mxu0 0
    %2057 = vmatprep.subr.bf16.mxu0 0
    %2058 = vmatpush1.bf16.msra.mxu0 0
    %2059 = vmatprep.subr.bf16.mxu0 0
    %2060 = vmatpush1.bf16.msra.mxu0 0
    %2061 = vmatprep.mubr.bf16.mxu0 0
    %2062 = vmatmul.mubr.bf16.gmra.mrb[0].mxu0 %v2027
    %v2063 = vpop.f32.mrb[0].mxu0
    %v2064 = vadd.f32 0.0, %v2063
    %v2065 = vpop.f32.mrb[0].mxu0
    %v2066 = vpop.f32.mrb[0].mxu0
    %v2067 = vadd.f32 0.0, %v2066
    %v2068 = vpop.f32.mrb[0].mxu0
    %2069 = vdwg.mxu0
    %2070 = vrot.lane.b32.xlu0 %v1259, 56
    %v2071 = vpop.permute.xlu0 %2070
    %v2074 = vsel %vm694, %v1878, 0
    %2076 = vmatprep.subr.bf16.mxu0 0
    %2077 = vmatpush1.bf16.msra.mxu0 %v2071
    %2078 = vmatprep.subr.bf16.mxu0 0
    %2079 = vmatpush1.bf16.msra.mxu0 0
    %2080 = vmatprep.subr.bf16.mxu0 0
    %2081 = vmatpush1.bf16.msra.mxu0 0
    %2082 = vmatprep.subr.bf16.mxu0 0
    %2083 = vmatpush1.bf16.msra.mxu0 0
    %2084 = vmatprep.subr.bf16.mxu0 0
    %2085 = vmatpush1.bf16.msra.mxu0 0
    %2086 = vmatprep.subr.bf16.mxu0 0
    %2087 = vmatpush1.bf16.msra.mxu0 0
    %2088 = vmatprep.subr.bf16.mxu0 0
    %2089 = vmatpush1.bf16.msra.mxu0 0
    %2090 = vmatprep.subr.bf16.mxu0 0
    %2091 = vmatpush1.bf16.msra.mxu0 0
    %2092 = vmatprep.subr.bf16.mxu0 0
    %2093 = vmatpush1.bf16.msra.mxu0 0
    %2094 = vmatprep.subr.bf16.mxu0 0
    %2095 = vmatpush1.bf16.msra.mxu0 0
    %2096 = vmatprep.subr.bf16.mxu0 0
    %2097 = vmatpush1.bf16.msra.mxu0 0
    %2098 = vmatprep.subr.bf16.mxu0 0
    %2099 = vmatpush1.bf16.msra.mxu0 0
    %2100 = vmatprep.subr.bf16.mxu0 0
    %2101 = vmatpush1.bf16.msra.mxu0 0
    %2102 = vmatprep.subr.bf16.mxu0 0
    %2103 = vmatpush1.bf16.msra.mxu0 0
    %2104 = vmatprep.subr.bf16.mxu0 0
    %2105 = vmatpush1.bf16.msra.mxu0 0
    %2106 = vmatprep.subr.bf16.mxu0 0
    %2107 = vmatpush1.bf16.msra.mxu0 0
    %2108 = vmatprep.mubr.bf16.mxu0 0
    %2109 = vmatmul.mubr.bf16.gmra.mrb[0].mxu0 %v2074
    %v2110 = vpop.f32.mrb[0].mxu0
    %v2111 = vadd.f32 0.0, %v2110
    %v2112 = vpop.f32.mrb[0].mxu0
    %v2113 = vpop.f32.mrb[0].mxu0
    %v2114 = vadd.f32 0.0, %v2113
    %v2115 = vpop.f32.mrb[0].mxu0
    %2116 = vdwg.mxu0
    %2117 = vrot.lane.b32.xlu0 %v1260, 56
    %v2118 = vpop.permute.xlu0 %2117
    %v2121 = vsel %vm694, %v1879, 0
    %2123 = vmatprep.subr.bf16.mxu0 0
    %2124 = vmatpush1.bf16.msra.mxu0 %v2118
    %2125 = vmatprep.subr.bf16.mxu0 0
    %2126 = vmatpush1.bf16.msra.mxu0 0
    %2127 = vmatprep.subr.bf16.mxu0 0
    %2128 = vmatpush1.bf16.msra.mxu0 0
    %2129 = vmatprep.subr.bf16.mxu0 0
    %2130 = vmatpush1.bf16.msra.mxu0 0
    %2131 = vmatprep.subr.bf16.mxu0 0
    %2132 = vmatpush1.bf16.msra.mxu0 0
    %2133 = vmatprep.subr.bf16.mxu0 0
    %2134 = vmatpush1.bf16.msra.mxu0 0
    %2135 = vmatprep.subr.bf16.mxu0 0
    %2136 = vmatpush1.bf16.msra.mxu0 0
    %2137 = vmatprep.subr.bf16.mxu0 0
    %2138 = vmatpush1.bf16.msra.mxu0 0
    %2139 = vmatprep.subr.bf16.mxu0 0
    %2140 = vmatpush1.bf16.msra.mxu0 0
    %2141 = vmatprep.subr.bf16.mxu0 0
    %2142 = vmatpush1.bf16.msra.mxu0 0
    %2143 = vmatprep.subr.bf16.mxu0 0
    %2144 = vmatpush1.bf16.msra.mxu0 0
    %2145 = vmatprep.subr.bf16.mxu0 0
    %2146 = vmatpush1.bf16.msra.mxu0 0
    %2147 = vmatprep.subr.bf16.mxu0 0
    %2148 = vmatpush1.bf16.msra.mxu0 0
    %2149 = vmatprep.subr.bf16.mxu0 0
    %2150 = vmatpush1.bf16.msra.mxu0 0
    %2151 = vmatprep.subr.bf16.mxu0 0
    %2152 = vmatpush1.bf16.msra.mxu0 0
    %2153 = vmatprep.subr.bf16.mxu0 0
    %2154 = vmatpush1.bf16.msra.mxu0 0
    %2155 = vmatprep.mubr.bf16.mxu0 0
    %2156 = vmatmul.mubr.bf16.gmra.mrb[0].mxu0 %v2121
    %v2157 = vpop.f32.mrb[0].mxu0
    %v2158 = vadd.f32 0.0, %v2157
    %v2159 = vpop.f32.mrb[0].mxu0
    %v2160 = vpop.f32.mrb[0].mxu0
    %v2161 = vadd.f32 0.0, %v2160
    %v2162 = vpop.f32.mrb[0].mxu0
    %2163 = vdwg.mxu0
    %2164 = vrot.lane.b32.xlu0 %v1261, 56
    %v2165 = vpop.permute.xlu0 %2164
    %v2168 = vsel %vm694, %v1880, 0
    %2170 = vmatprep.subr.bf16.mxu0 0
    %2171 = vmatpush1.bf16.msra.mxu0 %v2165
    %2172 = vmatprep.subr.bf16.mxu0 0
    %2173 = vmatpush1.bf16.msra.mxu0 0
    %2174 = vmatprep.subr.bf16.mxu0 0
    %2175 = vmatpush1.bf16.msra.mxu0 0
    %2176 = vmatprep.subr.bf16.mxu0 0
    %2177 = vmatpush1.bf16.msra.mxu0 0
    %2178 = vmatprep.subr.bf16.mxu0 0
    %2179 = vmatpush1.bf16.msra.mxu0 0
    %2180 = vmatprep.subr.bf16.mxu0 0
    %2181 = vmatpush1.bf16.msra.mxu0 0
    %2182 = vmatprep.subr.bf16.mxu0 0
    %2183 = vmatpush1.bf16.msra.mxu0 0
    %2184 = vmatprep.subr.bf16.mxu0 0
    %2185 = vmatpush1.bf16.msra.mxu0 0
    %2186 = vmatprep.subr.bf16.mxu0 0
    %2187 = vmatpush1.bf16.msra.mxu0 0
    %2188 = vmatprep.subr.bf16.mxu0 0
    %2189 = vmatpush1.bf16.msra.mxu0 0
    %2190 = vmatprep.subr.bf16.mxu0 0
    %2191 = vmatpush1.bf16.msra.mxu0 0
    %2192 = vmatprep.subr.bf16.mxu0 0
    %2193 = vmatpush1.bf16.msra.mxu0 0
    %2194 = vmatprep.subr.bf16.mxu0 0
    %2195 = vmatpush1.bf16.msra.mxu0 0
    %2196 = vmatprep.subr.bf16.mxu0 0
    %2197 = vmatpush1.bf16.msra.mxu0 0
    %2198 = vmatprep.subr.bf16.mxu0 0
    %2199 = vmatpush1.bf16.msra.mxu0 0
    %2200 = vmatprep.subr.bf16.mxu0 0
    %2201 = vmatpush1.bf16.msra.mxu0 0
    %2202 = vmatprep.mubr.bf16.mxu0 0
    %2203 = vmatmul.mubr.bf16.gmra.mrb[0].mxu0 %v2168
    %v2204 = vpop.f32.mrb[0].mxu0
    %v2205 = vadd.f32 0.0, %v2204
    %v2206 = vpop.f32.mrb[0].mxu0
    %v2207 = vpop.f32.mrb[0].mxu0
    %v2208 = vadd.f32 0.0, %v2207
    %v2209 = vpop.f32.mrb[0].mxu0
    %2210 = vdwg.mxu0
    %2211 = vrot.lane.b32.xlu0 %v1262, 56
    %v2212 = vpop.permute.xlu0 %2211
    %v2215 = vsel %vm694, %v1881, 0
    %2217 = vmatprep.subr.bf16.mxu0 0
    %2218 = vmatpush1.bf16.msra.mxu0 %v2212
    %2219 = vmatprep.subr.bf16.mxu0 0
    %2220 = vmatpush1.bf16.msra.mxu0 0
    %2221 = vmatprep.subr.bf16.mxu0 0
    %2222 = vmatpush1.bf16.msra.mxu0 0
    %2223 = vmatprep.subr.bf16.mxu0 0
    %2224 = vmatpush1.bf16.msra.mxu0 0
    %2225 = vmatprep.subr.bf16.mxu0 0
    %2226 = vmatpush1.bf16.msra.mxu0 0
    %2227 = vmatprep.subr.bf16.mxu0 0
    %2228 = vmatpush1.bf16.msra.mxu0 0
    %2229 = vmatprep.subr.bf16.mxu0 0
    %2230 = vmatpush1.bf16.msra.mxu0 0
    %2231 = vmatprep.subr.bf16.mxu0 0
    %2232 = vmatpush1.bf16.msra.mxu0 0
    %2233 = vmatprep.subr.bf16.mxu0 0
    %2234 = vmatpush1.bf16.msra.mxu0 0
    %2235 = vmatprep.subr.bf16.mxu0 0
    %2236 = vmatpush1.bf16.msra.mxu0 0
    %2237 = vmatprep.subr.bf16.mxu0 0
    %2238 = vmatpush1.bf16.msra.mxu0 0
    %2239 = vmatprep.subr.bf16.mxu0 0
    %2240 = vmatpush1.bf16.msra.mxu0 0
    %2241 = vmatprep.subr.bf16.mxu0 0
    %2242 = vmatpush1.bf16.msra.mxu0 0
    %2243 = vmatprep.subr.bf16.mxu0 0
    %2244 = vmatpush1.bf16.msra.mxu0 0
    %2245 = vmatprep.subr.bf16.mxu0 0
    %2246 = vmatpush1.bf16.msra.mxu0 0
    %2247 = vmatprep.subr.bf16.mxu0 0
    %2248 = vmatpush1.bf16.msra.mxu0 0
    %2249 = vmatprep.mubr.bf16.mxu0 0
    %2250 = vmatmul.mubr.bf16.gmra.mrb[0].mxu0 %v2215
    %v2251 = vpop.f32.mrb[0].mxu0
    %v2252 = vadd.f32 0.0, %v2251
    %v2253 = vpop.f32.mrb[0].mxu0
    %v2254 = vpop.f32.mrb[0].mxu0
    %v2255 = vadd.f32 0.0, %v2254
    %v2256 = vpop.f32.mrb[0].mxu0
    %2257 = vdwg.mxu0
    %v2258 = vld [vmem:[#allocation2] sm:$0xff]
    %v2259 = vld [vmem:[#allocation2 + $0x8] sm:$0xff]
    %v2260 = vld [vmem:[#allocation2 + $0x10] sm:$0xff]
    %v2261 = vld [vmem:[#allocation2 + $0x18] sm:$0xff]
    %v2262 = vld [vmem:[#allocation2 + $0x20] sm:$0xff]
    %v2263 = vld [vmem:[#allocation2 + $0x28] sm:$0xff]
    %v2264 = vld [vmem:[#allocation2 + $0x30] sm:$0xff]
    %v2265 = vld [vmem:[#allocation2 + $0x38] sm:$0xff]
    %s2266 = scalar_lea.vmem %s3, 32
    %v2267 = vld [vmem:[%s2266] sm:$0xff]
    %v2268 = vld [vmem:[%s2266 + $0x8] sm:$0xff]
    %2270 = vrot.lane.b32.xlu0 %v2258, 112
    %v2271 = vpop.permute.xlu0 %2270
    %2272 = vrot.lane.b32.xlu0 %v2258, 80
    %v2273 = vpop.permute.xlu0 %2272
    %v2275 = vsel %vm280, %v2271, 0
    %v2278 = vsel %vm280, %v2273, 0
    %2280 = vmatprep.subr.bf16.mxu0 0
    %2281 = vmatpush1.bf16.xpose.msra.mxu0 %v2278
    %2282 = vmatprep.subr.bf16.mxu0 0
    %2283 = vmatpush1.bf16.xpose.msra.mxu0 0
    %2284 = vmatprep.subr.bf16.mxu0 0
    %2285 = vmatpush1.bf16.xpose.msra.mxu0 0
    %2286 = vmatprep.subr.bf16.mxu0 0
    %2287 = vmatpush1.bf16.xpose.msra.mxu0 0
    %2288 = vmatprep.subr.bf16.mxu0 0
    %2289 = vmatpush1.bf16.xpose.msra.mxu0 0
    %2290 = vmatprep.subr.bf16.mxu0 0
    %2291 = vmatpush1.bf16.xpose.msra.mxu0 0
    %2292 = vmatprep.subr.bf16.mxu0 0
    %2293 = vmatpush1.bf16.xpose.msra.mxu0 0
    %2294 = vmatprep.subr.bf16.mxu0 0
    %2295 = vmatpush1.bf16.xpose.msra.mxu0 0
    %2296 = vmatprep.subr.bf16.mxu0 0
    %2297 = vmatpush1.bf16.xpose.msra.mxu0 0
    %2298 = vmatprep.subr.bf16.mxu0 0
    %2299 = vmatpush1.bf16.xpose.msra.mxu0 0
    %2300 = vmatprep.subr.bf16.mxu0 0
    %2301 = vmatpush1.bf16.xpose.msra.mxu0 0
    %2302 = vmatprep.subr.bf16.mxu0 0
    %2303 = vmatpush1.bf16.xpose.msra.mxu0 0
    %2304 = vmatprep.subr.bf16.mxu0 0
    %2305 = vmatpush1.bf16.xpose.msra.mxu0 0
    %2306 = vmatprep.subr.bf16.mxu0 0
    %2307 = vmatpush1.bf16.xpose.msra.mxu0 0
    %2308 = vmatprep.subr.bf16.mxu0 0
    %2309 = vmatpush1.bf16.xpose.msra.mxu0 0
    %2310 = vmatprep.subr.bf16.mxu0 0
    %2311 = vmatpush1.bf16.xpose.msra.mxu0 0
    %2312 = vmatprep.mubr.bf16.mxu0 0
    %2313 = vmatmul.mubr.bf16.gmra.mrb[0].mxu0 %v2275
    %v2314 = vpop.f32.mrb[0].mxu0
    %v2315 = vadd.f32 %v2267, %v2314
    %v2316 = vpop.f32.mrb[0].mxu0
    %v2317 = vpop.f32.mrb[0].mxu0
    %v2318 = vadd.f32 %v2268, %v2317
    %v2319 = vpop.f32.mrb[0].mxu0
    %2320 = vdwg.mxu0
    %2322 = vrot.lane.b32.xlu0 %v2259, 112
    %v2323 = vpop.permute.xlu0 %2322
    %2324 = vrot.lane.b32.xlu0 %v2259, 80
    %v2325 = vpop.permute.xlu0 %2324
    %v2327 = vsel %vm280, %v2323, 0
    %v2330 = vsel %vm280, %v2325, 0
    %2332 = vmatprep.subr.bf16.mxu0 0
    %2333 = vmatpush1.bf16.xpose.msra.mxu0 %v2330
    %2334 = vmatprep.subr.bf16.mxu0 0
    %2335 = vmatpush1.bf16.xpose.msra.mxu0 0
    %2336 = vmatprep.subr.bf16.mxu0 0
    %2337 = vmatpush1.bf16.xpose.msra.mxu0 0
    %2338 = vmatprep.subr.bf16.mxu0 0
    %2339 = vmatpush1.bf16.xpose.msra.mxu0 0
    %2340 = vmatprep.subr.bf16.mxu0 0
    %2341 = vmatpush1.bf16.xpose.msra.mxu0 0
    %2342 = vmatprep.subr.bf16.mxu0 0
    %2343 = vmatpush1.bf16.xpose.msra.mxu0 0
    %2344 = vmatprep.subr.bf16.mxu0 0
    %2345 = vmatpush1.bf16.xpose.msra.mxu0 0
    %2346 = vmatprep.subr.bf16.mxu0 0
    %2347 = vmatpush1.bf16.xpose.msra.mxu0 0
    %2348 = vmatprep.subr.bf16.mxu0 0
    %2349 = vmatpush1.bf16.xpose.msra.mxu0 0
    %2350 = vmatprep.subr.bf16.mxu0 0
    %2351 = vmatpush1.bf16.xpose.msra.mxu0 0
    %2352 = vmatprep.subr.bf16.mxu0 0
    %2353 = vmatpush1.bf16.xpose.msra.mxu0 0
    %2354 = vmatprep.subr.bf16.mxu0 0
    %2355 = vmatpush1.bf16.xpose.msra.mxu0 0
    %2356 = vmatprep.subr.bf16.mxu0 0
    %2357 = vmatpush1.bf16.xpose.msra.mxu0 0
    %2358 = vmatprep.subr.bf16.mxu0 0
    %2359 = vmatpush1.bf16.xpose.msra.mxu0 0
    %2360 = vmatprep.subr.bf16.mxu0 0
    %2361 = vmatpush1.bf16.xpose.msra.mxu0 0
    %2362 = vmatprep.subr.bf16.mxu0 0
    %2363 = vmatpush1.bf16.xpose.msra.mxu0 0
    %2364 = vmatprep.mubr.bf16.mxu0 0
    %2365 = vmatmul.mubr.bf16.gmra.mrb[0].mxu0 %v2327
    %v2366 = vpop.f32.mrb[0].mxu0
    %v2367 = vadd.f32 %v2267, %v2366
    %v2368 = vpop.f32.mrb[0].mxu0
    %v2369 = vpop.f32.mrb[0].mxu0
    %v2370 = vadd.f32 %v2268, %v2369
    %v2371 = vpop.f32.mrb[0].mxu0
    %2372 = vdwg.mxu0
    %2374 = vrot.lane.b32.xlu0 %v2260, 112
    %v2375 = vpop.permute.xlu0 %2374
    %2376 = vrot.lane.b32.xlu0 %v2260, 80
    %v2377 = vpop.permute.xlu0 %2376
    %v2379 = vsel %vm280, %v2375, 0
    %v2382 = vsel %vm280, %v2377, 0
    %2384 = vmatprep.subr.bf16.mxu0 0
    %2385 = vmatpush1.bf16.xpose.msra.mxu0 %v2382
    %2386 = vmatprep.subr.bf16.mxu0 0
    %2387 = vmatpush1.bf16.xpose.msra.mxu0 0
    %2388 = vmatprep.subr.bf16.mxu0 0
    %2389 = vmatpush1.bf16.xpose.msra.mxu0 0
    %2390 = vmatprep.subr.bf16.mxu0 0
    %2391 = vmatpush1.bf16.xpose.msra.mxu0 0
    %2392 = vmatprep.subr.bf16.mxu0 0
    %2393 = vmatpush1.bf16.xpose.msra.mxu0 0
    %2394 = vmatprep.subr.bf16.mxu0 0
    %2395 = vmatpush1.bf16.xpose.msra.mxu0 0
    %2396 = vmatprep.subr.bf16.mxu0 0
    %2397 = vmatpush1.bf16.xpose.msra.mxu0 0
    %2398 = vmatprep.subr.bf16.mxu0 0
    %2399 = vmatpush1.bf16.xpose.msra.mxu0 0
    %2400 = vmatprep.subr.bf16.mxu0 0
    %2401 = vmatpush1.bf16.xpose.msra.mxu0 0
    %2402 = vmatprep.subr.bf16.mxu0 0
    %2403 = vmatpush1.bf16.xpose.msra.mxu0 0
    %2404 = vmatprep.subr.bf16.mxu0 0
    %2405 = vmatpush1.bf16.xpose.msra.mxu0 0
    %2406 = vmatprep.subr.bf16.mxu0 0
    %2407 = vmatpush1.bf16.xpose.msra.mxu0 0
    %2408 = vmatprep.subr.bf16.mxu0 0
    %2409 = vmatpush1.bf16.xpose.msra.mxu0 0
    %2410 = vmatprep.subr.bf16.mxu0 0
    %2411 = vmatpush1.bf16.xpose.msra.mxu0 0
    %2412 = vmatprep.subr.bf16.mxu0 0
    %2413 = vmatpush1.bf16.xpose.msra.mxu0 0
    %2414 = vmatprep.subr.bf16.mxu0 0
    %2415 = vmatpush1.bf16.xpose.msra.mxu0 0
    %2416 = vmatprep.mubr.bf16.mxu0 0
    %2417 = vmatmul.mubr.bf16.gmra.mrb[0].mxu0 %v2379
    %v2418 = vpop.f32.mrb[0].mxu0
    %v2419 = vadd.f32 %v2267, %v2418
    %v2420 = vpop.f32.mrb[0].mxu0
    %v2421 = vpop.f32.mrb[0].mxu0
    %v2422 = vadd.f32 %v2268, %v2421
    %v2423 = vpop.f32.mrb[0].mxu0
    %2424 = vdwg.mxu0
    %2426 = vrot.lane.b32.xlu0 %v2261, 112
    %v2427 = vpop.permute.xlu0 %2426
    %2428 = vrot.lane.b32.xlu0 %v2261, 80
    %v2429 = vpop.permute.xlu0 %2428
    %v2431 = vsel %vm280, %v2427, 0
    %v2434 = vsel %vm280, %v2429, 0
    %2436 = vmatprep.subr.bf16.mxu0 0
    %2437 = vmatpush1.bf16.xpose.msra.mxu0 %v2434
    %2438 = vmatprep.subr.bf16.mxu0 0
    %2439 = vmatpush1.bf16.xpose.msra.mxu0 0
    %2440 = vmatprep.subr.bf16.mxu0 0
    %2441 = vmatpush1.bf16.xpose.msra.mxu0 0
    %2442 = vmatprep.subr.bf16.mxu0 0
    %2443 = vmatpush1.bf16.xpose.msra.mxu0 0
    %2444 = vmatprep.subr.bf16.mxu0 0
    %2445 = vmatpush1.bf16.xpose.msra.mxu0 0
    %2446 = vmatprep.subr.bf16.mxu0 0
    %2447 = vmatpush1.bf16.xpose.msra.mxu0 0
    %2448 = vmatprep.subr.bf16.mxu0 0
    %2449 = vmatpush1.bf16.xpose.msra.mxu0 0
    %2450 = vmatprep.subr.bf16.mxu0 0
    %2451 = vmatpush1.bf16.xpose.msra.mxu0 0
    %2452 = vmatprep.subr.bf16.mxu0 0
    %2453 = vmatpush1.bf16.xpose.msra.mxu0 0
    %2454 = vmatprep.subr.bf16.mxu0 0
    %2455 = vmatpush1.bf16.xpose.msra.mxu0 0
    %2456 = vmatprep.subr.bf16.mxu0 0
    %2457 = vmatpush1.bf16.xpose.msra.mxu0 0
    %2458 = vmatprep.subr.bf16.mxu0 0
    %2459 = vmatpush1.bf16.xpose.msra.mxu0 0
    %2460 = vmatprep.subr.bf16.mxu0 0
    %2461 = vmatpush1.bf16.xpose.msra.mxu0 0
    %2462 = vmatprep.subr.bf16.mxu0 0
    %2463 = vmatpush1.bf16.xpose.msra.mxu0 0
    %2464 = vmatprep.subr.bf16.mxu0 0
    %2465 = vmatpush1.bf16.xpose.msra.mxu0 0
    %2466 = vmatprep.subr.bf16.mxu0 0
    %2467 = vmatpush1.bf16.xpose.msra.mxu0 0
    %2468 = vmatprep.mubr.bf16.mxu0 0
    %2469 = vmatmul.mubr.bf16.gmra.mrb[0].mxu0 %v2431
    %v2470 = vpop.f32.mrb[0].mxu0
    %v2471 = vadd.f32 %v2267, %v2470
    %v2472 = vpop.f32.mrb[0].mxu0
    %v2473 = vpop.f32.mrb[0].mxu0
    %v2474 = vadd.f32 %v2268, %v2473
    %v2475 = vpop.f32.mrb[0].mxu0
    %2476 = vdwg.mxu0
    %2478 = vrot.lane.b32.xlu0 %v2262, 112
    %v2479 = vpop.permute.xlu0 %2478
    %2480 = vrot.lane.b32.xlu0 %v2262, 80
    %v2481 = vpop.permute.xlu0 %2480
    %v2483 = vsel %vm280, %v2479, 0
    %v2486 = vsel %vm280, %v2481, 0
    %2488 = vmatprep.subr.bf16.mxu0 0
    %2489 = vmatpush1.bf16.xpose.msra.mxu0 %v2486
    %2490 = vmatprep.subr.bf16.mxu0 0
    %2491 = vmatpush1.bf16.xpose.msra.mxu0 0
    %2492 = vmatprep.subr.bf16.mxu0 0
    %2493 = vmatpush1.bf16.xpose.msra.mxu0 0
    %2494 = vmatprep.subr.bf16.mxu0 0
    %2495 = vmatpush1.bf16.xpose.msra.mxu0 0
    %2496 = vmatprep.subr.bf16.mxu0 0
    %2497 = vmatpush1.bf16.xpose.msra.mxu0 0
    %2498 = vmatprep.subr.bf16.mxu0 0
    %2499 = vmatpush1.bf16.xpose.msra.mxu0 0
    %2500 = vmatprep.subr.bf16.mxu0 0
    %2501 = vmatpush1.bf16.xpose.msra.mxu0 0
    %2502 = vmatprep.subr.bf16.mxu0 0
    %2503 = vmatpush1.bf16.xpose.msra.mxu0 0
    %2504 = vmatprep.subr.bf16.mxu0 0
    %2505 = vmatpush1.bf16.xpose.msra.mxu0 0
    %2506 = vmatprep.subr.bf16.mxu0 0
    %2507 = vmatpush1.bf16.xpose.msra.mxu0 0
    %2508 = vmatprep.subr.bf16.mxu0 0
    %2509 = vmatpush1.bf16.xpose.msra.mxu0 0
    %2510 = vmatprep.subr.bf16.mxu0 0
    %2511 = vmatpush1.bf16.xpose.msra.mxu0 0
    %2512 = vmatprep.subr.bf16.mxu0 0
    %2513 = vmatpush1.bf16.xpose.msra.mxu0 0
    %2514 = vmatprep.subr.bf16.mxu0 0
    %2515 = vmatpush1.bf16.xpose.msra.mxu0 0
    %2516 = vmatprep.subr.bf16.mxu0 0
    %2517 = vmatpush1.bf16.xpose.msra.mxu0 0
    %2518 = vmatprep.subr.bf16.mxu0 0
    %2519 = vmatpush1.bf16.xpose.msra.mxu0 0
    %2520 = vmatprep.mubr.bf16.mxu0 0
    %2521 = vmatmul.mubr.bf16.gmra.mrb[0].mxu0 %v2483
    %v2522 = vpop.f32.mrb[0].mxu0
    %v2523 = vadd.f32 %v2267, %v2522
    %v2524 = vpop.f32.mrb[0].mxu0
    %v2525 = vpop.f32.mrb[0].mxu0
    %v2526 = vadd.f32 %v2268, %v2525
    %v2527 = vpop.f32.mrb[0].mxu0
    %2528 = vdwg.mxu0
    %2530 = vrot.lane.b32.xlu0 %v2263, 112
    %v2531 = vpop.permute.xlu0 %2530
    %2532 = vrot.lane.b32.xlu0 %v2263, 80
    %v2533 = vpop.permute.xlu0 %2532
    %v2535 = vsel %vm280, %v2531, 0
    %v2538 = vsel %vm280, %v2533, 0
    %2540 = vmatprep.subr.bf16.mxu0 0
    %2541 = vmatpush1.bf16.xpose.msra.mxu0 %v2538
    %2542 = vmatprep.subr.bf16.mxu0 0
    %2543 = vmatpush1.bf16.xpose.msra.mxu0 0
    %2544 = vmatprep.subr.bf16.mxu0 0
    %2545 = vmatpush1.bf16.xpose.msra.mxu0 0
    %2546 = vmatprep.subr.bf16.mxu0 0
    %2547 = vmatpush1.bf16.xpose.msra.mxu0 0
    %2548 = vmatprep.subr.bf16.mxu0 0
    %2549 = vmatpush1.bf16.xpose.msra.mxu0 0
    %2550 = vmatprep.subr.bf16.mxu0 0
    %2551 = vmatpush1.bf16.xpose.msra.mxu0 0
    %2552 = vmatprep.subr.bf16.mxu0 0
    %2553 = vmatpush1.bf16.xpose.msra.mxu0 0
    %2554 = vmatprep.subr.bf16.mxu0 0
    %2555 = vmatpush1.bf16.xpose.msra.mxu0 0
    %2556 = vmatprep.subr.bf16.mxu0 0
    %2557 = vmatpush1.bf16.xpose.msra.mxu0 0
    %2558 = vmatprep.subr.bf16.mxu0 0
    %2559 = vmatpush1.bf16.xpose.msra.mxu0 0
    %2560 = vmatprep.subr.bf16.mxu0 0
    %2561 = vmatpush1.bf16.xpose.msra.mxu0 0
    %2562 = vmatprep.subr.bf16.mxu0 0
    %2563 = vmatpush1.bf16.xpose.msra.mxu0 0
    %2564 = vmatprep.subr.bf16.mxu0 0
    %2565 = vmatpush1.bf16.xpose.msra.mxu0 0
    %2566 = vmatprep.subr.bf16.mxu0 0
    %2567 = vmatpush1.bf16.xpose.msra.mxu0 0
    %2568 = vmatprep.subr.bf16.mxu0 0
    %2569 = vmatpush1.bf16.xpose.msra.mxu0 0
    %2570 = vmatprep.subr.bf16.mxu0 0
    %2571 = vmatpush1.bf16.xpose.msra.mxu0 0
    %2572 = vmatprep.mubr.bf16.mxu0 0
    %2573 = vmatmul.mubr.bf16.gmra.mrb[0].mxu0 %v2535
    %v2574 = vpop.f32.mrb[0].mxu0
    %v2575 = vadd.f32 %v2267, %v2574
    %v2576 = vpop.f32.mrb[0].mxu0
    %v2577 = vpop.f32.mrb[0].mxu0
    %v2578 = vadd.f32 %v2268, %v2577
    %v2579 = vpop.f32.mrb[0].mxu0
    %2580 = vdwg.mxu0
    %2582 = vrot.lane.b32.xlu0 %v2264, 112
    %v2583 = vpop.permute.xlu0 %2582
    %2584 = vrot.lane.b32.xlu0 %v2264, 80
    %v2585 = vpop.permute.xlu0 %2584
    %v2587 = vsel %vm280, %v2583, 0
    %v2590 = vsel %vm280, %v2585, 0
    %2592 = vmatprep.subr.bf16.mxu0 0
    %2593 = vmatpush1.bf16.xpose.msra.mxu0 %v2590
    %2594 = vmatprep.subr.bf16.mxu0 0
    %2595 = vmatpush1.bf16.xpose.msra.mxu0 0
    %2596 = vmatprep.subr.bf16.mxu0 0
    %2597 = vmatpush1.bf16.xpose.msra.mxu0 0
    %2598 = vmatprep.subr.bf16.mxu0 0
    %2599 = vmatpush1.bf16.xpose.msra.mxu0 0
    %2600 = vmatprep.subr.bf16.mxu0 0
    %2601 = vmatpush1.bf16.xpose.msra.mxu0 0
    %2602 = vmatprep.subr.bf16.mxu0 0
    %2603 = vmatpush1.bf16.xpose.msra.mxu0 0
    %2604 = vmatprep.subr.bf16.mxu0 0
    %2605 = vmatpush1.bf16.xpose.msra.mxu0 0
    %2606 = vmatprep.subr.bf16.mxu0 0
    %2607 = vmatpush1.bf16.xpose.msra.mxu0 0
    %2608 = vmatprep.subr.bf16.mxu0 0
    %2609 = vmatpush1.bf16.xpose.msra.mxu0 0
    %2610 = vmatprep.subr.bf16.mxu0 0
    %2611 = vmatpush1.bf16.xpose.msra.mxu0 0
    %2612 = vmatprep.subr.bf16.mxu0 0
    %2613 = vmatpush1.bf16.xpose.msra.mxu0 0
    %2614 = vmatprep.subr.bf16.mxu0 0
    %2615 = vmatpush1.bf16.xpose.msra.mxu0 0
    %2616 = vmatprep.subr.bf16.mxu0 0
    %2617 = vmatpush1.bf16.xpose.msra.mxu0 0
    %2618 = vmatprep.subr.bf16.mxu0 0
    %2619 = vmatpush1.bf16.xpose.msra.mxu0 0
    %2620 = vmatprep.subr.bf16.mxu0 0
    %2621 = vmatpush1.bf16.xpose.msra.mxu0 0
    %2622 = vmatprep.subr.bf16.mxu0 0
    %2623 = vmatpush1.bf16.xpose.msra.mxu0 0
    %2624 = vmatprep.mubr.bf16.mxu0 0
    %2625 = vmatmul.mubr.bf16.gmra.mrb[0].mxu0 %v2587
    %v2626 = vpop.f32.mrb[0].mxu0
    %v2627 = vadd.f32 %v2267, %v2626
    %v2628 = vpop.f32.mrb[0].mxu0
    %v2629 = vpop.f32.mrb[0].mxu0
    %v2630 = vadd.f32 %v2268, %v2629
    %v2631 = vpop.f32.mrb[0].mxu0
    %2632 = vdwg.mxu0
    %2634 = vrot.lane.b32.xlu0 %v2265, 112
    %v2635 = vpop.permute.xlu0 %2634
    %2636 = vrot.lane.b32.xlu0 %v2265, 80
    %v2637 = vpop.permute.xlu0 %2636
    %v2639 = vsel %vm280, %v2635, 0
    %v2642 = vsel %vm280, %v2637, 0
    %2644 = vmatprep.subr.bf16.mxu0 0
    %2645 = vmatpush1.bf16.xpose.msra.mxu0 %v2642
    %2646 = vmatprep.subr.bf16.mxu0 0
    %2647 = vmatpush1.bf16.xpose.msra.mxu0 0
    %2648 = vmatprep.subr.bf16.mxu0 0
    %2649 = vmatpush1.bf16.xpose.msra.mxu0 0
    %2650 = vmatprep.subr.bf16.mxu0 0
    %2651 = vmatpush1.bf16.xpose.msra.mxu0 0
    %2652 = vmatprep.subr.bf16.mxu0 0
    %2653 = vmatpush1.bf16.xpose.msra.mxu0 0
    %2654 = vmatprep.subr.bf16.mxu0 0
    %2655 = vmatpush1.bf16.xpose.msra.mxu0 0
    %2656 = vmatprep.subr.bf16.mxu0 0
    %2657 = vmatpush1.bf16.xpose.msra.mxu0 0
    %2658 = vmatprep.subr.bf16.mxu0 0
    %2659 = vmatpush1.bf16.xpose.msra.mxu0 0
    %2660 = vmatprep.subr.bf16.mxu0 0
    %2661 = vmatpush1.bf16.xpose.msra.mxu0 0
    %2662 = vmatprep.subr.bf16.mxu0 0
    %2663 = vmatpush1.bf16.xpose.msra.mxu0 0
    %2664 = vmatprep.subr.bf16.mxu0 0
    %2665 = vmatpush1.bf16.xpose.msra.mxu0 0
    %2666 = vmatprep.subr.bf16.mxu0 0
    %2667 = vmatpush1.bf16.xpose.msra.mxu0 0
    %2668 = vmatprep.subr.bf16.mxu0 0
    %2669 = vmatpush1.bf16.xpose.msra.mxu0 0
    %2670 = vmatprep.subr.bf16.mxu0 0
    %2671 = vmatpush1.bf16.xpose.msra.mxu0 0
    %2672 = vmatprep.subr.bf16.mxu0 0
    %2673 = vmatpush1.bf16.xpose.msra.mxu0 0
    %2674 = vmatprep.subr.bf16.mxu0 0
    %2675 = vmatpush1.bf16.xpose.msra.mxu0 0
    %2676 = vmatprep.mubr.bf16.mxu0 0
    %2677 = vmatmul.mubr.bf16.gmra.mrb[0].mxu0 %v2639
    %v2678 = vpop.f32.mrb[0].mxu0
    %v2679 = vadd.f32 %v2267, %v2678
    %v2680 = vpop.f32.mrb[0].mxu0
    %v2681 = vpop.f32.mrb[0].mxu0
    %v2682 = vadd.f32 %v2268, %v2681
    %v2683 = vpop.f32.mrb[0].mxu0
    %2684 = vdwg.mxu0
    %v2685 = vadd.f32 %v2315, %v259
    %v2686 = vadd.f32 %v2318, %v260
    %v2687 = vadd.f32 %v2367, %v261
    %v2688 = vadd.f32 %v2370, %v262
    %v2689 = vadd.f32 %v2419, %v263
    %v2690 = vadd.f32 %v2422, %v264
    %v2691 = vadd.f32 %v2471, %v265
    %v2692 = vadd.f32 %v2474, %v266
    %v2693 = vadd.f32 %v2523, %v259
    %v2694 = vadd.f32 %v2526, %v260
    %v2695 = vadd.f32 %v2575, %v261
    %v2696 = vadd.f32 %v2578, %v262
    %v2697 = vadd.f32 %v2627, %v263
    %v2698 = vadd.f32 %v2630, %v264
    %v2699 = vadd.f32 %v2679, %v265
    %v2700 = vadd.f32 %v2682, %v266
    %v2701 = vsel %vm694, %v2685, -inf
    %2702 = vmax.xlane.f32.xlu0 %v2701
    %v2703 = vpop.xlane.xlu0 %2702
    %v2704 = vsel %vm694, %v2686, -inf
    %2705 = vmax.xlane.f32.xlu0 %v2704
    %v2706 = vpop.xlane.xlu0 %2705
    %v2707 = vsel %vm694, %v2687, -inf
    %2708 = vmax.xlane.f32.xlu0 %v2707
    %v2709 = vpop.xlane.xlu0 %2708
    %v2710 = vsel %vm694, %v2688, -inf
    %2711 = vmax.xlane.f32.xlu0 %v2710
    %v2712 = vpop.xlane.xlu0 %2711
    %v2713 = vsel %vm694, %v2689, -inf
    %2714 = vmax.xlane.f32.xlu0 %v2713
    %v2715 = vpop.xlane.xlu0 %2714
    %v2716 = vsel %vm694, %v2690, -inf
    %2717 = vmax.xlane.f32.xlu0 %v2716
    %v2718 = vpop.xlane.xlu0 %2717
    %v2719 = vsel %vm694, %v2691, -inf
    %2720 = vmax.xlane.f32.xlu0 %v2719
    %v2721 = vpop.xlane.xlu0 %2720
    %v2722 = vsel %vm694, %v2692, -inf
    %2723 = vmax.xlane.f32.xlu0 %v2722
    %v2724 = vpop.xlane.xlu0 %2723
    %v2725 = vsel %vm694, %v2693, -inf
    %2726 = vmax.xlane.f32.xlu0 %v2725
    %v2727 = vpop.xlane.xlu0 %2726
    %v2728 = vsel %vm694, %v2694, -inf
    %2729 = vmax.xlane.f32.xlu0 %v2728
    %v2730 = vpop.xlane.xlu0 %2729
    %v2731 = vsel %vm694, %v2695, -inf
    %2732 = vmax.xlane.f32.xlu0 %v2731
    %v2733 = vpop.xlane.xlu0 %2732
    %v2734 = vsel %vm694, %v2696, -inf
    %2735 = vmax.xlane.f32.xlu0 %v2734
    %v2736 = vpop.xlane.xlu0 %2735
    %v2737 = vsel %vm694, %v2697, -inf
    %2738 = vmax.xlane.f32.xlu0 %v2737
    %v2739 = vpop.xlane.xlu0 %2738
    %v2740 = vsel %vm694, %v2698, -inf
    %2741 = vmax.xlane.f32.xlu0 %v2740
    %v2742 = vpop.xlane.xlu0 %2741
    %v2743 = vsel %vm694, %v2699, -inf
    %2744 = vmax.xlane.f32.xlu0 %v2743
    %v2745 = vpop.xlane.xlu0 %2744
    %v2746 = vsel %vm694, %v2700, -inf
    %2747 = vmax.xlane.f32.xlu0 %v2746
    %v2748 = vpop.xlane.xlu0 %2747
    %v2749 = vsub.f32 %v2685, %v2703
    %v2750 = vsub.f32 %v2686, %v2706
    %v2751 = vsub.f32 %v2687, %v2709
    %v2752 = vsub.f32 %v2688, %v2712
    %v2753 = vsub.f32 %v2689, %v2715
    %v2754 = vsub.f32 %v2690, %v2718
    %v2755 = vsub.f32 %v2691, %v2721
    %v2756 = vsub.f32 %v2692, %v2724
    %v2757 = vsub.f32 %v2693, %v2727
    %v2758 = vsub.f32 %v2694, %v2730
    %v2759 = vsub.f32 %v2695, %v2733
    %v2760 = vsub.f32 %v2696, %v2736
    %v2761 = vsub.f32 %v2697, %v2739
    %v2762 = vsub.f32 %v2698, %v2742
    %v2763 = vsub.f32 %v2699, %v2745
    %v2764 = vsub.f32 %v2700, %v2748
    %v2765 = vmul.f32 %v2749, 1.442695
    %v2766 = vpow.pop %v2765
    %v2767 = vmul.f32 %v2750, 1.442695
    %v2768 = vpow.pop %v2767
    %v2769 = vmul.f32 %v2751, 1.442695
    %v2770 = vpow.pop %v2769
    %v2771 = vmul.f32 %v2752, 1.442695
    %v2772 = vpow.pop %v2771
    %v2773 = vmul.f32 %v2753, 1.442695
    %v2774 = vpow.pop %v2773
    %v2775 = vmul.f32 %v2754, 1.442695
    %v2776 = vpow.pop %v2775
    %v2777 = vmul.f32 %v2755, 1.442695
    %v2778 = vpow.pop %v2777
    %v2779 = vmul.f32 %v2756, 1.442695
    %v2780 = vpow.pop %v2779
    %v2781 = vmul.f32 %v2757, 1.442695
    %v2782 = vpow.pop %v2781
    %v2783 = vmul.f32 %v2758, 1.442695
    %v2784 = vpow.pop %v2783
    %v2785 = vmul.f32 %v2759, 1.442695
    %v2786 = vpow.pop %v2785
    %v2787 = vmul.f32 %v2760, 1.442695
    %v2788 = vpow.pop %v2787
    %v2789 = vmul.f32 %v2761, 1.442695
    %v2790 = vpow.pop %v2789
    %v2791 = vmul.f32 %v2762, 1.442695
    %v2792 = vpow.pop %v2791
    %v2793 = vmul.f32 %v2763, 1.442695
    %v2794 = vpow.pop %v2793
    %v2795 = vmul.f32 %v2764, 1.442695
    %v2796 = vpow.pop %v2795
    %v2797 = vsel %vm694, %v2766, 0.0
    %2798 = vadd.xlane.f32.xlu0 %v2797
    %v2799 = vpop.xlane.xlu0 %2798
    %v2800 = vsel %vm694, %v2768, 0.0
    %2801 = vadd.xlane.f32.xlu0 %v2800
    %v2802 = vpop.xlane.xlu0 %2801
    %v2803 = vsel %vm694, %v2770, 0.0
    %2804 = vadd.xlane.f32.xlu0 %v2803
    %v2805 = vpop.xlane.xlu0 %2804
    %v2806 = vsel %vm694, %v2772, 0.0
    %2807 = vadd.xlane.f32.xlu0 %v2806
    %v2808 = vpop.xlane.xlu0 %2807
    %v2809 = vsel %vm694, %v2774, 0.0
    %2810 = vadd.xlane.f32.xlu0 %v2809
    %v2811 = vpop.xlane.xlu0 %2810
    %v2812 = vsel %vm694, %v2776, 0.0
    %2813 = vadd.xlane.f32.xlu0 %v2812
    %v2814 = vpop.xlane.xlu0 %2813
    %v2815 = vsel %vm694, %v2778, 0.0
    %2816 = vadd.xlane.f32.xlu0 %v2815
    %v2817 = vpop.xlane.xlu0 %2816
    %v2818 = vsel %vm694, %v2780, 0.0
    %2819 = vadd.xlane.f32.xlu0 %v2818
    %v2820 = vpop.xlane.xlu0 %2819
    %v2821 = vsel %vm694, %v2782, 0.0
    %2822 = vadd.xlane.f32.xlu0 %v2821
    %v2823 = vpop.xlane.xlu0 %2822
    %v2824 = vsel %vm694, %v2784, 0.0
    %2825 = vadd.xlane.f32.xlu0 %v2824
    %v2826 = vpop.xlane.xlu0 %2825
    %v2827 = vsel %vm694, %v2786, 0.0
    %2828 = vadd.xlane.f32.xlu0 %v2827
    %v2829 = vpop.xlane.xlu0 %2828
    %v2830 = vsel %vm694, %v2788, 0.0
    %2831 = vadd.xlane.f32.xlu0 %v2830
    %v2832 = vpop.xlane.xlu0 %2831
    %v2833 = vsel %vm694, %v2790, 0.0
    %2834 = vadd.xlane.f32.xlu0 %v2833
    %v2835 = vpop.xlane.xlu0 %2834
    %v2836 = vsel %vm694, %v2792, 0.0
    %2837 = vadd.xlane.f32.xlu0 %v2836
    %v2838 = vpop.xlane.xlu0 %2837
    %v2839 = vsel %vm694, %v2794, 0.0
    %2840 = vadd.xlane.f32.xlu0 %v2839
    %v2841 = vpop.xlane.xlu0 %2840
    %v2842 = vsel %vm694, %v2796, 0.0
    %2843 = vadd.xlane.f32.xlu0 %v2842
    %v2844 = vpop.xlane.xlu0 %2843
    %v2845 = vrcp.pop %v2799
    %v2846 = vrcp.pop %v2802
    %v2847 = vrcp.pop %v2805
    %v2848 = vrcp.pop %v2808
    %v2849 = vrcp.pop %v2811
    %v2850 = vrcp.pop %v2814
    %v2851 = vrcp.pop %v2817
    %v2852 = vrcp.pop %v2820
    %v2853 = vrcp.pop %v2823
    %v2854 = vrcp.pop %v2826
    %v2855 = vrcp.pop %v2829
    %v2856 = vrcp.pop %v2832
    %v2857 = vrcp.pop %v2835
    %v2858 = vrcp.pop %v2838
    %v2859 = vrcp.pop %v2841
    %v2860 = vrcp.pop %v2844
    %v2861 = vmul.f32 %v2766, %v2845
    %v2862 = vmul.f32 %v2768, %v2846
    %v2863 = vmul.f32 %v2770, %v2847
    %v2864 = vmul.f32 %v2772, %v2848
    %v2865 = vmul.f32 %v2774, %v2849
    %v2866 = vmul.f32 %v2776, %v2850
    %v2867 = vmul.f32 %v2778, %v2851
    %v2868 = vmul.f32 %v2780, %v2852
    %v2869 = vmul.f32 %v2782, %v2853
    %v2870 = vmul.f32 %v2784, %v2854
    %v2871 = vmul.f32 %v2786, %v2855
    %v2872 = vmul.f32 %v2788, %v2856
    %v2873 = vmul.f32 %v2790, %v2857
    %v2874 = vmul.f32 %v2792, %v2858
    %v2875 = vmul.f32 %v2794, %v2859
    %v2876 = vmul.f32 %v2796, %v2860
    %v2877 = vpack.c.bf16 %v2862, %v2861
    %v2878 = vpack.c.bf16 %v2864, %v2863
    %v2879 = vpack.c.bf16 %v2866, %v2865
    %v2880 = vpack.c.bf16 %v2868, %v2867
    %v2881 = vpack.c.bf16 %v2870, %v2869
    %v2882 = vpack.c.bf16 %v2872, %v2871
    %v2883 = vpack.c.bf16 %v2874, %v2873
    %v2884 = vpack.c.bf16 %v2876, %v2875
    %2885 = vrot.lane.b32.xlu0 %v2258, 48
    %v2886 = vpop.permute.xlu0 %2885
    %v2889 = vsel %vm694, %v2877, 0
    %2891 = vmatprep.subr.bf16.mxu0 0
    %2892 = vmatpush1.bf16.msra.mxu0 %v2886
    %2893 = vmatprep.subr.bf16.mxu0 0
    %2894 = vmatpush1.bf16.msra.mxu0 0
    %2895 = vmatprep.subr.bf16.mxu0 0
    %2896 = vmatpush1.bf16.msra.mxu0 0
    %2897 = vmatprep.subr.bf16.mxu0 0
    %2898 = vmatpush1.bf16.msra.mxu0 0
    %2899 = vmatprep.subr.bf16.mxu0 0
    %2900 = vmatpush1.bf16.msra.mxu0 0
    %2901 = vmatprep.subr.bf16.mxu0 0
    %2902 = vmatpush1.bf16.msra.mxu0 0
    %2903 = vmatprep.subr.bf16.mxu0 0
    %2904 = vmatpush1.bf16.msra.mxu0 0
    %2905 = vmatprep.subr.bf16.mxu0 0
    %2906 = vmatpush1.bf16.msra.mxu0 0
    %2907 = vmatprep.subr.bf16.mxu0 0
    %2908 = vmatpush1.bf16.msra.mxu0 0
    %2909 = vmatprep.subr.bf16.mxu0 0
    %2910 = vmatpush1.bf16.msra.mxu0 0
    %2911 = vmatprep.subr.bf16.mxu0 0
    %2912 = vmatpush1.bf16.msra.mxu0 0
    %2913 = vmatprep.subr.bf16.mxu0 0
    %2914 = vmatpush1.bf16.msra.mxu0 0
    %2915 = vmatprep.subr.bf16.mxu0 0
    %2916 = vmatpush1.bf16.msra.mxu0 0
    %2917 = vmatprep.subr.bf16.mxu0 0
    %2918 = vmatpush1.bf16.msra.mxu0 0
    %2919 = vmatprep.subr.bf16.mxu0 0
    %2920 = vmatpush1.bf16.msra.mxu0 0
    %2921 = vmatprep.subr.bf16.mxu0 0
    %2922 = vmatpush1.bf16.msra.mxu0 0
    %2923 = vmatprep.mubr.bf16.mxu0 0
    %2924 = vmatmul.mubr.bf16.gmra.mrb[0].mxu0 %v2889
    %v2925 = vpop.f32.mrb[0].mxu0
    %v2926 = vadd.f32 0.0, %v2925
    %v2927 = vpop.f32.mrb[0].mxu0
    %v2928 = vpop.f32.mrb[0].mxu0
    %v2929 = vadd.f32 0.0, %v2928
    %v2930 = vpop.f32.mrb[0].mxu0
    %2931 = vdwg.mxu0
    %2932 = vrot.lane.b32.xlu0 %v2259, 48
    %v2933 = vpop.permute.xlu0 %2932
    %v2936 = vsel %vm694, %v2878, 0
    %2938 = vmatprep.subr.bf16.mxu0 0
    %2939 = vmatpush1.bf16.msra.mxu0 %v2933
    %2940 = vmatprep.subr.bf16.mxu0 0
    %2941 = vmatpush1.bf16.msra.mxu0 0
    %2942 = vmatprep.subr.bf16.mxu0 0
    %2943 = vmatpush1.bf16.msra.mxu0 0
    %2944 = vmatprep.subr.bf16.mxu0 0
    %2945 = vmatpush1.bf16.msra.mxu0 0
    %2946 = vmatprep.subr.bf16.mxu0 0
    %2947 = vmatpush1.bf16.msra.mxu0 0
    %2948 = vmatprep.subr.bf16.mxu0 0
    %2949 = vmatpush1.bf16.msra.mxu0 0
    %2950 = vmatprep.subr.bf16.mxu0 0
    %2951 = vmatpush1.bf16.msra.mxu0 0
    %2952 = vmatprep.subr.bf16.mxu0 0
    %2953 = vmatpush1.bf16.msra.mxu0 0
    %2954 = vmatprep.subr.bf16.mxu0 0
    %2955 = vmatpush1.bf16.msra.mxu0 0
    %2956 = vmatprep.subr.bf16.mxu0 0
    %2957 = vmatpush1.bf16.msra.mxu0 0
    %2958 = vmatprep.subr.bf16.mxu0 0
    %2959 = vmatpush1.bf16.msra.mxu0 0
    %2960 = vmatprep.subr.bf16.mxu0 0
    %2961 = vmatpush1.bf16.msra.mxu0 0
    %2962 = vmatprep.subr.bf16.mxu0 0
    %2963 = vmatpush1.bf16.msra.mxu0 0
    %2964 = vmatprep.subr.bf16.mxu0 0
    %2965 = vmatpush1.bf16.msra.mxu0 0
    %2966 = vmatprep.subr.bf16.mxu0 0
    %2967 = vmatpush1.bf16.msra.mxu0 0
    %2968 = vmatprep.subr.bf16.mxu0 0
    %2969 = vmatpush1.bf16.msra.mxu0 0
    %2970 = vmatprep.mubr.bf16.mxu0 0
    %2971 = vmatmul.mubr.bf16.gmra.mrb[0].mxu0 %v2936
    %v2972 = vpop.f32.mrb[0].mxu0
    %v2973 = vadd.f32 0.0, %v2972
    %v2974 = vpop.f32.mrb[0].mxu0
    %v2975 = vpop.f32.mrb[0].mxu0
    %v2976 = vadd.f32 0.0, %v2975
    %v2977 = vpop.f32.mrb[0].mxu0
    %2978 = vdwg.mxu0
    %2979 = vrot.lane.b32.xlu0 %v2260, 48
    %v2980 = vpop.permute.xlu0 %2979
    %v2983 = vsel %vm694, %v2879, 0
    %2985 = vmatprep.subr.bf16.mxu0 0
    %2986 = vmatpush1.bf16.msra.mxu0 %v2980
    %2987 = vmatprep.subr.bf16.mxu0 0
    %2988 = vmatpush1.bf16.msra.mxu0 0
    %2989 = vmatprep.subr.bf16.mxu0 0
    %2990 = vmatpush1.bf16.msra.mxu0 0
    %2991 = vmatprep.subr.bf16.mxu0 0
    %2992 = vmatpush1.bf16.msra.mxu0 0
    %2993 = vmatprep.subr.bf16.mxu0 0
    %2994 = vmatpush1.bf16.msra.mxu0 0
    %2995 = vmatprep.subr.bf16.mxu0 0
    %2996 = vmatpush1.bf16.msra.mxu0 0
    %2997 = vmatprep.subr.bf16.mxu0 0
    %2998 = vmatpush1.bf16.msra.mxu0 0
    %2999 = vmatprep.subr.bf16.mxu0 0
    %3000 = vmatpush1.bf16.msra.mxu0 0
    %3001 = vmatprep.subr.bf16.mxu0 0
    %3002 = vmatpush1.bf16.msra.mxu0 0
    %3003 = vmatprep.subr.bf16.mxu0 0
    %3004 = vmatpush1.bf16.msra.mxu0 0
    %3005 = vmatprep.subr.bf16.mxu0 0
    %3006 = vmatpush1.bf16.msra.mxu0 0
    %3007 = vmatprep.subr.bf16.mxu0 0
    %3008 = vmatpush1.bf16.msra.mxu0 0
    %3009 = vmatprep.subr.bf16.mxu0 0
    %3010 = vmatpush1.bf16.msra.mxu0 0
    %3011 = vmatprep.subr.bf16.mxu0 0
    %3012 = vmatpush1.bf16.msra.mxu0 0
    %3013 = vmatprep.subr.bf16.mxu0 0
    %3014 = vmatpush1.bf16.msra.mxu0 0
    %3015 = vmatprep.subr.bf16.mxu0 0
    %3016 = vmatpush1.bf16.msra.mxu0 0
    %3017 = vmatprep.mubr.bf16.mxu0 0
    %3018 = vmatmul.mubr.bf16.gmra.mrb[0].mxu0 %v2983
    %v3019 = vpop.f32.mrb[0].mxu0
    %v3020 = vadd.f32 0.0, %v3019
    %v3021 = vpop.f32.mrb[0].mxu0
    %v3022 = vpop.f32.mrb[0].mxu0
    %v3023 = vadd.f32 0.0, %v3022
    %v3024 = vpop.f32.mrb[0].mxu0
    %3025 = vdwg.mxu0
    %3026 = vrot.lane.b32.xlu0 %v2261, 48
    %v3027 = vpop.permute.xlu0 %3026
    %v3030 = vsel %vm694, %v2880, 0
    %3032 = vmatprep.subr.bf16.mxu0 0
    %3033 = vmatpush1.bf16.msra.mxu0 %v3027
    %3034 = vmatprep.subr.bf16.mxu0 0
    %3035 = vmatpush1.bf16.msra.mxu0 0
    %3036 = vmatprep.subr.bf16.mxu0 0
    %3037 = vmatpush1.bf16.msra.mxu0 0
    %3038 = vmatprep.subr.bf16.mxu0 0
    %3039 = vmatpush1.bf16.msra.mxu0 0
    %3040 = vmatprep.subr.bf16.mxu0 0
    %3041 = vmatpush1.bf16.msra.mxu0 0
    %3042 = vmatprep.subr.bf16.mxu0 0
    %3043 = vmatpush1.bf16.msra.mxu0 0
    %3044 = vmatprep.subr.bf16.mxu0 0
    %3045 = vmatpush1.bf16.msra.mxu0 0
    %3046 = vmatprep.subr.bf16.mxu0 0
    %3047 = vmatpush1.bf16.msra.mxu0 0
    %3048 = vmatprep.subr.bf16.mxu0 0
    %3049 = vmatpush1.bf16.msra.mxu0 0
    %3050 = vmatprep.subr.bf16.mxu0 0
    %3051 = vmatpush1.bf16.msra.mxu0 0
    %3052 = vmatprep.subr.bf16.mxu0 0
    %3053 = vmatpush1.bf16.msra.mxu0 0
    %3054 = vmatprep.subr.bf16.mxu0 0
    %3055 = vmatpush1.bf16.msra.mxu0 0
    %3056 = vmatprep.subr.bf16.mxu0 0
    %3057 = vmatpush1.bf16.msra.mxu0 0
    %3058 = vmatprep.subr.bf16.mxu0 0
    %3059 = vmatpush1.bf16.msra.mxu0 0
    %3060 = vmatprep.subr.bf16.mxu0 0
    %3061 = vmatpush1.bf16.msra.mxu0 0
    %3062 = vmatprep.subr.bf16.mxu0 0
    %3063 = vmatpush1.bf16.msra.mxu0 0
    %3064 = vmatprep.mubr.bf16.mxu0 0
    %3065 = vmatmul.mubr.bf16.gmra.mrb[0].mxu0 %v3030
    %v3066 = vpop.f32.mrb[0].mxu0
    %v3067 = vadd.f32 0.0, %v3066
    %v3068 = vpop.f32.mrb[0].mxu0
    %v3069 = vpop.f32.mrb[0].mxu0
    %v3070 = vadd.f32 0.0, %v3069
    %v3071 = vpop.f32.mrb[0].mxu0
    %3072 = vdwg.mxu0
    %3073 = vrot.lane.b32.xlu0 %v2262, 48
    %v3074 = vpop.permute.xlu0 %3073
    %v3077 = vsel %vm694, %v2881, 0
    %3079 = vmatprep.subr.bf16.mxu0 0
    %3080 = vmatpush1.bf16.msra.mxu0 %v3074
    %3081 = vmatprep.subr.bf16.mxu0 0
    %3082 = vmatpush1.bf16.msra.mxu0 0
    %3083 = vmatprep.subr.bf16.mxu0 0
    %3084 = vmatpush1.bf16.msra.mxu0 0
    %3085 = vmatprep.subr.bf16.mxu0 0
    %3086 = vmatpush1.bf16.msra.mxu0 0
    %3087 = vmatprep.subr.bf16.mxu0 0
    %3088 = vmatpush1.bf16.msra.mxu0 0
    %3089 = vmatprep.subr.bf16.mxu0 0
    %3090 = vmatpush1.bf16.msra.mxu0 0
    %3091 = vmatprep.subr.bf16.mxu0 0
    %3092 = vmatpush1.bf16.msra.mxu0 0
    %3093 = vmatprep.subr.bf16.mxu0 0
    %3094 = vmatpush1.bf16.msra.mxu0 0
    %3095 = vmatprep.subr.bf16.mxu0 0
    %3096 = vmatpush1.bf16.msra.mxu0 0
    %3097 = vmatprep.subr.bf16.mxu0 0
    %3098 = vmatpush1.bf16.msra.mxu0 0
    %3099 = vmatprep.subr.bf16.mxu0 0
    %3100 = vmatpush1.bf16.msra.mxu0 0
    %3101 = vmatprep.subr.bf16.mxu0 0
    %3102 = vmatpush1.bf16.msra.mxu0 0
    %3103 = vmatprep.subr.bf16.mxu0 0
    %3104 = vmatpush1.bf16.msra.mxu0 0
    %3105 = vmatprep.subr.bf16.mxu0 0
    %3106 = vmatpush1.bf16.msra.mxu0 0
    %3107 = vmatprep.subr.bf16.mxu0 0
    %3108 = vmatpush1.bf16.msra.mxu0 0
    %3109 = vmatprep.subr.bf16.mxu0 0
    %3110 = vmatpush1.bf16.msra.mxu0 0
    %3111 = vmatprep.mubr.bf16.mxu0 0
    %3112 = vmatmul.mubr.bf16.gmra.mrb[0].mxu0 %v3077
    %v3113 = vpop.f32.mrb[0].mxu0
    %v3114 = vadd.f32 0.0, %v3113
    %v3115 = vpop.f32.mrb[0].mxu0
    %v3116 = vpop.f32.mrb[0].mxu0
    %v3117 = vadd.f32 0.0, %v3116
    %v3118 = vpop.f32.mrb[0].mxu0
    %3119 = vdwg.mxu0
    %3120 = vrot.lane.b32.xlu0 %v2263, 48
    %v3121 = vpop.permute.xlu0 %3120
    %v3124 = vsel %vm694, %v2882, 0
    %3126 = vmatprep.subr.bf16.mxu0 0
    %3127 = vmatpush1.bf16.msra.mxu0 %v3121
    %3128 = vmatprep.subr.bf16.mxu0 0
    %3129 = vmatpush1.bf16.msra.mxu0 0
    %3130 = vmatprep.subr.bf16.mxu0 0
    %3131 = vmatpush1.bf16.msra.mxu0 0
    %3132 = vmatprep.subr.bf16.mxu0 0
    %3133 = vmatpush1.bf16.msra.mxu0 0
    %3134 = vmatprep.subr.bf16.mxu0 0
    %3135 = vmatpush1.bf16.msra.mxu0 0
    %3136 = vmatprep.subr.bf16.mxu0 0
    %3137 = vmatpush1.bf16.msra.mxu0 0
    %3138 = vmatprep.subr.bf16.mxu0 0
    %3139 = vmatpush1.bf16.msra.mxu0 0
    %3140 = vmatprep.subr.bf16.mxu0 0
    %3141 = vmatpush1.bf16.msra.mxu0 0
    %3142 = vmatprep.subr.bf16.mxu0 0
    %3143 = vmatpush1.bf16.msra.mxu0 0
    %3144 = vmatprep.subr.bf16.mxu0 0
    %3145 = vmatpush1.bf16.msra.mxu0 0
    %3146 = vmatprep.subr.bf16.mxu0 0
    %3147 = vmatpush1.bf16.msra.mxu0 0
    %3148 = vmatprep.subr.bf16.mxu0 0
    %3149 = vmatpush1.bf16.msra.mxu0 0
    %3150 = vmatprep.subr.bf16.mxu0 0
    %3151 = vmatpush1.bf16.msra.mxu0 0
    %3152 = vmatprep.subr.bf16.mxu0 0
    %3153 = vmatpush1.bf16.msra.mxu0 0
    %3154 = vmatprep.subr.bf16.mxu0 0
    %3155 = vmatpush1.bf16.msra.mxu0 0
    %3156 = vmatprep.subr.bf16.mxu0 0
    %3157 = vmatpush1.bf16.msra.mxu0 0
    %3158 = vmatprep.mubr.bf16.mxu0 0
    %3159 = vmatmul.mubr.bf16.gmra.mrb[0].mxu0 %v3124
    %v3160 = vpop.f32.mrb[0].mxu0
    %v3161 = vadd.f32 0.0, %v3160
    %v3162 = vpop.f32.mrb[0].mxu0
    %v3163 = vpop.f32.mrb[0].mxu0
    %v3164 = vadd.f32 0.0, %v3163
    %v3165 = vpop.f32.mrb[0].mxu0
    %3166 = vdwg.mxu0
    %3167 = vrot.lane.b32.xlu0 %v2264, 48
    %v3168 = vpop.permute.xlu0 %3167
    %v3171 = vsel %vm694, %v2883, 0
    %3173 = vmatprep.subr.bf16.mxu0 0
    %3174 = vmatpush1.bf16.msra.mxu0 %v3168
    %3175 = vmatprep.subr.bf16.mxu0 0
    %3176 = vmatpush1.bf16.msra.mxu0 0
    %3177 = vmatprep.subr.bf16.mxu0 0
    %3178 = vmatpush1.bf16.msra.mxu0 0
    %3179 = vmatprep.subr.bf16.mxu0 0
    %3180 = vmatpush1.bf16.msra.mxu0 0
    %3181 = vmatprep.subr.bf16.mxu0 0
    %3182 = vmatpush1.bf16.msra.mxu0 0
    %3183 = vmatprep.subr.bf16.mxu0 0
    %3184 = vmatpush1.bf16.msra.mxu0 0
    %3185 = vmatprep.subr.bf16.mxu0 0
    %3186 = vmatpush1.bf16.msra.mxu0 0
    %3187 = vmatprep.subr.bf16.mxu0 0
    %3188 = vmatpush1.bf16.msra.mxu0 0
    %3189 = vmatprep.subr.bf16.mxu0 0
    %3190 = vmatpush1.bf16.msra.mxu0 0
    %3191 = vmatprep.subr.bf16.mxu0 0
    %3192 = vmatpush1.bf16.msra.mxu0 0
    %3193 = vmatprep.subr.bf16.mxu0 0
    %3194 = vmatpush1.bf16.msra.mxu0 0
    %3195 = vmatprep.subr.bf16.mxu0 0
    %3196 = vmatpush1.bf16.msra.mxu0 0
    %3197 = vmatprep.subr.bf16.mxu0 0
    %3198 = vmatpush1.bf16.msra.mxu0 0
    %3199 = vmatprep.subr.bf16.mxu0 0
    %3200 = vmatpush1.bf16.msra.mxu0 0
    %3201 = vmatprep.subr.bf16.mxu0 0
    %3202 = vmatpush1.bf16.msra.mxu0 0
    %3203 = vmatprep.subr.bf16.mxu0 0
    %3204 = vmatpush1.bf16.msra.mxu0 0
    %3205 = vmatprep.mubr.bf16.mxu0 0
    %3206 = vmatmul.mubr.bf16.gmra.mrb[0].mxu0 %v3171
    %v3207 = vpop.f32.mrb[0].mxu0
    %v3208 = vadd.f32 0.0, %v3207
    %v3209 = vpop.f32.mrb[0].mxu0
    %v3210 = vpop.f32.mrb[0].mxu0
    %v3211 = vadd.f32 0.0, %v3210
    %v3212 = vpop.f32.mrb[0].mxu0
    %3213 = vdwg.mxu0
    %3214 = vrot.lane.b32.xlu0 %v2265, 48
    %v3215 = vpop.permute.xlu0 %3214
    %v3218 = vsel %vm694, %v2884, 0
    %3220 = vmatprep.subr.bf16.mxu0 0
    %3221 = vmatpush1.bf16.msra.mxu0 %v3215
    %3222 = vmatprep.subr.bf16.mxu0 0
    %3223 = vmatpush1.bf16.msra.mxu0 0
    %3224 = vmatprep.subr.bf16.mxu0 0
    %3225 = vmatpush1.bf16.msra.mxu0 0
    %3226 = vmatprep.subr.bf16.mxu0 0
    %3227 = vmatpush1.bf16.msra.mxu0 0
    %3228 = vmatprep.subr.bf16.mxu0 0
    %3229 = vmatpush1.bf16.msra.mxu0 0
    %3230 = vmatprep.subr.bf16.mxu0 0
    %3231 = vmatpush1.bf16.msra.mxu0 0
    %3232 = vmatprep.subr.bf16.mxu0 0
    %3233 = vmatpush1.bf16.msra.mxu0 0
    %3234 = vmatprep.subr.bf16.mxu0 0
    %3235 = vmatpush1.bf16.msra.mxu0 0
    %3236 = vmatprep.subr.bf16.mxu0 0
    %3237 = vmatpush1.bf16.msra.mxu0 0
    %3238 = vmatprep.subr.bf16.mxu0 0
    %3239 = vmatpush1.bf16.msra.mxu0 0
    %3240 = vmatprep.subr.bf16.mxu0 0
    %3241 = vmatpush1.bf16.msra.mxu0 0
    %3242 = vmatprep.subr.bf16.mxu0 0
    %3243 = vmatpush1.bf16.msra.mxu0 0
    %3244 = vmatprep.subr.bf16.mxu0 0
    %3245 = vmatpush1.bf16.msra.mxu0 0
    %3246 = vmatprep.subr.bf16.mxu0 0
    %3247 = vmatpush1.bf16.msra.mxu0 0
    %3248 = vmatprep.subr.bf16.mxu0 0
    %3249 = vmatpush1.bf16.msra.mxu0 0
    %3250 = vmatprep.subr.bf16.mxu0 0
    %3251 = vmatpush1.bf16.msra.mxu0 0
    %3252 = vmatprep.mubr.bf16.mxu0 0
    %3253 = vmatmul.mubr.bf16.gmra.mrb[0].mxu0 %v3218
    %v3254 = vpop.f32.mrb[0].mxu0
    %v3255 = vadd.f32 0.0, %v3254
    %v3256 = vpop.f32.mrb[0].mxu0
    %v3257 = vpop.f32.mrb[0].mxu0
    %v3258 = vadd.f32 0.0, %v3257
    %v3259 = vpop.f32.mrb[0].mxu0
    %3260 = vdwg.mxu0
    %v3261 = vld [vmem:[#allocation2] sm:$0xff]
    %v3262 = vld [vmem:[#allocation2 + $0x8] sm:$0xff]
    %v3263 = vld [vmem:[#allocation2 + $0x10] sm:$0xff]
    %v3264 = vld [vmem:[#allocation2 + $0x18] sm:$0xff]
    %v3265 = vld [vmem:[#allocation2 + $0x20] sm:$0xff]
    %v3266 = vld [vmem:[#allocation2 + $0x28] sm:$0xff]
    %v3267 = vld [vmem:[#allocation2 + $0x30] sm:$0xff]
    %v3268 = vld [vmem:[#allocation2 + $0x38] sm:$0xff]
    %s3269 = scalar_lea.vmem %s3, 48
    %v3270 = vld [vmem:[%s3269] sm:$0xff]
    %v3271 = vld [vmem:[%s3269 + $0x8] sm:$0xff]
    %3273 = vrot.lane.b32.xlu0 %v3261, 104
    %v3274 = vpop.permute.xlu0 %3273
    %3275 = vrot.lane.b32.xlu0 %v3261, 72
    %v3276 = vpop.permute.xlu0 %3275
    %v3278 = vsel %vm280, %v3274, 0
    %v3281 = vsel %vm280, %v3276, 0
    %3283 = vmatprep.subr.bf16.mxu0 0
    %3284 = vmatpush1.bf16.xpose.msra.mxu0 %v3281
    %3285 = vmatprep.subr.bf16.mxu0 0
    %3286 = vmatpush1.bf16.xpose.msra.mxu0 0
    %3287 = vmatprep.subr.bf16.mxu0 0
    %3288 = vmatpush1.bf16.xpose.msra.mxu0 0
    %3289 = vmatprep.subr.bf16.mxu0 0
    %3290 = vmatpush1.bf16.xpose.msra.mxu0 0
    %3291 = vmatprep.subr.bf16.mxu0 0
    %3292 = vmatpush1.bf16.xpose.msra.mxu0 0
    %3293 = vmatprep.subr.bf16.mxu0 0
    %3294 = vmatpush1.bf16.xpose.msra.mxu0 0
    %3295 = vmatprep.subr.bf16.mxu0 0
    %3296 = vmatpush1.bf16.xpose.msra.mxu0 0
    %3297 = vmatprep.subr.bf16.mxu0 0
    %3298 = vmatpush1.bf16.xpose.msra.mxu0 0
    %3299 = vmatprep.subr.bf16.mxu0 0
    %3300 = vmatpush1.bf16.xpose.msra.mxu0 0
    %3301 = vmatprep.subr.bf16.mxu0 0
    %3302 = vmatpush1.bf16.xpose.msra.mxu0 0
    %3303 = vmatprep.subr.bf16.mxu0 0
    %3304 = vmatpush1.bf16.xpose.msra.mxu0 0
    %3305 = vmatprep.subr.bf16.mxu0 0
    %3306 = vmatpush1.bf16.xpose.msra.mxu0 0
    %3307 = vmatprep.subr.bf16.mxu0 0
    %3308 = vmatpush1.bf16.xpose.msra.mxu0 0
    %3309 = vmatprep.subr.bf16.mxu0 0
    %3310 = vmatpush1.bf16.xpose.msra.mxu0 0
    %3311 = vmatprep.subr.bf16.mxu0 0
    %3312 = vmatpush1.bf16.xpose.msra.mxu0 0
    %3313 = vmatprep.subr.bf16.mxu0 0
    %3314 = vmatpush1.bf16.xpose.msra.mxu0 0
    %3315 = vmatprep.mubr.bf16.mxu0 0
    %3316 = vmatmul.mubr.bf16.gmra.mrb[0].mxu0 %v3278
    %v3317 = vpop.f32.mrb[0].mxu0
    %v3318 = vadd.f32 %v3270, %v3317
    %v3319 = vpop.f32.mrb[0].mxu0
    %v3320 = vpop.f32.mrb[0].mxu0
    %v3321 = vadd.f32 %v3271, %v3320
    %v3322 = vpop.f32.mrb[0].mxu0
    %3323 = vdwg.mxu0
    %3325 = vrot.lane.b32.xlu0 %v3262, 104
    %v3326 = vpop.permute.xlu0 %3325
    %3327 = vrot.lane.b32.xlu0 %v3262, 72
    %v3328 = vpop.permute.xlu0 %3327
    %v3330 = vsel %vm280, %v3326, 0
    %v3333 = vsel %vm280, %v3328, 0
    %3335 = vmatprep.subr.bf16.mxu0 0
    %3336 = vmatpush1.bf16.xpose.msra.mxu0 %v3333
    %3337 = vmatprep.subr.bf16.mxu0 0
    %3338 = vmatpush1.bf16.xpose.msra.mxu0 0
    %3339 = vmatprep.subr.bf16.mxu0 0
    %3340 = vmatpush1.bf16.xpose.msra.mxu0 0
    %3341 = vmatprep.subr.bf16.mxu0 0
    %3342 = vmatpush1.bf16.xpose.msra.mxu0 0
    %3343 = vmatprep.subr.bf16.mxu0 0
    %3344 = vmatpush1.bf16.xpose.msra.mxu0 0
    %3345 = vmatprep.subr.bf16.mxu0 0
    %3346 = vmatpush1.bf16.xpose.msra.mxu0 0
    %3347 = vmatprep.subr.bf16.mxu0 0
    %3348 = vmatpush1.bf16.xpose.msra.mxu0 0
    %3349 = vmatprep.subr.bf16.mxu0 0
    %3350 = vmatpush1.bf16.xpose.msra.mxu0 0
    %3351 = vmatprep.subr.bf16.mxu0 0
    %3352 = vmatpush1.bf16.xpose.msra.mxu0 0
    %3353 = vmatprep.subr.bf16.mxu0 0
    %3354 = vmatpush1.bf16.xpose.msra.mxu0 0
    %3355 = vmatprep.subr.bf16.mxu0 0
    %3356 = vmatpush1.bf16.xpose.msra.mxu0 0
    %3357 = vmatprep.subr.bf16.mxu0 0
    %3358 = vmatpush1.bf16.xpose.msra.mxu0 0
    %3359 = vmatprep.subr.bf16.mxu0 0
    %3360 = vmatpush1.bf16.xpose.msra.mxu0 0
    %3361 = vmatprep.subr.bf16.mxu0 0
    %3362 = vmatpush1.bf16.xpose.msra.mxu0 0
    %3363 = vmatprep.subr.bf16.mxu0 0
    %3364 = vmatpush1.bf16.xpose.msra.mxu0 0
    %3365 = vmatprep.subr.bf16.mxu0 0
    %3366 = vmatpush1.bf16.xpose.msra.mxu0 0
    %3367 = vmatprep.mubr.bf16.mxu0 0
    %3368 = vmatmul.mubr.bf16.gmra.mrb[0].mxu0 %v3330
    %v3369 = vpop.f32.mrb[0].mxu0
    %v3370 = vadd.f32 %v3270, %v3369
    %v3371 = vpop.f32.mrb[0].mxu0
    %v3372 = vpop.f32.mrb[0].mxu0
    %v3373 = vadd.f32 %v3271, %v3372
    %v3374 = vpop.f32.mrb[0].mxu0
    %3375 = vdwg.mxu0
    %3377 = vrot.lane.b32.xlu0 %v3263, 104
    %v3378 = vpop.permute.xlu0 %3377
    %3379 = vrot.lane.b32.xlu0 %v3263, 72
    %v3380 = vpop.permute.xlu0 %3379
    %v3382 = vsel %vm280, %v3378, 0
    %v3385 = vsel %vm280, %v3380, 0
    %3387 = vmatprep.subr.bf16.mxu0 0
    %3388 = vmatpush1.bf16.xpose.msra.mxu0 %v3385
    %3389 = vmatprep.subr.bf16.mxu0 0
    %3390 = vmatpush1.bf16.xpose.msra.mxu0 0
    %3391 = vmatprep.subr.bf16.mxu0 0
    %3392 = vmatpush1.bf16.xpose.msra.mxu0 0
    %3393 = vmatprep.subr.bf16.mxu0 0
    %3394 = vmatpush1.bf16.xpose.msra.mxu0 0
    %3395 = vmatprep.subr.bf16.mxu0 0
    %3396 = vmatpush1.bf16.xpose.msra.mxu0 0
    %3397 = vmatprep.subr.bf16.mxu0 0
    %3398 = vmatpush1.bf16.xpose.msra.mxu0 0
    %3399 = vmatprep.subr.bf16.mxu0 0
    %3400 = vmatpush1.bf16.xpose.msra.mxu0 0
    %3401 = vmatprep.subr.bf16.mxu0 0
    %3402 = vmatpush1.bf16.xpose.msra.mxu0 0
    %3403 = vmatprep.subr.bf16.mxu0 0
    %3404 = vmatpush1.bf16.xpose.msra.mxu0 0
    %3405 = vmatprep.subr.bf16.mxu0 0
    %3406 = vmatpush1.bf16.xpose.msra.mxu0 0
    %3407 = vmatprep.subr.bf16.mxu0 0
    %3408 = vmatpush1.bf16.xpose.msra.mxu0 0
    %3409 = vmatprep.subr.bf16.mxu0 0
    %3410 = vmatpush1.bf16.xpose.msra.mxu0 0
    %3411 = vmatprep.subr.bf16.mxu0 0
    %3412 = vmatpush1.bf16.xpose.msra.mxu0 0
    %3413 = vmatprep.subr.bf16.mxu0 0
    %3414 = vmatpush1.bf16.xpose.msra.mxu0 0
    %3415 = vmatprep.subr.bf16.mxu0 0
    %3416 = vmatpush1.bf16.xpose.msra.mxu0 0
    %3417 = vmatprep.subr.bf16.mxu0 0
    %3418 = vmatpush1.bf16.xpose.msra.mxu0 0
    %3419 = vmatprep.mubr.bf16.mxu0 0
    %3420 = vmatmul.mubr.bf16.gmra.mrb[0].mxu0 %v3382
    %v3421 = vpop.f32.mrb[0].mxu0
    %v3422 = vadd.f32 %v3270, %v3421
    %v3423 = vpop.f32.mrb[0].mxu0
    %v3424 = vpop.f32.mrb[0].mxu0
    %v3425 = vadd.f32 %v3271, %v3424
    %v3426 = vpop.f32.mrb[0].mxu0
    %3427 = vdwg.mxu0
    %3429 = vrot.lane.b32.xlu0 %v3264, 104
    %v3430 = vpop.permute.xlu0 %3429
    %3431 = vrot.lane.b32.xlu0 %v3264, 72
    %v3432 = vpop.permute.xlu0 %3431
    %v3434 = vsel %vm280, %v3430, 0
    %v3437 = vsel %vm280, %v3432, 0
    %3439 = vmatprep.subr.bf16.mxu0 0
    %3440 = vmatpush1.bf16.xpose.msra.mxu0 %v3437
    %3441 = vmatprep.subr.bf16.mxu0 0
    %3442 = vmatpush1.bf16.xpose.msra.mxu0 0
    %3443 = vmatprep.subr.bf16.mxu0 0
    %3444 = vmatpush1.bf16.xpose.msra.mxu0 0
    %3445 = vmatprep.subr.bf16.mxu0 0
    %3446 = vmatpush1.bf16.xpose.msra.mxu0 0
    %3447 = vmatprep.subr.bf16.mxu0 0
    %3448 = vmatpush1.bf16.xpose.msra.mxu0 0
    %3449 = vmatprep.subr.bf16.mxu0 0
    %3450 = vmatpush1.bf16.xpose.msra.mxu0 0
    %3451 = vmatprep.subr.bf16.mxu0 0
    %3452 = vmatpush1.bf16.xpose.msra.mxu0 0
    %3453 = vmatprep.subr.bf16.mxu0 0
    %3454 = vmatpush1.bf16.xpose.msra.mxu0 0
    %3455 = vmatprep.subr.bf16.mxu0 0
    %3456 = vmatpush1.bf16.xpose.msra.mxu0 0
    %3457 = vmatprep.subr.bf16.mxu0 0
    %3458 = vmatpush1.bf16.xpose.msra.mxu0 0
    %3459 = vmatprep.subr.bf16.mxu0 0
    %3460 = vmatpush1.bf16.xpose.msra.mxu0 0
    %3461 = vmatprep.subr.bf16.mxu0 0
    %3462 = vmatpush1.bf16.xpose.msra.mxu0 0
    %3463 = vmatprep.subr.bf16.mxu0 0
    %3464 = vmatpush1.bf16.xpose.msra.mxu0 0
    %3465 = vmatprep.subr.bf16.mxu0 0
    %3466 = vmatpush1.bf16.xpose.msra.mxu0 0
    %3467 = vmatprep.subr.bf16.mxu0 0
    %3468 = vmatpush1.bf16.xpose.msra.mxu0 0
    %3469 = vmatprep.subr.bf16.mxu0 0
    %3470 = vmatpush1.bf16.xpose.msra.mxu0 0
    %3471 = vmatprep.mubr.bf16.mxu0 0
    %3472 = vmatmul.mubr.bf16.gmra.mrb[0].mxu0 %v3434
    %v3473 = vpop.f32.mrb[0].mxu0
    %v3474 = vadd.f32 %v3270, %v3473
    %v3475 = vpop.f32.mrb[0].mxu0
    %v3476 = vpop.f32.mrb[0].mxu0
    %v3477 = vadd.f32 %v3271, %v3476
    %v3478 = vpop.f32.mrb[0].mxu0
    %3479 = vdwg.mxu0
    %3481 = vrot.lane.b32.xlu0 %v3265, 104
    %v3482 = vpop.permute.xlu0 %3481
    %3483 = vrot.lane.b32.xlu0 %v3265, 72
    %v3484 = vpop.permute.xlu0 %3483
    %v3486 = vsel %vm280, %v3482, 0
    %v3489 = vsel %vm280, %v3484, 0
    %3491 = vmatprep.subr.bf16.mxu0 0
    %3492 = vmatpush1.bf16.xpose.msra.mxu0 %v3489
    %3493 = vmatprep.subr.bf16.mxu0 0
    %3494 = vmatpush1.bf16.xpose.msra.mxu0 0
    %3495 = vmatprep.subr.bf16.mxu0 0
    %3496 = vmatpush1.bf16.xpose.msra.mxu0 0
    %3497 = vmatprep.subr.bf16.mxu0 0
    %3498 = vmatpush1.bf16.xpose.msra.mxu0 0
    %3499 = vmatprep.subr.bf16.mxu0 0
    %3500 = vmatpush1.bf16.xpose.msra.mxu0 0
    %3501 = vmatprep.subr.bf16.mxu0 0
    %3502 = vmatpush1.bf16.xpose.msra.mxu0 0
    %3503 = vmatprep.subr.bf16.mxu0 0
    %3504 = vmatpush1.bf16.xpose.msra.mxu0 0
    %3505 = vmatprep.subr.bf16.mxu0 0
    %3506 = vmatpush1.bf16.xpose.msra.mxu0 0
    %3507 = vmatprep.subr.bf16.mxu0 0
    %3508 = vmatpush1.bf16.xpose.msra.mxu0 0
    %3509 = vmatprep.subr.bf16.mxu0 0
    %3510 = vmatpush1.bf16.xpose.msra.mxu0 0
    %3511 = vmatprep.subr.bf16.mxu0 0
    %3512 = vmatpush1.bf16.xpose.msra.mxu0 0
    %3513 = vmatprep.subr.bf16.mxu0 0
    %3514 = vmatpush1.bf16.xpose.msra.mxu0 0
    %3515 = vmatprep.subr.bf16.mxu0 0
    %3516 = vmatpush1.bf16.xpose.msra.mxu0 0
    %3517 = vmatprep.subr.bf16.mxu0 0
    %3518 = vmatpush1.bf16.xpose.msra.mxu0 0
    %3519 = vmatprep.subr.bf16.mxu0 0
    %3520 = vmatpush1.bf16.xpose.msra.mxu0 0
    %3521 = vmatprep.subr.bf16.mxu0 0
    %3522 = vmatpush1.bf16.xpose.msra.mxu0 0
    %3523 = vmatprep.mubr.bf16.mxu0 0
    %3524 = vmatmul.mubr.bf16.gmra.mrb[0].mxu0 %v3486
    %v3525 = vpop.f32.mrb[0].mxu0
    %v3526 = vadd.f32 %v3270, %v3525
    %v3527 = vpop.f32.mrb[0].mxu0
    %v3528 = vpop.f32.mrb[0].mxu0
    %v3529 = vadd.f32 %v3271, %v3528
    %v3530 = vpop.f32.mrb[0].mxu0
    %3531 = vdwg.mxu0
    %3533 = vrot.lane.b32.xlu0 %v3266, 104
    %v3534 = vpop.permute.xlu0 %3533
    %3535 = vrot.lane.b32.xlu0 %v3266, 72
    %v3536 = vpop.permute.xlu0 %3535
    %v3538 = vsel %vm280, %v3534, 0
    %v3541 = vsel %vm280, %v3536, 0
    %3543 = vmatprep.subr.bf16.mxu0 0
    %3544 = vmatpush1.bf16.xpose.msra.mxu0 %v3541
    %3545 = vmatprep.subr.bf16.mxu0 0
    %3546 = vmatpush1.bf16.xpose.msra.mxu0 0
    %3547 = vmatprep.subr.bf16.mxu0 0
    %3548 = vmatpush1.bf16.xpose.msra.mxu0 0
    %3549 = vmatprep.subr.bf16.mxu0 0
    %3550 = vmatpush1.bf16.xpose.msra.mxu0 0
    %3551 = vmatprep.subr.bf16.mxu0 0
    %3552 = vmatpush1.bf16.xpose.msra.mxu0 0
    %3553 = vmatprep.subr.bf16.mxu0 0
    %3554 = vmatpush1.bf16.xpose.msra.mxu0 0
    %3555 = vmatprep.subr.bf16.mxu0 0
    %3556 = vmatpush1.bf16.xpose.msra.mxu0 0
    %3557 = vmatprep.subr.bf16.mxu0 0
    %3558 = vmatpush1.bf16.xpose.msra.mxu0 0
    %3559 = vmatprep.subr.bf16.mxu0 0
    %3560 = vmatpush1.bf16.xpose.msra.mxu0 0
    %3561 = vmatprep.subr.bf16.mxu0 0
    %3562 = vmatpush1.bf16.xpose.msra.mxu0 0
    %3563 = vmatprep.subr.bf16.mxu0 0
    %3564 = vmatpush1.bf16.xpose.msra.mxu0 0
    %3565 = vmatprep.subr.bf16.mxu0 0
    %3566 = vmatpush1.bf16.xpose.msra.mxu0 0
    %3567 = vmatprep.subr.bf16.mxu0 0
    %3568 = vmatpush1.bf16.xpose.msra.mxu0 0
    %3569 = vmatprep.subr.bf16.mxu0 0
    %3570 = vmatpush1.bf16.xpose.msra.mxu0 0
    %3571 = vmatprep.subr.bf16.mxu0 0
    %3572 = vmatpush1.bf16.xpose.msra.mxu0 0
    %3573 = vmatprep.subr.bf16.mxu0 0
    %3574 = vmatpush1.bf16.xpose.msra.mxu0 0
    %3575 = vmatprep.mubr.bf16.mxu0 0
    %3576 = vmatmul.mubr.bf16.gmra.mrb[0].mxu0 %v3538
    %v3577 = vpop.f32.mrb[0].mxu0
    %v3578 = vadd.f32 %v3270, %v3577
    %v3579 = vpop.f32.mrb[0].mxu0
    %v3580 = vpop.f32.mrb[0].mxu0
    %v3581 = vadd.f32 %v3271, %v3580
    %v3582 = vpop.f32.mrb[0].mxu0
    %3583 = vdwg.mxu0
    %3585 = vrot.lane.b32.xlu0 %v3267, 104
    %v3586 = vpop.permute.xlu0 %3585
    %3587 = vrot.lane.b32.xlu0 %v3267, 72
    %v3588 = vpop.permute.xlu0 %3587
    %v3590 = vsel %vm280, %v3586, 0
    %v3593 = vsel %vm280, %v3588, 0
    %3595 = vmatprep.subr.bf16.mxu0 0
    %3596 = vmatpush1.bf16.xpose.msra.mxu0 %v3593
    %3597 = vmatprep.subr.bf16.mxu0 0
    %3598 = vmatpush1.bf16.xpose.msra.mxu0 0
    %3599 = vmatprep.subr.bf16.mxu0 0
    %3600 = vmatpush1.bf16.xpose.msra.mxu0 0
    %3601 = vmatprep.subr.bf16.mxu0 0
    %3602 = vmatpush1.bf16.xpose.msra.mxu0 0
    %3603 = vmatprep.subr.bf16.mxu0 0
    %3604 = vmatpush1.bf16.xpose.msra.mxu0 0
    %3605 = vmatprep.subr.bf16.mxu0 0
    %3606 = vmatpush1.bf16.xpose.msra.mxu0 0
    %3607 = vmatprep.subr.bf16.mxu0 0
    %3608 = vmatpush1.bf16.xpose.msra.mxu0 0
    %3609 = vmatprep.subr.bf16.mxu0 0
    %3610 = vmatpush1.bf16.xpose.msra.mxu0 0
    %3611 = vmatprep.subr.bf16.mxu0 0
    %3612 = vmatpush1.bf16.xpose.msra.mxu0 0
    %3613 = vmatprep.subr.bf16.mxu0 0
    %3614 = vmatpush1.bf16.xpose.msra.mxu0 0
    %3615 = vmatprep.subr.bf16.mxu0 0
    %3616 = vmatpush1.bf16.xpose.msra.mxu0 0
    %3617 = vmatprep.subr.bf16.mxu0 0
    %3618 = vmatpush1.bf16.xpose.msra.mxu0 0
    %3619 = vmatprep.subr.bf16.mxu0 0
    %3620 = vmatpush1.bf16.xpose.msra.mxu0 0
    %3621 = vmatprep.subr.bf16.mxu0 0
    %3622 = vmatpush1.bf16.xpose.msra.mxu0 0
    %3623 = vmatprep.subr.bf16.mxu0 0
    %3624 = vmatpush1.bf16.xpose.msra.mxu0 0
    %3625 = vmatprep.subr.bf16.mxu0 0
    %3626 = vmatpush1.bf16.xpose.msra.mxu0 0
    %3627 = vmatprep.mubr.bf16.mxu0 0
    %3628 = vmatmul.mubr.bf16.gmra.mrb[0].mxu0 %v3590
    %v3629 = vpop.f32.mrb[0].mxu0
    %v3630 = vadd.f32 %v3270, %v3629
    %v3631 = vpop.f32.mrb[0].mxu0
    %v3632 = vpop.f32.mrb[0].mxu0
    %v3633 = vadd.f32 %v3271, %v3632
    %v3634 = vpop.f32.mrb[0].mxu0
    %3635 = vdwg.mxu0
    %3637 = vrot.lane.b32.xlu0 %v3268, 104
    %v3638 = vpop.permute.xlu0 %3637
    %3639 = vrot.lane.b32.xlu0 %v3268, 72
    %v3640 = vpop.permute.xlu0 %3639
    %v3642 = vsel %vm280, %v3638, 0
    %v3645 = vsel %vm280, %v3640, 0
    %3647 = vmatprep.subr.bf16.mxu0 0
    %3648 = vmatpush1.bf16.xpose.msra.mxu0 %v3645
    %3649 = vmatprep.subr.bf16.mxu0 0
    %3650 = vmatpush1.bf16.xpose.msra.mxu0 0
    %3651 = vmatprep.subr.bf16.mxu0 0
    %3652 = vmatpush1.bf16.xpose.msra.mxu0 0
    %3653 = vmatprep.subr.bf16.mxu0 0
    %3654 = vmatpush1.bf16.xpose.msra.mxu0 0
    %3655 = vmatprep.subr.bf16.mxu0 0
    %3656 = vmatpush1.bf16.xpose.msra.mxu0 0
    %3657 = vmatprep.subr.bf16.mxu0 0
    %3658 = vmatpush1.bf16.xpose.msra.mxu0 0
    %3659 = vmatprep.subr.bf16.mxu0 0
    %3660 = vmatpush1.bf16.xpose.msra.mxu0 0
    %3661 = vmatprep.subr.bf16.mxu0 0
    %3662 = vmatpush1.bf16.xpose.msra.mxu0 0
    %3663 = vmatprep.subr.bf16.mxu0 0
    %3664 = vmatpush1.bf16.xpose.msra.mxu0 0
    %3665 = vmatprep.subr.bf16.mxu0 0
    %3666 = vmatpush1.bf16.xpose.msra.mxu0 0
    %3667 = vmatprep.subr.bf16.mxu0 0
    %3668 = vmatpush1.bf16.xpose.msra.mxu0 0
    %3669 = vmatprep.subr.bf16.mxu0 0
    %3670 = vmatpush1.bf16.xpose.msra.mxu0 0
    %3671 = vmatprep.subr.bf16.mxu0 0
    %3672 = vmatpush1.bf16.xpose.msra.mxu0 0
    %3673 = vmatprep.subr.bf16.mxu0 0
    %3674 = vmatpush1.bf16.xpose.msra.mxu0 0
    %3675 = vmatprep.subr.bf16.mxu0 0
    %3676 = vmatpush1.bf16.xpose.msra.mxu0 0
    %3677 = vmatprep.subr.bf16.mxu0 0
    %3678 = vmatpush1.bf16.xpose.msra.mxu0 0
    %3679 = vmatprep.mubr.bf16.mxu0 0
    %3680 = vmatmul.mubr.bf16.gmra.mrb[0].mxu0 %v3642
    %v3681 = vpop.f32.mrb[0].mxu0
    %v3682 = vadd.f32 %v3270, %v3681
    %v3683 = vpop.f32.mrb[0].mxu0
    %v3684 = vpop.f32.mrb[0].mxu0
    %v3685 = vadd.f32 %v3271, %v3684
    %v3686 = vpop.f32.mrb[0].mxu0
    %3687 = vdwg.mxu0
    %v3688 = vadd.f32 %v3318, %v259
    %v3689 = vadd.f32 %v3321, %v260
    %v3690 = vadd.f32 %v3370, %v261
    %v3691 = vadd.f32 %v3373, %v262
    %v3692 = vadd.f32 %v3422, %v263
    %v3693 = vadd.f32 %v3425, %v264
    %v3694 = vadd.f32 %v3474, %v265
    %v3695 = vadd.f32 %v3477, %v266
    %v3696 = vadd.f32 %v3526, %v259
    %v3697 = vadd.f32 %v3529, %v260
    %v3698 = vadd.f32 %v3578, %v261
    %v3699 = vadd.f32 %v3581, %v262
    %v3700 = vadd.f32 %v3630, %v263
    %v3701 = vadd.f32 %v3633, %v264
    %v3702 = vadd.f32 %v3682, %v265
    %v3703 = vadd.f32 %v3685, %v266
    %v3704 = vsel %vm694, %v3688, -inf
    %3705 = vmax.xlane.f32.xlu0 %v3704
    %v3706 = vpop.xlane.xlu0 %3705
    %v3707 = vsel %vm694, %v3689, -inf
    %3708 = vmax.xlane.f32.xlu0 %v3707
    %v3709 = vpop.xlane.xlu0 %3708
    %v3710 = vsel %vm694, %v3690, -inf
    %3711 = vmax.xlane.f32.xlu0 %v3710
    %v3712 = vpop.xlane.xlu0 %3711
    %v3713 = vsel %vm694, %v3691, -inf
    %3714 = vmax.xlane.f32.xlu0 %v3713
    %v3715 = vpop.xlane.xlu0 %3714
    %v3716 = vsel %vm694, %v3692, -inf
    %3717 = vmax.xlane.f32.xlu0 %v3716
    %v3718 = vpop.xlane.xlu0 %3717
    %v3719 = vsel %vm694, %v3693, -inf
    %3720 = vmax.xlane.f32.xlu0 %v3719
    %v3721 = vpop.xlane.xlu0 %3720
    %v3722 = vsel %vm694, %v3694, -inf
    %3723 = vmax.xlane.f32.xlu0 %v3722
    %v3724 = vpop.xlane.xlu0 %3723
    %v3725 = vsel %vm694, %v3695, -inf
    %3726 = vmax.xlane.f32.xlu0 %v3725
    %v3727 = vpop.xlane.xlu0 %3726
    %v3728 = vsel %vm694, %v3696, -inf
    %3729 = vmax.xlane.f32.xlu0 %v3728
    %v3730 = vpop.xlane.xlu0 %3729
    %v3731 = vsel %vm694, %v3697, -inf
    %3732 = vmax.xlane.f32.xlu0 %v3731
    %v3733 = vpop.xlane.xlu0 %3732
    %v3734 = vsel %vm694, %v3698, -inf
    %3735 = vmax.xlane.f32.xlu0 %v3734
    %v3736 = vpop.xlane.xlu0 %3735
    %v3737 = vsel %vm694, %v3699, -inf
    %3738 = vmax.xlane.f32.xlu0 %v3737
    %v3739 = vpop.xlane.xlu0 %3738
    %v3740 = vsel %vm694, %v3700, -inf
    %3741 = vmax.xlane.f32.xlu0 %v3740
    %v3742 = vpop.xlane.xlu0 %3741
    %v3743 = vsel %vm694, %v3701, -inf
    %3744 = vmax.xlane.f32.xlu0 %v3743
    %v3745 = vpop.xlane.xlu0 %3744
    %v3746 = vsel %vm694, %v3702, -inf
    %3747 = vmax.xlane.f32.xlu0 %v3746
    %v3748 = vpop.xlane.xlu0 %3747
    %v3749 = vsel %vm694, %v3703, -inf
    %3750 = vmax.xlane.f32.xlu0 %v3749
    %v3751 = vpop.xlane.xlu0 %3750
    %v3752 = vsub.f32 %v3688, %v3706
    %v3753 = vsub.f32 %v3689, %v3709
    %v3754 = vsub.f32 %v3690, %v3712
    %v3755 = vsub.f32 %v3691, %v3715
    %v3756 = vsub.f32 %v3692, %v3718
    %v3757 = vsub.f32 %v3693, %v3721
    %v3758 = vsub.f32 %v3694, %v3724
    %v3759 = vsub.f32 %v3695, %v3727
    %v3760 = vsub.f32 %v3696, %v3730
    %v3761 = vsub.f32 %v3697, %v3733
    %v3762 = vsub.f32 %v3698, %v3736
    %v3763 = vsub.f32 %v3699, %v3739
    %v3764 = vsub.f32 %v3700, %v3742
    %v3765 = vsub.f32 %v3701, %v3745
    %v3766 = vsub.f32 %v3702, %v3748
    %v3767 = vsub.f32 %v3703, %v3751
    %v3768 = vmul.f32 %v3752, 1.442695
    %v3769 = vpow.pop %v3768
    %v3770 = vmul.f32 %v3753, 1.442695
    %v3771 = vpow.pop %v3770
    %v3772 = vmul.f32 %v3754, 1.442695
    %v3773 = vpow.pop %v3772
    %v3774 = vmul.f32 %v3755, 1.442695
    %v3775 = vpow.pop %v3774
    %v3776 = vmul.f32 %v3756, 1.442695
    %v3777 = vpow.pop %v3776
    %v3778 = vmul.f32 %v3757, 1.442695
    %v3779 = vpow.pop %v3778
    %v3780 = vmul.f32 %v3758, 1.442695
    %v3781 = vpow.pop %v3780
    %v3782 = vmul.f32 %v3759, 1.442695
    %v3783 = vpow.pop %v3782
    %v3784 = vmul.f32 %v3760, 1.442695
    %v3785 = vpow.pop %v3784
    %v3786 = vmul.f32 %v3761, 1.442695
    %v3787 = vpow.pop %v3786
    %v3788 = vmul.f32 %v3762, 1.442695
    %v3789 = vpow.pop %v3788
    %v3790 = vmul.f32 %v3763, 1.442695
    %v3791 = vpow.pop %v3790
    %v3792 = vmul.f32 %v3764, 1.442695
    %v3793 = vpow.pop %v3792
    %v3794 = vmul.f32 %v3765, 1.442695
    %v3795 = vpow.pop %v3794
    %v3796 = vmul.f32 %v3766, 1.442695
    %v3797 = vpow.pop %v3796
    %v3798 = vmul.f32 %v3767, 1.442695
    %v3799 = vpow.pop %v3798
    %v3800 = vsel %vm694, %v3769, 0.0
    %3801 = vadd.xlane.f32.xlu0 %v3800
    %v3802 = vpop.xlane.xlu0 %3801
    %v3803 = vsel %vm694, %v3771, 0.0
    %3804 = vadd.xlane.f32.xlu0 %v3803
    %v3805 = vpop.xlane.xlu0 %3804
    %v3806 = vsel %vm694, %v3773, 0.0
    %3807 = vadd.xlane.f32.xlu0 %v3806
    %v3808 = vpop.xlane.xlu0 %3807
    %v3809 = vsel %vm694, %v3775, 0.0
    %3810 = vadd.xlane.f32.xlu0 %v3809
    %v3811 = vpop.xlane.xlu0 %3810
    %v3812 = vsel %vm694, %v3777, 0.0
    %3813 = vadd.xlane.f32.xlu0 %v3812
    %v3814 = vpop.xlane.xlu0 %3813
    %v3815 = vsel %vm694, %v3779, 0.0
    %3816 = vadd.xlane.f32.xlu0 %v3815
    %v3817 = vpop.xlane.xlu0 %3816
    %v3818 = vsel %vm694, %v3781, 0.0
    %3819 = vadd.xlane.f32.xlu0 %v3818
    %v3820 = vpop.xlane.xlu0 %3819
    %v3821 = vsel %vm694, %v3783, 0.0
    %3822 = vadd.xlane.f32.xlu0 %v3821
    %v3823 = vpop.xlane.xlu0 %3822
    %v3824 = vsel %vm694, %v3785, 0.0
    %3825 = vadd.xlane.f32.xlu0 %v3824
    %v3826 = vpop.xlane.xlu0 %3825
    %v3827 = vsel %vm694, %v3787, 0.0
    %3828 = vadd.xlane.f32.xlu0 %v3827
    %v3829 = vpop.xlane.xlu0 %3828
    %v3830 = vsel %vm694, %v3789, 0.0
    %3831 = vadd.xlane.f32.xlu0 %v3830
    %v3832 = vpop.xlane.xlu0 %3831
    %v3833 = vsel %vm694, %v3791, 0.0
    %3834 = vadd.xlane.f32.xlu0 %v3833
    %v3835 = vpop.xlane.xlu0 %3834
    %v3836 = vsel %vm694, %v3793, 0.0
    %3837 = vadd.xlane.f32.xlu0 %v3836
    %v3838 = vpop.xlane.xlu0 %3837
    %v3839 = vsel %vm694, %v3795, 0.0
    %3840 = vadd.xlane.f32.xlu0 %v3839
    %v3841 = vpop.xlane.xlu0 %3840
    %v3842 = vsel %vm694, %v3797, 0.0
    %3843 = vadd.xlane.f32.xlu0 %v3842
    %v3844 = vpop.xlane.xlu0 %3843
    %v3845 = vsel %vm694, %v3799, 0.0
    %3846 = vadd.xlane.f32.xlu0 %v3845
    %v3847 = vpop.xlane.xlu0 %3846
    %v3848 = vrcp.pop %v3802
    %v3849 = vrcp.pop %v3805
    %v3850 = vrcp.pop %v3808
    %v3851 = vrcp.pop %v3811
    %v3852 = vrcp.pop %v3814
    %v3853 = vrcp.pop %v3817
    %v3854 = vrcp.pop %v3820
    %v3855 = vrcp.pop %v3823
    %v3856 = vrcp.pop %v3826
    %v3857 = vrcp.pop %v3829
    %v3858 = vrcp.pop %v3832
    %v3859 = vrcp.pop %v3835
    %v3860 = vrcp.pop %v3838
    %v3861 = vrcp.pop %v3841
    %v3862 = vrcp.pop %v3844
    %v3863 = vrcp.pop %v3847
    %v3864 = vmul.f32 %v3769, %v3848
    %v3865 = vmul.f32 %v3771, %v3849
    %v3866 = vmul.f32 %v3773, %v3850
    %v3867 = vmul.f32 %v3775, %v3851
    %v3868 = vmul.f32 %v3777, %v3852
    %v3869 = vmul.f32 %v3779, %v3853
    %v3870 = vmul.f32 %v3781, %v3854
    %v3871 = vmul.f32 %v3783, %v3855
    %v3872 = vmul.f32 %v3785, %v3856
    %v3873 = vmul.f32 %v3787, %v3857
    %v3874 = vmul.f32 %v3789, %v3858
    %v3875 = vmul.f32 %v3791, %v3859
    %v3876 = vmul.f32 %v3793, %v3860
    %v3877 = vmul.f32 %v3795, %v3861
    %v3878 = vmul.f32 %v3797, %v3862
    %v3879 = vmul.f32 %v3799, %v3863
    %v3880 = vpack.c.bf16 %v3865, %v3864
    %v3881 = vpack.c.bf16 %v3867, %v3866
    %v3882 = vpack.c.bf16 %v3869, %v3868
    %v3883 = vpack.c.bf16 %v3871, %v3870
    %v3884 = vpack.c.bf16 %v3873, %v3872
    %v3885 = vpack.c.bf16 %v3875, %v3874
    %v3886 = vpack.c.bf16 %v3877, %v3876
    %v3887 = vpack.c.bf16 %v3879, %v3878
    %3888 = vrot.lane.b32.xlu0 %v3261, 40
    %v3889 = vpop.permute.xlu0 %3888
    %v3892 = vsel %vm694, %v3880, 0
    %3894 = vmatprep.subr.bf16.mxu0 0
    %3895 = vmatpush1.bf16.msra.mxu0 %v3889
    %3896 = vmatprep.subr.bf16.mxu0 0
    %3897 = vmatpush1.bf16.msra.mxu0 0
    %3898 = vmatprep.subr.bf16.mxu0 0
    %3899 = vmatpush1.bf16.msra.mxu0 0
    %3900 = vmatprep.subr.bf16.mxu0 0
    %3901 = vmatpush1.bf16.msra.mxu0 0
    %3902 = vmatprep.subr.bf16.mxu0 0
    %3903 = vmatpush1.bf16.msra.mxu0 0
    %3904 = vmatprep.subr.bf16.mxu0 0
    %3905 = vmatpush1.bf16.msra.mxu0 0
    %3906 = vmatprep.subr.bf16.mxu0 0
    %3907 = vmatpush1.bf16.msra.mxu0 0
    %3908 = vmatprep.subr.bf16.mxu0 0
    %3909 = vmatpush1.bf16.msra.mxu0 0
    %3910 = vmatprep.subr.bf16.mxu0 0
    %3911 = vmatpush1.bf16.msra.mxu0 0
    %3912 = vmatprep.subr.bf16.mxu0 0
    %3913 = vmatpush1.bf16.msra.mxu0 0
    %3914 = vmatprep.subr.bf16.mxu0 0
    %3915 = vmatpush1.bf16.msra.mxu0 0
    %3916 = vmatprep.subr.bf16.mxu0 0
    %3917 = vmatpush1.bf16.msra.mxu0 0
    %3918 = vmatprep.subr.bf16.mxu0 0
    %3919 = vmatpush1.bf16.msra.mxu0 0
    %3920 = vmatprep.subr.bf16.mxu0 0
    %3921 = vmatpush1.bf16.msra.mxu0 0
    %3922 = vmatprep.subr.bf16.mxu0 0
    %3923 = vmatpush1.bf16.msra.mxu0 0
    %3924 = vmatprep.subr.bf16.mxu0 0
    %3925 = vmatpush1.bf16.msra.mxu0 0
    %3926 = vmatprep.mubr.bf16.mxu0 0
    %3927 = vmatmul.mubr.bf16.gmra.mrb[0].mxu0 %v3892
    %v3928 = vpop.f32.mrb[0].mxu0
    %v3929 = vadd.f32 0.0, %v3928
    %v3930 = vpop.f32.mrb[0].mxu0
    %v3931 = vpop.f32.mrb[0].mxu0
    %v3932 = vadd.f32 0.0, %v3931
    %v3933 = vpop.f32.mrb[0].mxu0
    %3934 = vdwg.mxu0
    %3935 = vrot.lane.b32.xlu0 %v3262, 40
    %v3936 = vpop.permute.xlu0 %3935
    %v3939 = vsel %vm694, %v3881, 0
    %3941 = vmatprep.subr.bf16.mxu0 0
    %3942 = vmatpush1.bf16.msra.mxu0 %v3936
    %3943 = vmatprep.subr.bf16.mxu0 0
    %3944 = vmatpush1.bf16.msra.mxu0 0
    %3945 = vmatprep.subr.bf16.mxu0 0
    %3946 = vmatpush1.bf16.msra.mxu0 0
    %3947 = vmatprep.subr.bf16.mxu0 0
    %3948 = vmatpush1.bf16.msra.mxu0 0
    %3949 = vmatprep.subr.bf16.mxu0 0
    %3950 = vmatpush1.bf16.msra.mxu0 0
    %3951 = vmatprep.subr.bf16.mxu0 0
    %3952 = vmatpush1.bf16.msra.mxu0 0
    %3953 = vmatprep.subr.bf16.mxu0 0
    %3954 = vmatpush1.bf16.msra.mxu0 0
    %3955 = vmatprep.subr.bf16.mxu0 0
    %3956 = vmatpush1.bf16.msra.mxu0 0
    %3957 = vmatprep.subr.bf16.mxu0 0
    %3958 = vmatpush1.bf16.msra.mxu0 0
    %3959 = vmatprep.subr.bf16.mxu0 0
    %3960 = vmatpush1.bf16.msra.mxu0 0
    %3961 = vmatprep.subr.bf16.mxu0 0
    %3962 = vmatpush1.bf16.msra.mxu0 0
    %3963 = vmatprep.subr.bf16.mxu0 0
    %3964 = vmatpush1.bf16.msra.mxu0 0
    %3965 = vmatprep.subr.bf16.mxu0 0
    %3966 = vmatpush1.bf16.msra.mxu0 0
    %3967 = vmatprep.subr.bf16.mxu0 0
    %3968 = vmatpush1.bf16.msra.mxu0 0
    %3969 = vmatprep.subr.bf16.mxu0 0
    %3970 = vmatpush1.bf16.msra.mxu0 0
    %3971 = vmatprep.subr.bf16.mxu0 0
    %3972 = vmatpush1.bf16.msra.mxu0 0
    %3973 = vmatprep.mubr.bf16.mxu0 0
    %3974 = vmatmul.mubr.bf16.gmra.mrb[0].mxu0 %v3939
    %v3975 = vpop.f32.mrb[0].mxu0
    %v3976 = vadd.f32 0.0, %v3975
    %v3977 = vpop.f32.mrb[0].mxu0
    %v3978 = vpop.f32.mrb[0].mxu0
    %v3979 = vadd.f32 0.0, %v3978
    %v3980 = vpop.f32.mrb[0].mxu0
    %3981 = vdwg.mxu0
    %3982 = vrot.lane.b32.xlu0 %v3263, 40
    %v3983 = vpop.permute.xlu0 %3982
    %v3986 = vsel %vm694, %v3882, 0
    %3988 = vmatprep.subr.bf16.mxu0 0
    %3989 = vmatpush1.bf16.msra.mxu0 %v3983
    %3990 = vmatprep.subr.bf16.mxu0 0
    %3991 = vmatpush1.bf16.msra.mxu0 0
    %3992 = vmatprep.subr.bf16.mxu0 0
    %3993 = vmatpush1.bf16.msra.mxu0 0
    %3994 = vmatprep.subr.bf16.mxu0 0
    %3995 = vmatpush1.bf16.msra.mxu0 0
    %3996 = vmatprep.subr.bf16.mxu0 0
    %3997 = vmatpush1.bf16.msra.mxu0 0
    %3998 = vmatprep.subr.bf16.mxu0 0
    %3999 = vmatpush1.bf16.msra.mxu0 0
    %4000 = vmatprep.subr.bf16.mxu0 0
    %4001 = vmatpush1.bf16.msra.mxu0 0
    %4002 = vmatprep.subr.bf16.mxu0 0
    %4003 = vmatpush1.bf16.msra.mxu0 0
    %4004 = vmatprep.subr.bf16.mxu0 0
    %4005 = vmatpush1.bf16.msra.mxu0 0
    %4006 = vmatprep.subr.bf16.mxu0 0
    %4007 = vmatpush1.bf16.msra.mxu0 0
    %4008 = vmatprep.subr.bf16.mxu0 0
    %4009 = vmatpush1.bf16.msra.mxu0 0
    %4010 = vmatprep.subr.bf16.mxu0 0
    %4011 = vmatpush1.bf16.msra.mxu0 0
    %4012 = vmatprep.subr.bf16.mxu0 0
    %4013 = vmatpush1.bf16.msra.mxu0 0
    %4014 = vmatprep.subr.bf16.mxu0 0
    %4015 = vmatpush1.bf16.msra.mxu0 0
    %4016 = vmatprep.subr.bf16.mxu0 0
    %4017 = vmatpush1.bf16.msra.mxu0 0
    %4018 = vmatprep.subr.bf16.mxu0 0
    %4019 = vmatpush1.bf16.msra.mxu0 0
    %4020 = vmatprep.mubr.bf16.mxu0 0
    %4021 = vmatmul.mubr.bf16.gmra.mrb[0].mxu0 %v3986
    %v4022 = vpop.f32.mrb[0].mxu0
    %v4023 = vadd.f32 0.0, %v4022
    %v4024 = vpop.f32.mrb[0].mxu0
    %v4025 = vpop.f32.mrb[0].mxu0
    %v4026 = vadd.f32 0.0, %v4025
    %v4027 = vpop.f32.mrb[0].mxu0
    %4028 = vdwg.mxu0
    %4029 = vrot.lane.b32.xlu0 %v3264, 40
    %v4030 = vpop.permute.xlu0 %4029
    %v4033 = vsel %vm694, %v3883, 0
    %4035 = vmatprep.subr.bf16.mxu0 0
    %4036 = vmatpush1.bf16.msra.mxu0 %v4030
    %4037 = vmatprep.subr.bf16.mxu0 0
    %4038 = vmatpush1.bf16.msra.mxu0 0
    %4039 = vmatprep.subr.bf16.mxu0 0
    %4040 = vmatpush1.bf16.msra.mxu0 0
    %4041 = vmatprep.subr.bf16.mxu0 0
    %4042 = vmatpush1.bf16.msra.mxu0 0
    %4043 = vmatprep.subr.bf16.mxu0 0
    %4044 = vmatpush1.bf16.msra.mxu0 0
    %4045 = vmatprep.subr.bf16.mxu0 0
    %4046 = vmatpush1.bf16.msra.mxu0 0
    %4047 = vmatprep.subr.bf16.mxu0 0
    %4048 = vmatpush1.bf16.msra.mxu0 0
    %4049 = vmatprep.subr.bf16.mxu0 0
    %4050 = vmatpush1.bf16.msra.mxu0 0
    %4051 = vmatprep.subr.bf16.mxu0 0
    %4052 = vmatpush1.bf16.msra.mxu0 0
    %4053 = vmatprep.subr.bf16.mxu0 0
    %4054 = vmatpush1.bf16.msra.mxu0 0
    %4055 = vmatprep.subr.bf16.mxu0 0
    %4056 = vmatpush1.bf16.msra.mxu0 0
    %4057 = vmatprep.subr.bf16.mxu0 0
    %4058 = vmatpush1.bf16.msra.mxu0 0
    %4059 = vmatprep.subr.bf16.mxu0 0
    %4060 = vmatpush1.bf16.msra.mxu0 0
    %4061 = vmatprep.subr.bf16.mxu0 0
    %4062 = vmatpush1.bf16.msra.mxu0 0
    %4063 = vmatprep.subr.bf16.mxu0 0
    %4064 = vmatpush1.bf16.msra.mxu0 0
    %4065 = vmatprep.subr.bf16.mxu0 0
    %4066 = vmatpush1.bf16.msra.mxu0 0
    %4067 = vmatprep.mubr.bf16.mxu0 0
    %4068 = vmatmul.mubr.bf16.gmra.mrb[0].mxu0 %v4033
    %v4069 = vpop.f32.mrb[0].mxu0
    %v4070 = vadd.f32 0.0, %v4069
    %v4071 = vpop.f32.mrb[0].mxu0
    %v4072 = vpop.f32.mrb[0].mxu0
    %v4073 = vadd.f32 0.0, %v4072
    %v4074 = vpop.f32.mrb[0].mxu0
    %4075 = vdwg.mxu0
    %4076 = vrot.lane.b32.xlu0 %v3265, 40
    %v4077 = vpop.permute.xlu0 %4076
    %v4080 = vsel %vm694, %v3884, 0
    %4082 = vmatprep.subr.bf16.mxu0 0
    %4083 = vmatpush1.bf16.msra.mxu0 %v4077
    %4084 = vmatprep.subr.bf16.mxu0 0
    %4085 = vmatpush1.bf16.msra.mxu0 0
    %4086 = vmatprep.subr.bf16.mxu0 0
    %4087 = vmatpush1.bf16.msra.mxu0 0
    %4088 = vmatprep.subr.bf16.mxu0 0
    %4089 = vmatpush1.bf16.msra.mxu0 0
    %4090 = vmatprep.subr.bf16.mxu0 0
    %4091 = vmatpush1.bf16.msra.mxu0 0
    %4092 = vmatprep.subr.bf16.mxu0 0
    %4093 = vmatpush1.bf16.msra.mxu0 0
    %4094 = vmatprep.subr.bf16.mxu0 0
    %4095 = vmatpush1.bf16.msra.mxu0 0
    %4096 = vmatprep.subr.bf16.mxu0 0
    %4097 = vmatpush1.bf16.msra.mxu0 0
    %4098 = vmatprep.subr.bf16.mxu0 0
    %4099 = vmatpush1.bf16.msra.mxu0 0
    %4100 = vmatprep.subr.bf16.mxu0 0
    %4101 = vmatpush1.bf16.msra.mxu0 0
    %4102 = vmatprep.subr.bf16.mxu0 0
    %4103 = vmatpush1.bf16.msra.mxu0 0
    %4104 = vmatprep.subr.bf16.mxu0 0
    %4105 = vmatpush1.bf16.msra.mxu0 0
    %4106 = vmatprep.subr.bf16.mxu0 0
    %4107 = vmatpush1.bf16.msra.mxu0 0
    %4108 = vmatprep.subr.bf16.mxu0 0
    %4109 = vmatpush1.bf16.msra.mxu0 0
    %4110 = vmatprep.subr.bf16.mxu0 0
    %4111 = vmatpush1.bf16.msra.mxu0 0
    %4112 = vmatprep.subr.bf16.mxu0 0
    %4113 = vmatpush1.bf16.msra.mxu0 0
    %4114 = vmatprep.mubr.bf16.mxu0 0
    %4115 = vmatmul.mubr.bf16.gmra.mrb[0].mxu0 %v4080
    %v4116 = vpop.f32.mrb[0].mxu0
    %v4117 = vadd.f32 0.0, %v4116
    %v4118 = vpop.f32.mrb[0].mxu0
    %v4119 = vpop.f32.mrb[0].mxu0
    %v4120 = vadd.f32 0.0, %v4119
    %v4121 = vpop.f32.mrb[0].mxu0
    %4122 = vdwg.mxu0
    %4123 = vrot.lane.b32.xlu0 %v3266, 40
    %v4124 = vpop.permute.xlu0 %4123
    %v4127 = vsel %vm694, %v3885, 0
    %4129 = vmatprep.subr.bf16.mxu0 0
    %4130 = vmatpush1.bf16.msra.mxu0 %v4124
    %4131 = vmatprep.subr.bf16.mxu0 0
    %4132 = vmatpush1.bf16.msra.mxu0 0
    %4133 = vmatprep.subr.bf16.mxu0 0
    %4134 = vmatpush1.bf16.msra.mxu0 0
    %4135 = vmatprep.subr.bf16.mxu0 0
    %4136 = vmatpush1.bf16.msra.mxu0 0
    %4137 = vmatprep.subr.bf16.mxu0 0
    %4138 = vmatpush1.bf16.msra.mxu0 0
    %4139 = vmatprep.subr.bf16.mxu0 0
    %4140 = vmatpush1.bf16.msra.mxu0 0
    %4141 = vmatprep.subr.bf16.mxu0 0
    %4142 = vmatpush1.bf16.msra.mxu0 0
    %4143 = vmatprep.subr.bf16.mxu0 0
    %4144 = vmatpush1.bf16.msra.mxu0 0
    %4145 = vmatprep.subr.bf16.mxu0 0
    %4146 = vmatpush1.bf16.msra.mxu0 0
    %4147 = vmatprep.subr.bf16.mxu0 0
    %4148 = vmatpush1.bf16.msra.mxu0 0
    %4149 = vmatprep.subr.bf16.mxu0 0
    %4150 = vmatpush1.bf16.msra.mxu0 0
    %4151 = vmatprep.subr.bf16.mxu0 0
    %4152 = vmatpush1.bf16.msra.mxu0 0
    %4153 = vmatprep.subr.bf16.mxu0 0
    %4154 = vmatpush1.bf16.msra.mxu0 0
    %4155 = vmatprep.subr.bf16.mxu0 0
    %4156 = vmatpush1.bf16.msra.mxu0 0
    %4157 = vmatprep.subr.bf16.mxu0 0
    %4158 = vmatpush1.bf16.msra.mxu0 0
    %4159 = vmatprep.subr.bf16.mxu0 0
    %4160 = vmatpush1.bf16.msra.mxu0 0
    %4161 = vmatprep.mubr.bf16.mxu0 0
    %4162 = vmatmul.mubr.bf16.gmra.mrb[0].mxu0 %v4127
    %v4163 = vpop.f32.mrb[0].mxu0
    %v4164 = vadd.f32 0.0, %v4163
    %v4165 = vpop.f32.mrb[0].mxu0
    %v4166 = vpop.f32.mrb[0].mxu0
    %v4167 = vadd.f32 0.0, %v4166
    %v4168 = vpop.f32.mrb[0].mxu0
    %4169 = vdwg.mxu0
    %4170 = vrot.lane.b32.xlu0 %v3267, 40
    %v4171 = vpop.permute.xlu0 %4170
    %v4174 = vsel %vm694, %v3886, 0
    %4176 = vmatprep.subr.bf16.mxu0 0
    %4177 = vmatpush1.bf16.msra.mxu0 %v4171
    %4178 = vmatprep.subr.bf16.mxu0 0
    %4179 = vmatpush1.bf16.msra.mxu0 0
    %4180 = vmatprep.subr.bf16.mxu0 0
    %4181 = vmatpush1.bf16.msra.mxu0 0
    %4182 = vmatprep.subr.bf16.mxu0 0
    %4183 = vmatpush1.bf16.msra.mxu0 0
    %4184 = vmatprep.subr.bf16.mxu0 0
    %4185 = vmatpush1.bf16.msra.mxu0 0
    %4186 = vmatprep.subr.bf16.mxu0 0
    %4187 = vmatpush1.bf16.msra.mxu0 0
    %4188 = vmatprep.subr.bf16.mxu0 0
    %4189 = vmatpush1.bf16.msra.mxu0 0
    %4190 = vmatprep.subr.bf16.mxu0 0
    %4191 = vmatpush1.bf16.msra.mxu0 0
    %4192 = vmatprep.subr.bf16.mxu0 0
    %4193 = vmatpush1.bf16.msra.mxu0 0
    %4194 = vmatprep.subr.bf16.mxu0 0
    %4195 = vmatpush1.bf16.msra.mxu0 0
    %4196 = vmatprep.subr.bf16.mxu0 0
    %4197 = vmatpush1.bf16.msra.mxu0 0
    %4198 = vmatprep.subr.bf16.mxu0 0
    %4199 = vmatpush1.bf16.msra.mxu0 0
    %4200 = vmatprep.subr.bf16.mxu0 0
    %4201 = vmatpush1.bf16.msra.mxu0 0
    %4202 = vmatprep.subr.bf16.mxu0 0
    %4203 = vmatpush1.bf16.msra.mxu0 0
    %4204 = vmatprep.subr.bf16.mxu0 0
    %4205 = vmatpush1.bf16.msra.mxu0 0
    %4206 = vmatprep.subr.bf16.mxu0 0
    %4207 = vmatpush1.bf16.msra.mxu0 0
    %4208 = vmatprep.mubr.bf16.mxu0 0
    %4209 = vmatmul.mubr.bf16.gmra.mrb[0].mxu0 %v4174
    %v4210 = vpop.f32.mrb[0].mxu0
    %v4211 = vadd.f32 0.0, %v4210
    %v4212 = vpop.f32.mrb[0].mxu0
    %v4213 = vpop.f32.mrb[0].mxu0
    %v4214 = vadd.f32 0.0, %v4213
    %v4215 = vpop.f32.mrb[0].mxu0
    %4216 = vdwg.mxu0
    %4217 = vrot.lane.b32.xlu0 %v3268, 40
    %v4218 = vpop.permute.xlu0 %4217
    %v4221 = vsel %vm694, %v3887, 0
    %4223 = vmatprep.subr.bf16.mxu0 0
    %4224 = vmatpush1.bf16.msra.mxu0 %v4218
    %4225 = vmatprep.subr.bf16.mxu0 0
    %4226 = vmatpush1.bf16.msra.mxu0 0
    %4227 = vmatprep.subr.bf16.mxu0 0
    %4228 = vmatpush1.bf16.msra.mxu0 0
    %4229 = vmatprep.subr.bf16.mxu0 0
    %4230 = vmatpush1.bf16.msra.mxu0 0
    %4231 = vmatprep.subr.bf16.mxu0 0
    %4232 = vmatpush1.bf16.msra.mxu0 0
    %4233 = vmatprep.subr.bf16.mxu0 0
    %4234 = vmatpush1.bf16.msra.mxu0 0
    %4235 = vmatprep.subr.bf16.mxu0 0
    %4236 = vmatpush1.bf16.msra.mxu0 0
    %4237 = vmatprep.subr.bf16.mxu0 0
    %4238 = vmatpush1.bf16.msra.mxu0 0
    %4239 = vmatprep.subr.bf16.mxu0 0
    %4240 = vmatpush1.bf16.msra.mxu0 0
    %4241 = vmatprep.subr.bf16.mxu0 0
    %4242 = vmatpush1.bf16.msra.mxu0 0
    %4243 = vmatprep.subr.bf16.mxu0 0
    %4244 = vmatpush1.bf16.msra.mxu0 0
    %4245 = vmatprep.subr.bf16.mxu0 0
    %4246 = vmatpush1.bf16.msra.mxu0 0
    %4247 = vmatprep.subr.bf16.mxu0 0
    %4248 = vmatpush1.bf16.msra.mxu0 0
    %4249 = vmatprep.subr.bf16.mxu0 0
    %4250 = vmatpush1.bf16.msra.mxu0 0
    %4251 = vmatprep.subr.bf16.mxu0 0
    %4252 = vmatpush1.bf16.msra.mxu0 0
    %4253 = vmatprep.subr.bf16.mxu0 0
    %4254 = vmatpush1.bf16.msra.mxu0 0
    %4255 = vmatprep.mubr.bf16.mxu0 0
    %4256 = vmatmul.mubr.bf16.gmra.mrb[0].mxu0 %v4221
    %v4257 = vpop.f32.mrb[0].mxu0
    %v4258 = vadd.f32 0.0, %v4257
    %v4259 = vpop.f32.mrb[0].mxu0
    %v4260 = vpop.f32.mrb[0].mxu0
    %v4261 = vadd.f32 0.0, %v4260
    %v4262 = vpop.f32.mrb[0].mxu0
    %4263 = vdwg.mxu0
    %4280 = vrot.lane.b32.xlu0 %v1923, 8
    %v4281 = vpop.permute.xlu0 %4280
    %4282 = vrot.lane.b32.xlu0 %v1926, 8
    %v4283 = vpop.permute.xlu0 %4282
    %4284 = vrot.lane.b32.xlu0 %v1970, 8
    %v4285 = vpop.permute.xlu0 %4284
    %4286 = vrot.lane.b32.xlu0 %v1973, 8
    %v4287 = vpop.permute.xlu0 %4286
    %4288 = vrot.lane.b32.xlu0 %v2017, 8
    %v4289 = vpop.permute.xlu0 %4288
    %4290 = vrot.lane.b32.xlu0 %v2020, 8
    %v4291 = vpop.permute.xlu0 %4290
    %4292 = vrot.lane.b32.xlu0 %v2064, 8
    %v4293 = vpop.permute.xlu0 %4292
    %4294 = vrot.lane.b32.xlu0 %v2067, 8
    %v4295 = vpop.permute.xlu0 %4294
    %4296 = vrot.lane.b32.xlu0 %v2111, 8
    %v4297 = vpop.permute.xlu0 %4296
    %4298 = vrot.lane.b32.xlu0 %v2114, 8
    %v4299 = vpop.permute.xlu0 %4298
    %4300 = vrot.lane.b32.xlu0 %v2158, 8
    %v4301 = vpop.permute.xlu0 %4300
    %4302 = vrot.lane.b32.xlu0 %v2161, 8
    %v4303 = vpop.permute.xlu0 %4302
    %4304 = vrot.lane.b32.xlu0 %v2205, 8
    %v4305 = vpop.permute.xlu0 %4304
    %4306 = vrot.lane.b32.xlu0 %v2208, 8
    %v4307 = vpop.permute.xlu0 %4306
    %4308 = vrot.lane.b32.xlu0 %v2252, 8
    %v4309 = vpop.permute.xlu0 %4308
    %4310 = vrot.lane.b32.xlu0 %v2255, 8
    %v4311 = vpop.permute.xlu0 %4310
    %4344 = vrot.lane.b32.xlu0 %v2926, 16
    %v4345 = vpop.permute.xlu0 %4344
    %4346 = vrot.lane.b32.xlu0 %v2929, 16
    %v4347 = vpop.permute.xlu0 %4346
    %4348 = vrot.lane.b32.xlu0 %v2973, 16
    %v4349 = vpop.permute.xlu0 %4348
    %4350 = vrot.lane.b32.xlu0 %v2976, 16
    %v4351 = vpop.permute.xlu0 %4350
    %4352 = vrot.lane.b32.xlu0 %v3020, 16
    %v4353 = vpop.permute.xlu0 %4352
    %4354 = vrot.lane.b32.xlu0 %v3023, 16
    %v4355 = vpop.permute.xlu0 %4354
    %4356 = vrot.lane.b32.xlu0 %v3067, 16
    %v4357 = vpop.permute.xlu0 %4356
    %4358 = vrot.lane.b32.xlu0 %v3070, 16
    %v4359 = vpop.permute.xlu0 %4358
    %4360 = vrot.lane.b32.xlu0 %v3114, 16
    %v4361 = vpop.permute.xlu0 %4360
    %4362 = vrot.lane.b32.xlu0 %v3117, 16
    %v4363 = vpop.permute.xlu0 %4362
    %4364 = vrot.lane.b32.xlu0 %v3161, 16
    %v4365 = vpop.permute.xlu0 %4364
    %4366 = vrot.lane.b32.xlu0 %v3164, 16
    %v4367 = vpop.permute.xlu0 %4366
    %4368 = vrot.lane.b32.xlu0 %v3208, 16
    %v4369 = vpop.permute.xlu0 %4368
    %4370 = vrot.lane.b32.xlu0 %v3211, 16
    %v4371 = vpop.permute.xlu0 %4370
    %4372 = vrot.lane.b32.xlu0 %v3255, 16
    %v4373 = vpop.permute.xlu0 %4372
    %4374 = vrot.lane.b32.xlu0 %v3258, 16
    %v4375 = vpop.permute.xlu0 %4374
    %4408 = vrot.lane.b32.xlu0 %v3929, 24
    %v4409 = vpop.permute.xlu0 %4408
    %4410 = vrot.lane.b32.xlu0 %v3932, 24
    %v4411 = vpop.permute.xlu0 %4410
    %4412 = vrot.lane.b32.xlu0 %v3976, 24
    %v4413 = vpop.permute.xlu0 %4412
    %4414 = vrot.lane.b32.xlu0 %v3979, 24
    %v4415 = vpop.permute.xlu0 %4414
    %4416 = vrot.lane.b32.xlu0 %v4023, 24
    %v4417 = vpop.permute.xlu0 %4416
    %4418 = vrot.lane.b32.xlu0 %v4026, 24
    %v4419 = vpop.permute.xlu0 %4418
    %4420 = vrot.lane.b32.xlu0 %v4070, 24
    %v4421 = vpop.permute.xlu0 %4420
    %4422 = vrot.lane.b32.xlu0 %v4073, 24
    %v4423 = vpop.permute.xlu0 %4422
    %4424 = vrot.lane.b32.xlu0 %v4117, 24
    %v4425 = vpop.permute.xlu0 %4424
    %4426 = vrot.lane.b32.xlu0 %v4120, 24
    %v4427 = vpop.permute.xlu0 %4426
    %4428 = vrot.lane.b32.xlu0 %v4164, 24
    %v4429 = vpop.permute.xlu0 %4428
    %4430 = vrot.lane.b32.xlu0 %v4167, 24
    %v4431 = vpop.permute.xlu0 %4430
    %4432 = vrot.lane.b32.xlu0 %v4211, 24
    %v4433 = vpop.permute.xlu0 %4432
    %4434 = vrot.lane.b32.xlu0 %v4214, 24
    %v4435 = vpop.permute.xlu0 %4434
    %4436 = vrot.lane.b32.xlu0 %v4258, 24
    %v4437 = vpop.permute.xlu0 %4436
    %4438 = vrot.lane.b32.xlu0 %v4261, 24
    %v4439 = vpop.permute.xlu0 %4438
    %v4456 = vsel %vm280, %v920, %v4281
    %v4457 = vsel %vm280, %v923, %v4283
    %v4458 = vsel %vm280, %v967, %v4285
    %v4459 = vsel %vm280, %v970, %v4287
    %v4460 = vsel %vm280, %v1014, %v4289
    %v4461 = vsel %vm280, %v1017, %v4291
    %v4462 = vsel %vm280, %v1061, %v4293
    %v4463 = vsel %vm280, %v1064, %v4295
    %v4464 = vsel %vm280, %v1108, %v4297
    %v4465 = vsel %vm280, %v1111, %v4299
    %v4466 = vsel %vm280, %v1155, %v4301
    %v4467 = vsel %vm280, %v1158, %v4303
    %v4468 = vsel %vm280, %v1202, %v4305
    %v4469 = vsel %vm280, %v1205, %v4307
    %v4470 = vsel %vm280, %v1249, %v4309
    %v4471 = vsel %vm280, %v1252, %v4311
    %v4472 = vsel %vm694, %v4456, %v4345
    %v4473 = vsel %vm694, %v4457, %v4347
    %v4474 = vsel %vm694, %v4458, %v4349
    %v4475 = vsel %vm694, %v4459, %v4351
    %v4476 = vsel %vm694, %v4460, %v4353
    %v4477 = vsel %vm694, %v4461, %v4355
    %v4478 = vsel %vm694, %v4462, %v4357
    %v4479 = vsel %vm694, %v4463, %v4359
    %v4480 = vsel %vm694, %v4464, %v4361
    %v4481 = vsel %vm694, %v4465, %v4363
    %v4482 = vsel %vm694, %v4466, %v4365
    %v4483 = vsel %vm694, %v4467, %v4367
    %v4484 = vsel %vm694, %v4468, %v4369
    %v4485 = vsel %vm694, %v4469, %v4371
    %v4486 = vsel %vm694, %v4470, %v4373
    %v4487 = vsel %vm694, %v4471, %v4375
    %vm4488 = vcmask 195584
    %v4489 = vsel %vm4488, %v4472, %v4409
    %v4490 = vsel %vm4488, %v4473, %v4411
    %v4491 = vsel %vm4488, %v4474, %v4413
    %v4492 = vsel %vm4488, %v4475, %v4415
    %v4493 = vsel %vm4488, %v4476, %v4417
    %v4494 = vsel %vm4488, %v4477, %v4419
    %v4495 = vsel %vm4488, %v4478, %v4421
    %v4496 = vsel %vm4488, %v4479, %v4423
    %v4497 = vsel %vm4488, %v4480, %v4425
    %v4498 = vsel %vm4488, %v4481, %v4427
    %v4499 = vsel %vm4488, %v4482, %v4429
    %v4500 = vsel %vm4488, %v4483, %v4431
    %v4501 = vsel %vm4488, %v4484, %v4433
    %v4502 = vsel %vm4488, %v4485, %v4435
    %v4503 = vsel %vm4488, %v4486, %v4437
    %v4504 = vsel %vm4488, %v4487, %v4439
    %v4505 = vpack.c.bf16 %v4490, %v4489
    %v4506 = vpack.c.bf16 %v4492, %v4491
    %v4507 = vpack.c.bf16 %v4494, %v4493
    %v4508 = vpack.c.bf16 %v4496, %v4495
    %v4509 = vpack.c.bf16 %v4498, %v4497
    %v4510 = vpack.c.bf16 %v4500, %v4499
    %v4511 = vpack.c.bf16 %v4502, %v4501
    %v4512 = vpack.c.bf16 %v4504, %v4503
    %4513 = vst.msk [vmem:[#allocation3] sm:$0xff] %vm120, %v4505
    %4514 = vst.msk [vmem:[#allocation3 + $0x8] sm:$0xff] %vm120, %v4506
    %4515 = vst.msk [vmem:[#allocation3 + $0x10] sm:$0xff] %vm120, %v4507
    %4516 = vst.msk [vmem:[#allocation3 + $0x18] sm:$0xff] %vm120, %v4508
    %4517 = vst.msk [vmem:[#allocation3 + $0x20] sm:$0xff] %vm120, %v4509
    %4518 = vst.msk [vmem:[#allocation3 + $0x28] sm:$0xff] %vm120, %v4510
    %4519 = vst.msk [vmem:[#allocation3 + $0x30] sm:$0xff] %vm120, %v4511
    %4520 = vst.msk [vmem:[#allocation3 + $0x38] sm:$0xff] %vm120, %v4512
    %v4521 = vld [vmem:[#allocation3] sm:$0xff]
    %v4522 = vld [vmem:[#allocation3 + $0x8] sm:$0xff]
    %v4523 = vld [vmem:[#allocation3 + $0x10] sm:$0xff]
    %v4524 = vld [vmem:[#allocation3 + $0x18] sm:$0xff]
    %v4525 = vld [vmem:[#allocation3 + $0x20] sm:$0xff]
    %v4526 = vld [vmem:[#allocation3 + $0x28] sm:$0xff]
    %v4527 = vld [vmem:[#allocation3 + $0x30] sm:$0xff]
    %v4528 = vld [vmem:[#allocation3 + $0x38] sm:$0xff]
    %v4529 = vld [vmem:[%s5] sm:$0xf]
    %v4530 = vld [vmem:[%s5 + $0x4] sm:$0xf]
    %v4531 = vld [vmem:[%s5 + $0x8] sm:$0xf]
    %v4532 = vld [vmem:[%s5 + $0xc] sm:$0xf]
    %v4533 = vld [vmem:[%s6] sm:$0x1]
    %v4535 = vlaneseq
    %v4536 = vshrl.u32 %v4535, 7
    %v4537 = vsub.s32 0, %v4536
    %v4538 = vrot.slane %v4533, %v4537
    %v4544 = vunpack.c.l.b16 %v4529
    %v4545 = vunpack.c.l.b16 %v4530
    %v4546 = vunpack.c.l.b16 %v4531
    %v4547 = vunpack.c.l.b16 %v4532
    %v4548 = vpack.c.b16 %v4545, %v4544
    %v4549 = vpack.c.b16 %v4547, %v4546
    %v4553 = vsel %vm120, %v4521, 0
    %v4556 = vsel %vm120, %v4522, 0
    %v4559 = vsel %vm120, %v4523, 0
    %v4562 = vsel %vm120, %v4524, 0
    %v4565 = vsel %vm120, %v4525, 0
    %v4568 = vsel %vm120, %v4526, 0
    %v4571 = vsel %vm120, %v4527, 0
    %v4574 = vsel %vm120, %v4528, 0
    %4576 = vmatprep.subr.bf16.mxu0 0
    %4577 = vmatpush1.bf16.msra.mxu0 %v4548
    %4578 = vmatprep.subr.bf16.mxu0 0
    %4579 = vmatpush1.bf16.msra.mxu0 %v4549
    %4580 = vmatprep.subr.bf16.mxu0 0
    %4581 = vmatpush1.bf16.msra.mxu0 0
    %4582 = vmatprep.subr.bf16.mxu0 0
    %4583 = vmatpush1.bf16.msra.mxu0 0
    %4584 = vmatprep.subr.bf16.mxu0 0
    %4585 = vmatpush1.bf16.msra.mxu0 0
    %4586 = vmatprep.subr.bf16.mxu0 0
    %4587 = vmatpush1.bf16.msra.mxu0 0
    %4588 = vmatprep.subr.bf16.mxu0 0
    %4589 = vmatpush1.bf16.msra.mxu0 0
    %4590 = vmatprep.subr.bf16.mxu0 0
    %4591 = vmatpush1.bf16.msra.mxu0 0
    %4592 = vmatprep.subr.bf16.mxu0 0
    %4593 = vmatpush1.bf16.msra.mxu0 0
    %4594 = vmatprep.subr.bf16.mxu0 0
    %4595 = vmatpush1.bf16.msra.mxu0 0
    %4596 = vmatprep.subr.bf16.mxu0 0
    %4597 = vmatpush1.bf16.msra.mxu0 0
    %4598 = vmatprep.subr.bf16.mxu0 0
    %4599 = vmatpush1.bf16.msra.mxu0 0
    %4600 = vmatprep.subr.bf16.mxu0 0
    %4601 = vmatpush1.bf16.msra.mxu0 0
    %4602 = vmatprep.subr.bf16.mxu0 0
    %4603 = vmatpush1.bf16.msra.mxu0 0
    %4604 = vmatprep.subr.bf16.mxu0 0
    %4605 = vmatpush1.bf16.msra.mxu0 0
    %4606 = vmatprep.subr.bf16.mxu0 0
    %4607 = vmatpush1.bf16.msra.mxu0 0
    %4608 = vmatprep.mubr.bf16.mxu0 0
    %4609 = vmatmul.mubr.bf16.gmra.mrb[0].mxu0 %v4553
    %v4610 = vpop.f32.mrb[0].mxu0
    %v4611 = vadd.f32 %v4538, %v4610
    %v4612 = vpop.f32.mrb[0].mxu0
    %v4613 = vpop.f32.mrb[0].mxu0
    %v4614 = vadd.f32 %v4538, %v4613
    %v4615 = vpop.f32.mrb[0].mxu0
    %4616 = vmatprep.mubr.bf16.mxu0 0
    %4617 = vmatmul.mubr.bf16.gmra.mrb[0].mxu0 %v4556
    %v4618 = vpop.f32.mrb[0].mxu0
    %v4619 = vadd.f32 %v4538, %v4618
    %v4620 = vpop.f32.mrb[0].mxu0
    %v4621 = vpop.f32.mrb[0].mxu0
    %v4622 = vadd.f32 %v4538, %v4621
    %v4623 = vpop.f32.mrb[0].mxu0
    %4624 = vmatprep.mubr.bf16.mxu0 0
    %4625 = vmatmul.mubr.bf16.gmra.mrb[0].mxu0 %v4559
    %v4626 = vpop.f32.mrb[0].mxu0
    %v4627 = vadd.f32 %v4538, %v4626
    %v4628 = vpop.f32.mrb[0].mxu0
    %v4629 = vpop.f32.mrb[0].mxu0
    %v4630 = vadd.f32 %v4538, %v4629
    %v4631 = vpop.f32.mrb[0].mxu0
    %4632 = vmatprep.mubr.bf16.mxu0 0
    %4633 = vmatmul.mubr.bf16.gmra.mrb[0].mxu0 %v4562
    %v4634 = vpop.f32.mrb[0].mxu0
    %v4635 = vadd.f32 %v4538, %v4634
    %v4636 = vpop.f32.mrb[0].mxu0
    %v4637 = vpop.f32.mrb[0].mxu0
    %v4638 = vadd.f32 %v4538, %v4637
    %v4639 = vpop.f32.mrb[0].mxu0
    %4640 = vmatprep.mubr.bf16.mxu0 0
    %4641 = vmatmul.mubr.bf16.gmra.mrb[0].mxu0 %v4565
    %v4642 = vpop.f32.mrb[0].mxu0
    %v4643 = vadd.f32 %v4538, %v4642
    %v4644 = vpop.f32.mrb[0].mxu0
    %v4645 = vpop.f32.mrb[0].mxu0
    %v4646 = vadd.f32 %v4538, %v4645
    %v4647 = vpop.f32.mrb[0].mxu0
    %4648 = vmatprep.mubr.bf16.mxu0 0
    %4649 = vmatmul.mubr.bf16.gmra.mrb[0].mxu0 %v4568
    %v4650 = vpop.f32.mrb[0].mxu0
    %v4651 = vadd.f32 %v4538, %v4650
    %v4652 = vpop.f32.mrb[0].mxu0
    %v4653 = vpop.f32.mrb[0].mxu0
    %v4654 = vadd.f32 %v4538, %v4653
    %v4655 = vpop.f32.mrb[0].mxu0
    %4656 = vmatprep.mubr.bf16.mxu0 0
    %4657 = vmatmul.mubr.bf16.gmra.mrb[0].mxu0 %v4571
    %v4658 = vpop.f32.mrb[0].mxu0
    %v4659 = vadd.f32 %v4538, %v4658
    %v4660 = vpop.f32.mrb[0].mxu0
    %v4661 = vpop.f32.mrb[0].mxu0
    %v4662 = vadd.f32 %v4538, %v4661
    %v4663 = vpop.f32.mrb[0].mxu0
    %4664 = vmatprep.mubr.bf16.mxu0 0
    %4665 = vmatmul.mubr.bf16.gmra.mrb[0].mxu0 %v4574
    %v4666 = vpop.f32.mrb[0].mxu0
    %v4667 = vadd.f32 %v4538, %v4666
    %v4668 = vpop.f32.mrb[0].mxu0
    %v4669 = vpop.f32.mrb[0].mxu0
    %v4670 = vadd.f32 %v4538, %v4669
    %v4671 = vpop.f32.mrb[0].mxu0
    %4672 = vdwg.mxu0
    %4673 = vst.msk [vmem:[%s7] sm:$0xff] %vm120, %v4611
    %4674 = vst.msk [vmem:[%s7 + $0x8] sm:$0xff] %vm120, %v4614
    %4675 = vst.msk [vmem:[%s7 + $0x10] sm:$0xff] %vm120, %v4619
    %4676 = vst.msk [vmem:[%s7 + $0x18] sm:$0xff] %vm120, %v4622
    %4677 = vst.msk [vmem:[%s7 + $0x20] sm:$0xff] %vm120, %v4627
    %4678 = vst.msk [vmem:[%s7 + $0x28] sm:$0xff] %vm120, %v4630
    %4679 = vst.msk [vmem:[%s7 + $0x30] sm:$0xff] %vm120, %v4635
    %4680 = vst.msk [vmem:[%s7 + $0x38] sm:$0xff] %vm120, %v4638
    %4681 = vst.msk [vmem:[%s7 + $0x40] sm:$0xff] %vm120, %v4643
    %4682 = vst.msk [vmem:[%s7 + $0x48] sm:$0xff] %vm120, %v4646
    %4683 = vst.msk [vmem:[%s7 + $0x50] sm:$0xff] %vm120, %v4651
    %4684 = vst.msk [vmem:[%s7 + $0x58] sm:$0xff] %vm120, %v4654
    %4685 = vst.msk [vmem:[%s7 + $0x60] sm:$0xff] %vm120, %v4659
    %4686 = vst.msk [vmem:[%s7 + $0x68] sm:$0xff] %vm120, %v4662
    %4687 = vst.msk [vmem:[%s7 + $0x70] sm:$0xff] %vm120, %v4667
    %4688 = vst.msk [vmem:[%s7 + $0x78] sm:$0xff] %vm120, %v4670
    // Predicated region
    $region34: #{tpu_custom_call.1} parent=1 // pred_check
      _
    $region35: #{tpu_custom_call.1} parent=1 // pred_check_branch
      %4690 = sbr.rel (0) target = $region37
    $region36: #{tpu_custom_call.1} parent=1 // pred_region
      _
    $region37: #{tpu_custom_call.1} parent=1 // pred_fallthru
      _
    // Predicated region
    $region38: #{tpu_custom_call.1} parent=1 // pred_check
      _
    $region39: #{tpu_custom_call.1} parent=1 // pred_check_branch
      %4692 = sbr.rel (0) target = $region41
    $region40: #{tpu_custom_call.1} parent=1 // pred_region
      _
    $region41: #{tpu_custom_call.1} parent=1 // pred_fallthru
      _
    %4693 = vsyncpa [#allocation5], 1

</llo_original>
